<compile_context>
chip_gen: v7x
topology: tpu7x:2x2x1
jax: 0.10.0
libtpu: 0.0.40
codegen_flags: <defaults>
</compile_context>

<pallas_src>
import functools

import jax
import jax.numpy as jnp
from jax.experimental import pallas as pl
from jax.experimental.pallas import tpu as pltpu


def _conv3x3_taps(src_pad_ref, w_ref, H, W, Cin, Cout, matmul_dtype):
    """3x3 'same' conv from a zero-padded (H+2, W+2, Cin) VMEM ref.

    Computed as 9 shifted-window 2-D matmuls (H*W, Cin) @ (Cin, Cout),
    accumulated in f32 on the MXU. Returns (H*W, Cout) f32.
    """
    acc = jnp.zeros((H * W, Cout), jnp.float32)
    for kh in range(3):
        for kw in range(3):
            patch = src_pad_ref[kh:kh + H, kw:kw + W, :]        # (H, W, Cin)
            patch2d = patch.reshape(H * W, Cin)                 # M = H*W
            w_tap = w_ref[kh * 3 + kw]                          # (Cin, Cout)
            if matmul_dtype is not None:
                patch2d = patch2d.astype(matmul_dtype)
                w_tap = w_tap.astype(matmul_dtype)
            acc = acc + jnp.dot(patch2d, w_tap,
                                preferred_element_type=jnp.float32)
    return acc


def _unet_conv_block_kernel(x_ref, w1_ref, b1_ref, w2_ref, b2_ref, o_ref,
                            xpad_ref, midpad_ref, *, slope, matmul_dtype):
    # x_ref  : (1, H, W, Cin)   unpadded NHWC input tile (one batch element)
    # w1_ref : (9, Cin, Cout)   conv1 weights, 3x3 taps flattened
    # b1_ref : (1, Cout)
    # w2_ref : (9, Cout, Cout)
    # b2_ref : (1, Cout)
    # o_ref  : (1, H, W, Cout)
    # xpad_ref   : VMEM (H+2, W+2, Cin)  f32 zero-padded input
    # midpad_ref : VMEM (H+2, W+2, Cout) f32 zero-padded intermediate activation
    H, W, Cin = x_ref.shape[1], x_ref.shape[2], x_ref.shape[3]
    Cout = b1_ref.shape[1]

    # ---- in-kernel zero padding (replaces wrapper-side jnp.pad HBM copies) ----
    xpad_ref[...] = jnp.zeros_like(xpad_ref)
    xpad_ref[1:H + 1, 1:W + 1, :] = x_ref[0].astype(xpad_ref.dtype)

    # ---- conv1 + bias + LeakyReLU (f32 accumulation) ----
    acc1 = _conv3x3_taps(xpad_ref, w1_ref, H, W, Cin, Cout, matmul_dtype)
    acc1 = acc1 + b1_ref[...]                                   # (1, Cout) broadcast
    act1 = jnp.where(acc1 >= 0, acc1, acc1 * slope)

    # ---- intermediate activation stays in VMEM (no HBM round trip) ----
    midpad_ref[...] = jnp.zeros_like(midpad_ref)
    midpad_ref[1:H + 1, 1:W + 1, :] = act1.reshape(H, W, Cout)

    # ---- conv2 + bias + LeakyReLU ----
    acc2 = _conv3x3_taps(midpad_ref, w2_ref, H, W, Cout, Cout, matmul_dtype)
    acc2 = acc2 + b2_ref[...]
    act2 = jnp.where(acc2 >= 0, acc2, acc2 * slope)

    o_ref[0] = act2.reshape(H, W, Cout).astype(o_ref.dtype)


def unet_up_block_nocat(x_nchw, params, slope=0.2, matmul_dtype=None):
    """Forward pass of UNetUpBlock_nocat. Input/output are NCHW like PyTorch.

    matmul_dtype: set to jnp.bfloat16 on v6e/v7x for the fast MXU path
    (f32 accumulation is kept either way); None keeps full f32 matmuls.
    """
    N, Cin, H, W = x_nchw.shape
    Cout = params["b1"].shape[0]

    # Single layout change around the whole fused two-conv block.
    x_nhwc = jnp.transpose(x_nchw, (0, 2, 3, 1))                # NCHW -> NHWC

    w1 = params["w1"].reshape(9, Cin, Cout)                     # (3,3,Cin,Cout) -> (9,Cin,Cout)
    w2 = params["w2"].reshape(9, Cout, Cout)
    b1 = params["b1"].reshape(1, Cout)
    b2 = params["b2"].reshape(1, Cout)

    kernel = functools.partial(_unet_conv_block_kernel,
                               slope=slope, matmul_dtype=matmul_dtype)

    out_nhwc = pl.pallas_call(
        kernel,
        out_shape=jax.ShapeDtypeStruct((N, H, W, Cout), x_nchw.dtype),
        grid_spec=pltpu.PrefetchScalarGridSpec(
            num_scalar_prefetch=0,
            grid=(N,),
            in_specs=[
                pl.BlockSpec((1, H, W, Cin), lambda n: (n, 0, 0, 0)),
                pl.BlockSpec((9, Cin, Cout), lambda n: (0, 0, 0)),
                pl.BlockSpec((1, Cout), lambda n: (0, 0)),
                pl.BlockSpec((9, Cout, Cout), lambda n: (0, 0, 0)),
                pl.BlockSpec((1, Cout), lambda n: (0, 0)),
            ],
            out_specs=pl.BlockSpec((1, H, W, Cout), lambda n: (n, 0, 0, 0)),
            scratch_shapes=[
                pltpu.VMEM((H + 2, W + 2, Cin), jnp.float32),   # padded input
                pltpu.VMEM((H + 2, W + 2, Cout), jnp.float32),  # padded intermediate
            ],
        ),
        compiler_params=pltpu.CompilerParams(
            dimension_semantics=("parallel",),
            vmem_limit_bytes=32 * 1024 * 1024,
        ),
    )(x_nhwc, w1, b1, w2, b2)

    return jnp.transpose(out_nhwc, (0, 3, 1, 2))                # NHWC -> NCHW


def init_params(key, in_size, out_size, dtype=jnp.float32):
    k1, k2, k3, k4 = jax.random.split(key, 4)
    # Deterministic synthetic init (shapes match nn.Conv2d(in, out, 3, padding=1, bias=True)).
    # Weights stored as (kh, kw, Cin, Cout) for the NHWC kernel.
    fan1 = in_size * 9
    fan2 = out_size * 9
    return {
        "w1": (jax.random.normal(k1, (3, 3, in_size, out_size), dtype)
               / jnp.sqrt(fan1).astype(dtype)),
        "b1": jax.random.normal(k2, (out_size,), dtype) * 0.01,
        "w2": (jax.random.normal(k3, (3, 3, out_size, out_size), dtype)
               / jnp.sqrt(fan2).astype(dtype)),
        "b2": jax.random.normal(k4, (out_size,), dtype) * 0.01,
    }


def _reference(x_nchw, params, slope=0.2):
    """Pure-JAX reference (lax conv) for verification."""
    def conv(x, w, b):
        # x: NCHW, w stored as HWIO -> convert to OIHW
        w_oihw = jnp.transpose(w, (3, 2, 0, 1))
        y = jax.lax.conv_general_dilated(
            x, w_oihw, window_strides=(1, 1), padding="SAME",
            dimension_numbers=("NCHW", "OIHW", "NCHW"))
        y = y + b[None, :, None, None]
        return jnp.where(y >= 0, y, y * slope)

    x = conv(x_nchw, params["w1"], params["b1"])
    x = conv(x, params["w2"], params["b2"])
    return x


if __name__ == "__main__":
    in_size, out_size = 4, 8
    N, H, W = 2, 16, 16
    slope = 0.2

    key = jax.random.PRNGKey(0)
    kx, kp = jax.random.split(key)
    x = jax.random.normal(kx, (N, in_size, H, W), jnp.float32)
    params = init_params(kp, in_size, out_size)

    # f32 matmuls here so the check against the f32 reference is tight;
    # pass matmul_dtype=jnp.bfloat16 on v6e/v7x for the fast MXU path.
    out = unet_up_block_nocat(x, params, slope)
    out = jax.block_until_ready(out)

    ref = _reference(x, params, slope)
    assert out.shape == (N, out_size, H, W)
    assert jnp.allclose(out, ref, atol=1e-4, rtol=1e-4), "mismatch vs reference"

    print("KERNEL_OK")
</pallas_src>

<mosaic_0001>
module attributes {stable_mosaic.version = 11 : i64} {
  func.func @_unet_conv_block_kernel(%arg0: i32, %arg1: memref<1x16x16x4xf32, #tpu.memory_space<vmem>>, %arg2: memref<9x4x8xf32, #tpu.memory_space<vmem>>, %arg3: memref<1x8xf32, #tpu.memory_space<vmem>>, %arg4: memref<9x8x8xf32, #tpu.memory_space<vmem>>, %arg5: memref<1x8xf32, #tpu.memory_space<vmem>>, %arg6: memref<1x16x16x8xf32, #tpu.memory_space<vmem>>, %arg7: memref<18x18x4xf32, #tpu.memory_space<vmem>>, %arg8: memref<18x18x8xf32, #tpu.memory_space<vmem>>) attributes {dimension_semantics = [#tpu.dimension_semantics<parallel>], iteration_bounds = array<i64: 2>, scalar_prefetch = 0 : i64, scratch_operands = 2 : i64, tpu.core_type = #tpu.core_type<tc>, window_params = [{transform_indices = @transform_0, window_bounds = array<i64: 1, 16, 16, 4>}, {pipeline_mode = #tpu.pipeline_mode<synchronous>, transform_indices = @transform_1, window_bounds = array<i64: 9, 4, 8>}, {pipeline_mode = #tpu.pipeline_mode<synchronous>, transform_indices = @transform_2, window_bounds = array<i64: 1, 8>}, {pipeline_mode = #tpu.pipeline_mode<synchronous>, transform_indices = @transform_3, window_bounds = array<i64: 9, 8, 8>}, {pipeline_mode = #tpu.pipeline_mode<synchronous>, transform_indices = @transform_4, window_bounds = array<i64: 1, 8>}, {transform_indices = @transform_5, window_bounds = array<i64: 1, 16, 16, 8>}]} {
    %cst = arith.constant 0.000000e+00 : f32
    %0 = vector.broadcast %cst : f32 to vector<18x18x4xf32>
    %c0 = arith.constant 0 : index
    %c0_0 = arith.constant 0 : index
    %c0_1 = arith.constant 0 : index
    %1 = vector.load %arg7[%c0, %c0_0, %c0_1] : memref<18x18x4xf32, #tpu.memory_space<vmem>>, vector<18x18x4xf32>
    tpu.vector_store %arg7[%c0, %c0_0, %c0_1], %0 {strides = array<i32>} : memref<18x18x4xf32, #tpu.memory_space<vmem>>, vector<18x18x4xf32>,
    %c0_2 = arith.constant 0 : index
    %c0_3 = arith.constant 0 : index
    %c0_4 = arith.constant 0 : index
    %c0_5 = arith.constant 0 : index
    %2 = vector.load %arg1[%c0_2, %c0_3, %c0_4, %c0_5] : memref<1x16x16x4xf32, #tpu.memory_space<vmem>>, vector<1x16x16x4xf32>
    %3 = vector.shape_cast %2 : vector<1x16x16x4xf32> to vector<16x16x4xf32>
    %c1 = arith.constant 1 : index
    %c1_6 = arith.constant 1 : index
    %c0_7 = arith.constant 0 : index
    %4 = vector.load %arg7[%c1, %c1_6, %c0_7] : memref<18x18x4xf32, #tpu.memory_space<vmem>>, vector<16x16x4xf32>
    tpu.vector_store %arg7[%c1, %c1_6, %c0_7], %3 {strides = array<i32>} : memref<18x18x4xf32, #tpu.memory_space<vmem>>, vector<16x16x4xf32>,
    %cst_8 = arith.constant 0.000000e+00 : f32
    %5 = vector.broadcast %cst_8 : f32 to vector<256x8xf32>
    %c0_9 = arith.constant 0 : index
    %c0_10 = arith.constant 0 : index
    %c0_11 = arith.constant 0 : index
    %6 = vector.load %arg7[%c0_9, %c0_10, %c0_11] : memref<18x18x4xf32, #tpu.memory_space<vmem>>, vector<16x16x4xf32>
    %7 = vector.shape_cast %6 : vector<16x16x4xf32> to vector<256x4xf32>
    %c0_12 = arith.constant 0 : index
    %c0_13 = arith.constant 0 : index
    %c0_14 = arith.constant 0 : index
    %8 = vector.load %arg2[%c0_12, %c0_13, %c0_14] : memref<9x4x8xf32, #tpu.memory_space<vmem>>, vector<1x4x8xf32>
    %9 = vector.shape_cast %8 : vector<1x4x8xf32> to vector<4x8xf32>
    %cst_15 = arith.constant dense<0.000000e+00> : vector<256x8xf32>
    %10 = tpu.matmul %7, %9, %cst_15 {dimension_numbers = #tpu.dot_dimension_numbers<[1], [0], [0], [1], [0, 0, 1, 1], [], []>} : vector<256x4xf32>, vector<4x8xf32>, vector<256x8xf32> -> vector<256x8xf32>
    %11 = arith.addf %5, %10 : vector<256x8xf32>
    %c0_16 = arith.constant 0 : index
    %c1_17 = arith.constant 1 : index
    %c0_18 = arith.constant 0 : index
    %12 = vector.load %arg7[%c0_16, %c1_17, %c0_18] : memref<18x18x4xf32, #tpu.memory_space<vmem>>, vector<16x16x4xf32>
    %13 = vector.shape_cast %12 : vector<16x16x4xf32> to vector<256x4xf32>
    %c1_19 = arith.constant 1 : index
    %c0_20 = arith.constant 0 : index
    %c0_21 = arith.constant 0 : index
    %14 = vector.load %arg2[%c1_19, %c0_20, %c0_21] : memref<9x4x8xf32, #tpu.memory_space<vmem>>, vector<1x4x8xf32>
    %15 = vector.shape_cast %14 : vector<1x4x8xf32> to vector<4x8xf32>
    %cst_22 = arith.constant dense<0.000000e+00> : vector<256x8xf32>
    %16 = tpu.matmul %13, %15, %cst_22 {dimension_numbers = #tpu.dot_dimension_numbers<[1], [0], [0], [1], [0, 0, 1, 1], [], []>} : vector<256x4xf32>, vector<4x8xf32>, vector<256x8xf32> -> vector<256x8xf32>
    %17 = arith.addf %11, %16 : vector<256x8xf32>
    %c0_23 = arith.constant 0 : index
    %c2 = arith.constant 2 : index
    %c0_24 = arith.constant 0 : index
    %18 = vector.load %arg7[%c0_23, %c2, %c0_24] : memref<18x18x4xf32, #tpu.memory_space<vmem>>, vector<16x16x4xf32>
    %19 = vector.shape_cast %18 : vector<16x16x4xf32> to vector<256x4xf32>
    %c2_25 = arith.constant 2 : index
    %c0_26 = arith.constant 0 : index
    %c0_27 = arith.constant 0 : index
    %20 = vector.load %arg2[%c2_25, %c0_26, %c0_27] : memref<9x4x8xf32, #tpu.memory_space<vmem>>, vector<1x4x8xf32>
    %21 = vector.shape_cast %20 : vector<1x4x8xf32> to vector<4x8xf32>
    %cst_28 = arith.constant dense<0.000000e+00> : vector<256x8xf32>
    %22 = tpu.matmul %19, %21, %cst_28 {dimension_numbers = #tpu.dot_dimension_numbers<[1], [0], [0], [1], [0, 0, 1, 1], [], []>} : vector<256x4xf32>, vector<4x8xf32>, vector<256x8xf32> -> vector<256x8xf32>
    %23 = arith.addf %17, %22 : vector<256x8xf32>
    %c1_29 = arith.constant 1 : index
    %c0_30 = arith.constant 0 : index
    %c0_31 = arith.constant 0 : index
    %24 = vector.load %arg7[%c1_29, %c0_30, %c0_31] : memref<18x18x4xf32, #tpu.memory_space<vmem>>, vector<16x16x4xf32>
    %25 = vector.shape_cast %24 : vector<16x16x4xf32> to vector<256x4xf32>
    %c3 = arith.constant 3 : index
    %c0_32 = arith.constant 0 : index
    %c0_33 = arith.constant 0 : index
    %26 = vector.load %arg2[%c3, %c0_32, %c0_33] : memref<9x4x8xf32, #tpu.memory_space<vmem>>, vector<1x4x8xf32>
    %27 = vector.shape_cast %26 : vector<1x4x8xf32> to vector<4x8xf32>
    %cst_34 = arith.constant dense<0.000000e+00> : vector<256x8xf32>
    %28 = tpu.matmul %25, %27, %cst_34 {dimension_numbers = #tpu.dot_dimension_numbers<[1], [0], [0], [1], [0, 0, 1, 1], [], []>} : vector<256x4xf32>, vector<4x8xf32>, vector<256x8xf32> -> vector<256x8xf32>
    %29 = arith.addf %23, %28 : vector<256x8xf32>
    %c1_35 = arith.constant 1 : index
    %c1_36 = arith.constant 1 : index
    %c0_37 = arith.constant 0 : index
    %30 = vector.load %arg7[%c1_35, %c1_36, %c0_37] : memref<18x18x4xf32, #tpu.memory_space<vmem>>, vector<16x16x4xf32>
    %31 = vector.shape_cast %30 : vector<16x16x4xf32> to vector<256x4xf32>
    %c4 = arith.constant 4 : index
    %c0_38 = arith.constant 0 : index
    %c0_39 = arith.constant 0 : index
    %32 = vector.load %arg2[%c4, %c0_38, %c0_39] : memref<9x4x8xf32, #tpu.memory_space<vmem>>, vector<1x4x8xf32>
    %33 = vector.shape_cast %32 : vector<1x4x8xf32> to vector<4x8xf32>
    %cst_40 = arith.constant dense<0.000000e+00> : vector<256x8xf32>
    %34 = tpu.matmul %31, %33, %cst_40 {dimension_numbers = #tpu.dot_dimension_numbers<[1], [0], [0], [1], [0, 0, 1, 1], [], []>} : vector<256x4xf32>, vector<4x8xf32>, vector<256x8xf32> -> vector<256x8xf32>
    %35 = arith.addf %29, %34 : vector<256x8xf32>
    %c1_41 = arith.constant 1 : index
    %c2_42 = arith.constant 2 : index
    %c0_43 = arith.constant 0 : index
    %36 = vector.load %arg7[%c1_41, %c2_42, %c0_43] : memref<18x18x4xf32, #tpu.memory_space<vmem>>, vector<16x16x4xf32>
    %37 = vector.shape_cast %36 : vector<16x16x4xf32> to vector<256x4xf32>
    %c5 = arith.constant 5 : index
    %c0_44 = arith.constant 0 : index
    %c0_45 = arith.constant 0 : index
    %38 = vector.load %arg2[%c5, %c0_44, %c0_45] : memref<9x4x8xf32, #tpu.memory_space<vmem>>, vector<1x4x8xf32>
    %39 = vector.shape_cast %38 : vector<1x4x8xf32> to vector<4x8xf32>
    %cst_46 = arith.constant dense<0.000000e+00> : vector<256x8xf32>
    %40 = tpu.matmul %37, %39, %cst_46 {dimension_numbers = #tpu.dot_dimension_numbers<[1], [0], [0], [1], [0, 0, 1, 1], [], []>} : vector<256x4xf32>, vector<4x8xf32>, vector<256x8xf32> -> vector<256x8xf32>
    %41 = arith.addf %35, %40 : vector<256x8xf32>
    %c2_47 = arith.constant 2 : index
    %c0_48 = arith.constant 0 : index
    %c0_49 = arith.constant 0 : index
    %42 = vector.load %arg7[%c2_47, %c0_48, %c0_49] : memref<18x18x4xf32, #tpu.memory_space<vmem>>, vector<16x16x4xf32>
    %43 = vector.shape_cast %42 : vector<16x16x4xf32> to vector<256x4xf32>
    %c6 = arith.constant 6 : index
    %c0_50 = arith.constant 0 : index
    %c0_51 = arith.constant 0 : index
    %44 = vector.load %arg2[%c6, %c0_50, %c0_51] : memref<9x4x8xf32, #tpu.memory_space<vmem>>, vector<1x4x8xf32>
    %45 = vector.shape_cast %44 : vector<1x4x8xf32> to vector<4x8xf32>
    %cst_52 = arith.constant dense<0.000000e+00> : vector<256x8xf32>
    %46 = tpu.matmul %43, %45, %cst_52 {dimension_numbers = #tpu.dot_dimension_numbers<[1], [0], [0], [1], [0, 0, 1, 1], [], []>} : vector<256x4xf32>, vector<4x8xf32>, vector<256x8xf32> -> vector<256x8xf32>
    %47 = arith.addf %41, %46 : vector<256x8xf32>
    %c2_53 = arith.constant 2 : index
    %c1_54 = arith.constant 1 : index
    %c0_55 = arith.constant 0 : index
    %48 = vector.load %arg7[%c2_53, %c1_54, %c0_55] : memref<18x18x4xf32, #tpu.memory_space<vmem>>, vector<16x16x4xf32>
    %49 = vector.shape_cast %48 : vector<16x16x4xf32> to vector<256x4xf32>
    %c7 = arith.constant 7 : index
    %c0_56 = arith.constant 0 : index
    %c0_57 = arith.constant 0 : index
    %50 = vector.load %arg2[%c7, %c0_56, %c0_57] : memref<9x4x8xf32, #tpu.memory_space<vmem>>, vector<1x4x8xf32>
    %51 = vector.shape_cast %50 : vector<1x4x8xf32> to vector<4x8xf32>
    %cst_58 = arith.constant dense<0.000000e+00> : vector<256x8xf32>
    %52 = tpu.matmul %49, %51, %cst_58 {dimension_numbers = #tpu.dot_dimension_numbers<[1], [0], [0], [1], [0, 0, 1, 1], [], []>} : vector<256x4xf32>, vector<4x8xf32>, vector<256x8xf32> -> vector<256x8xf32>
    %53 = arith.addf %47, %52 : vector<256x8xf32>
    %c2_59 = arith.constant 2 : index
    %c2_60 = arith.constant 2 : index
    %c0_61 = arith.constant 0 : index
    %54 = vector.load %arg7[%c2_59, %c2_60, %c0_61] : memref<18x18x4xf32, #tpu.memory_space<vmem>>, vector<16x16x4xf32>
    %55 = vector.shape_cast %54 : vector<16x16x4xf32> to vector<256x4xf32>
    %c8 = arith.constant 8 : index
    %c0_62 = arith.constant 0 : index
    %c0_63 = arith.constant 0 : index
    %56 = vector.load %arg2[%c8, %c0_62, %c0_63] : memref<9x4x8xf32, #tpu.memory_space<vmem>>, vector<1x4x8xf32>
    %57 = vector.shape_cast %56 : vector<1x4x8xf32> to vector<4x8xf32>
    %cst_64 = arith.constant dense<0.000000e+00> : vector<256x8xf32>
    %58 = tpu.matmul %55, %57, %cst_64 {dimension_numbers = #tpu.dot_dimension_numbers<[1], [0], [0], [1], [0, 0, 1, 1], [], []>} : vector<256x4xf32>, vector<4x8xf32>, vector<256x8xf32> -> vector<256x8xf32>
    %59 = arith.addf %53, %58 : vector<256x8xf32>
    %c0_65 = arith.constant 0 : index
    %c0_66 = arith.constant 0 : index
    %60 = vector.load %arg3[%c0_65, %c0_66] : memref<1x8xf32, #tpu.memory_space<vmem>>, vector<1x8xf32>
    %61 = vector.broadcast %60 : vector<1x8xf32> to vector<256x8xf32>
    %62 = arith.addf %59, %61 : vector<256x8xf32>
    %cst_67 = arith.constant 0.000000e+00 : f32
    %63 = vector.broadcast %cst_67 : f32 to vector<256x8xf32>
    %64 = arith.cmpf oge, %62, %63 : vector<256x8xf32>
    %cst_68 = arith.constant 2.000000e-01 : f32
    %65 = vector.broadcast %cst_68 : f32 to vector<256x8xf32>
    %66 = arith.mulf %62, %65 : vector<256x8xf32>
    %67 = arith.select %64, %62, %66 : vector<256x8xi1>, vector<256x8xf32>
    %cst_69 = arith.constant 0.000000e+00 : f32
    %68 = vector.broadcast %cst_69 : f32 to vector<18x18x8xf32>
    %c0_70 = arith.constant 0 : index
    %c0_71 = arith.constant 0 : index
    %c0_72 = arith.constant 0 : index
    %69 = vector.load %arg8[%c0_70, %c0_71, %c0_72] : memref<18x18x8xf32, #tpu.memory_space<vmem>>, vector<18x18x8xf32>
    tpu.vector_store %arg8[%c0_70, %c0_71, %c0_72], %68 {strides = array<i32>} : memref<18x18x8xf32, #tpu.memory_space<vmem>>, vector<18x18x8xf32>,
    %70 = vector.shape_cast %67 : vector<256x8xf32> to vector<16x16x8xf32>
    %c1_73 = arith.constant 1 : index
    %c1_74 = arith.constant 1 : index
    %c0_75 = arith.constant 0 : index
    %71 = vector.load %arg8[%c1_73, %c1_74, %c0_75] : memref<18x18x8xf32, #tpu.memory_space<vmem>>, vector<16x16x8xf32>
    tpu.vector_store %arg8[%c1_73, %c1_74, %c0_75], %70 {strides = array<i32>} : memref<18x18x8xf32, #tpu.memory_space<vmem>>, vector<16x16x8xf32>,
    %cst_76 = arith.constant 0.000000e+00 : f32
    %72 = vector.broadcast %cst_76 : f32 to vector<256x8xf32>
    %c0_77 = arith.constant 0 : index
    %c0_78 = arith.constant 0 : index
    %c0_79 = arith.constant 0 : index
    %73 = vector.load %arg8[%c0_77, %c0_78, %c0_79] : memref<18x18x8xf32, #tpu.memory_space<vmem>>, vector<16x16x8xf32>
    %74 = vector.shape_cast %73 : vector<16x16x8xf32> to vector<256x8xf32>
    %c0_80 = arith.constant 0 : index
    %c0_81 = arith.constant 0 : index
    %c0_82 = arith.constant 0 : index
    %75 = vector.load %arg4[%c0_80, %c0_81, %c0_82] : memref<9x8x8xf32, #tpu.memory_space<vmem>>, vector<1x8x8xf32>
    %76 = vector.shape_cast %75 : vector<1x8x8xf32> to vector<8x8xf32>
    %cst_83 = arith.constant dense<0.000000e+00> : vector<256x8xf32>
    %77 = tpu.matmul %74, %76, %cst_83 {dimension_numbers = #tpu.dot_dimension_numbers<[1], [0], [0], [1], [0, 0, 1, 1], [], []>} : vector<256x8xf32>, vector<8x8xf32>, vector<256x8xf32> -> vector<256x8xf32>
    %78 = arith.addf %72, %77 : vector<256x8xf32>
    %c0_84 = arith.constant 0 : index
    %c1_85 = arith.constant 1 : index
    %c0_86 = arith.constant 0 : index
    %79 = vector.load %arg8[%c0_84, %c1_85, %c0_86] : memref<18x18x8xf32, #tpu.memory_space<vmem>>, vector<16x16x8xf32>
    %80 = vector.shape_cast %79 : vector<16x16x8xf32> to vector<256x8xf32>
    %c1_87 = arith.constant 1 : index
    %c0_88 = arith.constant 0 : index
    %c0_89 = arith.constant 0 : index
    %81 = vector.load %arg4[%c1_87, %c0_88, %c0_89] : memref<9x8x8xf32, #tpu.memory_space<vmem>>, vector<1x8x8xf32>
    %82 = vector.shape_cast %81 : vector<1x8x8xf32> to vector<8x8xf32>
    %cst_90 = arith.constant dense<0.000000e+00> : vector<256x8xf32>
    %83 = tpu.matmul %80, %82, %cst_90 {dimension_numbers = #tpu.dot_dimension_numbers<[1], [0], [0], [1], [0, 0, 1, 1], [], []>} : vector<256x8xf32>, vector<8x8xf32>, vector<256x8xf32> -> vector<256x8xf32>
    %84 = arith.addf %78, %83 : vector<256x8xf32>
    %c0_91 = arith.constant 0 : index
    %c2_92 = arith.constant 2 : index
    %c0_93 = arith.constant 0 : index
    %85 = vector.load %arg8[%c0_91, %c2_92, %c0_93] : memref<18x18x8xf32, #tpu.memory_space<vmem>>, vector<16x16x8xf32>
    %86 = vector.shape_cast %85 : vector<16x16x8xf32> to vector<256x8xf32>
    %c2_94 = arith.constant 2 : index
    %c0_95 = arith.constant 0 : index
    %c0_96 = arith.constant 0 : index
    %87 = vector.load %arg4[%c2_94, %c0_95, %c0_96] : memref<9x8x8xf32, #tpu.memory_space<vmem>>, vector<1x8x8xf32>
    %88 = vector.shape_cast %87 : vector<1x8x8xf32> to vector<8x8xf32>
    %cst_97 = arith.constant dense<0.000000e+00> : vector<256x8xf32>
    %89 = tpu.matmul %86, %88, %cst_97 {dimension_numbers = #tpu.dot_dimension_numbers<[1], [0], [0], [1], [0, 0, 1, 1], [], []>} : vector<256x8xf32>, vector<8x8xf32>, vector<256x8xf32> -> vector<256x8xf32>
    %90 = arith.addf %84, %89 : vector<256x8xf32>
    %c1_98 = arith.constant 1 : index
    %c0_99 = arith.constant 0 : index
    %c0_100 = arith.constant 0 : index
    %91 = vector.load %arg8[%c1_98, %c0_99, %c0_100] : memref<18x18x8xf32, #tpu.memory_space<vmem>>, vector<16x16x8xf32>
    %92 = vector.shape_cast %91 : vector<16x16x8xf32> to vector<256x8xf32>
    %c3_101 = arith.constant 3 : index
    %c0_102 = arith.constant 0 : index
    %c0_103 = arith.constant 0 : index
    %93 = vector.load %arg4[%c3_101, %c0_102, %c0_103] : memref<9x8x8xf32, #tpu.memory_space<vmem>>, vector<1x8x8xf32>
    %94 = vector.shape_cast %93 : vector<1x8x8xf32> to vector<8x8xf32>
    %cst_104 = arith.constant dense<0.000000e+00> : vector<256x8xf32>
    %95 = tpu.matmul %92, %94, %cst_104 {dimension_numbers = #tpu.dot_dimension_numbers<[1], [0], [0], [1], [0, 0, 1, 1], [], []>} : vector<256x8xf32>, vector<8x8xf32>, vector<256x8xf32> -> vector<256x8xf32>
    %96 = arith.addf %90, %95 : vector<256x8xf32>
    %c1_105 = arith.constant 1 : index
    %c1_106 = arith.constant 1 : index
    %c0_107 = arith.constant 0 : index
    %97 = vector.load %arg8[%c1_105, %c1_106, %c0_107] : memref<18x18x8xf32, #tpu.memory_space<vmem>>, vector<16x16x8xf32>
    %98 = vector.shape_cast %97 : vector<16x16x8xf32> to vector<256x8xf32>
    %c4_108 = arith.constant 4 : index
    %c0_109 = arith.constant 0 : index
    %c0_110 = arith.constant 0 : index
    %99 = vector.load %arg4[%c4_108, %c0_109, %c0_110] : memref<9x8x8xf32, #tpu.memory_space<vmem>>, vector<1x8x8xf32>
    %100 = vector.shape_cast %99 : vector<1x8x8xf32> to vector<8x8xf32>
    %cst_111 = arith.constant dense<0.000000e+00> : vector<256x8xf32>
    %101 = tpu.matmul %98, %100, %cst_111 {dimension_numbers = #tpu.dot_dimension_numbers<[1], [0], [0], [1], [0, 0, 1, 1], [], []>} : vector<256x8xf32>, vector<8x8xf32>, vector<256x8xf32> -> vector<256x8xf32>
    %102 = arith.addf %96, %101 : vector<256x8xf32>
    %c1_112 = arith.constant 1 : index
    %c2_113 = arith.constant 2 : index
    %c0_114 = arith.constant 0 : index
    %103 = vector.load %arg8[%c1_112, %c2_113, %c0_114] : memref<18x18x8xf32, #tpu.memory_space<vmem>>, vector<16x16x8xf32>
    %104 = vector.shape_cast %103 : vector<16x16x8xf32> to vector<256x8xf32>
    %c5_115 = arith.constant 5 : index
    %c0_116 = arith.constant 0 : index
    %c0_117 = arith.constant 0 : index
    %105 = vector.load %arg4[%c5_115, %c0_116, %c0_117] : memref<9x8x8xf32, #tpu.memory_space<vmem>>, vector<1x8x8xf32>
    %106 = vector.shape_cast %105 : vector<1x8x8xf32> to vector<8x8xf32>
    %cst_118 = arith.constant dense<0.000000e+00> : vector<256x8xf32>
    %107 = tpu.matmul %104, %106, %cst_118 {dimension_numbers = #tpu.dot_dimension_numbers<[1], [0], [0], [1], [0, 0, 1, 1], [], []>} : vector<256x8xf32>, vector<8x8xf32>, vector<256x8xf32> -> vector<256x8xf32>
    %108 = arith.addf %102, %107 : vector<256x8xf32>
    %c2_119 = arith.constant 2 : index
    %c0_120 = arith.constant 0 : index
    %c0_121 = arith.constant 0 : index
    %109 = vector.load %arg8[%c2_119, %c0_120, %c0_121] : memref<18x18x8xf32, #tpu.memory_space<vmem>>, vector<16x16x8xf32>
    %110 = vector.shape_cast %109 : vector<16x16x8xf32> to vector<256x8xf32>
    %c6_122 = arith.constant 6 : index
    %c0_123 = arith.constant 0 : index
    %c0_124 = arith.constant 0 : index
    %111 = vector.load %arg4[%c6_122, %c0_123, %c0_124] : memref<9x8x8xf32, #tpu.memory_space<vmem>>, vector<1x8x8xf32>
    %112 = vector.shape_cast %111 : vector<1x8x8xf32> to vector<8x8xf32>
    %cst_125 = arith.constant dense<0.000000e+00> : vector<256x8xf32>
    %113 = tpu.matmul %110, %112, %cst_125 {dimension_numbers = #tpu.dot_dimension_numbers<[1], [0], [0], [1], [0, 0, 1, 1], [], []>} : vector<256x8xf32>, vector<8x8xf32>, vector<256x8xf32> -> vector<256x8xf32>
    %114 = arith.addf %108, %113 : vector<256x8xf32>
    %c2_126 = arith.constant 2 : index
    %c1_127 = arith.constant 1 : index
    %c0_128 = arith.constant 0 : index
    %115 = vector.load %arg8[%c2_126, %c1_127, %c0_128] : memref<18x18x8xf32, #tpu.memory_space<vmem>>, vector<16x16x8xf32>
    %116 = vector.shape_cast %115 : vector<16x16x8xf32> to vector<256x8xf32>
    %c7_129 = arith.constant 7 : index
    %c0_130 = arith.constant 0 : index
    %c0_131 = arith.constant 0 : index
    %117 = vector.load %arg4[%c7_129, %c0_130, %c0_131] : memref<9x8x8xf32, #tpu.memory_space<vmem>>, vector<1x8x8xf32>
    %118 = vector.shape_cast %117 : vector<1x8x8xf32> to vector<8x8xf32>
    %cst_132 = arith.constant dense<0.000000e+00> : vector<256x8xf32>
    %119 = tpu.matmul %116, %118, %cst_132 {dimension_numbers = #tpu.dot_dimension_numbers<[1], [0], [0], [1], [0, 0, 1, 1], [], []>} : vector<256x8xf32>, vector<8x8xf32>, vector<256x8xf32> -> vector<256x8xf32>
    %120 = arith.addf %114, %119 : vector<256x8xf32>
    %c2_133 = arith.constant 2 : index
    %c2_134 = arith.constant 2 : index
    %c0_135 = arith.constant 0 : index
    %121 = vector.load %arg8[%c2_133, %c2_134, %c0_135] : memref<18x18x8xf32, #tpu.memory_space<vmem>>, vector<16x16x8xf32>
    %122 = vector.shape_cast %121 : vector<16x16x8xf32> to vector<256x8xf32>
    %c8_136 = arith.constant 8 : index
    %c0_137 = arith.constant 0 : index
    %c0_138 = arith.constant 0 : index
    %123 = vector.load %arg4[%c8_136, %c0_137, %c0_138] : memref<9x8x8xf32, #tpu.memory_space<vmem>>, vector<1x8x8xf32>
    %124 = vector.shape_cast %123 : vector<1x8x8xf32> to vector<8x8xf32>
    %cst_139 = arith.constant dense<0.000000e+00> : vector<256x8xf32>
    %125 = tpu.matmul %122, %124, %cst_139 {dimension_numbers = #tpu.dot_dimension_numbers<[1], [0], [0], [1], [0, 0, 1, 1], [], []>} : vector<256x8xf32>, vector<8x8xf32>, vector<256x8xf32> -> vector<256x8xf32>
    %126 = arith.addf %120, %125 : vector<256x8xf32>
    %c0_140 = arith.constant 0 : index
    %c0_141 = arith.constant 0 : index
    %127 = vector.load %arg5[%c0_140, %c0_141] : memref<1x8xf32, #tpu.memory_space<vmem>>, vector<1x8xf32>
    %128 = vector.broadcast %127 : vector<1x8xf32> to vector<256x8xf32>
    %129 = arith.addf %126, %128 : vector<256x8xf32>
    %cst_142 = arith.constant 0.000000e+00 : f32
    %130 = vector.broadcast %cst_142 : f32 to vector<256x8xf32>
    %131 = arith.cmpf oge, %129, %130 : vector<256x8xf32>
    %cst_143 = arith.constant 2.000000e-01 : f32
    %132 = vector.broadcast %cst_143 : f32 to vector<256x8xf32>
    %133 = arith.mulf %129, %132 : vector<256x8xf32>
    %134 = arith.select %131, %129, %133 : vector<256x8xi1>, vector<256x8xf32>
    %135 = vector.shape_cast %134 : vector<256x8xf32> to vector<16x16x8xf32>
    %c0_144 = arith.constant 0 : index
    %c0_145 = arith.constant 0 : index
    %c0_146 = arith.constant 0 : index
    %c0_147 = arith.constant 0 : index
    %136 = vector.load %arg6[%c0_144, %c0_145, %c0_146, %c0_147] : memref<1x16x16x8xf32, #tpu.memory_space<vmem>>, vector<1x16x16x8xf32>
    %137 = vector.shape_cast %136 : vector<1x16x16x8xf32> to vector<16x16x8xf32>
    %138 = vector.shape_cast %135 : vector<16x16x8xf32> to vector<1x16x16x8xf32>
    tpu.vector_store %arg6[%c0_144, %c0_145, %c0_146, %c0_147], %138 {strides = array<i32>} : memref<1x16x16x8xf32, #tpu.memory_space<vmem>>, vector<1x16x16x8xf32>,
    return
  }
  func.func @transform_0(%arg0: i32) -> (i32, i32, i32, i32) {
    %c0_i32 = arith.constant 0 : i32
    %c0_i32_0 = arith.constant 0 : i32
    %c0_i32_1 = arith.constant 0 : i32
    %c0_i32_2 = arith.constant 0 : i32
    return %arg0, %c0_i32, %c0_i32_0, %c0_i32_1 : i32, i32, i32, i32
  }
  func.func @transform_1(%arg0: i32) -> (i32, i32, i32) {
    %c0_i32 = arith.constant 0 : i32
    %c0_i32_0 = arith.constant 0 : i32
    %c0_i32_1 = arith.constant 0 : i32
    %c0_i32_2 = arith.constant 0 : i32
    return %c0_i32, %c0_i32_0, %c0_i32_1 : i32, i32, i32
  }
  func.func @transform_2(%arg0: i32) -> (i32, i32) {
    %c0_i32 = arith.constant 0 : i32
    %c0_i32_0 = arith.constant 0 : i32
    %c0_i32_1 = arith.constant 0 : i32
    return %c0_i32, %c0_i32_0 : i32, i32
  }
  func.func @transform_3(%arg0: i32) -> (i32, i32, i32) {
    %c0_i32 = arith.constant 0 : i32
    %c0_i32_0 = arith.constant 0 : i32
    %c0_i32_1 = arith.constant 0 : i32
    %c0_i32_2 = arith.constant 0 : i32
    return %c0_i32, %c0_i32_0, %c0_i32_1 : i32, i32, i32
  }
  func.func @transform_4(%arg0: i32) -> (i32, i32) {
    %c0_i32 = arith.constant 0 : i32
    %c0_i32_0 = arith.constant 0 : i32
    %c0_i32_1 = arith.constant 0 : i32
    return %c0_i32, %c0_i32_0 : i32, i32
  }
  func.func @transform_5(%arg0: i32) -> (i32, i32, i32, i32) {
    %c0_i32 = arith.constant 0 : i32
    %c0_i32_0 = arith.constant 0 : i32
    %c0_i32_1 = arith.constant 0 : i32
    %c0_i32_2 = arith.constant 0 : i32
    return %arg0, %c0_i32, %c0_i32_0, %c0_i32_1 : i32, i32, i32, i32
  }
}

</mosaic_0001>

<llo_original>
// kernel: tpu_custom_call.1
$region0: #{tpu_custom_call.1}
  #allocation0 [shape = 'u32[]', space=smem, size = 0x4, offset = 0x4, fixed_abs, tag = 'smem constant byte address 0x4 - core index']
  #allocation1 [shape = 'u32[144,128]{1,0:T(1,128)}', space=vmem, size = 0x12000, scoped, tag = 'internal scratch']
  #allocation2 [shape = 'f32[18,18,4]{2,1,0:T(8,128)}', space=vmem, size = 0x36000, scoped, tag = 'scratch operand']
  #allocation3 [shape = 'f32[18,18,8]{2,1,0:T(8,128)}', space=vmem, size = 0x36000, scoped, tag = 'scratch operand']
  %s0 = inlined_call_operand.vmem [shape: f32[2,16,16,4], index: 0, kind: input, shape index: {}]
  %s1 = inlined_call_operand.vmem [shape: f32[9,4,8], index: 1, kind: input, shape index: {}]
  %s2 = inlined_call_operand.vmem [shape: f32[1,8], index: 2, kind: input, shape index: {}]
  %s3 = inlined_call_operand.vmem [shape: f32[9,8,8], index: 3, kind: input, shape index: {}]
  %s4 = inlined_call_operand.vmem [shape: f32[1,8], index: 4, kind: input, shape index: {}]
  %s5 = inlined_call_operand.vmem [shape: f32[2,16,16,8], index: 5, kind: output, shape index: {}]
  %s6 = sld [smem:[#allocation0]]
  $region53: #{tpu_custom_call.1} parent=0
    _
  %s8 = ssub.s32 1, %s6
  %s9 = scalar_select 0, %s8, %s6
  loop: start=0, step=1, limit=4
  $region2: #{tpu_custom_call.1} parent=0 // loop_pre_header
    _
  $region3: #{tpu_custom_call.1} parent=0 // loop_header
    %s11 = sphi 0, %s15
    %p12 = scmp.ge.s32.totalorder %s11, 4
    %s21 = sphi 0, %s23
    %s24 = sphi 0, %s21
    %s25 = sphi 0, %s24
    %s41 = sphi 0, %s25
    %s45 = sphi 0, %s45
    %s47 = sphi 0, %s45
    %s48 = sphi 0, %s47
    %s62 = sphi 0, %s48
    %s66 = sphi 0, %s66
    %s68 = sphi 0, %s66
    %s69 = sphi 0, %s68
    %s83 = sphi 0, %s69
    %s87 = sphi 0, %s87
    %s89 = sphi 0, %s87
    %s90 = sphi 0, %s89
    %s104 = sphi 0, %s90
    %s108 = sphi 0, %s108
    %s110 = sphi 0, %s108
    %s111 = sphi 0, %s110
    %s125 = sphi 0, %s111
    %s131 = sphi 0, %s133
    %s134 = sphi 0, %s131
    %s135 = sphi 0, %s134
    %s151 = sphi 0, %s135
  $region4: #{tpu_custom_call.1} parent=0 // loop_header_branch
    %14 = sbr.rel (%p12) target = $region8
  $region5: #{tpu_custom_call.1} parent=0 // loop_body
    %s16 = ssub.s32 %s11, 1
    %s17 = ssub.s32 %s11, 2
    %s18 = sadd.s32 %s11, 1
    %s19 = ssub.s32 %s11, %s18
    %p20 = scmp.eq.s32.totalorder %s19, 0
    %s22 = sadd.s32 %s21, 1
    %s23 = scalar_select %p20, %s21, %s22
    %p26 = pneg %p20
    %p27 = scmp.eq.s32.totalorder %s11, 1
    %p28 = por %p26, %p27
    %p29 = scmp.ne.s32.totalorder %s21, %s24
    %p30 = scmp.eq.s32.totalorder %s11, 0
    %p31 = por %p29, %p30
    %p32 = scmp.ne.s32.totalorder %s21, %s24
    %p33 = scmp.eq.s32.totalorder %s16, 1
    %p34 = por %p32, %p33
    %p35 = scmp.ne.s32.totalorder %s24, %s25
    %p36 = scmp.eq.s32.totalorder %s16, 0
    %p37 = por %p35, %p36
    %p38 = scmp.ne.s32.totalorder %s24, %s25
    %p39 = scmp.eq.s32.totalorder %s17, 1
    %p40 = por %p38, %p39
    %p42 = scmp.ne.s32.totalorder %s25, %s41
    %p43 = scmp.eq.s32.totalorder %s17, 0
    %p44 = por %p42, %p43
    %s46 = sadd.s32 %s45, 1
    %p49 = scmp.eq.s32.totalorder %s11, 1
    %p50 = scmp.ne.s32.totalorder %s45, %s47
    %p51 = scmp.eq.s32.totalorder %s11, 0
    %p52 = por %p50, %p51
    %p53 = scmp.ne.s32.totalorder %s45, %s47
    %p54 = scmp.eq.s32.totalorder %s16, 1
    %p55 = por %p53, %p54
    %p56 = scmp.ne.s32.totalorder %s47, %s48
    %p57 = scmp.eq.s32.totalorder %s16, 0
    %p58 = por %p56, %p57
    %p59 = scmp.ne.s32.totalorder %s47, %s48
    %p60 = scmp.eq.s32.totalorder %s17, 1
    %p61 = por %p59, %p60
    %p63 = scmp.ne.s32.totalorder %s48, %s62
    %p64 = scmp.eq.s32.totalorder %s17, 0
    %p65 = por %p63, %p64
    %s67 = sadd.s32 %s66, 1
    %p70 = scmp.eq.s32.totalorder %s11, 1
    %p71 = scmp.ne.s32.totalorder %s66, %s68
    %p72 = scmp.eq.s32.totalorder %s11, 0
    %p73 = por %p71, %p72
    %p74 = scmp.ne.s32.totalorder %s66, %s68
    %p75 = scmp.eq.s32.totalorder %s16, 1
    %p76 = por %p74, %p75
    %p77 = scmp.ne.s32.totalorder %s68, %s69
    %p78 = scmp.eq.s32.totalorder %s16, 0
    %p79 = por %p77, %p78
    %p80 = scmp.ne.s32.totalorder %s68, %s69
    %p81 = scmp.eq.s32.totalorder %s17, 1
    %p82 = por %p80, %p81
    %p84 = scmp.ne.s32.totalorder %s69, %s83
    %p85 = scmp.eq.s32.totalorder %s17, 0
    %p86 = por %p84, %p85
    %s88 = sadd.s32 %s87, 1
    %p91 = scmp.eq.s32.totalorder %s11, 1
    %p92 = scmp.ne.s32.totalorder %s87, %s89
    %p93 = scmp.eq.s32.totalorder %s11, 0
    %p94 = por %p92, %p93
    %p95 = scmp.ne.s32.totalorder %s87, %s89
    %p96 = scmp.eq.s32.totalorder %s16, 1
    %p97 = por %p95, %p96
    %p98 = scmp.ne.s32.totalorder %s89, %s90
    %p99 = scmp.eq.s32.totalorder %s16, 0
    %p100 = por %p98, %p99
    %p101 = scmp.ne.s32.totalorder %s89, %s90
    %p102 = scmp.eq.s32.totalorder %s17, 1
    %p103 = por %p101, %p102
    %p105 = scmp.ne.s32.totalorder %s90, %s104
    %p106 = scmp.eq.s32.totalorder %s17, 0
    %p107 = por %p105, %p106
    %s109 = sadd.s32 %s108, 1
    %p112 = scmp.eq.s32.totalorder %s11, 1
    %p113 = scmp.ne.s32.totalorder %s108, %s110
    %p114 = scmp.eq.s32.totalorder %s11, 0
    %p115 = por %p113, %p114
    %p116 = scmp.ne.s32.totalorder %s108, %s110
    %p117 = scmp.eq.s32.totalorder %s16, 1
    %p118 = por %p116, %p117
    %p119 = scmp.ne.s32.totalorder %s110, %s111
    %p120 = scmp.eq.s32.totalorder %s16, 0
    %p121 = por %p119, %p120
    %p122 = scmp.ne.s32.totalorder %s110, %s111
    %p123 = scmp.eq.s32.totalorder %s17, 1
    %p124 = por %p122, %p123
    %p126 = scmp.ne.s32.totalorder %s111, %s125
    %p127 = scmp.eq.s32.totalorder %s17, 0
    %p128 = por %p126, %p127
    %s129 = ssub.s32 %s11, %s18
    %p130 = scmp.eq.s32.totalorder %s129, 0
    %s132 = sadd.s32 %s131, 1
    %s133 = scalar_select %p130, %s131, %s132
    %p136 = pneg %p130
    %p137 = scmp.eq.s32.totalorder %s11, 1
    %p138 = por %p136, %p137
    %p139 = scmp.ne.s32.totalorder %s131, %s134
    %p140 = scmp.eq.s32.totalorder %s11, 0
    %p141 = por %p139, %p140
    %p142 = scmp.ne.s32.totalorder %s131, %s134
    %p143 = scmp.eq.s32.totalorder %s16, 1
    %p144 = por %p142, %p143
    %p145 = scmp.ne.s32.totalorder %s134, %s135
    %p146 = scmp.eq.s32.totalorder %s16, 0
    %p147 = por %p145, %p146
    %p148 = scmp.ne.s32.totalorder %s134, %s135
    %p149 = scmp.eq.s32.totalorder %s17, 1
    %p150 = por %p148, %p149
    %p152 = scmp.ne.s32.totalorder %s135, %s151
    %p153 = scmp.eq.s32.totalorder %s17, 0
    %p154 = por %p152, %p153
    %p155 = scmp.le.s32.totalorder 1, %s11
    %p156 = scmp.lt.s32.totalorder %s11, 3
    %p157 = pnand %p155, %p156
    %p158 = pneg %p157
    // Predicated region
    $region9: #{tpu_custom_call.1} parent=5 // pred_check
      _
    $region10: #{tpu_custom_call.1} parent=5 // pred_check_branch
      %160 = sbr.rel (%p157) target = $region12
    $region11: #{tpu_custom_call.1} parent=5 // pred_region
      %s161 = ssub.s32 %s11, 1
      // Predicated region
      $region13: #{tpu_custom_call.1} parent=11 // pred_check
        %p162 = pneg %p58
      $region14: #{tpu_custom_call.1} parent=11 // pred_check_branch
        %164 = sbr.rel (%p162) target = $region16
      $region15: #{tpu_custom_call.1} parent=11 // pred_region
        _
      $region16: #{tpu_custom_call.1} parent=11 // pred_fallthru
        _
      // Predicated region
      $region17: #{tpu_custom_call.1} parent=11 // pred_check
        %p165 = pneg %p79
      $region18: #{tpu_custom_call.1} parent=11 // pred_check_branch
        %167 = sbr.rel (%p165) target = $region20
      $region19: #{tpu_custom_call.1} parent=11 // pred_region
        _
      $region20: #{tpu_custom_call.1} parent=11 // pred_fallthru
        _
      // Predicated region
      $region21: #{tpu_custom_call.1} parent=11 // pred_check
        %p168 = pneg %p100
      $region22: #{tpu_custom_call.1} parent=11 // pred_check_branch
        %170 = sbr.rel (%p168) target = $region24
      $region23: #{tpu_custom_call.1} parent=11 // pred_region
        _
      $region24: #{tpu_custom_call.1} parent=11 // pred_fallthru
        _
      // Predicated region
      $region25: #{tpu_custom_call.1} parent=11 // pred_check
        %p171 = pneg %p121
      $region26: #{tpu_custom_call.1} parent=11 // pred_check_branch
        %173 = sbr.rel (%p171) target = $region28
      $region27: #{tpu_custom_call.1} parent=11 // pred_region
        _
      $region28: #{tpu_custom_call.1} parent=11 // pred_fallthru
        _
    $region12: #{tpu_custom_call.1} parent=5 // pred_fallthru
      _
    %p174 = scmp.lt.s32.totalorder %s11, 2
    // Predicated region
    $region29: #{tpu_custom_call.1} parent=5 // pred_check
      %p175 = pneg %p174
    $region30: #{tpu_custom_call.1} parent=5 // pred_check_branch
      %177 = sbr.rel (%p175) target = $region32
    $region31: #{tpu_custom_call.1} parent=5 // pred_region
      // Predicated region
      $region33: #{tpu_custom_call.1} parent=31 // pred_check
        %p178 = pneg %p31
      $region34: #{tpu_custom_call.1} parent=31 // pred_check_branch
        %180 = sbr.rel (%p178) target = $region36
      $region35: #{tpu_custom_call.1} parent=31 // pred_region
        %p181 = scmp.lt.s32.totalorder %s11, 1
        %s182 = scalar_select %p181, %s11, 1
        %s183 = smul.addr %s182, 32
        %s184 = smul.addr %s183, 8
        %s185 = scalar_lea.vmem %s0, %s184
      $region36: #{tpu_custom_call.1} parent=31 // pred_fallthru
        _
    $region32: #{tpu_custom_call.1} parent=5 // pred_fallthru
      _
    %p186 = scmp.le.s32.totalorder 1, %s11
    %p187 = scmp.lt.s32.totalorder %s11, 3
    %p188 = pnand %p186, %p187
    %p189 = pneg %p188
    // Predicated region
    $region37: #{tpu_custom_call.1} parent=5 // pred_check
      _
    $region38: #{tpu_custom_call.1} parent=5 // pred_check_branch
      %191 = sbr.rel (%p188) target = $region40
    $region39: #{tpu_custom_call.1} parent=5 // pred_region
      %s192 = ssub.s32 %s11, 1
      %p193 = scmp.lt.s32.totalorder %s16, 1
      %s194 = scalar_select %p193, %s16, 1
      %s195 = smul.addr %s194, 32
      %s196 = smul.addr %s195, 8
      %s197 = scalar_lea.vmem %s0, %s196
      %p198 = pneg %p37
      %p199 = pneg %p34
      %p200 = pneg %p58
      %p201 = pneg %p55
      %p202 = pneg %p79
      %p203 = pneg %p76
      %p204 = pneg %p100
      %p205 = pneg %p97
      %p206 = pneg %p121
      %p207 = pneg %p118
      %p208 = pneg %p147
      %p209 = pneg %p144
      %p210 = scmp.lt.s32.totalorder %s16, 1
      %s211 = scalar_select %p210, %s16, 1
      %s212 = smul.addr %s211, 32
      %s213 = smul.addr %s212, 8
      %s214 = scalar_lea.vmem %s5, %s213
      %p215 = scmp.lt.s32.totalorder %s16, 1
      %s216 = scalar_select %p215, %s16, 1
      %s217 = smul.addr %s216, 32
      %s218 = smul.addr %s217, 8
      %s219 = scalar_lea.vmem %s0, %s218
      %p220 = scmp.lt.s32.totalorder %s16, 1
      %s221 = scalar_select %p220, %s16, 1
      %s222 = smul.addr %s221, 32
      %s223 = smul.addr %s222, 8
      %s224 = scalar_lea.vmem %s5, %s223
      %vm225 = vcmask 31744
      %226 = vst.msk [vmem:[#allocation2] sm:$0xff] %vm225, 0.0
      %227 = vst.msk [vmem:[#allocation2 + $0x8] sm:$0xff] %vm225, 0.0
      %vm228 = vcmask 25600
      %229 = vst.msk [vmem:[#allocation2 + $0x10] sm:$0x3] %vm228, 0.0
      %230 = vst.msk [vmem:[#allocation2 + $0x18] sm:$0xff] %vm225, 0.0
      %231 = vst.msk [vmem:[#allocation2 + $0x20] sm:$0xff] %vm225, 0.0
      %232 = vst.msk [vmem:[#allocation2 + $0x28] sm:$0x3] %vm228, 0.0
      %233 = vst.msk [vmem:[#allocation2 + $0x30] sm:$0xff] %vm225, 0.0
      %234 = vst.msk [vmem:[#allocation2 + $0x38] sm:$0xff] %vm225, 0.0
      %235 = vst.msk [vmem:[#allocation2 + $0x40] sm:$0x3] %vm228, 0.0
      %236 = vst.msk [vmem:[#allocation2 + $0x48] sm:$0xff] %vm225, 0.0
      %237 = vst.msk [vmem:[#allocation2 + $0x50] sm:$0xff] %vm225, 0.0
      %238 = vst.msk [vmem:[#allocation2 + $0x58] sm:$0x3] %vm228, 0.0
      %239 = vst.msk [vmem:[#allocation2 + $0x60] sm:$0xff] %vm225, 0.0
      %240 = vst.msk [vmem:[#allocation2 + $0x68] sm:$0xff] %vm225, 0.0
      %241 = vst.msk [vmem:[#allocation2 + $0x70] sm:$0x3] %vm228, 0.0
      %242 = vst.msk [vmem:[#allocation2 + $0x78] sm:$0xff] %vm225, 0.0
      %243 = vst.msk [vmem:[#allocation2 + $0x80] sm:$0xff] %vm225, 0.0
      %244 = vst.msk [vmem:[#allocation2 + $0x88] sm:$0x3] %vm228, 0.0
      %245 = vst.msk [vmem:[#allocation2 + $0x90] sm:$0xff] %vm225, 0.0
      %246 = vst.msk [vmem:[#allocation2 + $0x98] sm:$0xff] %vm225, 0.0
      %247 = vst.msk [vmem:[#allocation2 + $0xa0] sm:$0x3] %vm228, 0.0
      %248 = vst.msk [vmem:[#allocation2 + $0xa8] sm:$0xff] %vm225, 0.0
      %249 = vst.msk [vmem:[#allocation2 + $0xb0] sm:$0xff] %vm225, 0.0
      %250 = vst.msk [vmem:[#allocation2 + $0xb8] sm:$0x3] %vm228, 0.0
      %251 = vst.msk [vmem:[#allocation2 + $0xc0] sm:$0xff] %vm225, 0.0
      %252 = vst.msk [vmem:[#allocation2 + $0xc8] sm:$0xff] %vm225, 0.0
      %253 = vst.msk [vmem:[#allocation2 + $0xd0] sm:$0x3] %vm228, 0.0
      %254 = vst.msk [vmem:[#allocation2 + $0xd8] sm:$0xff] %vm225, 0.0
      %255 = vst.msk [vmem:[#allocation2 + $0xe0] sm:$0xff] %vm225, 0.0
      %256 = vst.msk [vmem:[#allocation2 + $0xe8] sm:$0x3] %vm228, 0.0
      %257 = vst.msk [vmem:[#allocation2 + $0xf0] sm:$0xff] %vm225, 0.0
      %258 = vst.msk [vmem:[#allocation2 + $0xf8] sm:$0xff] %vm225, 0.0
      %259 = vst.msk [vmem:[#allocation2 + $0x100] sm:$0x3] %vm228, 0.0
      %260 = vst.msk [vmem:[#allocation2 + $0x108] sm:$0xff] %vm225, 0.0
      %261 = vst.msk [vmem:[#allocation2 + $0x110] sm:$0xff] %vm225, 0.0
      %262 = vst.msk [vmem:[#allocation2 + $0x118] sm:$0x3] %vm228, 0.0
      %263 = vst.msk [vmem:[#allocation2 + $0x120] sm:$0xff] %vm225, 0.0
      %264 = vst.msk [vmem:[#allocation2 + $0x128] sm:$0xff] %vm225, 0.0
      %265 = vst.msk [vmem:[#allocation2 + $0x130] sm:$0x3] %vm228, 0.0
      %266 = vst.msk [vmem:[#allocation2 + $0x138] sm:$0xff] %vm225, 0.0
      %267 = vst.msk [vmem:[#allocation2 + $0x140] sm:$0xff] %vm225, 0.0
      %268 = vst.msk [vmem:[#allocation2 + $0x148] sm:$0x3] %vm228, 0.0
      %269 = vst.msk [vmem:[#allocation2 + $0x150] sm:$0xff] %vm225, 0.0
      %270 = vst.msk [vmem:[#allocation2 + $0x158] sm:$0xff] %vm225, 0.0
      %271 = vst.msk [vmem:[#allocation2 + $0x160] sm:$0x3] %vm228, 0.0
      %272 = vst.msk [vmem:[#allocation2 + $0x168] sm:$0xff] %vm225, 0.0
      %273 = vst.msk [vmem:[#allocation2 + $0x170] sm:$0xff] %vm225, 0.0
      %274 = vst.msk [vmem:[#allocation2 + $0x178] sm:$0x3] %vm228, 0.0
      %275 = vst.msk [vmem:[#allocation2 + $0x180] sm:$0xff] %vm225, 0.0
      %276 = vst.msk [vmem:[#allocation2 + $0x188] sm:$0xff] %vm225, 0.0
      %277 = vst.msk [vmem:[#allocation2 + $0x190] sm:$0x3] %vm228, 0.0
      %278 = vst.msk [vmem:[#allocation2 + $0x198] sm:$0xff] %vm225, 0.0
      %279 = vst.msk [vmem:[#allocation2 + $0x1a0] sm:$0xff] %vm225, 0.0
      %280 = vst.msk [vmem:[#allocation2 + $0x1a8] sm:$0x3] %vm228, 0.0
      %v281 = vld [vmem:[%s219] sm:$0xff]
      %v282 = vld [vmem:[%s219 + $0x8] sm:$0xff]
      %v283 = vld [vmem:[%s219 + $0x10] sm:$0xff]
      %v284 = vld [vmem:[%s219 + $0x18] sm:$0xff]
      %v285 = vld [vmem:[%s219 + $0x20] sm:$0xff]
      %v286 = vld [vmem:[%s219 + $0x28] sm:$0xff]
      %v287 = vld [vmem:[%s219 + $0x30] sm:$0xff]
      %v288 = vld [vmem:[%s219 + $0x38] sm:$0xff]
      %v289 = vld [vmem:[%s219 + $0x40] sm:$0xff]
      %v290 = vld [vmem:[%s219 + $0x48] sm:$0xff]
      %v291 = vld [vmem:[%s219 + $0x50] sm:$0xff]
      %v292 = vld [vmem:[%s219 + $0x58] sm:$0xff]
      %v293 = vld [vmem:[%s219 + $0x60] sm:$0xff]
      %v294 = vld [vmem:[%s219 + $0x68] sm:$0xff]
      %v295 = vld [vmem:[%s219 + $0x70] sm:$0xff]
      %v296 = vld [vmem:[%s219 + $0x78] sm:$0xff]
      %v297 = vld [vmem:[%s219 + $0x80] sm:$0xff]
      %v298 = vld [vmem:[%s219 + $0x88] sm:$0xff]
      %v299 = vld [vmem:[%s219 + $0x90] sm:$0xff]
      %v300 = vld [vmem:[%s219 + $0x98] sm:$0xff]
      %v301 = vld [vmem:[%s219 + $0xa0] sm:$0xff]
      %v302 = vld [vmem:[%s219 + $0xa8] sm:$0xff]
      %v303 = vld [vmem:[%s219 + $0xb0] sm:$0xff]
      %v304 = vld [vmem:[%s219 + $0xb8] sm:$0xff]
      %v305 = vld [vmem:[%s219 + $0xc0] sm:$0xff]
      %v306 = vld [vmem:[%s219 + $0xc8] sm:$0xff]
      %v307 = vld [vmem:[%s219 + $0xd0] sm:$0xff]
      %v308 = vld [vmem:[%s219 + $0xd8] sm:$0xff]
      %v309 = vld [vmem:[%s219 + $0xe0] sm:$0xff]
      %v310 = vld [vmem:[%s219 + $0xe8] sm:$0xff]
      %v311 = vld [vmem:[%s219 + $0xf0] sm:$0xff]
      %v312 = vld [vmem:[%s219 + $0xf8] sm:$0xff]
      %s313 = scalar_lea.vmem [#allocation2], 24
      %314 = vst.msk [vmem:[%s313 + $0x1] sm:$0xff] %vm225, %v281
      %315 = vst.msk [vmem:[%s313 + $0x9] sm:$0xff] %vm225, %v282
      %316 = vst.msk [vmem:[%s313 + $0x19] sm:$0xff] %vm225, %v283
      %317 = vst.msk [vmem:[%s313 + $0x21] sm:$0xff] %vm225, %v284
      %318 = vst.msk [vmem:[%s313 + $0x31] sm:$0xff] %vm225, %v285
      %319 = vst.msk [vmem:[%s313 + $0x39] sm:$0xff] %vm225, %v286
      %320 = vst.msk [vmem:[%s313 + $0x49] sm:$0xff] %vm225, %v287
      %321 = vst.msk [vmem:[%s313 + $0x51] sm:$0xff] %vm225, %v288
      %322 = vst.msk [vmem:[%s313 + $0x61] sm:$0xff] %vm225, %v289
      %323 = vst.msk [vmem:[%s313 + $0x69] sm:$0xff] %vm225, %v290
      %324 = vst.msk [vmem:[%s313 + $0x79] sm:$0xff] %vm225, %v291
      %325 = vst.msk [vmem:[%s313 + $0x81] sm:$0xff] %vm225, %v292
      %326 = vst.msk [vmem:[%s313 + $0x91] sm:$0xff] %vm225, %v293
      %327 = vst.msk [vmem:[%s313 + $0x99] sm:$0xff] %vm225, %v294
      %328 = vst.msk [vmem:[%s313 + $0xa9] sm:$0xff] %vm225, %v295
      %329 = vst.msk [vmem:[%s313 + $0xb1] sm:$0xff] %vm225, %v296
      %330 = vst.msk [vmem:[%s313 + $0xc1] sm:$0xff] %vm225, %v297
      %331 = vst.msk [vmem:[%s313 + $0xc9] sm:$0xff] %vm225, %v298
      %332 = vst.msk [vmem:[%s313 + $0xd9] sm:$0xff] %vm225, %v299
      %333 = vst.msk [vmem:[%s313 + $0xe1] sm:$0xff] %vm225, %v300
      %334 = vst.msk [vmem:[%s313 + $0xf1] sm:$0xff] %vm225, %v301
      %335 = vst.msk [vmem:[%s313 + $0xf9] sm:$0xff] %vm225, %v302
      %336 = vst.msk [vmem:[%s313 + $0x109] sm:$0xff] %vm225, %v303
      %337 = vst.msk [vmem:[%s313 + $0x111] sm:$0xff] %vm225, %v304
      %338 = vst.msk [vmem:[%s313 + $0x121] sm:$0xff] %vm225, %v305
      %339 = vst.msk [vmem:[%s313 + $0x129] sm:$0xff] %vm225, %v306
      %340 = vst.msk [vmem:[%s313 + $0x139] sm:$0xff] %vm225, %v307
      %341 = vst.msk [vmem:[%s313 + $0x141] sm:$0xff] %vm225, %v308
      %342 = vst.msk [vmem:[%s313 + $0x151] sm:$0xff] %vm225, %v309
      %343 = vst.msk [vmem:[%s313 + $0x159] sm:$0xff] %vm225, %v310
      %344 = vst.msk [vmem:[%s313 + $0x169] sm:$0xff] %vm225, %v311
      %345 = vst.msk [vmem:[%s313 + $0x171] sm:$0xff] %vm225, %v312
      %v346 = vld [vmem:[#allocation2] sm:$0xff]
      %v347 = vld [vmem:[#allocation2 + $0x8] sm:$0xff]
      %v348 = vld [vmem:[#allocation2 + $0x18] sm:$0xff]
      %v349 = vld [vmem:[#allocation2 + $0x20] sm:$0xff]
      %v350 = vld [vmem:[#allocation2 + $0x30] sm:$0xff]
      %v351 = vld [vmem:[#allocation2 + $0x38] sm:$0xff]
      %v352 = vld [vmem:[#allocation2 + $0x48] sm:$0xff]
      %v353 = vld [vmem:[#allocation2 + $0x50] sm:$0xff]
      %v354 = vld [vmem:[#allocation2 + $0x60] sm:$0xff]
      %v355 = vld [vmem:[#allocation2 + $0x68] sm:$0xff]
      %v356 = vld [vmem:[#allocation2 + $0x78] sm:$0xff]
      %v357 = vld [vmem:[#allocation2 + $0x80] sm:$0xff]
      %v358 = vld [vmem:[#allocation2 + $0x90] sm:$0xff]
      %v359 = vld [vmem:[#allocation2 + $0x98] sm:$0xff]
      %v360 = vld [vmem:[#allocation2 + $0xa8] sm:$0xff]
      %v361 = vld [vmem:[#allocation2 + $0xb0] sm:$0xff]
      %v362 = vld [vmem:[#allocation2 + $0xc0] sm:$0xff]
      %v363 = vld [vmem:[#allocation2 + $0xc8] sm:$0xff]
      %v364 = vld [vmem:[#allocation2 + $0xd8] sm:$0xff]
      %v365 = vld [vmem:[#allocation2 + $0xe0] sm:$0xff]
      %v366 = vld [vmem:[#allocation2 + $0xf0] sm:$0xff]
      %v367 = vld [vmem:[#allocation2 + $0xf8] sm:$0xff]
      %v368 = vld [vmem:[#allocation2 + $0x108] sm:$0xff]
      %v369 = vld [vmem:[#allocation2 + $0x110] sm:$0xff]
      %v370 = vld [vmem:[#allocation2 + $0x120] sm:$0xff]
      %v371 = vld [vmem:[#allocation2 + $0x128] sm:$0xff]
      %v372 = vld [vmem:[#allocation2 + $0x138] sm:$0xff]
      %v373 = vld [vmem:[#allocation2 + $0x140] sm:$0xff]
      %v374 = vld [vmem:[#allocation2 + $0x150] sm:$0xff]
      %v375 = vld [vmem:[#allocation2 + $0x158] sm:$0xff]
      %v376 = vld [vmem:[#allocation2 + $0x168] sm:$0xff]
      %v377 = vld [vmem:[#allocation2 + $0x170] sm:$0xff]
      %v378 = vld [vmem:[%s1] sm:$0xf]
      %v379 = vld [vmem:[#allocation2 + $0x1] sm:$0xff]
      %v380 = vld [vmem:[#allocation2 + $0x9] sm:$0xff]
      %v381 = vld [vmem:[#allocation2 + $0x19] sm:$0xff]
      %v382 = vld [vmem:[#allocation2 + $0x21] sm:$0xff]
      %v383 = vld [vmem:[#allocation2 + $0x31] sm:$0xff]
      %v384 = vld [vmem:[#allocation2 + $0x39] sm:$0xff]
      %v385 = vld [vmem:[#allocation2 + $0x49] sm:$0xff]
      %v386 = vld [vmem:[#allocation2 + $0x51] sm:$0xff]
      %v387 = vld [vmem:[#allocation2 + $0x61] sm:$0xff]
      %v388 = vld [vmem:[#allocation2 + $0x69] sm:$0xff]
      %v389 = vld [vmem:[#allocation2 + $0x79] sm:$0xff]
      %v390 = vld [vmem:[#allocation2 + $0x81] sm:$0xff]
      %v391 = vld [vmem:[#allocation2 + $0x91] sm:$0xff]
      %v392 = vld [vmem:[#allocation2 + $0x99] sm:$0xff]
      %v393 = vld [vmem:[#allocation2 + $0xa9] sm:$0xff]
      %v394 = vld [vmem:[#allocation2 + $0xb1] sm:$0xff]
      %v395 = vld [vmem:[#allocation2 + $0xc1] sm:$0xff]
      %v396 = vld [vmem:[#allocation2 + $0xc9] sm:$0xff]
      %v397 = vld [vmem:[#allocation2 + $0xd9] sm:$0xff]
      %v398 = vld [vmem:[#allocation2 + $0xe1] sm:$0xff]
      %v399 = vld [vmem:[#allocation2 + $0xf1] sm:$0xff]
      %v400 = vld [vmem:[#allocation2 + $0xf9] sm:$0xff]
      %v401 = vld [vmem:[#allocation2 + $0x109] sm:$0xff]
      %v402 = vld [vmem:[#allocation2 + $0x111] sm:$0xff]
      %v403 = vld [vmem:[#allocation2 + $0x121] sm:$0xff]
      %v404 = vld [vmem:[#allocation2 + $0x129] sm:$0xff]
      %v405 = vld [vmem:[#allocation2 + $0x139] sm:$0xff]
      %v406 = vld [vmem:[#allocation2 + $0x141] sm:$0xff]
      %v407 = vld [vmem:[#allocation2 + $0x151] sm:$0xff]
      %v408 = vld [vmem:[#allocation2 + $0x159] sm:$0xff]
      %v409 = vld [vmem:[#allocation2 + $0x169] sm:$0xff]
      %v410 = vld [vmem:[#allocation2 + $0x171] sm:$0xff]
      %s411 = scalar_lea.vmem %s1, 4
      %v412 = vld [vmem:[%s411] sm:$0xf]
      %v414 = vsel %vm225, %v379, 0
      %v417 = vsel %vm225, %v380, 0
      %v420 = vsel %vm225, %v381, 0
      %v423 = vsel %vm225, %v382, 0
      %v426 = vsel %vm225, %v383, 0
      %v429 = vsel %vm225, %v384, 0
      %v432 = vsel %vm225, %v385, 0
      %v435 = vsel %vm225, %v386, 0
      %v438 = vsel %vm225, %v387, 0
      %v441 = vsel %vm225, %v388, 0
      %v444 = vsel %vm225, %v389, 0
      %v447 = vsel %vm225, %v390, 0
      %v450 = vsel %vm225, %v391, 0
      %v453 = vsel %vm225, %v392, 0
      %v456 = vsel %vm225, %v393, 0
      %v459 = vsel %vm225, %v394, 0
      %v462 = vsel %vm225, %v395, 0
      %v465 = vsel %vm225, %v396, 0
      %v468 = vsel %vm225, %v397, 0
      %v471 = vsel %vm225, %v398, 0
      %v474 = vsel %vm225, %v399, 0
      %v477 = vsel %vm225, %v400, 0
      %v480 = vsel %vm225, %v401, 0
      %v483 = vsel %vm225, %v402, 0
      %v486 = vsel %vm225, %v403, 0
      %v489 = vsel %vm225, %v404, 0
      %v492 = vsel %vm225, %v405, 0
      %v495 = vsel %vm225, %v406, 0
      %v498 = vsel %vm225, %v407, 0
      %v501 = vsel %vm225, %v408, 0
      %v504 = vsel %vm225, %v409, 0
      %v507 = vsel %vm225, %v410, 0
      %vm509 = vcmask 1043456
      %v511 = vsel %vm509, %v412, 0
      %513 = vmatprep.subr.mxu0 0.0
      %514 = vmatpush1.msra.mxu0 %v511
      %515 = vmatprep.subr.mxu0 0.0
      %516 = vmatpush1.msra.mxu0 0.0
      %517 = vmatprep.subr.mxu0 0.0
      %518 = vmatpush1.msra.mxu0 0.0
      %519 = vmatprep.subr.mxu0 0.0
      %520 = vmatpush1.msra.mxu0 0.0
      %521 = vmatprep.subr.mxu0 0.0
      %522 = vmatpush1.msra.mxu0 0.0
      %523 = vmatprep.subr.mxu0 0.0
      %524 = vmatpush1.msra.mxu0 0.0
      %525 = vmatprep.subr.mxu0 0.0
      %526 = vmatpush1.msra.mxu0 0.0
      %527 = vmatprep.subr.mxu0 0.0
      %528 = vmatpush1.msra.mxu0 0.0
      %529 = vmatprep.subr.mxu0 0.0
      %530 = vmatpush1.msra.mxu0 0.0
      %531 = vmatprep.subr.mxu0 0.0
      %532 = vmatpush1.msra.mxu0 0.0
      %533 = vmatprep.subr.mxu0 0.0
      %534 = vmatpush1.msra.mxu0 0.0
      %535 = vmatprep.subr.mxu0 0.0
      %536 = vmatpush1.msra.mxu0 0.0
      %537 = vmatprep.subr.mxu0 0.0
      %538 = vmatpush1.msra.mxu0 0.0
      %539 = vmatprep.subr.mxu0 0.0
      %540 = vmatpush1.msra.mxu0 0.0
      %541 = vmatprep.subr.mxu0 0.0
      %542 = vmatpush1.msra.mxu0 0.0
      %543 = vmatprep.subr.mxu0 0.0
      %544 = vmatpush1.msra.mxu0 0.0
      %545 = vmatprep.subr.mxu0 0.0
      %546 = vmatpush1.msra.mxu0 0.0
      %547 = vmatprep.subr.mxu0 0.0
      %548 = vmatpush1.msra.mxu0 0.0
      %549 = vmatprep.subr.mxu0 0.0
      %550 = vmatpush1.msra.mxu0 0.0
      %551 = vmatprep.subr.mxu0 0.0
      %552 = vmatpush1.msra.mxu0 0.0
      %553 = vmatprep.subr.mxu0 0.0
      %554 = vmatpush1.msra.mxu0 0.0
      %555 = vmatprep.subr.mxu0 0.0
      %556 = vmatpush1.msra.mxu0 0.0
      %557 = vmatprep.subr.mxu0 0.0
      %558 = vmatpush1.msra.mxu0 0.0
      %559 = vmatprep.subr.mxu0 0.0
      %560 = vmatpush1.msra.mxu0 0.0
      %561 = vmatprep.subr.mxu0 0.0
      %562 = vmatpush1.msra.mxu0 0.0
      %563 = vmatprep.subr.mxu0 0.0
      %564 = vmatpush1.msra.mxu0 0.0
      %565 = vmatprep.subr.mxu0 0.0
      %566 = vmatpush1.msra.mxu0 0.0
      %567 = vmatprep.subr.mxu0 0.0
      %568 = vmatpush1.msra.mxu0 0.0
      %569 = vmatprep.subr.mxu0 0.0
      %570 = vmatpush1.msra.mxu0 0.0
      %571 = vmatprep.subr.mxu0 0.0
      %572 = vmatpush1.msra.mxu0 0.0
      %573 = vmatprep.subr.mxu0 0.0
      %574 = vmatpush1.msra.mxu0 0.0
      %575 = vmatprep.subr.mxu0 0.0
      %576 = vmatpush1.msra.mxu0 0.0
      %577 = vmatprep.mubr.f32.mxu0 0.0
      %578 = vmatmul.mubr.f32.gmra.mrb[0].mxu0 %v414
      %v579 = vpop.f32.mrb[0].mxu0
      %v580 = vadd.f32 0.0, %v579
      %v581 = vpop.f32.mrb[0].mxu0
      %582 = vmatprep.mubr.f32.mxu0 0.0
      %583 = vmatmul.mubr.f32.gmra.mrb[0].mxu0 %v417
      %v584 = vpop.f32.mrb[0].mxu0
      %v585 = vadd.f32 0.0, %v584
      %v586 = vpop.f32.mrb[0].mxu0
      %587 = vmatprep.mubr.f32.mxu0 0.0
      %588 = vmatmul.mubr.f32.gmra.mrb[0].mxu0 %v420
      %v589 = vpop.f32.mrb[0].mxu0
      %v590 = vadd.f32 0.0, %v589
      %v591 = vpop.f32.mrb[0].mxu0
      %592 = vmatprep.mubr.f32.mxu0 0.0
      %593 = vmatmul.mubr.f32.gmra.mrb[0].mxu0 %v423
      %v594 = vpop.f32.mrb[0].mxu0
      %v595 = vadd.f32 0.0, %v594
      %v596 = vpop.f32.mrb[0].mxu0
      %597 = vmatprep.mubr.f32.mxu0 0.0
      %598 = vmatmul.mubr.f32.gmra.mrb[0].mxu0 %v426
      %v599 = vpop.f32.mrb[0].mxu0
      %v600 = vadd.f32 0.0, %v599
      %v601 = vpop.f32.mrb[0].mxu0
      %602 = vmatprep.mubr.f32.mxu0 0.0
      %603 = vmatmul.mubr.f32.gmra.mrb[0].mxu0 %v429
      %v604 = vpop.f32.mrb[0].mxu0
      %v605 = vadd.f32 0.0, %v604
      %v606 = vpop.f32.mrb[0].mxu0
      %607 = vmatprep.mubr.f32.mxu0 0.0
      %608 = vmatmul.mubr.f32.gmra.mrb[0].mxu0 %v432
      %v609 = vpop.f32.mrb[0].mxu0
      %v610 = vadd.f32 0.0, %v609
      %v611 = vpop.f32.mrb[0].mxu0
      %612 = vmatprep.mubr.f32.mxu0 0.0
      %613 = vmatmul.mubr.f32.gmra.mrb[0].mxu0 %v435
      %v614 = vpop.f32.mrb[0].mxu0
      %v615 = vadd.f32 0.0, %v614
      %v616 = vpop.f32.mrb[0].mxu0
      %617 = vmatprep.mubr.f32.mxu0 0.0
      %618 = vmatmul.mubr.f32.gmra.mrb[0].mxu0 %v438
      %v619 = vpop.f32.mrb[0].mxu0
      %v620 = vadd.f32 0.0, %v619
      %v621 = vpop.f32.mrb[0].mxu0
      %622 = vmatprep.mubr.f32.mxu0 0.0
      %623 = vmatmul.mubr.f32.gmra.mrb[0].mxu0 %v441
      %v624 = vpop.f32.mrb[0].mxu0
      %v625 = vadd.f32 0.0, %v624
      %v626 = vpop.f32.mrb[0].mxu0
      %627 = vmatprep.mubr.f32.mxu0 0.0
      %628 = vmatmul.mubr.f32.gmra.mrb[0].mxu0 %v444
      %v629 = vpop.f32.mrb[0].mxu0
      %v630 = vadd.f32 0.0, %v629
      %v631 = vpop.f32.mrb[0].mxu0
      %632 = vmatprep.mubr.f32.mxu0 0.0
      %633 = vmatmul.mubr.f32.gmra.mrb[0].mxu0 %v447
      %v634 = vpop.f32.mrb[0].mxu0
      %v635 = vadd.f32 0.0, %v634
      %v636 = vpop.f32.mrb[0].mxu0
      %637 = vmatprep.mubr.f32.mxu0 0.0
      %638 = vmatmul.mubr.f32.gmra.mrb[0].mxu0 %v450
      %v639 = vpop.f32.mrb[0].mxu0
      %v640 = vadd.f32 0.0, %v639
      %v641 = vpop.f32.mrb[0].mxu0
      %642 = vmatprep.mubr.f32.mxu0 0.0
      %643 = vmatmul.mubr.f32.gmra.mrb[0].mxu0 %v453
      %v644 = vpop.f32.mrb[0].mxu0
      %v645 = vadd.f32 0.0, %v644
      %v646 = vpop.f32.mrb[0].mxu0
      %647 = vmatprep.mubr.f32.mxu0 0.0
      %648 = vmatmul.mubr.f32.gmra.mrb[0].mxu0 %v456
      %v649 = vpop.f32.mrb[0].mxu0
      %v650 = vadd.f32 0.0, %v649
      %v651 = vpop.f32.mrb[0].mxu0
      %652 = vmatprep.mubr.f32.mxu0 0.0
      %653 = vmatmul.mubr.f32.gmra.mrb[0].mxu0 %v459
      %v654 = vpop.f32.mrb[0].mxu0
      %v655 = vadd.f32 0.0, %v654
      %v656 = vpop.f32.mrb[0].mxu0
      %657 = vmatprep.mubr.f32.mxu0 0.0
      %658 = vmatmul.mubr.f32.gmra.mrb[0].mxu0 %v462
      %v659 = vpop.f32.mrb[0].mxu0
      %v660 = vadd.f32 0.0, %v659
      %v661 = vpop.f32.mrb[0].mxu0
      %662 = vmatprep.mubr.f32.mxu0 0.0
      %663 = vmatmul.mubr.f32.gmra.mrb[0].mxu0 %v465
      %v664 = vpop.f32.mrb[0].mxu0
      %v665 = vadd.f32 0.0, %v664
      %v666 = vpop.f32.mrb[0].mxu0
      %667 = vmatprep.mubr.f32.mxu0 0.0
      %668 = vmatmul.mubr.f32.gmra.mrb[0].mxu0 %v468
      %v669 = vpop.f32.mrb[0].mxu0
      %v670 = vadd.f32 0.0, %v669
      %v671 = vpop.f32.mrb[0].mxu0
      %672 = vmatprep.mubr.f32.mxu0 0.0
      %673 = vmatmul.mubr.f32.gmra.mrb[0].mxu0 %v471
      %v674 = vpop.f32.mrb[0].mxu0
      %v675 = vadd.f32 0.0, %v674
      %v676 = vpop.f32.mrb[0].mxu0
      %677 = vmatprep.mubr.f32.mxu0 0.0
      %678 = vmatmul.mubr.f32.gmra.mrb[0].mxu0 %v474
      %v679 = vpop.f32.mrb[0].mxu0
      %v680 = vadd.f32 0.0, %v679
      %v681 = vpop.f32.mrb[0].mxu0
      %682 = vmatprep.mubr.f32.mxu0 0.0
      %683 = vmatmul.mubr.f32.gmra.mrb[0].mxu0 %v477
      %v684 = vpop.f32.mrb[0].mxu0
      %v685 = vadd.f32 0.0, %v684
      %v686 = vpop.f32.mrb[0].mxu0
      %687 = vmatprep.mubr.f32.mxu0 0.0
      %688 = vmatmul.mubr.f32.gmra.mrb[0].mxu0 %v480
      %v689 = vpop.f32.mrb[0].mxu0
      %v690 = vadd.f32 0.0, %v689
      %v691 = vpop.f32.mrb[0].mxu0
      %692 = vmatprep.mubr.f32.mxu0 0.0
      %693 = vmatmul.mubr.f32.gmra.mrb[0].mxu0 %v483
      %v694 = vpop.f32.mrb[0].mxu0
      %v695 = vadd.f32 0.0, %v694
      %v696 = vpop.f32.mrb[0].mxu0
      %697 = vmatprep.mubr.f32.mxu0 0.0
      %698 = vmatmul.mubr.f32.gmra.mrb[0].mxu0 %v486
      %v699 = vpop.f32.mrb[0].mxu0
      %v700 = vadd.f32 0.0, %v699
      %v701 = vpop.f32.mrb[0].mxu0
      %702 = vmatprep.mubr.f32.mxu0 0.0
      %703 = vmatmul.mubr.f32.gmra.mrb[0].mxu0 %v489
      %v704 = vpop.f32.mrb[0].mxu0
      %v705 = vadd.f32 0.0, %v704
      %v706 = vpop.f32.mrb[0].mxu0
      %707 = vmatprep.mubr.f32.mxu0 0.0
      %708 = vmatmul.mubr.f32.gmra.mrb[0].mxu0 %v492
      %v709 = vpop.f32.mrb[0].mxu0
      %v710 = vadd.f32 0.0, %v709
      %v711 = vpop.f32.mrb[0].mxu0
      %712 = vmatprep.mubr.f32.mxu0 0.0
      %713 = vmatmul.mubr.f32.gmra.mrb[0].mxu0 %v495
      %v714 = vpop.f32.mrb[0].mxu0
      %v715 = vadd.f32 0.0, %v714
      %v716 = vpop.f32.mrb[0].mxu0
      %717 = vmatprep.mubr.f32.mxu0 0.0
      %718 = vmatmul.mubr.f32.gmra.mrb[0].mxu0 %v498
      %v719 = vpop.f32.mrb[0].mxu0
      %v720 = vadd.f32 0.0, %v719
      %v721 = vpop.f32.mrb[0].mxu0
      %722 = vmatprep.mubr.f32.mxu0 0.0
      %723 = vmatmul.mubr.f32.gmra.mrb[0].mxu0 %v501
      %v724 = vpop.f32.mrb[0].mxu0
      %v725 = vadd.f32 0.0, %v724
      %v726 = vpop.f32.mrb[0].mxu0
      %727 = vmatprep.mubr.f32.mxu0 0.0
      %728 = vmatmul.mubr.f32.gmra.mrb[0].mxu0 %v504
      %v729 = vpop.f32.mrb[0].mxu0
      %v730 = vadd.f32 0.0, %v729
      %v731 = vpop.f32.mrb[0].mxu0
      %732 = vmatprep.mubr.f32.mxu0 0.0
      %733 = vmatmul.mubr.f32.gmra.mrb[0].mxu0 %v507
      %v734 = vpop.f32.mrb[0].mxu0
      %v735 = vadd.f32 0.0, %v734
      %v736 = vpop.f32.mrb[0].mxu0
      %737 = vdwg.mxu0
      %v739 = vsel %vm225, %v346, 0
      %v742 = vsel %vm225, %v347, 0
      %v745 = vsel %vm225, %v348, 0
      %v748 = vsel %vm225, %v349, 0
      %v751 = vsel %vm225, %v350, 0
      %v754 = vsel %vm225, %v351, 0
      %v757 = vsel %vm225, %v352, 0
      %v760 = vsel %vm225, %v353, 0
      %v763 = vsel %vm225, %v354, 0
      %v766 = vsel %vm225, %v355, 0
      %v769 = vsel %vm225, %v356, 0
      %v772 = vsel %vm225, %v357, 0
      %v775 = vsel %vm225, %v358, 0
      %v778 = vsel %vm225, %v359, 0
      %v781 = vsel %vm225, %v360, 0
      %v784 = vsel %vm225, %v361, 0
      %v787 = vsel %vm225, %v362, 0
      %v790 = vsel %vm225, %v363, 0
      %v793 = vsel %vm225, %v364, 0
      %v796 = vsel %vm225, %v365, 0
      %v799 = vsel %vm225, %v366, 0
      %v802 = vsel %vm225, %v367, 0
      %v805 = vsel %vm225, %v368, 0
      %v808 = vsel %vm225, %v369, 0
      %v811 = vsel %vm225, %v370, 0
      %v814 = vsel %vm225, %v371, 0
      %v817 = vsel %vm225, %v372, 0
      %v820 = vsel %vm225, %v373, 0
      %v823 = vsel %vm225, %v374, 0
      %v826 = vsel %vm225, %v375, 0
      %v829 = vsel %vm225, %v376, 0
      %v832 = vsel %vm225, %v377, 0
      %v835 = vsel %vm509, %v378, 0
      %837 = vmatprep.subr.mxu0 0.0
      %838 = vmatpush1.msra.mxu0 %v835
      %839 = vmatprep.subr.mxu0 0.0
      %840 = vmatpush1.msra.mxu0 0.0
      %841 = vmatprep.subr.mxu0 0.0
      %842 = vmatpush1.msra.mxu0 0.0
      %843 = vmatprep.subr.mxu0 0.0
      %844 = vmatpush1.msra.mxu0 0.0
      %845 = vmatprep.subr.mxu0 0.0
      %846 = vmatpush1.msra.mxu0 0.0
      %847 = vmatprep.subr.mxu0 0.0
      %848 = vmatpush1.msra.mxu0 0.0
      %849 = vmatprep.subr.mxu0 0.0
      %850 = vmatpush1.msra.mxu0 0.0
      %851 = vmatprep.subr.mxu0 0.0
      %852 = vmatpush1.msra.mxu0 0.0
      %853 = vmatprep.subr.mxu0 0.0
      %854 = vmatpush1.msra.mxu0 0.0
      %855 = vmatprep.subr.mxu0 0.0
      %856 = vmatpush1.msra.mxu0 0.0
      %857 = vmatprep.subr.mxu0 0.0
      %858 = vmatpush1.msra.mxu0 0.0
      %859 = vmatprep.subr.mxu0 0.0
      %860 = vmatpush1.msra.mxu0 0.0
      %861 = vmatprep.subr.mxu0 0.0
      %862 = vmatpush1.msra.mxu0 0.0
      %863 = vmatprep.subr.mxu0 0.0
      %864 = vmatpush1.msra.mxu0 0.0
      %865 = vmatprep.subr.mxu0 0.0
      %866 = vmatpush1.msra.mxu0 0.0
      %867 = vmatprep.subr.mxu0 0.0
      %868 = vmatpush1.msra.mxu0 0.0
      %869 = vmatprep.subr.mxu0 0.0
      %870 = vmatpush1.msra.mxu0 0.0
      %871 = vmatprep.subr.mxu0 0.0
      %872 = vmatpush1.msra.mxu0 0.0
      %873 = vmatprep.subr.mxu0 0.0
      %874 = vmatpush1.msra.mxu0 0.0
      %875 = vmatprep.subr.mxu0 0.0
      %876 = vmatpush1.msra.mxu0 0.0
      %877 = vmatprep.subr.mxu0 0.0
      %878 = vmatpush1.msra.mxu0 0.0
      %879 = vmatprep.subr.mxu0 0.0
      %880 = vmatpush1.msra.mxu0 0.0
      %881 = vmatprep.subr.mxu0 0.0
      %882 = vmatpush1.msra.mxu0 0.0
      %883 = vmatprep.subr.mxu0 0.0
      %884 = vmatpush1.msra.mxu0 0.0
      %885 = vmatprep.subr.mxu0 0.0
      %886 = vmatpush1.msra.mxu0 0.0
      %887 = vmatprep.subr.mxu0 0.0
      %888 = vmatpush1.msra.mxu0 0.0
      %889 = vmatprep.subr.mxu0 0.0
      %890 = vmatpush1.msra.mxu0 0.0
      %891 = vmatprep.subr.mxu0 0.0
      %892 = vmatpush1.msra.mxu0 0.0
      %893 = vmatprep.subr.mxu0 0.0
      %894 = vmatpush1.msra.mxu0 0.0
      %895 = vmatprep.subr.mxu0 0.0
      %896 = vmatpush1.msra.mxu0 0.0
      %897 = vmatprep.subr.mxu0 0.0
      %898 = vmatpush1.msra.mxu0 0.0
      %899 = vmatprep.subr.mxu0 0.0
      %900 = vmatpush1.msra.mxu0 0.0
      %901 = vmatprep.mubr.f32.mxu0 0.0
      %902 = vmatmul.mubr.f32.gmra.mrb[0].mxu0 %v739
      %v903 = vpop.f32.mrb[0].mxu0
      %v904 = vadd.f32 %v580, %v903
      %v905 = vpop.f32.mrb[0].mxu0
      %906 = vmatprep.mubr.f32.mxu0 0.0
      %907 = vmatmul.mubr.f32.gmra.mrb[0].mxu0 %v742
      %v908 = vpop.f32.mrb[0].mxu0
      %v909 = vadd.f32 %v585, %v908
      %v910 = vpop.f32.mrb[0].mxu0
      %911 = vmatprep.mubr.f32.mxu0 0.0
      %912 = vmatmul.mubr.f32.gmra.mrb[0].mxu0 %v745
      %v913 = vpop.f32.mrb[0].mxu0
      %v914 = vadd.f32 %v590, %v913
      %v915 = vpop.f32.mrb[0].mxu0
      %916 = vmatprep.mubr.f32.mxu0 0.0
      %917 = vmatmul.mubr.f32.gmra.mrb[0].mxu0 %v748
      %v918 = vpop.f32.mrb[0].mxu0
      %v919 = vadd.f32 %v595, %v918
      %v920 = vpop.f32.mrb[0].mxu0
      %921 = vmatprep.mubr.f32.mxu0 0.0
      %922 = vmatmul.mubr.f32.gmra.mrb[0].mxu0 %v751
      %v923 = vpop.f32.mrb[0].mxu0
      %v924 = vadd.f32 %v600, %v923
      %v925 = vpop.f32.mrb[0].mxu0
      %926 = vmatprep.mubr.f32.mxu0 0.0
      %927 = vmatmul.mubr.f32.gmra.mrb[0].mxu0 %v754
      %v928 = vpop.f32.mrb[0].mxu0
      %v929 = vadd.f32 %v605, %v928
      %v930 = vpop.f32.mrb[0].mxu0
      %931 = vmatprep.mubr.f32.mxu0 0.0
      %932 = vmatmul.mubr.f32.gmra.mrb[0].mxu0 %v757
      %v933 = vpop.f32.mrb[0].mxu0
      %v934 = vadd.f32 %v610, %v933
      %v935 = vpop.f32.mrb[0].mxu0
      %936 = vmatprep.mubr.f32.mxu0 0.0
      %937 = vmatmul.mubr.f32.gmra.mrb[0].mxu0 %v760
      %v938 = vpop.f32.mrb[0].mxu0
      %v939 = vadd.f32 %v615, %v938
      %v940 = vpop.f32.mrb[0].mxu0
      %941 = vmatprep.mubr.f32.mxu0 0.0
      %942 = vmatmul.mubr.f32.gmra.mrb[0].mxu0 %v763
      %v943 = vpop.f32.mrb[0].mxu0
      %v944 = vadd.f32 %v620, %v943
      %v945 = vpop.f32.mrb[0].mxu0
      %946 = vmatprep.mubr.f32.mxu0 0.0
      %947 = vmatmul.mubr.f32.gmra.mrb[0].mxu0 %v766
      %v948 = vpop.f32.mrb[0].mxu0
      %v949 = vadd.f32 %v625, %v948
      %v950 = vpop.f32.mrb[0].mxu0
      %951 = vmatprep.mubr.f32.mxu0 0.0
      %952 = vmatmul.mubr.f32.gmra.mrb[0].mxu0 %v769
      %v953 = vpop.f32.mrb[0].mxu0
      %v954 = vadd.f32 %v630, %v953
      %v955 = vpop.f32.mrb[0].mxu0
      %956 = vmatprep.mubr.f32.mxu0 0.0
      %957 = vmatmul.mubr.f32.gmra.mrb[0].mxu0 %v772
      %v958 = vpop.f32.mrb[0].mxu0
      %v959 = vadd.f32 %v635, %v958
      %v960 = vpop.f32.mrb[0].mxu0
      %961 = vmatprep.mubr.f32.mxu0 0.0
      %962 = vmatmul.mubr.f32.gmra.mrb[0].mxu0 %v775
      %v963 = vpop.f32.mrb[0].mxu0
      %v964 = vadd.f32 %v640, %v963
      %v965 = vpop.f32.mrb[0].mxu0
      %966 = vmatprep.mubr.f32.mxu0 0.0
      %967 = vmatmul.mubr.f32.gmra.mrb[0].mxu0 %v778
      %v968 = vpop.f32.mrb[0].mxu0
      %v969 = vadd.f32 %v645, %v968
      %v970 = vpop.f32.mrb[0].mxu0
      %971 = vmatprep.mubr.f32.mxu0 0.0
      %972 = vmatmul.mubr.f32.gmra.mrb[0].mxu0 %v781
      %v973 = vpop.f32.mrb[0].mxu0
      %v974 = vadd.f32 %v650, %v973
      %v975 = vpop.f32.mrb[0].mxu0
      %976 = vmatprep.mubr.f32.mxu0 0.0
      %977 = vmatmul.mubr.f32.gmra.mrb[0].mxu0 %v784
      %v978 = vpop.f32.mrb[0].mxu0
      %v979 = vadd.f32 %v655, %v978
      %v980 = vpop.f32.mrb[0].mxu0
      %981 = vmatprep.mubr.f32.mxu0 0.0
      %982 = vmatmul.mubr.f32.gmra.mrb[0].mxu0 %v787
      %v983 = vpop.f32.mrb[0].mxu0
      %v984 = vadd.f32 %v660, %v983
      %v985 = vpop.f32.mrb[0].mxu0
      %986 = vmatprep.mubr.f32.mxu0 0.0
      %987 = vmatmul.mubr.f32.gmra.mrb[0].mxu0 %v790
      %v988 = vpop.f32.mrb[0].mxu0
      %v989 = vadd.f32 %v665, %v988
      %v990 = vpop.f32.mrb[0].mxu0
      %991 = vmatprep.mubr.f32.mxu0 0.0
      %992 = vmatmul.mubr.f32.gmra.mrb[0].mxu0 %v793
      %v993 = vpop.f32.mrb[0].mxu0
      %v994 = vadd.f32 %v670, %v993
      %v995 = vpop.f32.mrb[0].mxu0
      %996 = vmatprep.mubr.f32.mxu0 0.0
      %997 = vmatmul.mubr.f32.gmra.mrb[0].mxu0 %v796
      %v998 = vpop.f32.mrb[0].mxu0
      %v999 = vadd.f32 %v675, %v998
      %v1000 = vpop.f32.mrb[0].mxu0
      %1001 = vmatprep.mubr.f32.mxu0 0.0
      %1002 = vmatmul.mubr.f32.gmra.mrb[0].mxu0 %v799
      %v1003 = vpop.f32.mrb[0].mxu0
      %v1004 = vadd.f32 %v680, %v1003
      %v1005 = vpop.f32.mrb[0].mxu0
      %1006 = vmatprep.mubr.f32.mxu0 0.0
      %1007 = vmatmul.mubr.f32.gmra.mrb[0].mxu0 %v802
      %v1008 = vpop.f32.mrb[0].mxu0
      %v1009 = vadd.f32 %v685, %v1008
      %v1010 = vpop.f32.mrb[0].mxu0
      %1011 = vmatprep.mubr.f32.mxu0 0.0
      %1012 = vmatmul.mubr.f32.gmra.mrb[0].mxu0 %v805
      %v1013 = vpop.f32.mrb[0].mxu0
      %v1014 = vadd.f32 %v690, %v1013
      %v1015 = vpop.f32.mrb[0].mxu0
      %1016 = vmatprep.mubr.f32.mxu0 0.0
      %1017 = vmatmul.mubr.f32.gmra.mrb[0].mxu0 %v808
      %v1018 = vpop.f32.mrb[0].mxu0
      %v1019 = vadd.f32 %v695, %v1018
      %v1020 = vpop.f32.mrb[0].mxu0
      %1021 = vmatprep.mubr.f32.mxu0 0.0
      %1022 = vmatmul.mubr.f32.gmra.mrb[0].mxu0 %v811
      %v1023 = vpop.f32.mrb[0].mxu0
      %v1024 = vadd.f32 %v700, %v1023
      %v1025 = vpop.f32.mrb[0].mxu0
      %1026 = vmatprep.mubr.f32.mxu0 0.0
      %1027 = vmatmul.mubr.f32.gmra.mrb[0].mxu0 %v814
      %v1028 = vpop.f32.mrb[0].mxu0
      %v1029 = vadd.f32 %v705, %v1028
      %v1030 = vpop.f32.mrb[0].mxu0
      %1031 = vmatprep.mubr.f32.mxu0 0.0
      %1032 = vmatmul.mubr.f32.gmra.mrb[0].mxu0 %v817
      %v1033 = vpop.f32.mrb[0].mxu0
      %v1034 = vadd.f32 %v710, %v1033
      %v1035 = vpop.f32.mrb[0].mxu0
      %1036 = vmatprep.mubr.f32.mxu0 0.0
      %1037 = vmatmul.mubr.f32.gmra.mrb[0].mxu0 %v820
      %v1038 = vpop.f32.mrb[0].mxu0
      %v1039 = vadd.f32 %v715, %v1038
      %v1040 = vpop.f32.mrb[0].mxu0
      %1041 = vmatprep.mubr.f32.mxu0 0.0
      %1042 = vmatmul.mubr.f32.gmra.mrb[0].mxu0 %v823
      %v1043 = vpop.f32.mrb[0].mxu0
      %v1044 = vadd.f32 %v720, %v1043
      %v1045 = vpop.f32.mrb[0].mxu0
      %1046 = vmatprep.mubr.f32.mxu0 0.0
      %1047 = vmatmul.mubr.f32.gmra.mrb[0].mxu0 %v826
      %v1048 = vpop.f32.mrb[0].mxu0
      %v1049 = vadd.f32 %v725, %v1048
      %v1050 = vpop.f32.mrb[0].mxu0
      %1051 = vmatprep.mubr.f32.mxu0 0.0
      %1052 = vmatmul.mubr.f32.gmra.mrb[0].mxu0 %v829
      %v1053 = vpop.f32.mrb[0].mxu0
      %v1054 = vadd.f32 %v730, %v1053
      %v1055 = vpop.f32.mrb[0].mxu0
      %1056 = vmatprep.mubr.f32.mxu0 0.0
      %1057 = vmatmul.mubr.f32.gmra.mrb[0].mxu0 %v832
      %v1058 = vpop.f32.mrb[0].mxu0
      %v1059 = vadd.f32 %v735, %v1058
      %v1060 = vpop.f32.mrb[0].mxu0
      %1061 = vdwg.mxu0
      %v1062 = vld [vmem:[#allocation2 + $0x2] sm:$0xff]
      %v1063 = vld [vmem:[#allocation2 + $0xa] sm:$0xff]
      %v1064 = vld [vmem:[#allocation2 + $0x1a] sm:$0xff]
      %v1065 = vld [vmem:[#allocation2 + $0x22] sm:$0xff]
      %v1066 = vld [vmem:[#allocation2 + $0x32] sm:$0xff]
      %v1067 = vld [vmem:[#allocation2 + $0x3a] sm:$0xff]
      %v1068 = vld [vmem:[#allocation2 + $0x4a] sm:$0xff]
      %v1069 = vld [vmem:[#allocation2 + $0x52] sm:$0xff]
      %v1070 = vld [vmem:[#allocation2 + $0x62] sm:$0xff]
      %v1071 = vld [vmem:[#allocation2 + $0x6a] sm:$0xff]
      %v1072 = vld [vmem:[#allocation2 + $0x7a] sm:$0xff]
      %v1073 = vld [vmem:[#allocation2 + $0x82] sm:$0xff]
      %v1074 = vld [vmem:[#allocation2 + $0x92] sm:$0xff]
      %v1075 = vld [vmem:[#allocation2 + $0x9a] sm:$0xff]
      %v1076 = vld [vmem:[#allocation2 + $0xaa] sm:$0xff]
      %v1077 = vld [vmem:[#allocation2 + $0xb2] sm:$0xff]
      %v1078 = vld [vmem:[#allocation2 + $0xc2] sm:$0xff]
      %v1079 = vld [vmem:[#allocation2 + $0xca] sm:$0xff]
      %v1080 = vld [vmem:[#allocation2 + $0xda] sm:$0xff]
      %v1081 = vld [vmem:[#allocation2 + $0xe2] sm:$0xff]
      %v1082 = vld [vmem:[#allocation2 + $0xf2] sm:$0xff]
      %v1083 = vld [vmem:[#allocation2 + $0xfa] sm:$0xff]
      %v1084 = vld [vmem:[#allocation2 + $0x10a] sm:$0xff]
      %v1085 = vld [vmem:[#allocation2 + $0x112] sm:$0xff]
      %v1086 = vld [vmem:[#allocation2 + $0x122] sm:$0xff]
      %v1087 = vld [vmem:[#allocation2 + $0x12a] sm:$0xff]
      %v1088 = vld [vmem:[#allocation2 + $0x13a] sm:$0xff]
      %v1089 = vld [vmem:[#allocation2 + $0x142] sm:$0xff]
      %v1090 = vld [vmem:[#allocation2 + $0x152] sm:$0xff]
      %v1091 = vld [vmem:[#allocation2 + $0x15a] sm:$0xff]
      %v1092 = vld [vmem:[#allocation2 + $0x16a] sm:$0xff]
      %v1093 = vld [vmem:[#allocation2 + $0x172] sm:$0xff]
      %s1094 = scalar_lea.vmem %s1, 8
      %v1095 = vld [vmem:[%s1094] sm:$0xf]
      %v1097 = vsel %vm225, %v1062, 0
      %v1100 = vsel %vm225, %v1063, 0
      %v1103 = vsel %vm225, %v1064, 0
      %v1106 = vsel %vm225, %v1065, 0
      %v1109 = vsel %vm225, %v1066, 0
      %v1112 = vsel %vm225, %v1067, 0
      %v1115 = vsel %vm225, %v1068, 0
      %v1118 = vsel %vm225, %v1069, 0
      %v1121 = vsel %vm225, %v1070, 0
      %v1124 = vsel %vm225, %v1071, 0
      %v1127 = vsel %vm225, %v1072, 0
      %v1130 = vsel %vm225, %v1073, 0
      %v1133 = vsel %vm225, %v1074, 0
      %v1136 = vsel %vm225, %v1075, 0
      %v1139 = vsel %vm225, %v1076, 0
      %v1142 = vsel %vm225, %v1077, 0
      %v1145 = vsel %vm225, %v1078, 0
      %v1148 = vsel %vm225, %v1079, 0
      %v1151 = vsel %vm225, %v1080, 0
      %v1154 = vsel %vm225, %v1081, 0
      %v1157 = vsel %vm225, %v1082, 0
      %v1160 = vsel %vm225, %v1083, 0
      %v1163 = vsel %vm225, %v1084, 0
      %v1166 = vsel %vm225, %v1085, 0
      %v1169 = vsel %vm225, %v1086, 0
      %v1172 = vsel %vm225, %v1087, 0
      %v1175 = vsel %vm225, %v1088, 0
      %v1178 = vsel %vm225, %v1089, 0
      %v1181 = vsel %vm225, %v1090, 0
      %v1184 = vsel %vm225, %v1091, 0
      %v1187 = vsel %vm225, %v1092, 0
      %v1190 = vsel %vm225, %v1093, 0
      %v1193 = vsel %vm509, %v1095, 0
      %1195 = vmatprep.subr.mxu0 0.0
      %1196 = vmatpush1.msra.mxu0 %v1193
      %1197 = vmatprep.subr.mxu0 0.0
      %1198 = vmatpush1.msra.mxu0 0.0
      %1199 = vmatprep.subr.mxu0 0.0
      %1200 = vmatpush1.msra.mxu0 0.0
      %1201 = vmatprep.subr.mxu0 0.0
      %1202 = vmatpush1.msra.mxu0 0.0
      %1203 = vmatprep.subr.mxu0 0.0
      %1204 = vmatpush1.msra.mxu0 0.0
      %1205 = vmatprep.subr.mxu0 0.0
      %1206 = vmatpush1.msra.mxu0 0.0
      %1207 = vmatprep.subr.mxu0 0.0
      %1208 = vmatpush1.msra.mxu0 0.0
      %1209 = vmatprep.subr.mxu0 0.0
      %1210 = vmatpush1.msra.mxu0 0.0
      %1211 = vmatprep.subr.mxu0 0.0
      %1212 = vmatpush1.msra.mxu0 0.0
      %1213 = vmatprep.subr.mxu0 0.0
      %1214 = vmatpush1.msra.mxu0 0.0
      %1215 = vmatprep.subr.mxu0 0.0
      %1216 = vmatpush1.msra.mxu0 0.0
      %1217 = vmatprep.subr.mxu0 0.0
      %1218 = vmatpush1.msra.mxu0 0.0
      %1219 = vmatprep.subr.mxu0 0.0
      %1220 = vmatpush1.msra.mxu0 0.0
      %1221 = vmatprep.subr.mxu0 0.0
      %1222 = vmatpush1.msra.mxu0 0.0
      %1223 = vmatprep.subr.mxu0 0.0
      %1224 = vmatpush1.msra.mxu0 0.0
      %1225 = vmatprep.subr.mxu0 0.0
      %1226 = vmatpush1.msra.mxu0 0.0
      %1227 = vmatprep.subr.mxu0 0.0
      %1228 = vmatpush1.msra.mxu0 0.0
      %1229 = vmatprep.subr.mxu0 0.0
      %1230 = vmatpush1.msra.mxu0 0.0
      %1231 = vmatprep.subr.mxu0 0.0
      %1232 = vmatpush1.msra.mxu0 0.0
      %1233 = vmatprep.subr.mxu0 0.0
      %1234 = vmatpush1.msra.mxu0 0.0
      %1235 = vmatprep.subr.mxu0 0.0
      %1236 = vmatpush1.msra.mxu0 0.0
      %1237 = vmatprep.subr.mxu0 0.0
      %1238 = vmatpush1.msra.mxu0 0.0
      %1239 = vmatprep.subr.mxu0 0.0
      %1240 = vmatpush1.msra.mxu0 0.0
      %1241 = vmatprep.subr.mxu0 0.0
      %1242 = vmatpush1.msra.mxu0 0.0
      %1243 = vmatprep.subr.mxu0 0.0
      %1244 = vmatpush1.msra.mxu0 0.0
      %1245 = vmatprep.subr.mxu0 0.0
      %1246 = vmatpush1.msra.mxu0 0.0
      %1247 = vmatprep.subr.mxu0 0.0
      %1248 = vmatpush1.msra.mxu0 0.0
      %1249 = vmatprep.subr.mxu0 0.0
      %1250 = vmatpush1.msra.mxu0 0.0
      %1251 = vmatprep.subr.mxu0 0.0
      %1252 = vmatpush1.msra.mxu0 0.0
      %1253 = vmatprep.subr.mxu0 0.0
      %1254 = vmatpush1.msra.mxu0 0.0
      %1255 = vmatprep.subr.mxu0 0.0
      %1256 = vmatpush1.msra.mxu0 0.0
      %1257 = vmatprep.subr.mxu0 0.0
      %1258 = vmatpush1.msra.mxu0 0.0
      %1259 = vmatprep.mubr.f32.mxu0 0.0
      %1260 = vmatmul.mubr.f32.gmra.mrb[0].mxu0 %v1097
      %v1261 = vpop.f32.mrb[0].mxu0
      %v1262 = vadd.f32 0.0, %v1261
      %v1263 = vpop.f32.mrb[0].mxu0
      %1264 = vmatprep.mubr.f32.mxu0 0.0
      %1265 = vmatmul.mubr.f32.gmra.mrb[0].mxu0 %v1100
      %v1266 = vpop.f32.mrb[0].mxu0
      %v1267 = vadd.f32 0.0, %v1266
      %v1268 = vpop.f32.mrb[0].mxu0
      %1269 = vmatprep.mubr.f32.mxu0 0.0
      %1270 = vmatmul.mubr.f32.gmra.mrb[0].mxu0 %v1103
      %v1271 = vpop.f32.mrb[0].mxu0
      %v1272 = vadd.f32 0.0, %v1271
      %v1273 = vpop.f32.mrb[0].mxu0
      %1274 = vmatprep.mubr.f32.mxu0 0.0
      %1275 = vmatmul.mubr.f32.gmra.mrb[0].mxu0 %v1106
      %v1276 = vpop.f32.mrb[0].mxu0
      %v1277 = vadd.f32 0.0, %v1276
      %v1278 = vpop.f32.mrb[0].mxu0
      %1279 = vmatprep.mubr.f32.mxu0 0.0
      %1280 = vmatmul.mubr.f32.gmra.mrb[0].mxu0 %v1109
      %v1281 = vpop.f32.mrb[0].mxu0
      %v1282 = vadd.f32 0.0, %v1281
      %v1283 = vpop.f32.mrb[0].mxu0
      %1284 = vmatprep.mubr.f32.mxu0 0.0
      %1285 = vmatmul.mubr.f32.gmra.mrb[0].mxu0 %v1112
      %v1286 = vpop.f32.mrb[0].mxu0
      %v1287 = vadd.f32 0.0, %v1286
      %v1288 = vpop.f32.mrb[0].mxu0
      %1289 = vmatprep.mubr.f32.mxu0 0.0
      %1290 = vmatmul.mubr.f32.gmra.mrb[0].mxu0 %v1115
      %v1291 = vpop.f32.mrb[0].mxu0
      %v1292 = vadd.f32 0.0, %v1291
      %v1293 = vpop.f32.mrb[0].mxu0
      %1294 = vmatprep.mubr.f32.mxu0 0.0
      %1295 = vmatmul.mubr.f32.gmra.mrb[0].mxu0 %v1118
      %v1296 = vpop.f32.mrb[0].mxu0
      %v1297 = vadd.f32 0.0, %v1296
      %v1298 = vpop.f32.mrb[0].mxu0
      %1299 = vmatprep.mubr.f32.mxu0 0.0
      %1300 = vmatmul.mubr.f32.gmra.mrb[0].mxu0 %v1121
      %v1301 = vpop.f32.mrb[0].mxu0
      %v1302 = vadd.f32 0.0, %v1301
      %v1303 = vpop.f32.mrb[0].mxu0
      %1304 = vmatprep.mubr.f32.mxu0 0.0
      %1305 = vmatmul.mubr.f32.gmra.mrb[0].mxu0 %v1124
      %v1306 = vpop.f32.mrb[0].mxu0
      %v1307 = vadd.f32 0.0, %v1306
      %v1308 = vpop.f32.mrb[0].mxu0
      %1309 = vmatprep.mubr.f32.mxu0 0.0
      %1310 = vmatmul.mubr.f32.gmra.mrb[0].mxu0 %v1127
      %v1311 = vpop.f32.mrb[0].mxu0
      %v1312 = vadd.f32 0.0, %v1311
      %v1313 = vpop.f32.mrb[0].mxu0
      %1314 = vmatprep.mubr.f32.mxu0 0.0
      %1315 = vmatmul.mubr.f32.gmra.mrb[0].mxu0 %v1130
      %v1316 = vpop.f32.mrb[0].mxu0
      %v1317 = vadd.f32 0.0, %v1316
      %v1318 = vpop.f32.mrb[0].mxu0
      %1319 = vmatprep.mubr.f32.mxu0 0.0
      %1320 = vmatmul.mubr.f32.gmra.mrb[0].mxu0 %v1133
      %v1321 = vpop.f32.mrb[0].mxu0
      %v1322 = vadd.f32 0.0, %v1321
      %v1323 = vpop.f32.mrb[0].mxu0
      %1324 = vmatprep.mubr.f32.mxu0 0.0
      %1325 = vmatmul.mubr.f32.gmra.mrb[0].mxu0 %v1136
      %v1326 = vpop.f32.mrb[0].mxu0
      %v1327 = vadd.f32 0.0, %v1326
      %v1328 = vpop.f32.mrb[0].mxu0
      %1329 = vmatprep.mubr.f32.mxu0 0.0
      %1330 = vmatmul.mubr.f32.gmra.mrb[0].mxu0 %v1139
      %v1331 = vpop.f32.mrb[0].mxu0
      %v1332 = vadd.f32 0.0, %v1331
      %v1333 = vpop.f32.mrb[0].mxu0
      %1334 = vmatprep.mubr.f32.mxu0 0.0
      %1335 = vmatmul.mubr.f32.gmra.mrb[0].mxu0 %v1142
      %v1336 = vpop.f32.mrb[0].mxu0
      %v1337 = vadd.f32 0.0, %v1336
      %v1338 = vpop.f32.mrb[0].mxu0
      %1339 = vmatprep.mubr.f32.mxu0 0.0
      %1340 = vmatmul.mubr.f32.gmra.mrb[0].mxu0 %v1145
      %v1341 = vpop.f32.mrb[0].mxu0
      %v1342 = vadd.f32 0.0, %v1341
      %v1343 = vpop.f32.mrb[0].mxu0
      %1344 = vmatprep.mubr.f32.mxu0 0.0
      %1345 = vmatmul.mubr.f32.gmra.mrb[0].mxu0 %v1148
      %v1346 = vpop.f32.mrb[0].mxu0
      %v1347 = vadd.f32 0.0, %v1346
      %v1348 = vpop.f32.mrb[0].mxu0
      %1349 = vmatprep.mubr.f32.mxu0 0.0
      %1350 = vmatmul.mubr.f32.gmra.mrb[0].mxu0 %v1151
      %v1351 = vpop.f32.mrb[0].mxu0
      %v1352 = vadd.f32 0.0, %v1351
      %v1353 = vpop.f32.mrb[0].mxu0
      %1354 = vmatprep.mubr.f32.mxu0 0.0
      %1355 = vmatmul.mubr.f32.gmra.mrb[0].mxu0 %v1154
      %v1356 = vpop.f32.mrb[0].mxu0
      %v1357 = vadd.f32 0.0, %v1356
      %v1358 = vpop.f32.mrb[0].mxu0
      %1359 = vmatprep.mubr.f32.mxu0 0.0
      %1360 = vmatmul.mubr.f32.gmra.mrb[0].mxu0 %v1157
      %v1361 = vpop.f32.mrb[0].mxu0
      %v1362 = vadd.f32 0.0, %v1361
      %v1363 = vpop.f32.mrb[0].mxu0
      %1364 = vmatprep.mubr.f32.mxu0 0.0
      %1365 = vmatmul.mubr.f32.gmra.mrb[0].mxu0 %v1160
      %v1366 = vpop.f32.mrb[0].mxu0
      %v1367 = vadd.f32 0.0, %v1366
      %v1368 = vpop.f32.mrb[0].mxu0
      %1369 = vmatprep.mubr.f32.mxu0 0.0
      %1370 = vmatmul.mubr.f32.gmra.mrb[0].mxu0 %v1163
      %v1371 = vpop.f32.mrb[0].mxu0
      %v1372 = vadd.f32 0.0, %v1371
      %v1373 = vpop.f32.mrb[0].mxu0
      %1374 = vmatprep.mubr.f32.mxu0 0.0
      %1375 = vmatmul.mubr.f32.gmra.mrb[0].mxu0 %v1166
      %v1376 = vpop.f32.mrb[0].mxu0
      %v1377 = vadd.f32 0.0, %v1376
      %v1378 = vpop.f32.mrb[0].mxu0
      %1379 = vmatprep.mubr.f32.mxu0 0.0
      %1380 = vmatmul.mubr.f32.gmra.mrb[0].mxu0 %v1169
      %v1381 = vpop.f32.mrb[0].mxu0
      %v1382 = vadd.f32 0.0, %v1381
      %v1383 = vpop.f32.mrb[0].mxu0
      %1384 = vmatprep.mubr.f32.mxu0 0.0
      %1385 = vmatmul.mubr.f32.gmra.mrb[0].mxu0 %v1172
      %v1386 = vpop.f32.mrb[0].mxu0
      %v1387 = vadd.f32 0.0, %v1386
      %v1388 = vpop.f32.mrb[0].mxu0
      %1389 = vmatprep.mubr.f32.mxu0 0.0
      %1390 = vmatmul.mubr.f32.gmra.mrb[0].mxu0 %v1175
      %v1391 = vpop.f32.mrb[0].mxu0
      %v1392 = vadd.f32 0.0, %v1391
      %v1393 = vpop.f32.mrb[0].mxu0
      %1394 = vmatprep.mubr.f32.mxu0 0.0
      %1395 = vmatmul.mubr.f32.gmra.mrb[0].mxu0 %v1178
      %v1396 = vpop.f32.mrb[0].mxu0
      %v1397 = vadd.f32 0.0, %v1396
      %v1398 = vpop.f32.mrb[0].mxu0
      %1399 = vmatprep.mubr.f32.mxu0 0.0
      %1400 = vmatmul.mubr.f32.gmra.mrb[0].mxu0 %v1181
      %v1401 = vpop.f32.mrb[0].mxu0
      %v1402 = vadd.f32 0.0, %v1401
      %v1403 = vpop.f32.mrb[0].mxu0
      %1404 = vmatprep.mubr.f32.mxu0 0.0
      %1405 = vmatmul.mubr.f32.gmra.mrb[0].mxu0 %v1184
      %v1406 = vpop.f32.mrb[0].mxu0
      %v1407 = vadd.f32 0.0, %v1406
      %v1408 = vpop.f32.mrb[0].mxu0
      %1409 = vmatprep.mubr.f32.mxu0 0.0
      %1410 = vmatmul.mubr.f32.gmra.mrb[0].mxu0 %v1187
      %v1411 = vpop.f32.mrb[0].mxu0
      %v1412 = vadd.f32 0.0, %v1411
      %v1413 = vpop.f32.mrb[0].mxu0
      %1414 = vmatprep.mubr.f32.mxu0 0.0
      %1415 = vmatmul.mubr.f32.gmra.mrb[0].mxu0 %v1190
      %v1416 = vpop.f32.mrb[0].mxu0
      %v1417 = vadd.f32 0.0, %v1416
      %v1418 = vpop.f32.mrb[0].mxu0
      %1419 = vdwg.mxu0
      %v1420 = vadd.f32 %v904, %v1262
      %v1421 = vadd.f32 %v909, %v1267
      %v1422 = vadd.f32 %v914, %v1272
      %v1423 = vadd.f32 %v919, %v1277
      %v1424 = vadd.f32 %v924, %v1282
      %v1425 = vadd.f32 %v929, %v1287
      %v1426 = vadd.f32 %v934, %v1292
      %v1427 = vadd.f32 %v939, %v1297
      %v1428 = vadd.f32 %v944, %v1302
      %v1429 = vadd.f32 %v949, %v1307
      %v1430 = vadd.f32 %v954, %v1312
      %v1431 = vadd.f32 %v959, %v1317
      %v1432 = vadd.f32 %v964, %v1322
      %v1433 = vadd.f32 %v969, %v1327
      %v1434 = vadd.f32 %v974, %v1332
      %v1435 = vadd.f32 %v979, %v1337
      %v1436 = vadd.f32 %v984, %v1342
      %v1437 = vadd.f32 %v989, %v1347
      %v1438 = vadd.f32 %v994, %v1352
      %v1439 = vadd.f32 %v999, %v1357
      %v1440 = vadd.f32 %v1004, %v1362
      %v1441 = vadd.f32 %v1009, %v1367
      %v1442 = vadd.f32 %v1014, %v1372
      %v1443 = vadd.f32 %v1019, %v1377
      %v1444 = vadd.f32 %v1024, %v1382
      %v1445 = vadd.f32 %v1029, %v1387
      %v1446 = vadd.f32 %v1034, %v1392
      %v1447 = vadd.f32 %v1039, %v1397
      %v1448 = vadd.f32 %v1044, %v1402
      %v1449 = vadd.f32 %v1049, %v1407
      %v1450 = vadd.f32 %v1054, %v1412
      %v1451 = vadd.f32 %v1059, %v1417
      %v1452 = vld [vmem:[%s313] sm:$0xff]
      %v1453 = vld [vmem:[%s313 + $0x8] sm:$0xff]
      %v1454 = vld [vmem:[%s313 + $0x18] sm:$0xff]
      %v1455 = vld [vmem:[%s313 + $0x20] sm:$0xff]
      %v1456 = vld [vmem:[%s313 + $0x30] sm:$0xff]
      %v1457 = vld [vmem:[%s313 + $0x38] sm:$0xff]
      %v1458 = vld [vmem:[%s313 + $0x48] sm:$0xff]
      %v1459 = vld [vmem:[%s313 + $0x50] sm:$0xff]
      %v1460 = vld [vmem:[%s313 + $0x60] sm:$0xff]
      %v1461 = vld [vmem:[%s313 + $0x68] sm:$0xff]
      %v1462 = vld [vmem:[%s313 + $0x78] sm:$0xff]
      %v1463 = vld [vmem:[%s313 + $0x80] sm:$0xff]
      %v1464 = vld [vmem:[%s313 + $0x90] sm:$0xff]
      %v1465 = vld [vmem:[%s313 + $0x98] sm:$0xff]
      %v1466 = vld [vmem:[%s313 + $0xa8] sm:$0xff]
      %v1467 = vld [vmem:[%s313 + $0xb0] sm:$0xff]
      %v1468 = vld [vmem:[%s313 + $0xc0] sm:$0xff]
      %v1469 = vld [vmem:[%s313 + $0xc8] sm:$0xff]
      %v1470 = vld [vmem:[%s313 + $0xd8] sm:$0xff]
      %v1471 = vld [vmem:[%s313 + $0xe0] sm:$0xff]
      %v1472 = vld [vmem:[%s313 + $0xf0] sm:$0xff]
      %v1473 = vld [vmem:[%s313 + $0xf8] sm:$0xff]
      %v1474 = vld [vmem:[%s313 + $0x108] sm:$0xff]
      %v1475 = vld [vmem:[%s313 + $0x110] sm:$0xff]
      %v1476 = vld [vmem:[%s313 + $0x120] sm:$0xff]
      %v1477 = vld [vmem:[%s313 + $0x128] sm:$0xff]
      %v1478 = vld [vmem:[%s313 + $0x138] sm:$0xff]
      %v1479 = vld [vmem:[%s313 + $0x140] sm:$0xff]
      %v1480 = vld [vmem:[%s313 + $0x150] sm:$0xff]
      %v1481 = vld [vmem:[%s313 + $0x158] sm:$0xff]
      %v1482 = vld [vmem:[%s313 + $0x168] sm:$0xff]
      %v1483 = vld [vmem:[%s313 + $0x170] sm:$0xff]
      %s1484 = scalar_lea.vmem %s1, 12
      %v1485 = vld [vmem:[%s1484] sm:$0xf]
      %v1487 = vsel %vm225, %v1452, 0
      %v1490 = vsel %vm225, %v1453, 0
      %v1493 = vsel %vm225, %v1454, 0
      %v1496 = vsel %vm225, %v1455, 0
      %v1499 = vsel %vm225, %v1456, 0
      %v1502 = vsel %vm225, %v1457, 0
      %v1505 = vsel %vm225, %v1458, 0
      %v1508 = vsel %vm225, %v1459, 0
      %v1511 = vsel %vm225, %v1460, 0
      %v1514 = vsel %vm225, %v1461, 0
      %v1517 = vsel %vm225, %v1462, 0
      %v1520 = vsel %vm225, %v1463, 0
      %v1523 = vsel %vm225, %v1464, 0
      %v1526 = vsel %vm225, %v1465, 0
      %v1529 = vsel %vm225, %v1466, 0
      %v1532 = vsel %vm225, %v1467, 0
      %v1535 = vsel %vm225, %v1468, 0
      %v1538 = vsel %vm225, %v1469, 0
      %v1541 = vsel %vm225, %v1470, 0
      %v1544 = vsel %vm225, %v1471, 0
      %v1547 = vsel %vm225, %v1472, 0
      %v1550 = vsel %vm225, %v1473, 0
      %v1553 = vsel %vm225, %v1474, 0
      %v1556 = vsel %vm225, %v1475, 0
      %v1559 = vsel %vm225, %v1476, 0
      %v1562 = vsel %vm225, %v1477, 0
      %v1565 = vsel %vm225, %v1478, 0
      %v1568 = vsel %vm225, %v1479, 0
      %v1571 = vsel %vm225, %v1480, 0
      %v1574 = vsel %vm225, %v1481, 0
      %v1577 = vsel %vm225, %v1482, 0
      %v1580 = vsel %vm225, %v1483, 0
      %v1583 = vsel %vm509, %v1485, 0
      %1585 = vmatprep.subr.mxu0 0.0
      %1586 = vmatpush1.msra.mxu0 %v1583
      %1587 = vmatprep.subr.mxu0 0.0
      %1588 = vmatpush1.msra.mxu0 0.0
      %1589 = vmatprep.subr.mxu0 0.0
      %1590 = vmatpush1.msra.mxu0 0.0
      %1591 = vmatprep.subr.mxu0 0.0
      %1592 = vmatpush1.msra.mxu0 0.0
      %1593 = vmatprep.subr.mxu0 0.0
      %1594 = vmatpush1.msra.mxu0 0.0
      %1595 = vmatprep.subr.mxu0 0.0
      %1596 = vmatpush1.msra.mxu0 0.0
      %1597 = vmatprep.subr.mxu0 0.0
      %1598 = vmatpush1.msra.mxu0 0.0
      %1599 = vmatprep.subr.mxu0 0.0
      %1600 = vmatpush1.msra.mxu0 0.0
      %1601 = vmatprep.subr.mxu0 0.0
      %1602 = vmatpush1.msra.mxu0 0.0
      %1603 = vmatprep.subr.mxu0 0.0
      %1604 = vmatpush1.msra.mxu0 0.0
      %1605 = vmatprep.subr.mxu0 0.0
      %1606 = vmatpush1.msra.mxu0 0.0
      %1607 = vmatprep.subr.mxu0 0.0
      %1608 = vmatpush1.msra.mxu0 0.0
      %1609 = vmatprep.subr.mxu0 0.0
      %1610 = vmatpush1.msra.mxu0 0.0
      %1611 = vmatprep.subr.mxu0 0.0
      %1612 = vmatpush1.msra.mxu0 0.0
      %1613 = vmatprep.subr.mxu0 0.0
      %1614 = vmatpush1.msra.mxu0 0.0
      %1615 = vmatprep.subr.mxu0 0.0
      %1616 = vmatpush1.msra.mxu0 0.0
      %1617 = vmatprep.subr.mxu0 0.0
      %1618 = vmatpush1.msra.mxu0 0.0
      %1619 = vmatprep.subr.mxu0 0.0
      %1620 = vmatpush1.msra.mxu0 0.0
      %1621 = vmatprep.subr.mxu0 0.0
      %1622 = vmatpush1.msra.mxu0 0.0
      %1623 = vmatprep.subr.mxu0 0.0
      %1624 = vmatpush1.msra.mxu0 0.0
      %1625 = vmatprep.subr.mxu0 0.0
      %1626 = vmatpush1.msra.mxu0 0.0
      %1627 = vmatprep.subr.mxu0 0.0
      %1628 = vmatpush1.msra.mxu0 0.0
      %1629 = vmatprep.subr.mxu0 0.0
      %1630 = vmatpush1.msra.mxu0 0.0
      %1631 = vmatprep.subr.mxu0 0.0
      %1632 = vmatpush1.msra.mxu0 0.0
      %1633 = vmatprep.subr.mxu0 0.0
      %1634 = vmatpush1.msra.mxu0 0.0
      %1635 = vmatprep.subr.mxu0 0.0
      %1636 = vmatpush1.msra.mxu0 0.0
      %1637 = vmatprep.subr.mxu0 0.0
      %1638 = vmatpush1.msra.mxu0 0.0
      %1639 = vmatprep.subr.mxu0 0.0
      %1640 = vmatpush1.msra.mxu0 0.0
      %1641 = vmatprep.subr.mxu0 0.0
      %1642 = vmatpush1.msra.mxu0 0.0
      %1643 = vmatprep.subr.mxu0 0.0
      %1644 = vmatpush1.msra.mxu0 0.0
      %1645 = vmatprep.subr.mxu0 0.0
      %1646 = vmatpush1.msra.mxu0 0.0
      %1647 = vmatprep.subr.mxu0 0.0
      %1648 = vmatpush1.msra.mxu0 0.0
      %1649 = vmatprep.mubr.f32.mxu0 0.0
      %1650 = vmatmul.mubr.f32.gmra.mrb[0].mxu0 %v1487
      %v1651 = vpop.f32.mrb[0].mxu0
      %v1652 = vadd.f32 0.0, %v1651
      %v1653 = vpop.f32.mrb[0].mxu0
      %1654 = vmatprep.mubr.f32.mxu0 0.0
      %1655 = vmatmul.mubr.f32.gmra.mrb[0].mxu0 %v1490
      %v1656 = vpop.f32.mrb[0].mxu0
      %v1657 = vadd.f32 0.0, %v1656
      %v1658 = vpop.f32.mrb[0].mxu0
      %1659 = vmatprep.mubr.f32.mxu0 0.0
      %1660 = vmatmul.mubr.f32.gmra.mrb[0].mxu0 %v1493
      %v1661 = vpop.f32.mrb[0].mxu0
      %v1662 = vadd.f32 0.0, %v1661
      %v1663 = vpop.f32.mrb[0].mxu0
      %1664 = vmatprep.mubr.f32.mxu0 0.0
      %1665 = vmatmul.mubr.f32.gmra.mrb[0].mxu0 %v1496
      %v1666 = vpop.f32.mrb[0].mxu0
      %v1667 = vadd.f32 0.0, %v1666
      %v1668 = vpop.f32.mrb[0].mxu0
      %1669 = vmatprep.mubr.f32.mxu0 0.0
      %1670 = vmatmul.mubr.f32.gmra.mrb[0].mxu0 %v1499
      %v1671 = vpop.f32.mrb[0].mxu0
      %v1672 = vadd.f32 0.0, %v1671
      %v1673 = vpop.f32.mrb[0].mxu0
      %1674 = vmatprep.mubr.f32.mxu0 0.0
      %1675 = vmatmul.mubr.f32.gmra.mrb[0].mxu0 %v1502
      %v1676 = vpop.f32.mrb[0].mxu0
      %v1677 = vadd.f32 0.0, %v1676
      %v1678 = vpop.f32.mrb[0].mxu0
      %1679 = vmatprep.mubr.f32.mxu0 0.0
      %1680 = vmatmul.mubr.f32.gmra.mrb[0].mxu0 %v1505
      %v1681 = vpop.f32.mrb[0].mxu0
      %v1682 = vadd.f32 0.0, %v1681
      %v1683 = vpop.f32.mrb[0].mxu0
      %1684 = vmatprep.mubr.f32.mxu0 0.0
      %1685 = vmatmul.mubr.f32.gmra.mrb[0].mxu0 %v1508
      %v1686 = vpop.f32.mrb[0].mxu0
      %v1687 = vadd.f32 0.0, %v1686
      %v1688 = vpop.f32.mrb[0].mxu0
      %1689 = vmatprep.mubr.f32.mxu0 0.0
      %1690 = vmatmul.mubr.f32.gmra.mrb[0].mxu0 %v1511
      %v1691 = vpop.f32.mrb[0].mxu0
      %v1692 = vadd.f32 0.0, %v1691
      %v1693 = vpop.f32.mrb[0].mxu0
      %1694 = vmatprep.mubr.f32.mxu0 0.0
      %1695 = vmatmul.mubr.f32.gmra.mrb[0].mxu0 %v1514
      %v1696 = vpop.f32.mrb[0].mxu0
      %v1697 = vadd.f32 0.0, %v1696
      %v1698 = vpop.f32.mrb[0].mxu0
      %1699 = vmatprep.mubr.f32.mxu0 0.0
      %1700 = vmatmul.mubr.f32.gmra.mrb[0].mxu0 %v1517
      %v1701 = vpop.f32.mrb[0].mxu0
      %v1702 = vadd.f32 0.0, %v1701
      %v1703 = vpop.f32.mrb[0].mxu0
      %1704 = vmatprep.mubr.f32.mxu0 0.0
      %1705 = vmatmul.mubr.f32.gmra.mrb[0].mxu0 %v1520
      %v1706 = vpop.f32.mrb[0].mxu0
      %v1707 = vadd.f32 0.0, %v1706
      %v1708 = vpop.f32.mrb[0].mxu0
      %1709 = vmatprep.mubr.f32.mxu0 0.0
      %1710 = vmatmul.mubr.f32.gmra.mrb[0].mxu0 %v1523
      %v1711 = vpop.f32.mrb[0].mxu0
      %v1712 = vadd.f32 0.0, %v1711
      %v1713 = vpop.f32.mrb[0].mxu0
      %1714 = vmatprep.mubr.f32.mxu0 0.0
      %1715 = vmatmul.mubr.f32.gmra.mrb[0].mxu0 %v1526
      %v1716 = vpop.f32.mrb[0].mxu0
      %v1717 = vadd.f32 0.0, %v1716
      %v1718 = vpop.f32.mrb[0].mxu0
      %1719 = vmatprep.mubr.f32.mxu0 0.0
      %1720 = vmatmul.mubr.f32.gmra.mrb[0].mxu0 %v1529
      %v1721 = vpop.f32.mrb[0].mxu0
      %v1722 = vadd.f32 0.0, %v1721
      %v1723 = vpop.f32.mrb[0].mxu0
      %1724 = vmatprep.mubr.f32.mxu0 0.0
      %1725 = vmatmul.mubr.f32.gmra.mrb[0].mxu0 %v1532
      %v1726 = vpop.f32.mrb[0].mxu0
      %v1727 = vadd.f32 0.0, %v1726
      %v1728 = vpop.f32.mrb[0].mxu0
      %1729 = vmatprep.mubr.f32.mxu0 0.0
      %1730 = vmatmul.mubr.f32.gmra.mrb[0].mxu0 %v1535
      %v1731 = vpop.f32.mrb[0].mxu0
      %v1732 = vadd.f32 0.0, %v1731
      %v1733 = vpop.f32.mrb[0].mxu0
      %1734 = vmatprep.mubr.f32.mxu0 0.0
      %1735 = vmatmul.mubr.f32.gmra.mrb[0].mxu0 %v1538
      %v1736 = vpop.f32.mrb[0].mxu0
      %v1737 = vadd.f32 0.0, %v1736
      %v1738 = vpop.f32.mrb[0].mxu0
      %1739 = vmatprep.mubr.f32.mxu0 0.0
      %1740 = vmatmul.mubr.f32.gmra.mrb[0].mxu0 %v1541
      %v1741 = vpop.f32.mrb[0].mxu0
      %v1742 = vadd.f32 0.0, %v1741
      %v1743 = vpop.f32.mrb[0].mxu0
      %1744 = vmatprep.mubr.f32.mxu0 0.0
      %1745 = vmatmul.mubr.f32.gmra.mrb[0].mxu0 %v1544
      %v1746 = vpop.f32.mrb[0].mxu0
      %v1747 = vadd.f32 0.0, %v1746
      %v1748 = vpop.f32.mrb[0].mxu0
      %1749 = vmatprep.mubr.f32.mxu0 0.0
      %1750 = vmatmul.mubr.f32.gmra.mrb[0].mxu0 %v1547
      %v1751 = vpop.f32.mrb[0].mxu0
      %v1752 = vadd.f32 0.0, %v1751
      %v1753 = vpop.f32.mrb[0].mxu0
      %1754 = vmatprep.mubr.f32.mxu0 0.0
      %1755 = vmatmul.mubr.f32.gmra.mrb[0].mxu0 %v1550
      %v1756 = vpop.f32.mrb[0].mxu0
      %v1757 = vadd.f32 0.0, %v1756
      %v1758 = vpop.f32.mrb[0].mxu0
      %1759 = vmatprep.mubr.f32.mxu0 0.0
      %1760 = vmatmul.mubr.f32.gmra.mrb[0].mxu0 %v1553
      %v1761 = vpop.f32.mrb[0].mxu0
      %v1762 = vadd.f32 0.0, %v1761
      %v1763 = vpop.f32.mrb[0].mxu0
      %1764 = vmatprep.mubr.f32.mxu0 0.0
      %1765 = vmatmul.mubr.f32.gmra.mrb[0].mxu0 %v1556
      %v1766 = vpop.f32.mrb[0].mxu0
      %v1767 = vadd.f32 0.0, %v1766
      %v1768 = vpop.f32.mrb[0].mxu0
      %1769 = vmatprep.mubr.f32.mxu0 0.0
      %1770 = vmatmul.mubr.f32.gmra.mrb[0].mxu0 %v1559
      %v1771 = vpop.f32.mrb[0].mxu0
      %v1772 = vadd.f32 0.0, %v1771
      %v1773 = vpop.f32.mrb[0].mxu0
      %1774 = vmatprep.mubr.f32.mxu0 0.0
      %1775 = vmatmul.mubr.f32.gmra.mrb[0].mxu0 %v1562
      %v1776 = vpop.f32.mrb[0].mxu0
      %v1777 = vadd.f32 0.0, %v1776
      %v1778 = vpop.f32.mrb[0].mxu0
      %1779 = vmatprep.mubr.f32.mxu0 0.0
      %1780 = vmatmul.mubr.f32.gmra.mrb[0].mxu0 %v1565
      %v1781 = vpop.f32.mrb[0].mxu0
      %v1782 = vadd.f32 0.0, %v1781
      %v1783 = vpop.f32.mrb[0].mxu0
      %1784 = vmatprep.mubr.f32.mxu0 0.0
      %1785 = vmatmul.mubr.f32.gmra.mrb[0].mxu0 %v1568
      %v1786 = vpop.f32.mrb[0].mxu0
      %v1787 = vadd.f32 0.0, %v1786
      %v1788 = vpop.f32.mrb[0].mxu0
      %1789 = vmatprep.mubr.f32.mxu0 0.0
      %1790 = vmatmul.mubr.f32.gmra.mrb[0].mxu0 %v1571
      %v1791 = vpop.f32.mrb[0].mxu0
      %v1792 = vadd.f32 0.0, %v1791
      %v1793 = vpop.f32.mrb[0].mxu0
      %1794 = vmatprep.mubr.f32.mxu0 0.0
      %1795 = vmatmul.mubr.f32.gmra.mrb[0].mxu0 %v1574
      %v1796 = vpop.f32.mrb[0].mxu0
      %v1797 = vadd.f32 0.0, %v1796
      %v1798 = vpop.f32.mrb[0].mxu0
      %1799 = vmatprep.mubr.f32.mxu0 0.0
      %1800 = vmatmul.mubr.f32.gmra.mrb[0].mxu0 %v1577
      %v1801 = vpop.f32.mrb[0].mxu0
      %v1802 = vadd.f32 0.0, %v1801
      %v1803 = vpop.f32.mrb[0].mxu0
      %1804 = vmatprep.mubr.f32.mxu0 0.0
      %1805 = vmatmul.mubr.f32.gmra.mrb[0].mxu0 %v1580
      %v1806 = vpop.f32.mrb[0].mxu0
      %v1807 = vadd.f32 0.0, %v1806
      %v1808 = vpop.f32.mrb[0].mxu0
      %1809 = vdwg.mxu0
      %v1810 = vadd.f32 %v1420, %v1652
      %v1811 = vadd.f32 %v1421, %v1657
      %v1812 = vadd.f32 %v1422, %v1662
      %v1813 = vadd.f32 %v1423, %v1667
      %v1814 = vadd.f32 %v1424, %v1672
      %v1815 = vadd.f32 %v1425, %v1677
      %v1816 = vadd.f32 %v1426, %v1682
      %v1817 = vadd.f32 %v1427, %v1687
      %v1818 = vadd.f32 %v1428, %v1692
      %v1819 = vadd.f32 %v1429, %v1697
      %v1820 = vadd.f32 %v1430, %v1702
      %v1821 = vadd.f32 %v1431, %v1707
      %v1822 = vadd.f32 %v1432, %v1712
      %v1823 = vadd.f32 %v1433, %v1717
      %v1824 = vadd.f32 %v1434, %v1722
      %v1825 = vadd.f32 %v1435, %v1727
      %v1826 = vadd.f32 %v1436, %v1732
      %v1827 = vadd.f32 %v1437, %v1737
      %v1828 = vadd.f32 %v1438, %v1742
      %v1829 = vadd.f32 %v1439, %v1747
      %v1830 = vadd.f32 %v1440, %v1752
      %v1831 = vadd.f32 %v1441, %v1757
      %v1832 = vadd.f32 %v1442, %v1762
      %v1833 = vadd.f32 %v1443, %v1767
      %v1834 = vadd.f32 %v1444, %v1772
      %v1835 = vadd.f32 %v1445, %v1777
      %v1836 = vadd.f32 %v1446, %v1782
      %v1837 = vadd.f32 %v1447, %v1787
      %v1838 = vadd.f32 %v1448, %v1792
      %v1839 = vadd.f32 %v1449, %v1797
      %v1840 = vadd.f32 %v1450, %v1802
      %v1841 = vadd.f32 %v1451, %v1807
      %v1842 = vld [vmem:[%s313 + $0x1] sm:$0xff]
      %v1843 = vld [vmem:[%s313 + $0x9] sm:$0xff]
      %v1844 = vld [vmem:[%s313 + $0x19] sm:$0xff]
      %v1845 = vld [vmem:[%s313 + $0x21] sm:$0xff]
      %v1846 = vld [vmem:[%s313 + $0x31] sm:$0xff]
      %v1847 = vld [vmem:[%s313 + $0x39] sm:$0xff]
      %v1848 = vld [vmem:[%s313 + $0x49] sm:$0xff]
      %v1849 = vld [vmem:[%s313 + $0x51] sm:$0xff]
      %v1850 = vld [vmem:[%s313 + $0x61] sm:$0xff]
      %v1851 = vld [vmem:[%s313 + $0x69] sm:$0xff]
      %v1852 = vld [vmem:[%s313 + $0x79] sm:$0xff]
      %v1853 = vld [vmem:[%s313 + $0x81] sm:$0xff]
      %v1854 = vld [vmem:[%s313 + $0x91] sm:$0xff]
      %v1855 = vld [vmem:[%s313 + $0x99] sm:$0xff]
      %v1856 = vld [vmem:[%s313 + $0xa9] sm:$0xff]
      %v1857 = vld [vmem:[%s313 + $0xb1] sm:$0xff]
      %v1858 = vld [vmem:[%s313 + $0xc1] sm:$0xff]
      %v1859 = vld [vmem:[%s313 + $0xc9] sm:$0xff]
      %v1860 = vld [vmem:[%s313 + $0xd9] sm:$0xff]
      %v1861 = vld [vmem:[%s313 + $0xe1] sm:$0xff]
      %v1862 = vld [vmem:[%s313 + $0xf1] sm:$0xff]
      %v1863 = vld [vmem:[%s313 + $0xf9] sm:$0xff]
      %v1864 = vld [vmem:[%s313 + $0x109] sm:$0xff]
      %v1865 = vld [vmem:[%s313 + $0x111] sm:$0xff]
      %v1866 = vld [vmem:[%s313 + $0x121] sm:$0xff]
      %v1867 = vld [vmem:[%s313 + $0x129] sm:$0xff]
      %v1868 = vld [vmem:[%s313 + $0x139] sm:$0xff]
      %v1869 = vld [vmem:[%s313 + $0x141] sm:$0xff]
      %v1870 = vld [vmem:[%s313 + $0x151] sm:$0xff]
      %v1871 = vld [vmem:[%s313 + $0x159] sm:$0xff]
      %v1872 = vld [vmem:[%s313 + $0x169] sm:$0xff]
      %v1873 = vld [vmem:[%s313 + $0x171] sm:$0xff]
      %s1874 = scalar_lea.vmem %s1, 16
      %v1875 = vld [vmem:[%s1874] sm:$0xf]
      %v1877 = vsel %vm225, %v1842, 0
      %v1880 = vsel %vm225, %v1843, 0
      %v1883 = vsel %vm225, %v1844, 0
      %v1886 = vsel %vm225, %v1845, 0
      %v1889 = vsel %vm225, %v1846, 0
      %v1892 = vsel %vm225, %v1847, 0
      %v1895 = vsel %vm225, %v1848, 0
      %v1898 = vsel %vm225, %v1849, 0
      %v1901 = vsel %vm225, %v1850, 0
      %v1904 = vsel %vm225, %v1851, 0
      %v1907 = vsel %vm225, %v1852, 0
      %v1910 = vsel %vm225, %v1853, 0
      %v1913 = vsel %vm225, %v1854, 0
      %v1916 = vsel %vm225, %v1855, 0
      %v1919 = vsel %vm225, %v1856, 0
      %v1922 = vsel %vm225, %v1857, 0
      %v1925 = vsel %vm225, %v1858, 0
      %v1928 = vsel %vm225, %v1859, 0
      %v1931 = vsel %vm225, %v1860, 0
      %v1934 = vsel %vm225, %v1861, 0
      %v1937 = vsel %vm225, %v1862, 0
      %v1940 = vsel %vm225, %v1863, 0
      %v1943 = vsel %vm225, %v1864, 0
      %v1946 = vsel %vm225, %v1865, 0
      %v1949 = vsel %vm225, %v1866, 0
      %v1952 = vsel %vm225, %v1867, 0
      %v1955 = vsel %vm225, %v1868, 0
      %v1958 = vsel %vm225, %v1869, 0
      %v1961 = vsel %vm225, %v1870, 0
      %v1964 = vsel %vm225, %v1871, 0
      %v1967 = vsel %vm225, %v1872, 0
      %v1970 = vsel %vm225, %v1873, 0
      %v1973 = vsel %vm509, %v1875, 0
      %1975 = vmatprep.subr.mxu0 0.0
      %1976 = vmatpush1.msra.mxu0 %v1973
      %1977 = vmatprep.subr.mxu0 0.0
      %1978 = vmatpush1.msra.mxu0 0.0
      %1979 = vmatprep.subr.mxu0 0.0
      %1980 = vmatpush1.msra.mxu0 0.0
      %1981 = vmatprep.subr.mxu0 0.0
      %1982 = vmatpush1.msra.mxu0 0.0
      %1983 = vmatprep.subr.mxu0 0.0
      %1984 = vmatpush1.msra.mxu0 0.0
      %1985 = vmatprep.subr.mxu0 0.0
      %1986 = vmatpush1.msra.mxu0 0.0
      %1987 = vmatprep.subr.mxu0 0.0
      %1988 = vmatpush1.msra.mxu0 0.0
      %1989 = vmatprep.subr.mxu0 0.0
      %1990 = vmatpush1.msra.mxu0 0.0
      %1991 = vmatprep.subr.mxu0 0.0
      %1992 = vmatpush1.msra.mxu0 0.0
      %1993 = vmatprep.subr.mxu0 0.0
      %1994 = vmatpush1.msra.mxu0 0.0
      %1995 = vmatprep.subr.mxu0 0.0
      %1996 = vmatpush1.msra.mxu0 0.0
      %1997 = vmatprep.subr.mxu0 0.0
      %1998 = vmatpush1.msra.mxu0 0.0
      %1999 = vmatprep.subr.mxu0 0.0
      %2000 = vmatpush1.msra.mxu0 0.0
      %2001 = vmatprep.subr.mxu0 0.0
      %2002 = vmatpush1.msra.mxu0 0.0
      %2003 = vmatprep.subr.mxu0 0.0
      %2004 = vmatpush1.msra.mxu0 0.0
      %2005 = vmatprep.subr.mxu0 0.0
      %2006 = vmatpush1.msra.mxu0 0.0
      %2007 = vmatprep.subr.mxu0 0.0
      %2008 = vmatpush1.msra.mxu0 0.0
      %2009 = vmatprep.subr.mxu0 0.0
      %2010 = vmatpush1.msra.mxu0 0.0
      %2011 = vmatprep.subr.mxu0 0.0
      %2012 = vmatpush1.msra.mxu0 0.0
      %2013 = vmatprep.subr.mxu0 0.0
      %2014 = vmatpush1.msra.mxu0 0.0
      %2015 = vmatprep.subr.mxu0 0.0
      %2016 = vmatpush1.msra.mxu0 0.0
      %2017 = vmatprep.subr.mxu0 0.0
      %2018 = vmatpush1.msra.mxu0 0.0
      %2019 = vmatprep.subr.mxu0 0.0
      %2020 = vmatpush1.msra.mxu0 0.0
      %2021 = vmatprep.subr.mxu0 0.0
      %2022 = vmatpush1.msra.mxu0 0.0
      %2023 = vmatprep.subr.mxu0 0.0
      %2024 = vmatpush1.msra.mxu0 0.0
      %2025 = vmatprep.subr.mxu0 0.0
      %2026 = vmatpush1.msra.mxu0 0.0
      %2027 = vmatprep.subr.mxu0 0.0
      %2028 = vmatpush1.msra.mxu0 0.0
      %2029 = vmatprep.subr.mxu0 0.0
      %2030 = vmatpush1.msra.mxu0 0.0
      %2031 = vmatprep.subr.mxu0 0.0
      %2032 = vmatpush1.msra.mxu0 0.0
      %2033 = vmatprep.subr.mxu0 0.0
      %2034 = vmatpush1.msra.mxu0 0.0
      %2035 = vmatprep.subr.mxu0 0.0
      %2036 = vmatpush1.msra.mxu0 0.0
      %2037 = vmatprep.subr.mxu0 0.0
      %2038 = vmatpush1.msra.mxu0 0.0
      %2039 = vmatprep.mubr.f32.mxu0 0.0
      %2040 = vmatmul.mubr.f32.gmra.mrb[0].mxu0 %v1877
      %v2041 = vpop.f32.mrb[0].mxu0
      %v2042 = vadd.f32 0.0, %v2041
      %v2043 = vpop.f32.mrb[0].mxu0
      %2044 = vmatprep.mubr.f32.mxu0 0.0
      %2045 = vmatmul.mubr.f32.gmra.mrb[0].mxu0 %v1880
      %v2046 = vpop.f32.mrb[0].mxu0
      %v2047 = vadd.f32 0.0, %v2046
      %v2048 = vpop.f32.mrb[0].mxu0
      %2049 = vmatprep.mubr.f32.mxu0 0.0
      %2050 = vmatmul.mubr.f32.gmra.mrb[0].mxu0 %v1883
      %v2051 = vpop.f32.mrb[0].mxu0
      %v2052 = vadd.f32 0.0, %v2051
      %v2053 = vpop.f32.mrb[0].mxu0
      %2054 = vmatprep.mubr.f32.mxu0 0.0
      %2055 = vmatmul.mubr.f32.gmra.mrb[0].mxu0 %v1886
      %v2056 = vpop.f32.mrb[0].mxu0
      %v2057 = vadd.f32 0.0, %v2056
      %v2058 = vpop.f32.mrb[0].mxu0
      %2059 = vmatprep.mubr.f32.mxu0 0.0
      %2060 = vmatmul.mubr.f32.gmra.mrb[0].mxu0 %v1889
      %v2061 = vpop.f32.mrb[0].mxu0
      %v2062 = vadd.f32 0.0, %v2061
      %v2063 = vpop.f32.mrb[0].mxu0
      %2064 = vmatprep.mubr.f32.mxu0 0.0
      %2065 = vmatmul.mubr.f32.gmra.mrb[0].mxu0 %v1892
      %v2066 = vpop.f32.mrb[0].mxu0
      %v2067 = vadd.f32 0.0, %v2066
      %v2068 = vpop.f32.mrb[0].mxu0
      %2069 = vmatprep.mubr.f32.mxu0 0.0
      %2070 = vmatmul.mubr.f32.gmra.mrb[0].mxu0 %v1895
      %v2071 = vpop.f32.mrb[0].mxu0
      %v2072 = vadd.f32 0.0, %v2071
      %v2073 = vpop.f32.mrb[0].mxu0
      %2074 = vmatprep.mubr.f32.mxu0 0.0
      %2075 = vmatmul.mubr.f32.gmra.mrb[0].mxu0 %v1898
      %v2076 = vpop.f32.mrb[0].mxu0
      %v2077 = vadd.f32 0.0, %v2076
      %v2078 = vpop.f32.mrb[0].mxu0
      %2079 = vmatprep.mubr.f32.mxu0 0.0
      %2080 = vmatmul.mubr.f32.gmra.mrb[0].mxu0 %v1901
      %v2081 = vpop.f32.mrb[0].mxu0
      %v2082 = vadd.f32 0.0, %v2081
      %v2083 = vpop.f32.mrb[0].mxu0
      %2084 = vmatprep.mubr.f32.mxu0 0.0
      %2085 = vmatmul.mubr.f32.gmra.mrb[0].mxu0 %v1904
      %v2086 = vpop.f32.mrb[0].mxu0
      %v2087 = vadd.f32 0.0, %v2086
      %v2088 = vpop.f32.mrb[0].mxu0
      %2089 = vmatprep.mubr.f32.mxu0 0.0
      %2090 = vmatmul.mubr.f32.gmra.mrb[0].mxu0 %v1907
      %v2091 = vpop.f32.mrb[0].mxu0
      %v2092 = vadd.f32 0.0, %v2091
      %v2093 = vpop.f32.mrb[0].mxu0
      %2094 = vmatprep.mubr.f32.mxu0 0.0
      %2095 = vmatmul.mubr.f32.gmra.mrb[0].mxu0 %v1910
      %v2096 = vpop.f32.mrb[0].mxu0
      %v2097 = vadd.f32 0.0, %v2096
      %v2098 = vpop.f32.mrb[0].mxu0
      %2099 = vmatprep.mubr.f32.mxu0 0.0
      %2100 = vmatmul.mubr.f32.gmra.mrb[0].mxu0 %v1913
      %v2101 = vpop.f32.mrb[0].mxu0
      %v2102 = vadd.f32 0.0, %v2101
      %v2103 = vpop.f32.mrb[0].mxu0
      %2104 = vmatprep.mubr.f32.mxu0 0.0
      %2105 = vmatmul.mubr.f32.gmra.mrb[0].mxu0 %v1916
      %v2106 = vpop.f32.mrb[0].mxu0
      %v2107 = vadd.f32 0.0, %v2106
      %v2108 = vpop.f32.mrb[0].mxu0
      %2109 = vmatprep.mubr.f32.mxu0 0.0
      %2110 = vmatmul.mubr.f32.gmra.mrb[0].mxu0 %v1919
      %v2111 = vpop.f32.mrb[0].mxu0
      %v2112 = vadd.f32 0.0, %v2111
      %v2113 = vpop.f32.mrb[0].mxu0
      %2114 = vmatprep.mubr.f32.mxu0 0.0
      %2115 = vmatmul.mubr.f32.gmra.mrb[0].mxu0 %v1922
      %v2116 = vpop.f32.mrb[0].mxu0
      %v2117 = vadd.f32 0.0, %v2116
      %v2118 = vpop.f32.mrb[0].mxu0
      %2119 = vmatprep.mubr.f32.mxu0 0.0
      %2120 = vmatmul.mubr.f32.gmra.mrb[0].mxu0 %v1925
      %v2121 = vpop.f32.mrb[0].mxu0
      %v2122 = vadd.f32 0.0, %v2121
      %v2123 = vpop.f32.mrb[0].mxu0
      %2124 = vmatprep.mubr.f32.mxu0 0.0
      %2125 = vmatmul.mubr.f32.gmra.mrb[0].mxu0 %v1928
      %v2126 = vpop.f32.mrb[0].mxu0
      %v2127 = vadd.f32 0.0, %v2126
      %v2128 = vpop.f32.mrb[0].mxu0
      %2129 = vmatprep.mubr.f32.mxu0 0.0
      %2130 = vmatmul.mubr.f32.gmra.mrb[0].mxu0 %v1931
      %v2131 = vpop.f32.mrb[0].mxu0
      %v2132 = vadd.f32 0.0, %v2131
      %v2133 = vpop.f32.mrb[0].mxu0
      %2134 = vmatprep.mubr.f32.mxu0 0.0
      %2135 = vmatmul.mubr.f32.gmra.mrb[0].mxu0 %v1934
      %v2136 = vpop.f32.mrb[0].mxu0
      %v2137 = vadd.f32 0.0, %v2136
      %v2138 = vpop.f32.mrb[0].mxu0
      %2139 = vmatprep.mubr.f32.mxu0 0.0
      %2140 = vmatmul.mubr.f32.gmra.mrb[0].mxu0 %v1937
      %v2141 = vpop.f32.mrb[0].mxu0
      %v2142 = vadd.f32 0.0, %v2141
      %v2143 = vpop.f32.mrb[0].mxu0
      %2144 = vmatprep.mubr.f32.mxu0 0.0
      %2145 = vmatmul.mubr.f32.gmra.mrb[0].mxu0 %v1940
      %v2146 = vpop.f32.mrb[0].mxu0
      %v2147 = vadd.f32 0.0, %v2146
      %v2148 = vpop.f32.mrb[0].mxu0
      %2149 = vmatprep.mubr.f32.mxu0 0.0
      %2150 = vmatmul.mubr.f32.gmra.mrb[0].mxu0 %v1943
      %v2151 = vpop.f32.mrb[0].mxu0
      %v2152 = vadd.f32 0.0, %v2151
      %v2153 = vpop.f32.mrb[0].mxu0
      %2154 = vmatprep.mubr.f32.mxu0 0.0
      %2155 = vmatmul.mubr.f32.gmra.mrb[0].mxu0 %v1946
      %v2156 = vpop.f32.mrb[0].mxu0
      %v2157 = vadd.f32 0.0, %v2156
      %v2158 = vpop.f32.mrb[0].mxu0
      %2159 = vmatprep.mubr.f32.mxu0 0.0
      %2160 = vmatmul.mubr.f32.gmra.mrb[0].mxu0 %v1949
      %v2161 = vpop.f32.mrb[0].mxu0
      %v2162 = vadd.f32 0.0, %v2161
      %v2163 = vpop.f32.mrb[0].mxu0
      %2164 = vmatprep.mubr.f32.mxu0 0.0
      %2165 = vmatmul.mubr.f32.gmra.mrb[0].mxu0 %v1952
      %v2166 = vpop.f32.mrb[0].mxu0
      %v2167 = vadd.f32 0.0, %v2166
      %v2168 = vpop.f32.mrb[0].mxu0
      %2169 = vmatprep.mubr.f32.mxu0 0.0
      %2170 = vmatmul.mubr.f32.gmra.mrb[0].mxu0 %v1955
      %v2171 = vpop.f32.mrb[0].mxu0
      %v2172 = vadd.f32 0.0, %v2171
      %v2173 = vpop.f32.mrb[0].mxu0
      %2174 = vmatprep.mubr.f32.mxu0 0.0
      %2175 = vmatmul.mubr.f32.gmra.mrb[0].mxu0 %v1958
      %v2176 = vpop.f32.mrb[0].mxu0
      %v2177 = vadd.f32 0.0, %v2176
      %v2178 = vpop.f32.mrb[0].mxu0
      %2179 = vmatprep.mubr.f32.mxu0 0.0
      %2180 = vmatmul.mubr.f32.gmra.mrb[0].mxu0 %v1961
      %v2181 = vpop.f32.mrb[0].mxu0
      %v2182 = vadd.f32 0.0, %v2181
      %v2183 = vpop.f32.mrb[0].mxu0
      %2184 = vmatprep.mubr.f32.mxu0 0.0
      %2185 = vmatmul.mubr.f32.gmra.mrb[0].mxu0 %v1964
      %v2186 = vpop.f32.mrb[0].mxu0
      %v2187 = vadd.f32 0.0, %v2186
      %v2188 = vpop.f32.mrb[0].mxu0
      %2189 = vmatprep.mubr.f32.mxu0 0.0
      %2190 = vmatmul.mubr.f32.gmra.mrb[0].mxu0 %v1967
      %v2191 = vpop.f32.mrb[0].mxu0
      %v2192 = vadd.f32 0.0, %v2191
      %v2193 = vpop.f32.mrb[0].mxu0
      %2194 = vmatprep.mubr.f32.mxu0 0.0
      %2195 = vmatmul.mubr.f32.gmra.mrb[0].mxu0 %v1970
      %v2196 = vpop.f32.mrb[0].mxu0
      %v2197 = vadd.f32 0.0, %v2196
      %v2198 = vpop.f32.mrb[0].mxu0
      %2199 = vdwg.mxu0
      %v2200 = vadd.f32 %v1810, %v2042
      %v2201 = vadd.f32 %v1811, %v2047
      %v2202 = vadd.f32 %v1812, %v2052
      %v2203 = vadd.f32 %v1813, %v2057
      %v2204 = vadd.f32 %v1814, %v2062
      %v2205 = vadd.f32 %v1815, %v2067
      %v2206 = vadd.f32 %v1816, %v2072
      %v2207 = vadd.f32 %v1817, %v2077
      %v2208 = vadd.f32 %v1818, %v2082
      %v2209 = vadd.f32 %v1819, %v2087
      %v2210 = vadd.f32 %v1820, %v2092
      %v2211 = vadd.f32 %v1821, %v2097
      %v2212 = vadd.f32 %v1822, %v2102
      %v2213 = vadd.f32 %v1823, %v2107
      %v2214 = vadd.f32 %v1824, %v2112
      %v2215 = vadd.f32 %v1825, %v2117
      %v2216 = vadd.f32 %v1826, %v2122
      %v2217 = vadd.f32 %v1827, %v2127
      %v2218 = vadd.f32 %v1828, %v2132
      %v2219 = vadd.f32 %v1829, %v2137
      %v2220 = vadd.f32 %v1830, %v2142
      %v2221 = vadd.f32 %v1831, %v2147
      %v2222 = vadd.f32 %v1832, %v2152
      %v2223 = vadd.f32 %v1833, %v2157
      %v2224 = vadd.f32 %v1834, %v2162
      %v2225 = vadd.f32 %v1835, %v2167
      %v2226 = vadd.f32 %v1836, %v2172
      %v2227 = vadd.f32 %v1837, %v2177
      %v2228 = vadd.f32 %v1838, %v2182
      %v2229 = vadd.f32 %v1839, %v2187
      %v2230 = vadd.f32 %v1840, %v2192
      %v2231 = vadd.f32 %v1841, %v2197
      %v2232 = vld [vmem:[%s313 + $0x2] sm:$0xff]
      %v2233 = vld [vmem:[%s313 + $0xa] sm:$0xff]
      %v2234 = vld [vmem:[%s313 + $0x1a] sm:$0xff]
      %v2235 = vld [vmem:[%s313 + $0x22] sm:$0xff]
      %v2236 = vld [vmem:[%s313 + $0x32] sm:$0xff]
      %v2237 = vld [vmem:[%s313 + $0x3a] sm:$0xff]
      %v2238 = vld [vmem:[%s313 + $0x4a] sm:$0xff]
      %v2239 = vld [vmem:[%s313 + $0x52] sm:$0xff]
      %v2240 = vld [vmem:[%s313 + $0x62] sm:$0xff]
      %v2241 = vld [vmem:[%s313 + $0x6a] sm:$0xff]
      %v2242 = vld [vmem:[%s313 + $0x7a] sm:$0xff]
      %v2243 = vld [vmem:[%s313 + $0x82] sm:$0xff]
      %v2244 = vld [vmem:[%s313 + $0x92] sm:$0xff]
      %v2245 = vld [vmem:[%s313 + $0x9a] sm:$0xff]
      %v2246 = vld [vmem:[%s313 + $0xaa] sm:$0xff]
      %v2247 = vld [vmem:[%s313 + $0xb2] sm:$0xff]
      %v2248 = vld [vmem:[%s313 + $0xc2] sm:$0xff]
      %v2249 = vld [vmem:[%s313 + $0xca] sm:$0xff]
      %v2250 = vld [vmem:[%s313 + $0xda] sm:$0xff]
      %v2251 = vld [vmem:[%s313 + $0xe2] sm:$0xff]
      %v2252 = vld [vmem:[%s313 + $0xf2] sm:$0xff]
      %v2253 = vld [vmem:[%s313 + $0xfa] sm:$0xff]
      %v2254 = vld [vmem:[%s313 + $0x10a] sm:$0xff]
      %v2255 = vld [vmem:[%s313 + $0x112] sm:$0xff]
      %v2256 = vld [vmem:[%s313 + $0x122] sm:$0xff]
      %v2257 = vld [vmem:[%s313 + $0x12a] sm:$0xff]
      %v2258 = vld [vmem:[%s313 + $0x13a] sm:$0xff]
      %v2259 = vld [vmem:[%s313 + $0x142] sm:$0xff]
      %v2260 = vld [vmem:[%s313 + $0x152] sm:$0xff]
      %v2261 = vld [vmem:[%s313 + $0x15a] sm:$0xff]
      %v2262 = vld [vmem:[%s313 + $0x16a] sm:$0xff]
      %v2263 = vld [vmem:[%s313 + $0x172] sm:$0xff]
      %s2264 = scalar_lea.vmem %s1, 20
      %v2265 = vld [vmem:[%s2264] sm:$0xf]
      %v2267 = vsel %vm225, %v2232, 0
      %v2270 = vsel %vm225, %v2233, 0
      %v2273 = vsel %vm225, %v2234, 0
      %v2276 = vsel %vm225, %v2235, 0
      %v2279 = vsel %vm225, %v2236, 0
      %v2282 = vsel %vm225, %v2237, 0
      %v2285 = vsel %vm225, %v2238, 0
      %v2288 = vsel %vm225, %v2239, 0
      %v2291 = vsel %vm225, %v2240, 0
      %v2294 = vsel %vm225, %v2241, 0
      %v2297 = vsel %vm225, %v2242, 0
      %v2300 = vsel %vm225, %v2243, 0
      %v2303 = vsel %vm225, %v2244, 0
      %v2306 = vsel %vm225, %v2245, 0
      %v2309 = vsel %vm225, %v2246, 0
      %v2312 = vsel %vm225, %v2247, 0
      %v2315 = vsel %vm225, %v2248, 0
      %v2318 = vsel %vm225, %v2249, 0
      %v2321 = vsel %vm225, %v2250, 0
      %v2324 = vsel %vm225, %v2251, 0
      %v2327 = vsel %vm225, %v2252, 0
      %v2330 = vsel %vm225, %v2253, 0
      %v2333 = vsel %vm225, %v2254, 0
      %v2336 = vsel %vm225, %v2255, 0
      %v2339 = vsel %vm225, %v2256, 0
      %v2342 = vsel %vm225, %v2257, 0
      %v2345 = vsel %vm225, %v2258, 0
      %v2348 = vsel %vm225, %v2259, 0
      %v2351 = vsel %vm225, %v2260, 0
      %v2354 = vsel %vm225, %v2261, 0
      %v2357 = vsel %vm225, %v2262, 0
      %v2360 = vsel %vm225, %v2263, 0
      %v2363 = vsel %vm509, %v2265, 0
      %2365 = vmatprep.subr.mxu0 0.0
      %2366 = vmatpush1.msra.mxu0 %v2363
      %2367 = vmatprep.subr.mxu0 0.0
      %2368 = vmatpush1.msra.mxu0 0.0
      %2369 = vmatprep.subr.mxu0 0.0
      %2370 = vmatpush1.msra.mxu0 0.0
      %2371 = vmatprep.subr.mxu0 0.0
      %2372 = vmatpush1.msra.mxu0 0.0
      %2373 = vmatprep.subr.mxu0 0.0
      %2374 = vmatpush1.msra.mxu0 0.0
      %2375 = vmatprep.subr.mxu0 0.0
      %2376 = vmatpush1.msra.mxu0 0.0
      %2377 = vmatprep.subr.mxu0 0.0
      %2378 = vmatpush1.msra.mxu0 0.0
      %2379 = vmatprep.subr.mxu0 0.0
      %2380 = vmatpush1.msra.mxu0 0.0
      %2381 = vmatprep.subr.mxu0 0.0
      %2382 = vmatpush1.msra.mxu0 0.0
      %2383 = vmatprep.subr.mxu0 0.0
      %2384 = vmatpush1.msra.mxu0 0.0
      %2385 = vmatprep.subr.mxu0 0.0
      %2386 = vmatpush1.msra.mxu0 0.0
      %2387 = vmatprep.subr.mxu0 0.0
      %2388 = vmatpush1.msra.mxu0 0.0
      %2389 = vmatprep.subr.mxu0 0.0
      %2390 = vmatpush1.msra.mxu0 0.0
      %2391 = vmatprep.subr.mxu0 0.0
      %2392 = vmatpush1.msra.mxu0 0.0
      %2393 = vmatprep.subr.mxu0 0.0
      %2394 = vmatpush1.msra.mxu0 0.0
      %2395 = vmatprep.subr.mxu0 0.0
      %2396 = vmatpush1.msra.mxu0 0.0
      %2397 = vmatprep.subr.mxu0 0.0
      %2398 = vmatpush1.msra.mxu0 0.0
      %2399 = vmatprep.subr.mxu0 0.0
      %2400 = vmatpush1.msra.mxu0 0.0
      %2401 = vmatprep.subr.mxu0 0.0
      %2402 = vmatpush1.msra.mxu0 0.0
      %2403 = vmatprep.subr.mxu0 0.0
      %2404 = vmatpush1.msra.mxu0 0.0
      %2405 = vmatprep.subr.mxu0 0.0
      %2406 = vmatpush1.msra.mxu0 0.0
      %2407 = vmatprep.subr.mxu0 0.0
      %2408 = vmatpush1.msra.mxu0 0.0
      %2409 = vmatprep.subr.mxu0 0.0
      %2410 = vmatpush1.msra.mxu0 0.0
      %2411 = vmatprep.subr.mxu0 0.0
      %2412 = vmatpush1.msra.mxu0 0.0
      %2413 = vmatprep.subr.mxu0 0.0
      %2414 = vmatpush1.msra.mxu0 0.0
      %2415 = vmatprep.subr.mxu0 0.0
      %2416 = vmatpush1.msra.mxu0 0.0
      %2417 = vmatprep.subr.mxu0 0.0
      %2418 = vmatpush1.msra.mxu0 0.0
      %2419 = vmatprep.subr.mxu0 0.0
      %2420 = vmatpush1.msra.mxu0 0.0
      %2421 = vmatprep.subr.mxu0 0.0
      %2422 = vmatpush1.msra.mxu0 0.0
      %2423 = vmatprep.subr.mxu0 0.0
      %2424 = vmatpush1.msra.mxu0 0.0
      %2425 = vmatprep.subr.mxu0 0.0
      %2426 = vmatpush1.msra.mxu0 0.0
      %2427 = vmatprep.subr.mxu0 0.0
      %2428 = vmatpush1.msra.mxu0 0.0
      %2429 = vmatprep.mubr.f32.mxu0 0.0
      %2430 = vmatmul.mubr.f32.gmra.mrb[0].mxu0 %v2267
      %v2431 = vpop.f32.mrb[0].mxu0
      %v2432 = vadd.f32 0.0, %v2431
      %v2433 = vpop.f32.mrb[0].mxu0
      %2434 = vmatprep.mubr.f32.mxu0 0.0
      %2435 = vmatmul.mubr.f32.gmra.mrb[0].mxu0 %v2270
      %v2436 = vpop.f32.mrb[0].mxu0
      %v2437 = vadd.f32 0.0, %v2436
      %v2438 = vpop.f32.mrb[0].mxu0
      %2439 = vmatprep.mubr.f32.mxu0 0.0
      %2440 = vmatmul.mubr.f32.gmra.mrb[0].mxu0 %v2273
      %v2441 = vpop.f32.mrb[0].mxu0
      %v2442 = vadd.f32 0.0, %v2441
      %v2443 = vpop.f32.mrb[0].mxu0
      %2444 = vmatprep.mubr.f32.mxu0 0.0
      %2445 = vmatmul.mubr.f32.gmra.mrb[0].mxu0 %v2276
      %v2446 = vpop.f32.mrb[0].mxu0
      %v2447 = vadd.f32 0.0, %v2446
      %v2448 = vpop.f32.mrb[0].mxu0
      %2449 = vmatprep.mubr.f32.mxu0 0.0
      %2450 = vmatmul.mubr.f32.gmra.mrb[0].mxu0 %v2279
      %v2451 = vpop.f32.mrb[0].mxu0
      %v2452 = vadd.f32 0.0, %v2451
      %v2453 = vpop.f32.mrb[0].mxu0
      %2454 = vmatprep.mubr.f32.mxu0 0.0
      %2455 = vmatmul.mubr.f32.gmra.mrb[0].mxu0 %v2282
      %v2456 = vpop.f32.mrb[0].mxu0
      %v2457 = vadd.f32 0.0, %v2456
      %v2458 = vpop.f32.mrb[0].mxu0
      %2459 = vmatprep.mubr.f32.mxu0 0.0
      %2460 = vmatmul.mubr.f32.gmra.mrb[0].mxu0 %v2285
      %v2461 = vpop.f32.mrb[0].mxu0
      %v2462 = vadd.f32 0.0, %v2461
      %v2463 = vpop.f32.mrb[0].mxu0
      %2464 = vmatprep.mubr.f32.mxu0 0.0
      %2465 = vmatmul.mubr.f32.gmra.mrb[0].mxu0 %v2288
      %v2466 = vpop.f32.mrb[0].mxu0
      %v2467 = vadd.f32 0.0, %v2466
      %v2468 = vpop.f32.mrb[0].mxu0
      %2469 = vmatprep.mubr.f32.mxu0 0.0
      %2470 = vmatmul.mubr.f32.gmra.mrb[0].mxu0 %v2291
      %v2471 = vpop.f32.mrb[0].mxu0
      %v2472 = vadd.f32 0.0, %v2471
      %v2473 = vpop.f32.mrb[0].mxu0
      %2474 = vmatprep.mubr.f32.mxu0 0.0
      %2475 = vmatmul.mubr.f32.gmra.mrb[0].mxu0 %v2294
      %v2476 = vpop.f32.mrb[0].mxu0
      %v2477 = vadd.f32 0.0, %v2476
      %v2478 = vpop.f32.mrb[0].mxu0
      %2479 = vmatprep.mubr.f32.mxu0 0.0
      %2480 = vmatmul.mubr.f32.gmra.mrb[0].mxu0 %v2297
      %v2481 = vpop.f32.mrb[0].mxu0
      %v2482 = vadd.f32 0.0, %v2481
      %v2483 = vpop.f32.mrb[0].mxu0
      %2484 = vmatprep.mubr.f32.mxu0 0.0
      %2485 = vmatmul.mubr.f32.gmra.mrb[0].mxu0 %v2300
      %v2486 = vpop.f32.mrb[0].mxu0
      %v2487 = vadd.f32 0.0, %v2486
      %v2488 = vpop.f32.mrb[0].mxu0
      %2489 = vmatprep.mubr.f32.mxu0 0.0
      %2490 = vmatmul.mubr.f32.gmra.mrb[0].mxu0 %v2303
      %v2491 = vpop.f32.mrb[0].mxu0
      %v2492 = vadd.f32 0.0, %v2491
      %v2493 = vpop.f32.mrb[0].mxu0
      %2494 = vmatprep.mubr.f32.mxu0 0.0
      %2495 = vmatmul.mubr.f32.gmra.mrb[0].mxu0 %v2306
      %v2496 = vpop.f32.mrb[0].mxu0
      %v2497 = vadd.f32 0.0, %v2496
      %v2498 = vpop.f32.mrb[0].mxu0
      %2499 = vmatprep.mubr.f32.mxu0 0.0
      %2500 = vmatmul.mubr.f32.gmra.mrb[0].mxu0 %v2309
      %v2501 = vpop.f32.mrb[0].mxu0
      %v2502 = vadd.f32 0.0, %v2501
      %v2503 = vpop.f32.mrb[0].mxu0
      %2504 = vmatprep.mubr.f32.mxu0 0.0
      %2505 = vmatmul.mubr.f32.gmra.mrb[0].mxu0 %v2312
      %v2506 = vpop.f32.mrb[0].mxu0
      %v2507 = vadd.f32 0.0, %v2506
      %v2508 = vpop.f32.mrb[0].mxu0
      %2509 = vmatprep.mubr.f32.mxu0 0.0
      %2510 = vmatmul.mubr.f32.gmra.mrb[0].mxu0 %v2315
      %v2511 = vpop.f32.mrb[0].mxu0
      %v2512 = vadd.f32 0.0, %v2511
      %v2513 = vpop.f32.mrb[0].mxu0
      %2514 = vmatprep.mubr.f32.mxu0 0.0
      %2515 = vmatmul.mubr.f32.gmra.mrb[0].mxu0 %v2318
      %v2516 = vpop.f32.mrb[0].mxu0
      %v2517 = vadd.f32 0.0, %v2516
      %v2518 = vpop.f32.mrb[0].mxu0
      %2519 = vmatprep.mubr.f32.mxu0 0.0
      %2520 = vmatmul.mubr.f32.gmra.mrb[0].mxu0 %v2321
      %v2521 = vpop.f32.mrb[0].mxu0
      %v2522 = vadd.f32 0.0, %v2521
      %v2523 = vpop.f32.mrb[0].mxu0
      %2524 = vmatprep.mubr.f32.mxu0 0.0
      %2525 = vmatmul.mubr.f32.gmra.mrb[0].mxu0 %v2324
      %v2526 = vpop.f32.mrb[0].mxu0
      %v2527 = vadd.f32 0.0, %v2526
      %v2528 = vpop.f32.mrb[0].mxu0
      %2529 = vmatprep.mubr.f32.mxu0 0.0
      %2530 = vmatmul.mubr.f32.gmra.mrb[0].mxu0 %v2327
      %v2531 = vpop.f32.mrb[0].mxu0
      %v2532 = vadd.f32 0.0, %v2531
      %v2533 = vpop.f32.mrb[0].mxu0
      %2534 = vmatprep.mubr.f32.mxu0 0.0
      %2535 = vmatmul.mubr.f32.gmra.mrb[0].mxu0 %v2330
      %v2536 = vpop.f32.mrb[0].mxu0
      %v2537 = vadd.f32 0.0, %v2536
      %v2538 = vpop.f32.mrb[0].mxu0
      %2539 = vmatprep.mubr.f32.mxu0 0.0
      %2540 = vmatmul.mubr.f32.gmra.mrb[0].mxu0 %v2333
      %v2541 = vpop.f32.mrb[0].mxu0
      %v2542 = vadd.f32 0.0, %v2541
      %v2543 = vpop.f32.mrb[0].mxu0
      %2544 = vmatprep.mubr.f32.mxu0 0.0
      %2545 = vmatmul.mubr.f32.gmra.mrb[0].mxu0 %v2336
      %v2546 = vpop.f32.mrb[0].mxu0
      %v2547 = vadd.f32 0.0, %v2546
      %v2548 = vpop.f32.mrb[0].mxu0
      %2549 = vmatprep.mubr.f32.mxu0 0.0
      %2550 = vmatmul.mubr.f32.gmra.mrb[0].mxu0 %v2339
      %v2551 = vpop.f32.mrb[0].mxu0
      %v2552 = vadd.f32 0.0, %v2551
      %v2553 = vpop.f32.mrb[0].mxu0
      %2554 = vmatprep.mubr.f32.mxu0 0.0
      %2555 = vmatmul.mubr.f32.gmra.mrb[0].mxu0 %v2342
      %v2556 = vpop.f32.mrb[0].mxu0
      %v2557 = vadd.f32 0.0, %v2556
      %v2558 = vpop.f32.mrb[0].mxu0
      %2559 = vmatprep.mubr.f32.mxu0 0.0
      %2560 = vmatmul.mubr.f32.gmra.mrb[0].mxu0 %v2345
      %v2561 = vpop.f32.mrb[0].mxu0
      %v2562 = vadd.f32 0.0, %v2561
      %v2563 = vpop.f32.mrb[0].mxu0
      %2564 = vmatprep.mubr.f32.mxu0 0.0
      %2565 = vmatmul.mubr.f32.gmra.mrb[0].mxu0 %v2348
      %v2566 = vpop.f32.mrb[0].mxu0
      %v2567 = vadd.f32 0.0, %v2566
      %v2568 = vpop.f32.mrb[0].mxu0
      %2569 = vmatprep.mubr.f32.mxu0 0.0
      %2570 = vmatmul.mubr.f32.gmra.mrb[0].mxu0 %v2351
      %v2571 = vpop.f32.mrb[0].mxu0
      %v2572 = vadd.f32 0.0, %v2571
      %v2573 = vpop.f32.mrb[0].mxu0
      %2574 = vmatprep.mubr.f32.mxu0 0.0
      %2575 = vmatmul.mubr.f32.gmra.mrb[0].mxu0 %v2354
      %v2576 = vpop.f32.mrb[0].mxu0
      %v2577 = vadd.f32 0.0, %v2576
      %v2578 = vpop.f32.mrb[0].mxu0
      %2579 = vmatprep.mubr.f32.mxu0 0.0
      %2580 = vmatmul.mubr.f32.gmra.mrb[0].mxu0 %v2357
      %v2581 = vpop.f32.mrb[0].mxu0
      %v2582 = vadd.f32 0.0, %v2581
      %v2583 = vpop.f32.mrb[0].mxu0
      %2584 = vmatprep.mubr.f32.mxu0 0.0
      %2585 = vmatmul.mubr.f32.gmra.mrb[0].mxu0 %v2360
      %v2586 = vpop.f32.mrb[0].mxu0
      %v2587 = vadd.f32 0.0, %v2586
      %v2588 = vpop.f32.mrb[0].mxu0
      %2589 = vdwg.mxu0
      %v2590 = vadd.f32 %v2200, %v2432
      %v2591 = vadd.f32 %v2201, %v2437
      %v2592 = vadd.f32 %v2202, %v2442
      %v2593 = vadd.f32 %v2203, %v2447
      %v2594 = vadd.f32 %v2204, %v2452
      %v2595 = vadd.f32 %v2205, %v2457
      %v2596 = vadd.f32 %v2206, %v2462
      %v2597 = vadd.f32 %v2207, %v2467
      %v2598 = vadd.f32 %v2208, %v2472
      %v2599 = vadd.f32 %v2209, %v2477
      %v2600 = vadd.f32 %v2210, %v2482
      %v2601 = vadd.f32 %v2211, %v2487
      %v2602 = vadd.f32 %v2212, %v2492
      %v2603 = vadd.f32 %v2213, %v2497
      %v2604 = vadd.f32 %v2214, %v2502
      %v2605 = vadd.f32 %v2215, %v2507
      %v2606 = vadd.f32 %v2216, %v2512
      %v2607 = vadd.f32 %v2217, %v2517
      %v2608 = vadd.f32 %v2218, %v2522
      %v2609 = vadd.f32 %v2219, %v2527
      %v2610 = vadd.f32 %v2220, %v2532
      %v2611 = vadd.f32 %v2221, %v2537
      %v2612 = vadd.f32 %v2222, %v2542
      %v2613 = vadd.f32 %v2223, %v2547
      %v2614 = vadd.f32 %v2224, %v2552
      %v2615 = vadd.f32 %v2225, %v2557
      %v2616 = vadd.f32 %v2226, %v2562
      %v2617 = vadd.f32 %v2227, %v2567
      %v2618 = vadd.f32 %v2228, %v2572
      %v2619 = vadd.f32 %v2229, %v2577
      %v2620 = vadd.f32 %v2230, %v2582
      %v2621 = vadd.f32 %v2231, %v2587
      %s2622 = scalar_lea.vmem [#allocation2], 48
      %v2623 = vld [vmem:[%s2622] sm:$0xff]
      %v2624 = vld [vmem:[%s2622 + $0x8] sm:$0xff]
      %v2625 = vld [vmem:[%s2622 + $0x18] sm:$0xff]
      %v2626 = vld [vmem:[%s2622 + $0x20] sm:$0xff]
      %v2627 = vld [vmem:[%s2622 + $0x30] sm:$0xff]
      %v2628 = vld [vmem:[%s2622 + $0x38] sm:$0xff]
      %v2629 = vld [vmem:[%s2622 + $0x48] sm:$0xff]
      %v2630 = vld [vmem:[%s2622 + $0x50] sm:$0xff]
      %v2631 = vld [vmem:[%s2622 + $0x60] sm:$0xff]
      %v2632 = vld [vmem:[%s2622 + $0x68] sm:$0xff]
      %v2633 = vld [vmem:[%s2622 + $0x78] sm:$0xff]
      %v2634 = vld [vmem:[%s2622 + $0x80] sm:$0xff]
      %v2635 = vld [vmem:[%s2622 + $0x90] sm:$0xff]
      %v2636 = vld [vmem:[%s2622 + $0x98] sm:$0xff]
      %v2637 = vld [vmem:[%s2622 + $0xa8] sm:$0xff]
      %v2638 = vld [vmem:[%s2622 + $0xb0] sm:$0xff]
      %v2639 = vld [vmem:[%s2622 + $0xc0] sm:$0xff]
      %v2640 = vld [vmem:[%s2622 + $0xc8] sm:$0xff]
      %v2641 = vld [vmem:[%s2622 + $0xd8] sm:$0xff]
      %v2642 = vld [vmem:[%s2622 + $0xe0] sm:$0xff]
      %v2643 = vld [vmem:[%s2622 + $0xf0] sm:$0xff]
      %v2644 = vld [vmem:[%s2622 + $0xf8] sm:$0xff]
      %v2645 = vld [vmem:[%s2622 + $0x108] sm:$0xff]
      %v2646 = vld [vmem:[%s2622 + $0x110] sm:$0xff]
      %v2647 = vld [vmem:[%s2622 + $0x120] sm:$0xff]
      %v2648 = vld [vmem:[%s2622 + $0x128] sm:$0xff]
      %v2649 = vld [vmem:[%s2622 + $0x138] sm:$0xff]
      %v2650 = vld [vmem:[%s2622 + $0x140] sm:$0xff]
      %v2651 = vld [vmem:[%s2622 + $0x150] sm:$0xff]
      %v2652 = vld [vmem:[%s2622 + $0x158] sm:$0xff]
      %v2653 = vld [vmem:[%s2622 + $0x168] sm:$0xff]
      %v2654 = vld [vmem:[%s2622 + $0x170] sm:$0xff]
      %s2655 = scalar_lea.vmem %s1, 24
      %v2656 = vld [vmem:[%s2655] sm:$0xf]
      %v2658 = vsel %vm225, %v2623, 0
      %v2661 = vsel %vm225, %v2624, 0
      %v2664 = vsel %vm225, %v2625, 0
      %v2667 = vsel %vm225, %v2626, 0
      %v2670 = vsel %vm225, %v2627, 0
      %v2673 = vsel %vm225, %v2628, 0
      %v2676 = vsel %vm225, %v2629, 0
      %v2679 = vsel %vm225, %v2630, 0
      %v2682 = vsel %vm225, %v2631, 0
      %v2685 = vsel %vm225, %v2632, 0
      %v2688 = vsel %vm225, %v2633, 0
      %v2691 = vsel %vm225, %v2634, 0
      %v2694 = vsel %vm225, %v2635, 0
      %v2697 = vsel %vm225, %v2636, 0
      %v2700 = vsel %vm225, %v2637, 0
      %v2703 = vsel %vm225, %v2638, 0
      %v2706 = vsel %vm225, %v2639, 0
      %v2709 = vsel %vm225, %v2640, 0
      %v2712 = vsel %vm225, %v2641, 0
      %v2715 = vsel %vm225, %v2642, 0
      %v2718 = vsel %vm225, %v2643, 0
      %v2721 = vsel %vm225, %v2644, 0
      %v2724 = vsel %vm225, %v2645, 0
      %v2727 = vsel %vm225, %v2646, 0
      %v2730 = vsel %vm225, %v2647, 0
      %v2733 = vsel %vm225, %v2648, 0
      %v2736 = vsel %vm225, %v2649, 0
      %v2739 = vsel %vm225, %v2650, 0
      %v2742 = vsel %vm225, %v2651, 0
      %v2745 = vsel %vm225, %v2652, 0
      %v2748 = vsel %vm225, %v2653, 0
      %v2751 = vsel %vm225, %v2654, 0
      %v2754 = vsel %vm509, %v2656, 0
      %2756 = vmatprep.subr.mxu0 0.0
      %2757 = vmatpush1.msra.mxu0 %v2754
      %2758 = vmatprep.subr.mxu0 0.0
      %2759 = vmatpush1.msra.mxu0 0.0
      %2760 = vmatprep.subr.mxu0 0.0
      %2761 = vmatpush1.msra.mxu0 0.0
      %2762 = vmatprep.subr.mxu0 0.0
      %2763 = vmatpush1.msra.mxu0 0.0
      %2764 = vmatprep.subr.mxu0 0.0
      %2765 = vmatpush1.msra.mxu0 0.0
      %2766 = vmatprep.subr.mxu0 0.0
      %2767 = vmatpush1.msra.mxu0 0.0
      %2768 = vmatprep.subr.mxu0 0.0
      %2769 = vmatpush1.msra.mxu0 0.0
      %2770 = vmatprep.subr.mxu0 0.0
      %2771 = vmatpush1.msra.mxu0 0.0
      %2772 = vmatprep.subr.mxu0 0.0
      %2773 = vmatpush1.msra.mxu0 0.0
      %2774 = vmatprep.subr.mxu0 0.0
      %2775 = vmatpush1.msra.mxu0 0.0
      %2776 = vmatprep.subr.mxu0 0.0
      %2777 = vmatpush1.msra.mxu0 0.0
      %2778 = vmatprep.subr.mxu0 0.0
      %2779 = vmatpush1.msra.mxu0 0.0
      %2780 = vmatprep.subr.mxu0 0.0
      %2781 = vmatpush1.msra.mxu0 0.0
      %2782 = vmatprep.subr.mxu0 0.0
      %2783 = vmatpush1.msra.mxu0 0.0
      %2784 = vmatprep.subr.mxu0 0.0
      %2785 = vmatpush1.msra.mxu0 0.0
      %2786 = vmatprep.subr.mxu0 0.0
      %2787 = vmatpush1.msra.mxu0 0.0
      %2788 = vmatprep.subr.mxu0 0.0
      %2789 = vmatpush1.msra.mxu0 0.0
      %2790 = vmatprep.subr.mxu0 0.0
      %2791 = vmatpush1.msra.mxu0 0.0
      %2792 = vmatprep.subr.mxu0 0.0
      %2793 = vmatpush1.msra.mxu0 0.0
      %2794 = vmatprep.subr.mxu0 0.0
      %2795 = vmatpush1.msra.mxu0 0.0
      %2796 = vmatprep.subr.mxu0 0.0
      %2797 = vmatpush1.msra.mxu0 0.0
      %2798 = vmatprep.subr.mxu0 0.0
      %2799 = vmatpush1.msra.mxu0 0.0
      %2800 = vmatprep.subr.mxu0 0.0
      %2801 = vmatpush1.msra.mxu0 0.0
      %2802 = vmatprep.subr.mxu0 0.0
      %2803 = vmatpush1.msra.mxu0 0.0
      %2804 = vmatprep.subr.mxu0 0.0
      %2805 = vmatpush1.msra.mxu0 0.0
      %2806 = vmatprep.subr.mxu0 0.0
      %2807 = vmatpush1.msra.mxu0 0.0
      %2808 = vmatprep.subr.mxu0 0.0
      %2809 = vmatpush1.msra.mxu0 0.0
      %2810 = vmatprep.subr.mxu0 0.0
      %2811 = vmatpush1.msra.mxu0 0.0
      %2812 = vmatprep.subr.mxu0 0.0
      %2813 = vmatpush1.msra.mxu0 0.0
      %2814 = vmatprep.subr.mxu0 0.0
      %2815 = vmatpush1.msra.mxu0 0.0
      %2816 = vmatprep.subr.mxu0 0.0
      %2817 = vmatpush1.msra.mxu0 0.0
      %2818 = vmatprep.subr.mxu0 0.0
      %2819 = vmatpush1.msra.mxu0 0.0
      %2820 = vmatprep.mubr.f32.mxu0 0.0
      %2821 = vmatmul.mubr.f32.gmra.mrb[0].mxu0 %v2658
      %v2822 = vpop.f32.mrb[0].mxu0
      %v2823 = vadd.f32 0.0, %v2822
      %v2824 = vpop.f32.mrb[0].mxu0
      %2825 = vmatprep.mubr.f32.mxu0 0.0
      %2826 = vmatmul.mubr.f32.gmra.mrb[0].mxu0 %v2661
      %v2827 = vpop.f32.mrb[0].mxu0
      %v2828 = vadd.f32 0.0, %v2827
      %v2829 = vpop.f32.mrb[0].mxu0
      %2830 = vmatprep.mubr.f32.mxu0 0.0
      %2831 = vmatmul.mubr.f32.gmra.mrb[0].mxu0 %v2664
      %v2832 = vpop.f32.mrb[0].mxu0
      %v2833 = vadd.f32 0.0, %v2832
      %v2834 = vpop.f32.mrb[0].mxu0
      %2835 = vmatprep.mubr.f32.mxu0 0.0
      %2836 = vmatmul.mubr.f32.gmra.mrb[0].mxu0 %v2667
      %v2837 = vpop.f32.mrb[0].mxu0
      %v2838 = vadd.f32 0.0, %v2837
      %v2839 = vpop.f32.mrb[0].mxu0
      %2840 = vmatprep.mubr.f32.mxu0 0.0
      %2841 = vmatmul.mubr.f32.gmra.mrb[0].mxu0 %v2670
      %v2842 = vpop.f32.mrb[0].mxu0
      %v2843 = vadd.f32 0.0, %v2842
      %v2844 = vpop.f32.mrb[0].mxu0
      %2845 = vmatprep.mubr.f32.mxu0 0.0
      %2846 = vmatmul.mubr.f32.gmra.mrb[0].mxu0 %v2673
      %v2847 = vpop.f32.mrb[0].mxu0
      %v2848 = vadd.f32 0.0, %v2847
      %v2849 = vpop.f32.mrb[0].mxu0
      %2850 = vmatprep.mubr.f32.mxu0 0.0
      %2851 = vmatmul.mubr.f32.gmra.mrb[0].mxu0 %v2676
      %v2852 = vpop.f32.mrb[0].mxu0
      %v2853 = vadd.f32 0.0, %v2852
      %v2854 = vpop.f32.mrb[0].mxu0
      %2855 = vmatprep.mubr.f32.mxu0 0.0
      %2856 = vmatmul.mubr.f32.gmra.mrb[0].mxu0 %v2679
      %v2857 = vpop.f32.mrb[0].mxu0
      %v2858 = vadd.f32 0.0, %v2857
      %v2859 = vpop.f32.mrb[0].mxu0
      %2860 = vmatprep.mubr.f32.mxu0 0.0
      %2861 = vmatmul.mubr.f32.gmra.mrb[0].mxu0 %v2682
      %v2862 = vpop.f32.mrb[0].mxu0
      %v2863 = vadd.f32 0.0, %v2862
      %v2864 = vpop.f32.mrb[0].mxu0
      %2865 = vmatprep.mubr.f32.mxu0 0.0
      %2866 = vmatmul.mubr.f32.gmra.mrb[0].mxu0 %v2685
      %v2867 = vpop.f32.mrb[0].mxu0
      %v2868 = vadd.f32 0.0, %v2867
      %v2869 = vpop.f32.mrb[0].mxu0
      %2870 = vmatprep.mubr.f32.mxu0 0.0
      %2871 = vmatmul.mubr.f32.gmra.mrb[0].mxu0 %v2688
      %v2872 = vpop.f32.mrb[0].mxu0
      %v2873 = vadd.f32 0.0, %v2872
      %v2874 = vpop.f32.mrb[0].mxu0
      %2875 = vmatprep.mubr.f32.mxu0 0.0
      %2876 = vmatmul.mubr.f32.gmra.mrb[0].mxu0 %v2691
      %v2877 = vpop.f32.mrb[0].mxu0
      %v2878 = vadd.f32 0.0, %v2877
      %v2879 = vpop.f32.mrb[0].mxu0
      %2880 = vmatprep.mubr.f32.mxu0 0.0
      %2881 = vmatmul.mubr.f32.gmra.mrb[0].mxu0 %v2694
      %v2882 = vpop.f32.mrb[0].mxu0
      %v2883 = vadd.f32 0.0, %v2882
      %v2884 = vpop.f32.mrb[0].mxu0
      %2885 = vmatprep.mubr.f32.mxu0 0.0
      %2886 = vmatmul.mubr.f32.gmra.mrb[0].mxu0 %v2697
      %v2887 = vpop.f32.mrb[0].mxu0
      %v2888 = vadd.f32 0.0, %v2887
      %v2889 = vpop.f32.mrb[0].mxu0
      %2890 = vmatprep.mubr.f32.mxu0 0.0
      %2891 = vmatmul.mubr.f32.gmra.mrb[0].mxu0 %v2700
      %v2892 = vpop.f32.mrb[0].mxu0
      %v2893 = vadd.f32 0.0, %v2892
      %v2894 = vpop.f32.mrb[0].mxu0
      %2895 = vmatprep.mubr.f32.mxu0 0.0
      %2896 = vmatmul.mubr.f32.gmra.mrb[0].mxu0 %v2703
      %v2897 = vpop.f32.mrb[0].mxu0
      %v2898 = vadd.f32 0.0, %v2897
      %v2899 = vpop.f32.mrb[0].mxu0
      %2900 = vmatprep.mubr.f32.mxu0 0.0
      %2901 = vmatmul.mubr.f32.gmra.mrb[0].mxu0 %v2706
      %v2902 = vpop.f32.mrb[0].mxu0
      %v2903 = vadd.f32 0.0, %v2902
      %v2904 = vpop.f32.mrb[0].mxu0
      %2905 = vmatprep.mubr.f32.mxu0 0.0
      %2906 = vmatmul.mubr.f32.gmra.mrb[0].mxu0 %v2709
      %v2907 = vpop.f32.mrb[0].mxu0
      %v2908 = vadd.f32 0.0, %v2907
      %v2909 = vpop.f32.mrb[0].mxu0
      %2910 = vmatprep.mubr.f32.mxu0 0.0
      %2911 = vmatmul.mubr.f32.gmra.mrb[0].mxu0 %v2712
      %v2912 = vpop.f32.mrb[0].mxu0
      %v2913 = vadd.f32 0.0, %v2912
      %v2914 = vpop.f32.mrb[0].mxu0
      %2915 = vmatprep.mubr.f32.mxu0 0.0
      %2916 = vmatmul.mubr.f32.gmra.mrb[0].mxu0 %v2715
      %v2917 = vpop.f32.mrb[0].mxu0
      %v2918 = vadd.f32 0.0, %v2917
      %v2919 = vpop.f32.mrb[0].mxu0
      %2920 = vmatprep.mubr.f32.mxu0 0.0
      %2921 = vmatmul.mubr.f32.gmra.mrb[0].mxu0 %v2718
      %v2922 = vpop.f32.mrb[0].mxu0
      %v2923 = vadd.f32 0.0, %v2922
      %v2924 = vpop.f32.mrb[0].mxu0
      %2925 = vmatprep.mubr.f32.mxu0 0.0
      %2926 = vmatmul.mubr.f32.gmra.mrb[0].mxu0 %v2721
      %v2927 = vpop.f32.mrb[0].mxu0
      %v2928 = vadd.f32 0.0, %v2927
      %v2929 = vpop.f32.mrb[0].mxu0
      %2930 = vmatprep.mubr.f32.mxu0 0.0
      %2931 = vmatmul.mubr.f32.gmra.mrb[0].mxu0 %v2724
      %v2932 = vpop.f32.mrb[0].mxu0
      %v2933 = vadd.f32 0.0, %v2932
      %v2934 = vpop.f32.mrb[0].mxu0
      %2935 = vmatprep.mubr.f32.mxu0 0.0
      %2936 = vmatmul.mubr.f32.gmra.mrb[0].mxu0 %v2727
      %v2937 = vpop.f32.mrb[0].mxu0
      %v2938 = vadd.f32 0.0, %v2937
      %v2939 = vpop.f32.mrb[0].mxu0
      %2940 = vmatprep.mubr.f32.mxu0 0.0
      %2941 = vmatmul.mubr.f32.gmra.mrb[0].mxu0 %v2730
      %v2942 = vpop.f32.mrb[0].mxu0
      %v2943 = vadd.f32 0.0, %v2942
      %v2944 = vpop.f32.mrb[0].mxu0
      %2945 = vmatprep.mubr.f32.mxu0 0.0
      %2946 = vmatmul.mubr.f32.gmra.mrb[0].mxu0 %v2733
      %v2947 = vpop.f32.mrb[0].mxu0
      %v2948 = vadd.f32 0.0, %v2947
      %v2949 = vpop.f32.mrb[0].mxu0
      %2950 = vmatprep.mubr.f32.mxu0 0.0
      %2951 = vmatmul.mubr.f32.gmra.mrb[0].mxu0 %v2736
      %v2952 = vpop.f32.mrb[0].mxu0
      %v2953 = vadd.f32 0.0, %v2952
      %v2954 = vpop.f32.mrb[0].mxu0
      %2955 = vmatprep.mubr.f32.mxu0 0.0
      %2956 = vmatmul.mubr.f32.gmra.mrb[0].mxu0 %v2739
      %v2957 = vpop.f32.mrb[0].mxu0
      %v2958 = vadd.f32 0.0, %v2957
      %v2959 = vpop.f32.mrb[0].mxu0
      %2960 = vmatprep.mubr.f32.mxu0 0.0
      %2961 = vmatmul.mubr.f32.gmra.mrb[0].mxu0 %v2742
      %v2962 = vpop.f32.mrb[0].mxu0
      %v2963 = vadd.f32 0.0, %v2962
      %v2964 = vpop.f32.mrb[0].mxu0
      %2965 = vmatprep.mubr.f32.mxu0 0.0
      %2966 = vmatmul.mubr.f32.gmra.mrb[0].mxu0 %v2745
      %v2967 = vpop.f32.mrb[0].mxu0
      %v2968 = vadd.f32 0.0, %v2967
      %v2969 = vpop.f32.mrb[0].mxu0
      %2970 = vmatprep.mubr.f32.mxu0 0.0
      %2971 = vmatmul.mubr.f32.gmra.mrb[0].mxu0 %v2748
      %v2972 = vpop.f32.mrb[0].mxu0
      %v2973 = vadd.f32 0.0, %v2972
      %v2974 = vpop.f32.mrb[0].mxu0
      %2975 = vmatprep.mubr.f32.mxu0 0.0
      %2976 = vmatmul.mubr.f32.gmra.mrb[0].mxu0 %v2751
      %v2977 = vpop.f32.mrb[0].mxu0
      %v2978 = vadd.f32 0.0, %v2977
      %v2979 = vpop.f32.mrb[0].mxu0
      %2980 = vdwg.mxu0
      %v2981 = vadd.f32 %v2590, %v2823
      %v2982 = vadd.f32 %v2591, %v2828
      %v2983 = vadd.f32 %v2592, %v2833
      %v2984 = vadd.f32 %v2593, %v2838
      %v2985 = vadd.f32 %v2594, %v2843
      %v2986 = vadd.f32 %v2595, %v2848
      %v2987 = vadd.f32 %v2596, %v2853
      %v2988 = vadd.f32 %v2597, %v2858
      %v2989 = vadd.f32 %v2598, %v2863
      %v2990 = vadd.f32 %v2599, %v2868
      %v2991 = vadd.f32 %v2600, %v2873
      %v2992 = vadd.f32 %v2601, %v2878
      %v2993 = vadd.f32 %v2602, %v2883
      %v2994 = vadd.f32 %v2603, %v2888
      %v2995 = vadd.f32 %v2604, %v2893
      %v2996 = vadd.f32 %v2605, %v2898
      %v2997 = vadd.f32 %v2606, %v2903
      %v2998 = vadd.f32 %v2607, %v2908
      %v2999 = vadd.f32 %v2608, %v2913
      %v3000 = vadd.f32 %v2609, %v2918
      %v3001 = vadd.f32 %v2610, %v2923
      %v3002 = vadd.f32 %v2611, %v2928
      %v3003 = vadd.f32 %v2612, %v2933
      %v3004 = vadd.f32 %v2613, %v2938
      %v3005 = vadd.f32 %v2614, %v2943
      %v3006 = vadd.f32 %v2615, %v2948
      %v3007 = vadd.f32 %v2616, %v2953
      %v3008 = vadd.f32 %v2617, %v2958
      %v3009 = vadd.f32 %v2618, %v2963
      %v3010 = vadd.f32 %v2619, %v2968
      %v3011 = vadd.f32 %v2620, %v2973
      %v3012 = vadd.f32 %v2621, %v2978
      %v3013 = vld [vmem:[%s2622 + $0x1] sm:$0xff]
      %v3014 = vld [vmem:[%s2622 + $0x9] sm:$0xff]
      %v3015 = vld [vmem:[%s2622 + $0x19] sm:$0xff]
      %v3016 = vld [vmem:[%s2622 + $0x21] sm:$0xff]
      %v3017 = vld [vmem:[%s2622 + $0x31] sm:$0xff]
      %v3018 = vld [vmem:[%s2622 + $0x39] sm:$0xff]
      %v3019 = vld [vmem:[%s2622 + $0x49] sm:$0xff]
      %v3020 = vld [vmem:[%s2622 + $0x51] sm:$0xff]
      %v3021 = vld [vmem:[%s2622 + $0x61] sm:$0xff]
      %v3022 = vld [vmem:[%s2622 + $0x69] sm:$0xff]
      %v3023 = vld [vmem:[%s2622 + $0x79] sm:$0xff]
      %v3024 = vld [vmem:[%s2622 + $0x81] sm:$0xff]
      %v3025 = vld [vmem:[%s2622 + $0x91] sm:$0xff]
      %v3026 = vld [vmem:[%s2622 + $0x99] sm:$0xff]
      %v3027 = vld [vmem:[%s2622 + $0xa9] sm:$0xff]
      %v3028 = vld [vmem:[%s2622 + $0xb1] sm:$0xff]
      %v3029 = vld [vmem:[%s2622 + $0xc1] sm:$0xff]
      %v3030 = vld [vmem:[%s2622 + $0xc9] sm:$0xff]
      %v3031 = vld [vmem:[%s2622 + $0xd9] sm:$0xff]
      %v3032 = vld [vmem:[%s2622 + $0xe1] sm:$0xff]
      %v3033 = vld [vmem:[%s2622 + $0xf1] sm:$0xff]
      %v3034 = vld [vmem:[%s2622 + $0xf9] sm:$0xff]
      %v3035 = vld [vmem:[%s2622 + $0x109] sm:$0xff]
      %v3036 = vld [vmem:[%s2622 + $0x111] sm:$0xff]
      %v3037 = vld [vmem:[%s2622 + $0x121] sm:$0xff]
      %v3038 = vld [vmem:[%s2622 + $0x129] sm:$0xff]
      %v3039 = vld [vmem:[%s2622 + $0x139] sm:$0xff]
      %v3040 = vld [vmem:[%s2622 + $0x141] sm:$0xff]
      %v3041 = vld [vmem:[%s2622 + $0x151] sm:$0xff]
      %v3042 = vld [vmem:[%s2622 + $0x159] sm:$0xff]
      %v3043 = vld [vmem:[%s2622 + $0x169] sm:$0xff]
      %v3044 = vld [vmem:[%s2622 + $0x171] sm:$0xff]
      %s3045 = scalar_lea.vmem %s1, 28
      %v3046 = vld [vmem:[%s3045] sm:$0xf]
      %v3048 = vsel %vm225, %v3013, 0
      %v3051 = vsel %vm225, %v3014, 0
      %v3054 = vsel %vm225, %v3015, 0
      %v3057 = vsel %vm225, %v3016, 0
      %v3060 = vsel %vm225, %v3017, 0
      %v3063 = vsel %vm225, %v3018, 0
      %v3066 = vsel %vm225, %v3019, 0
      %v3069 = vsel %vm225, %v3020, 0
      %v3072 = vsel %vm225, %v3021, 0
      %v3075 = vsel %vm225, %v3022, 0
      %v3078 = vsel %vm225, %v3023, 0
      %v3081 = vsel %vm225, %v3024, 0
      %v3084 = vsel %vm225, %v3025, 0
      %v3087 = vsel %vm225, %v3026, 0
      %v3090 = vsel %vm225, %v3027, 0
      %v3093 = vsel %vm225, %v3028, 0
      %v3096 = vsel %vm225, %v3029, 0
      %v3099 = vsel %vm225, %v3030, 0
      %v3102 = vsel %vm225, %v3031, 0
      %v3105 = vsel %vm225, %v3032, 0
      %v3108 = vsel %vm225, %v3033, 0
      %v3111 = vsel %vm225, %v3034, 0
      %v3114 = vsel %vm225, %v3035, 0
      %v3117 = vsel %vm225, %v3036, 0
      %v3120 = vsel %vm225, %v3037, 0
      %v3123 = vsel %vm225, %v3038, 0
      %v3126 = vsel %vm225, %v3039, 0
      %v3129 = vsel %vm225, %v3040, 0
      %v3132 = vsel %vm225, %v3041, 0
      %v3135 = vsel %vm225, %v3042, 0
      %v3138 = vsel %vm225, %v3043, 0
      %v3141 = vsel %vm225, %v3044, 0
      %v3144 = vsel %vm509, %v3046, 0
      %3146 = vmatprep.subr.mxu0 0.0
      %3147 = vmatpush1.msra.mxu0 %v3144
      %3148 = vmatprep.subr.mxu0 0.0
      %3149 = vmatpush1.msra.mxu0 0.0
      %3150 = vmatprep.subr.mxu0 0.0
      %3151 = vmatpush1.msra.mxu0 0.0
      %3152 = vmatprep.subr.mxu0 0.0
      %3153 = vmatpush1.msra.mxu0 0.0
      %3154 = vmatprep.subr.mxu0 0.0
      %3155 = vmatpush1.msra.mxu0 0.0
      %3156 = vmatprep.subr.mxu0 0.0
      %3157 = vmatpush1.msra.mxu0 0.0
      %3158 = vmatprep.subr.mxu0 0.0
      %3159 = vmatpush1.msra.mxu0 0.0
      %3160 = vmatprep.subr.mxu0 0.0
      %3161 = vmatpush1.msra.mxu0 0.0
      %3162 = vmatprep.subr.mxu0 0.0
      %3163 = vmatpush1.msra.mxu0 0.0
      %3164 = vmatprep.subr.mxu0 0.0
      %3165 = vmatpush1.msra.mxu0 0.0
      %3166 = vmatprep.subr.mxu0 0.0
      %3167 = vmatpush1.msra.mxu0 0.0
      %3168 = vmatprep.subr.mxu0 0.0
      %3169 = vmatpush1.msra.mxu0 0.0
      %3170 = vmatprep.subr.mxu0 0.0
      %3171 = vmatpush1.msra.mxu0 0.0
      %3172 = vmatprep.subr.mxu0 0.0
      %3173 = vmatpush1.msra.mxu0 0.0
      %3174 = vmatprep.subr.mxu0 0.0
      %3175 = vmatpush1.msra.mxu0 0.0
      %3176 = vmatprep.subr.mxu0 0.0
      %3177 = vmatpush1.msra.mxu0 0.0
      %3178 = vmatprep.subr.mxu0 0.0
      %3179 = vmatpush1.msra.mxu0 0.0
      %3180 = vmatprep.subr.mxu0 0.0
      %3181 = vmatpush1.msra.mxu0 0.0
      %3182 = vmatprep.subr.mxu0 0.0
      %3183 = vmatpush1.msra.mxu0 0.0
      %3184 = vmatprep.subr.mxu0 0.0
      %3185 = vmatpush1.msra.mxu0 0.0
      %3186 = vmatprep.subr.mxu0 0.0
      %3187 = vmatpush1.msra.mxu0 0.0
      %3188 = vmatprep.subr.mxu0 0.0
      %3189 = vmatpush1.msra.mxu0 0.0
      %3190 = vmatprep.subr.mxu0 0.0
      %3191 = vmatpush1.msra.mxu0 0.0
      %3192 = vmatprep.subr.mxu0 0.0
      %3193 = vmatpush1.msra.mxu0 0.0
      %3194 = vmatprep.subr.mxu0 0.0
      %3195 = vmatpush1.msra.mxu0 0.0
      %3196 = vmatprep.subr.mxu0 0.0
      %3197 = vmatpush1.msra.mxu0 0.0
      %3198 = vmatprep.subr.mxu0 0.0
      %3199 = vmatpush1.msra.mxu0 0.0
      %3200 = vmatprep.subr.mxu0 0.0
      %3201 = vmatpush1.msra.mxu0 0.0
      %3202 = vmatprep.subr.mxu0 0.0
      %3203 = vmatpush1.msra.mxu0 0.0
      %3204 = vmatprep.subr.mxu0 0.0
      %3205 = vmatpush1.msra.mxu0 0.0
      %3206 = vmatprep.subr.mxu0 0.0
      %3207 = vmatpush1.msra.mxu0 0.0
      %3208 = vmatprep.subr.mxu0 0.0
      %3209 = vmatpush1.msra.mxu0 0.0
      %3210 = vmatprep.mubr.f32.mxu0 0.0
      %3211 = vmatmul.mubr.f32.gmra.mrb[0].mxu0 %v3048
      %v3212 = vpop.f32.mrb[0].mxu0
      %v3213 = vadd.f32 0.0, %v3212
      %v3214 = vpop.f32.mrb[0].mxu0
      %3215 = vmatprep.mubr.f32.mxu0 0.0
      %3216 = vmatmul.mubr.f32.gmra.mrb[0].mxu0 %v3051
      %v3217 = vpop.f32.mrb[0].mxu0
      %v3218 = vadd.f32 0.0, %v3217
      %v3219 = vpop.f32.mrb[0].mxu0
      %3220 = vmatprep.mubr.f32.mxu0 0.0
      %3221 = vmatmul.mubr.f32.gmra.mrb[0].mxu0 %v3054
      %v3222 = vpop.f32.mrb[0].mxu0
      %v3223 = vadd.f32 0.0, %v3222
      %v3224 = vpop.f32.mrb[0].mxu0
      %3225 = vmatprep.mubr.f32.mxu0 0.0
      %3226 = vmatmul.mubr.f32.gmra.mrb[0].mxu0 %v3057
      %v3227 = vpop.f32.mrb[0].mxu0
      %v3228 = vadd.f32 0.0, %v3227
      %v3229 = vpop.f32.mrb[0].mxu0
      %3230 = vmatprep.mubr.f32.mxu0 0.0
      %3231 = vmatmul.mubr.f32.gmra.mrb[0].mxu0 %v3060
      %v3232 = vpop.f32.mrb[0].mxu0
      %v3233 = vadd.f32 0.0, %v3232
      %v3234 = vpop.f32.mrb[0].mxu0
      %3235 = vmatprep.mubr.f32.mxu0 0.0
      %3236 = vmatmul.mubr.f32.gmra.mrb[0].mxu0 %v3063
      %v3237 = vpop.f32.mrb[0].mxu0
      %v3238 = vadd.f32 0.0, %v3237
      %v3239 = vpop.f32.mrb[0].mxu0
      %3240 = vmatprep.mubr.f32.mxu0 0.0
      %3241 = vmatmul.mubr.f32.gmra.mrb[0].mxu0 %v3066
      %v3242 = vpop.f32.mrb[0].mxu0
      %v3243 = vadd.f32 0.0, %v3242
      %v3244 = vpop.f32.mrb[0].mxu0
      %3245 = vmatprep.mubr.f32.mxu0 0.0
      %3246 = vmatmul.mubr.f32.gmra.mrb[0].mxu0 %v3069
      %v3247 = vpop.f32.mrb[0].mxu0
      %v3248 = vadd.f32 0.0, %v3247
      %v3249 = vpop.f32.mrb[0].mxu0
      %3250 = vmatprep.mubr.f32.mxu0 0.0
      %3251 = vmatmul.mubr.f32.gmra.mrb[0].mxu0 %v3072
      %v3252 = vpop.f32.mrb[0].mxu0
      %v3253 = vadd.f32 0.0, %v3252
      %v3254 = vpop.f32.mrb[0].mxu0
      %3255 = vmatprep.mubr.f32.mxu0 0.0
      %3256 = vmatmul.mubr.f32.gmra.mrb[0].mxu0 %v3075
      %v3257 = vpop.f32.mrb[0].mxu0
      %v3258 = vadd.f32 0.0, %v3257
      %v3259 = vpop.f32.mrb[0].mxu0
      %3260 = vmatprep.mubr.f32.mxu0 0.0
      %3261 = vmatmul.mubr.f32.gmra.mrb[0].mxu0 %v3078
      %v3262 = vpop.f32.mrb[0].mxu0
      %v3263 = vadd.f32 0.0, %v3262
      %v3264 = vpop.f32.mrb[0].mxu0
      %3265 = vmatprep.mubr.f32.mxu0 0.0
      %3266 = vmatmul.mubr.f32.gmra.mrb[0].mxu0 %v3081
      %v3267 = vpop.f32.mrb[0].mxu0
      %v3268 = vadd.f32 0.0, %v3267
      %v3269 = vpop.f32.mrb[0].mxu0
      %3270 = vmatprep.mubr.f32.mxu0 0.0
      %3271 = vmatmul.mubr.f32.gmra.mrb[0].mxu0 %v3084
      %v3272 = vpop.f32.mrb[0].mxu0
      %v3273 = vadd.f32 0.0, %v3272
      %v3274 = vpop.f32.mrb[0].mxu0
      %3275 = vmatprep.mubr.f32.mxu0 0.0
      %3276 = vmatmul.mubr.f32.gmra.mrb[0].mxu0 %v3087
      %v3277 = vpop.f32.mrb[0].mxu0
      %v3278 = vadd.f32 0.0, %v3277
      %v3279 = vpop.f32.mrb[0].mxu0
      %3280 = vmatprep.mubr.f32.mxu0 0.0
      %3281 = vmatmul.mubr.f32.gmra.mrb[0].mxu0 %v3090
      %v3282 = vpop.f32.mrb[0].mxu0
      %v3283 = vadd.f32 0.0, %v3282
      %v3284 = vpop.f32.mrb[0].mxu0
      %3285 = vmatprep.mubr.f32.mxu0 0.0
      %3286 = vmatmul.mubr.f32.gmra.mrb[0].mxu0 %v3093
      %v3287 = vpop.f32.mrb[0].mxu0
      %v3288 = vadd.f32 0.0, %v3287
      %v3289 = vpop.f32.mrb[0].mxu0
      %3290 = vmatprep.mubr.f32.mxu0 0.0
      %3291 = vmatmul.mubr.f32.gmra.mrb[0].mxu0 %v3096
      %v3292 = vpop.f32.mrb[0].mxu0
      %v3293 = vadd.f32 0.0, %v3292
      %v3294 = vpop.f32.mrb[0].mxu0
      %3295 = vmatprep.mubr.f32.mxu0 0.0
      %3296 = vmatmul.mubr.f32.gmra.mrb[0].mxu0 %v3099
      %v3297 = vpop.f32.mrb[0].mxu0
      %v3298 = vadd.f32 0.0, %v3297
      %v3299 = vpop.f32.mrb[0].mxu0
      %3300 = vmatprep.mubr.f32.mxu0 0.0
      %3301 = vmatmul.mubr.f32.gmra.mrb[0].mxu0 %v3102
      %v3302 = vpop.f32.mrb[0].mxu0
      %v3303 = vadd.f32 0.0, %v3302
      %v3304 = vpop.f32.mrb[0].mxu0
      %3305 = vmatprep.mubr.f32.mxu0 0.0
      %3306 = vmatmul.mubr.f32.gmra.mrb[0].mxu0 %v3105
      %v3307 = vpop.f32.mrb[0].mxu0
      %v3308 = vadd.f32 0.0, %v3307
      %v3309 = vpop.f32.mrb[0].mxu0
      %3310 = vmatprep.mubr.f32.mxu0 0.0
      %3311 = vmatmul.mubr.f32.gmra.mrb[0].mxu0 %v3108
      %v3312 = vpop.f32.mrb[0].mxu0
      %v3313 = vadd.f32 0.0, %v3312
      %v3314 = vpop.f32.mrb[0].mxu0
      %3315 = vmatprep.mubr.f32.mxu0 0.0
      %3316 = vmatmul.mubr.f32.gmra.mrb[0].mxu0 %v3111
      %v3317 = vpop.f32.mrb[0].mxu0
      %v3318 = vadd.f32 0.0, %v3317
      %v3319 = vpop.f32.mrb[0].mxu0
      %3320 = vmatprep.mubr.f32.mxu0 0.0
      %3321 = vmatmul.mubr.f32.gmra.mrb[0].mxu0 %v3114
      %v3322 = vpop.f32.mrb[0].mxu0
      %v3323 = vadd.f32 0.0, %v3322
      %v3324 = vpop.f32.mrb[0].mxu0
      %3325 = vmatprep.mubr.f32.mxu0 0.0
      %3326 = vmatmul.mubr.f32.gmra.mrb[0].mxu0 %v3117
      %v3327 = vpop.f32.mrb[0].mxu0
      %v3328 = vadd.f32 0.0, %v3327
      %v3329 = vpop.f32.mrb[0].mxu0
      %3330 = vmatprep.mubr.f32.mxu0 0.0
      %3331 = vmatmul.mubr.f32.gmra.mrb[0].mxu0 %v3120
      %v3332 = vpop.f32.mrb[0].mxu0
      %v3333 = vadd.f32 0.0, %v3332
      %v3334 = vpop.f32.mrb[0].mxu0
      %3335 = vmatprep.mubr.f32.mxu0 0.0
      %3336 = vmatmul.mubr.f32.gmra.mrb[0].mxu0 %v3123
      %v3337 = vpop.f32.mrb[0].mxu0
      %v3338 = vadd.f32 0.0, %v3337
      %v3339 = vpop.f32.mrb[0].mxu0
      %3340 = vmatprep.mubr.f32.mxu0 0.0
      %3341 = vmatmul.mubr.f32.gmra.mrb[0].mxu0 %v3126
      %v3342 = vpop.f32.mrb[0].mxu0
      %v3343 = vadd.f32 0.0, %v3342
      %v3344 = vpop.f32.mrb[0].mxu0
      %3345 = vmatprep.mubr.f32.mxu0 0.0
      %3346 = vmatmul.mubr.f32.gmra.mrb[0].mxu0 %v3129
      %v3347 = vpop.f32.mrb[0].mxu0
      %v3348 = vadd.f32 0.0, %v3347
      %v3349 = vpop.f32.mrb[0].mxu0
      %3350 = vmatprep.mubr.f32.mxu0 0.0
      %3351 = vmatmul.mubr.f32.gmra.mrb[0].mxu0 %v3132
      %v3352 = vpop.f32.mrb[0].mxu0
      %v3353 = vadd.f32 0.0, %v3352
      %v3354 = vpop.f32.mrb[0].mxu0
      %3355 = vmatprep.mubr.f32.mxu0 0.0
      %3356 = vmatmul.mubr.f32.gmra.mrb[0].mxu0 %v3135
      %v3357 = vpop.f32.mrb[0].mxu0
      %v3358 = vadd.f32 0.0, %v3357
      %v3359 = vpop.f32.mrb[0].mxu0
      %3360 = vmatprep.mubr.f32.mxu0 0.0
      %3361 = vmatmul.mubr.f32.gmra.mrb[0].mxu0 %v3138
      %v3362 = vpop.f32.mrb[0].mxu0
      %v3363 = vadd.f32 0.0, %v3362
      %v3364 = vpop.f32.mrb[0].mxu0
      %3365 = vmatprep.mubr.f32.mxu0 0.0
      %3366 = vmatmul.mubr.f32.gmra.mrb[0].mxu0 %v3141
      %v3367 = vpop.f32.mrb[0].mxu0
      %v3368 = vadd.f32 0.0, %v3367
      %v3369 = vpop.f32.mrb[0].mxu0
      %3370 = vdwg.mxu0
      %v3371 = vadd.f32 %v2981, %v3213
      %v3372 = vadd.f32 %v2982, %v3218
      %v3373 = vadd.f32 %v2983, %v3223
      %v3374 = vadd.f32 %v2984, %v3228
      %v3375 = vadd.f32 %v2985, %v3233
      %v3376 = vadd.f32 %v2986, %v3238
      %v3377 = vadd.f32 %v2987, %v3243
      %v3378 = vadd.f32 %v2988, %v3248
      %v3379 = vadd.f32 %v2989, %v3253
      %v3380 = vadd.f32 %v2990, %v3258
      %v3381 = vadd.f32 %v2991, %v3263
      %v3382 = vadd.f32 %v2992, %v3268
      %v3383 = vadd.f32 %v2993, %v3273
      %v3384 = vadd.f32 %v2994, %v3278
      %v3385 = vadd.f32 %v2995, %v3283
      %v3386 = vadd.f32 %v2996, %v3288
      %v3387 = vadd.f32 %v2997, %v3293
      %v3388 = vadd.f32 %v2998, %v3298
      %v3389 = vadd.f32 %v2999, %v3303
      %v3390 = vadd.f32 %v3000, %v3308
      %v3391 = vadd.f32 %v3001, %v3313
      %v3392 = vadd.f32 %v3002, %v3318
      %v3393 = vadd.f32 %v3003, %v3323
      %v3394 = vadd.f32 %v3004, %v3328
      %v3395 = vadd.f32 %v3005, %v3333
      %v3396 = vadd.f32 %v3006, %v3338
      %v3397 = vadd.f32 %v3007, %v3343
      %v3398 = vadd.f32 %v3008, %v3348
      %v3399 = vadd.f32 %v3009, %v3353
      %v3400 = vadd.f32 %v3010, %v3358
      %v3401 = vadd.f32 %v3011, %v3363
      %v3402 = vadd.f32 %v3012, %v3368
      %v3403 = vld [vmem:[%s2622 + $0x2] sm:$0xff]
      %v3404 = vld [vmem:[%s2622 + $0xa] sm:$0xff]
      %v3405 = vld [vmem:[%s2622 + $0x1a] sm:$0xff]
      %v3406 = vld [vmem:[%s2622 + $0x22] sm:$0xff]
      %v3407 = vld [vmem:[%s2622 + $0x32] sm:$0xff]
      %v3408 = vld [vmem:[%s2622 + $0x3a] sm:$0xff]
      %v3409 = vld [vmem:[%s2622 + $0x4a] sm:$0xff]
      %v3410 = vld [vmem:[%s2622 + $0x52] sm:$0xff]
      %v3411 = vld [vmem:[%s2622 + $0x62] sm:$0xff]
      %v3412 = vld [vmem:[%s2622 + $0x6a] sm:$0xff]
      %v3413 = vld [vmem:[%s2622 + $0x7a] sm:$0xff]
      %v3414 = vld [vmem:[%s2622 + $0x82] sm:$0xff]
      %v3415 = vld [vmem:[%s2622 + $0x92] sm:$0xff]
      %v3416 = vld [vmem:[%s2622 + $0x9a] sm:$0xff]
      %v3417 = vld [vmem:[%s2622 + $0xaa] sm:$0xff]
      %v3418 = vld [vmem:[%s2622 + $0xb2] sm:$0xff]
      %v3419 = vld [vmem:[%s2622 + $0xc2] sm:$0xff]
      %v3420 = vld [vmem:[%s2622 + $0xca] sm:$0xff]
      %v3421 = vld [vmem:[%s2622 + $0xda] sm:$0xff]
      %v3422 = vld [vmem:[%s2622 + $0xe2] sm:$0xff]
      %v3423 = vld [vmem:[%s2622 + $0xf2] sm:$0xff]
      %v3424 = vld [vmem:[%s2622 + $0xfa] sm:$0xff]
      %v3425 = vld [vmem:[%s2622 + $0x10a] sm:$0xff]
      %v3426 = vld [vmem:[%s2622 + $0x112] sm:$0xff]
      %v3427 = vld [vmem:[%s2622 + $0x122] sm:$0xff]
      %v3428 = vld [vmem:[%s2622 + $0x12a] sm:$0xff]
      %v3429 = vld [vmem:[%s2622 + $0x13a] sm:$0xff]
      %v3430 = vld [vmem:[%s2622 + $0x142] sm:$0xff]
      %v3431 = vld [vmem:[%s2622 + $0x152] sm:$0xff]
      %v3432 = vld [vmem:[%s2622 + $0x15a] sm:$0xff]
      %v3433 = vld [vmem:[%s2622 + $0x16a] sm:$0xff]
      %v3434 = vld [vmem:[%s2622 + $0x172] sm:$0xff]
      %s3435 = scalar_lea.vmem %s1, 32
      %v3436 = vld [vmem:[%s3435] sm:$0xf]
      %v3438 = vsel %vm225, %v3403, 0
      %v3441 = vsel %vm225, %v3404, 0
      %v3444 = vsel %vm225, %v3405, 0
      %v3447 = vsel %vm225, %v3406, 0
      %v3450 = vsel %vm225, %v3407, 0
      %v3453 = vsel %vm225, %v3408, 0
      %v3456 = vsel %vm225, %v3409, 0
      %v3459 = vsel %vm225, %v3410, 0
      %v3462 = vsel %vm225, %v3411, 0
      %v3465 = vsel %vm225, %v3412, 0
      %v3468 = vsel %vm225, %v3413, 0
      %v3471 = vsel %vm225, %v3414, 0
      %v3474 = vsel %vm225, %v3415, 0
      %v3477 = vsel %vm225, %v3416, 0
      %v3480 = vsel %vm225, %v3417, 0
      %v3483 = vsel %vm225, %v3418, 0
      %v3486 = vsel %vm225, %v3419, 0
      %v3489 = vsel %vm225, %v3420, 0
      %v3492 = vsel %vm225, %v3421, 0
      %v3495 = vsel %vm225, %v3422, 0
      %v3498 = vsel %vm225, %v3423, 0
      %v3501 = vsel %vm225, %v3424, 0
      %v3504 = vsel %vm225, %v3425, 0
      %v3507 = vsel %vm225, %v3426, 0
      %v3510 = vsel %vm225, %v3427, 0
      %v3513 = vsel %vm225, %v3428, 0
      %v3516 = vsel %vm225, %v3429, 0
      %v3519 = vsel %vm225, %v3430, 0
      %v3522 = vsel %vm225, %v3431, 0
      %v3525 = vsel %vm225, %v3432, 0
      %v3528 = vsel %vm225, %v3433, 0
      %v3531 = vsel %vm225, %v3434, 0
      %v3534 = vsel %vm509, %v3436, 0
      %3536 = vmatprep.subr.mxu0 0.0
      %3537 = vmatpush1.msra.mxu0 %v3534
      %3538 = vmatprep.subr.mxu0 0.0
      %3539 = vmatpush1.msra.mxu0 0.0
      %3540 = vmatprep.subr.mxu0 0.0
      %3541 = vmatpush1.msra.mxu0 0.0
      %3542 = vmatprep.subr.mxu0 0.0
      %3543 = vmatpush1.msra.mxu0 0.0
      %3544 = vmatprep.subr.mxu0 0.0
      %3545 = vmatpush1.msra.mxu0 0.0
      %3546 = vmatprep.subr.mxu0 0.0
      %3547 = vmatpush1.msra.mxu0 0.0
      %3548 = vmatprep.subr.mxu0 0.0
      %3549 = vmatpush1.msra.mxu0 0.0
      %3550 = vmatprep.subr.mxu0 0.0
      %3551 = vmatpush1.msra.mxu0 0.0
      %3552 = vmatprep.subr.mxu0 0.0
      %3553 = vmatpush1.msra.mxu0 0.0
      %3554 = vmatprep.subr.mxu0 0.0
      %3555 = vmatpush1.msra.mxu0 0.0
      %3556 = vmatprep.subr.mxu0 0.0
      %3557 = vmatpush1.msra.mxu0 0.0
      %3558 = vmatprep.subr.mxu0 0.0
      %3559 = vmatpush1.msra.mxu0 0.0
      %3560 = vmatprep.subr.mxu0 0.0
      %3561 = vmatpush1.msra.mxu0 0.0
      %3562 = vmatprep.subr.mxu0 0.0
      %3563 = vmatpush1.msra.mxu0 0.0
      %3564 = vmatprep.subr.mxu0 0.0
      %3565 = vmatpush1.msra.mxu0 0.0
      %3566 = vmatprep.subr.mxu0 0.0
      %3567 = vmatpush1.msra.mxu0 0.0
      %3568 = vmatprep.subr.mxu0 0.0
      %3569 = vmatpush1.msra.mxu0 0.0
      %3570 = vmatprep.subr.mxu0 0.0
      %3571 = vmatpush1.msra.mxu0 0.0
      %3572 = vmatprep.subr.mxu0 0.0
      %3573 = vmatpush1.msra.mxu0 0.0
      %3574 = vmatprep.subr.mxu0 0.0
      %3575 = vmatpush1.msra.mxu0 0.0
      %3576 = vmatprep.subr.mxu0 0.0
      %3577 = vmatpush1.msra.mxu0 0.0
      %3578 = vmatprep.subr.mxu0 0.0
      %3579 = vmatpush1.msra.mxu0 0.0
      %3580 = vmatprep.subr.mxu0 0.0
      %3581 = vmatpush1.msra.mxu0 0.0
      %3582 = vmatprep.subr.mxu0 0.0
      %3583 = vmatpush1.msra.mxu0 0.0
      %3584 = vmatprep.subr.mxu0 0.0
      %3585 = vmatpush1.msra.mxu0 0.0
      %3586 = vmatprep.subr.mxu0 0.0
      %3587 = vmatpush1.msra.mxu0 0.0
      %3588 = vmatprep.subr.mxu0 0.0
      %3589 = vmatpush1.msra.mxu0 0.0
      %3590 = vmatprep.subr.mxu0 0.0
      %3591 = vmatpush1.msra.mxu0 0.0
      %3592 = vmatprep.subr.mxu0 0.0
      %3593 = vmatpush1.msra.mxu0 0.0
      %3594 = vmatprep.subr.mxu0 0.0
      %3595 = vmatpush1.msra.mxu0 0.0
      %3596 = vmatprep.subr.mxu0 0.0
      %3597 = vmatpush1.msra.mxu0 0.0
      %3598 = vmatprep.subr.mxu0 0.0
      %3599 = vmatpush1.msra.mxu0 0.0
      %3600 = vmatprep.mubr.f32.mxu0 0.0
      %3601 = vmatmul.mubr.f32.gmra.mrb[0].mxu0 %v3438
      %v3602 = vpop.f32.mrb[0].mxu0
      %v3603 = vadd.f32 0.0, %v3602
      %v3604 = vpop.f32.mrb[0].mxu0
      %3605 = vmatprep.mubr.f32.mxu0 0.0
      %3606 = vmatmul.mubr.f32.gmra.mrb[0].mxu0 %v3441
      %v3607 = vpop.f32.mrb[0].mxu0
      %v3608 = vadd.f32 0.0, %v3607
      %v3609 = vpop.f32.mrb[0].mxu0
      %3610 = vmatprep.mubr.f32.mxu0 0.0
      %3611 = vmatmul.mubr.f32.gmra.mrb[0].mxu0 %v3444
      %v3612 = vpop.f32.mrb[0].mxu0
      %v3613 = vadd.f32 0.0, %v3612
      %v3614 = vpop.f32.mrb[0].mxu0
      %3615 = vmatprep.mubr.f32.mxu0 0.0
      %3616 = vmatmul.mubr.f32.gmra.mrb[0].mxu0 %v3447
      %v3617 = vpop.f32.mrb[0].mxu0
      %v3618 = vadd.f32 0.0, %v3617
      %v3619 = vpop.f32.mrb[0].mxu0
      %3620 = vmatprep.mubr.f32.mxu0 0.0
      %3621 = vmatmul.mubr.f32.gmra.mrb[0].mxu0 %v3450
      %v3622 = vpop.f32.mrb[0].mxu0
      %v3623 = vadd.f32 0.0, %v3622
      %v3624 = vpop.f32.mrb[0].mxu0
      %3625 = vmatprep.mubr.f32.mxu0 0.0
      %3626 = vmatmul.mubr.f32.gmra.mrb[0].mxu0 %v3453
      %v3627 = vpop.f32.mrb[0].mxu0
      %v3628 = vadd.f32 0.0, %v3627
      %v3629 = vpop.f32.mrb[0].mxu0
      %3630 = vmatprep.mubr.f32.mxu0 0.0
      %3631 = vmatmul.mubr.f32.gmra.mrb[0].mxu0 %v3456
      %v3632 = vpop.f32.mrb[0].mxu0
      %v3633 = vadd.f32 0.0, %v3632
      %v3634 = vpop.f32.mrb[0].mxu0
      %3635 = vmatprep.mubr.f32.mxu0 0.0
      %3636 = vmatmul.mubr.f32.gmra.mrb[0].mxu0 %v3459
      %v3637 = vpop.f32.mrb[0].mxu0
      %v3638 = vadd.f32 0.0, %v3637
      %v3639 = vpop.f32.mrb[0].mxu0
      %3640 = vmatprep.mubr.f32.mxu0 0.0
      %3641 = vmatmul.mubr.f32.gmra.mrb[0].mxu0 %v3462
      %v3642 = vpop.f32.mrb[0].mxu0
      %v3643 = vadd.f32 0.0, %v3642
      %v3644 = vpop.f32.mrb[0].mxu0
      %3645 = vmatprep.mubr.f32.mxu0 0.0
      %3646 = vmatmul.mubr.f32.gmra.mrb[0].mxu0 %v3465
      %v3647 = vpop.f32.mrb[0].mxu0
      %v3648 = vadd.f32 0.0, %v3647
      %v3649 = vpop.f32.mrb[0].mxu0
      %3650 = vmatprep.mubr.f32.mxu0 0.0
      %3651 = vmatmul.mubr.f32.gmra.mrb[0].mxu0 %v3468
      %v3652 = vpop.f32.mrb[0].mxu0
      %v3653 = vadd.f32 0.0, %v3652
      %v3654 = vpop.f32.mrb[0].mxu0
      %3655 = vmatprep.mubr.f32.mxu0 0.0
      %3656 = vmatmul.mubr.f32.gmra.mrb[0].mxu0 %v3471
      %v3657 = vpop.f32.mrb[0].mxu0
      %v3658 = vadd.f32 0.0, %v3657
      %v3659 = vpop.f32.mrb[0].mxu0
      %3660 = vmatprep.mubr.f32.mxu0 0.0
      %3661 = vmatmul.mubr.f32.gmra.mrb[0].mxu0 %v3474
      %v3662 = vpop.f32.mrb[0].mxu0
      %v3663 = vadd.f32 0.0, %v3662
      %v3664 = vpop.f32.mrb[0].mxu0
      %3665 = vmatprep.mubr.f32.mxu0 0.0
      %3666 = vmatmul.mubr.f32.gmra.mrb[0].mxu0 %v3477
      %v3667 = vpop.f32.mrb[0].mxu0
      %v3668 = vadd.f32 0.0, %v3667
      %v3669 = vpop.f32.mrb[0].mxu0
      %3670 = vmatprep.mubr.f32.mxu0 0.0
      %3671 = vmatmul.mubr.f32.gmra.mrb[0].mxu0 %v3480
      %v3672 = vpop.f32.mrb[0].mxu0
      %v3673 = vadd.f32 0.0, %v3672
      %v3674 = vpop.f32.mrb[0].mxu0
      %3675 = vmatprep.mubr.f32.mxu0 0.0
      %3676 = vmatmul.mubr.f32.gmra.mrb[0].mxu0 %v3483
      %v3677 = vpop.f32.mrb[0].mxu0
      %v3678 = vadd.f32 0.0, %v3677
      %v3679 = vpop.f32.mrb[0].mxu0
      %3680 = vmatprep.mubr.f32.mxu0 0.0
      %3681 = vmatmul.mubr.f32.gmra.mrb[0].mxu0 %v3486
      %v3682 = vpop.f32.mrb[0].mxu0
      %v3683 = vadd.f32 0.0, %v3682
      %v3684 = vpop.f32.mrb[0].mxu0
      %3685 = vmatprep.mubr.f32.mxu0 0.0
      %3686 = vmatmul.mubr.f32.gmra.mrb[0].mxu0 %v3489
      %v3687 = vpop.f32.mrb[0].mxu0
      %v3688 = vadd.f32 0.0, %v3687
      %v3689 = vpop.f32.mrb[0].mxu0
      %3690 = vmatprep.mubr.f32.mxu0 0.0
      %3691 = vmatmul.mubr.f32.gmra.mrb[0].mxu0 %v3492
      %v3692 = vpop.f32.mrb[0].mxu0
      %v3693 = vadd.f32 0.0, %v3692
      %v3694 = vpop.f32.mrb[0].mxu0
      %3695 = vmatprep.mubr.f32.mxu0 0.0
      %3696 = vmatmul.mubr.f32.gmra.mrb[0].mxu0 %v3495
      %v3697 = vpop.f32.mrb[0].mxu0
      %v3698 = vadd.f32 0.0, %v3697
      %v3699 = vpop.f32.mrb[0].mxu0
      %3700 = vmatprep.mubr.f32.mxu0 0.0
      %3701 = vmatmul.mubr.f32.gmra.mrb[0].mxu0 %v3498
      %v3702 = vpop.f32.mrb[0].mxu0
      %v3703 = vadd.f32 0.0, %v3702
      %v3704 = vpop.f32.mrb[0].mxu0
      %3705 = vmatprep.mubr.f32.mxu0 0.0
      %3706 = vmatmul.mubr.f32.gmra.mrb[0].mxu0 %v3501
      %v3707 = vpop.f32.mrb[0].mxu0
      %v3708 = vadd.f32 0.0, %v3707
      %v3709 = vpop.f32.mrb[0].mxu0
      %3710 = vmatprep.mubr.f32.mxu0 0.0
      %3711 = vmatmul.mubr.f32.gmra.mrb[0].mxu0 %v3504
      %v3712 = vpop.f32.mrb[0].mxu0
      %v3713 = vadd.f32 0.0, %v3712
      %v3714 = vpop.f32.mrb[0].mxu0
      %3715 = vmatprep.mubr.f32.mxu0 0.0
      %3716 = vmatmul.mubr.f32.gmra.mrb[0].mxu0 %v3507
      %v3717 = vpop.f32.mrb[0].mxu0
      %v3718 = vadd.f32 0.0, %v3717
      %v3719 = vpop.f32.mrb[0].mxu0
      %3720 = vmatprep.mubr.f32.mxu0 0.0
      %3721 = vmatmul.mubr.f32.gmra.mrb[0].mxu0 %v3510
      %v3722 = vpop.f32.mrb[0].mxu0
      %v3723 = vadd.f32 0.0, %v3722
      %v3724 = vpop.f32.mrb[0].mxu0
      %3725 = vmatprep.mubr.f32.mxu0 0.0
      %3726 = vmatmul.mubr.f32.gmra.mrb[0].mxu0 %v3513
      %v3727 = vpop.f32.mrb[0].mxu0
      %v3728 = vadd.f32 0.0, %v3727
      %v3729 = vpop.f32.mrb[0].mxu0
      %3730 = vmatprep.mubr.f32.mxu0 0.0
      %3731 = vmatmul.mubr.f32.gmra.mrb[0].mxu0 %v3516
      %v3732 = vpop.f32.mrb[0].mxu0
      %v3733 = vadd.f32 0.0, %v3732
      %v3734 = vpop.f32.mrb[0].mxu0
      %3735 = vmatprep.mubr.f32.mxu0 0.0
      %3736 = vmatmul.mubr.f32.gmra.mrb[0].mxu0 %v3519
      %v3737 = vpop.f32.mrb[0].mxu0
      %v3738 = vadd.f32 0.0, %v3737
      %v3739 = vpop.f32.mrb[0].mxu0
      %3740 = vmatprep.mubr.f32.mxu0 0.0
      %3741 = vmatmul.mubr.f32.gmra.mrb[0].mxu0 %v3522
      %v3742 = vpop.f32.mrb[0].mxu0
      %v3743 = vadd.f32 0.0, %v3742
      %v3744 = vpop.f32.mrb[0].mxu0
      %3745 = vmatprep.mubr.f32.mxu0 0.0
      %3746 = vmatmul.mubr.f32.gmra.mrb[0].mxu0 %v3525
      %v3747 = vpop.f32.mrb[0].mxu0
      %v3748 = vadd.f32 0.0, %v3747
      %v3749 = vpop.f32.mrb[0].mxu0
      %3750 = vmatprep.mubr.f32.mxu0 0.0
      %3751 = vmatmul.mubr.f32.gmra.mrb[0].mxu0 %v3528
      %v3752 = vpop.f32.mrb[0].mxu0
      %v3753 = vadd.f32 0.0, %v3752
      %v3754 = vpop.f32.mrb[0].mxu0
      %3755 = vmatprep.mubr.f32.mxu0 0.0
      %3756 = vmatmul.mubr.f32.gmra.mrb[0].mxu0 %v3531
      %v3757 = vpop.f32.mrb[0].mxu0
      %v3758 = vadd.f32 0.0, %v3757
      %v3759 = vpop.f32.mrb[0].mxu0
      %3760 = vdwg.mxu0
      %v3761 = vadd.f32 %v3371, %v3603
      %v3762 = vadd.f32 %v3372, %v3608
      %v3763 = vadd.f32 %v3373, %v3613
      %v3764 = vadd.f32 %v3374, %v3618
      %v3765 = vadd.f32 %v3375, %v3623
      %v3766 = vadd.f32 %v3376, %v3628
      %v3767 = vadd.f32 %v3377, %v3633
      %v3768 = vadd.f32 %v3378, %v3638
      %v3769 = vadd.f32 %v3379, %v3643
      %v3770 = vadd.f32 %v3380, %v3648
      %v3771 = vadd.f32 %v3381, %v3653
      %v3772 = vadd.f32 %v3382, %v3658
      %v3773 = vadd.f32 %v3383, %v3663
      %v3774 = vadd.f32 %v3384, %v3668
      %v3775 = vadd.f32 %v3385, %v3673
      %v3776 = vadd.f32 %v3386, %v3678
      %v3777 = vadd.f32 %v3387, %v3683
      %v3778 = vadd.f32 %v3388, %v3688
      %v3779 = vadd.f32 %v3389, %v3693
      %v3780 = vadd.f32 %v3390, %v3698
      %v3781 = vadd.f32 %v3391, %v3703
      %v3782 = vadd.f32 %v3392, %v3708
      %v3783 = vadd.f32 %v3393, %v3713
      %v3784 = vadd.f32 %v3394, %v3718
      %v3785 = vadd.f32 %v3395, %v3723
      %v3786 = vadd.f32 %v3396, %v3728
      %v3787 = vadd.f32 %v3397, %v3733
      %v3788 = vadd.f32 %v3398, %v3738
      %v3789 = vadd.f32 %v3399, %v3743
      %v3790 = vadd.f32 %v3400, %v3748
      %v3791 = vadd.f32 %v3401, %v3753
      %v3792 = vadd.f32 %v3402, %v3758
      %v3793 = vld [vmem:[%s2] sm:$0x1]
      %v3795 = vlaneseq
      %v3796 = vshrl.u32 %v3795, 7
      %v3797 = vsub.s32 0, %v3796
      %v3798 = vrot.slane %v3793, %v3797
      %v3800 = vadd.f32 %v3761, %v3798
      %v3801 = vadd.f32 %v3762, %v3798
      %v3802 = vadd.f32 %v3763, %v3798
      %v3803 = vadd.f32 %v3764, %v3798
      %v3804 = vadd.f32 %v3765, %v3798
      %v3805 = vadd.f32 %v3766, %v3798
      %v3806 = vadd.f32 %v3767, %v3798
      %v3807 = vadd.f32 %v3768, %v3798
      %v3808 = vadd.f32 %v3769, %v3798
      %v3809 = vadd.f32 %v3770, %v3798
      %v3810 = vadd.f32 %v3771, %v3798
      %v3811 = vadd.f32 %v3772, %v3798
      %v3812 = vadd.f32 %v3773, %v3798
      %v3813 = vadd.f32 %v3774, %v3798
      %v3814 = vadd.f32 %v3775, %v3798
      %v3815 = vadd.f32 %v3776, %v3798
      %v3816 = vadd.f32 %v3777, %v3798
      %v3817 = vadd.f32 %v3778, %v3798
      %v3818 = vadd.f32 %v3779, %v3798
      %v3819 = vadd.f32 %v3780, %v3798
      %v3820 = vadd.f32 %v3781, %v3798
      %v3821 = vadd.f32 %v3782, %v3798
      %v3822 = vadd.f32 %v3783, %v3798
      %v3823 = vadd.f32 %v3784, %v3798
      %v3824 = vadd.f32 %v3785, %v3798
      %v3825 = vadd.f32 %v3786, %v3798
      %v3826 = vadd.f32 %v3787, %v3798
      %v3827 = vadd.f32 %v3788, %v3798
      %v3828 = vadd.f32 %v3789, %v3798
      %v3829 = vadd.f32 %v3790, %v3798
      %v3830 = vadd.f32 %v3791, %v3798
      %v3831 = vadd.f32 %v3792, %v3798
      %vm3832 = vcmp.ge.f32.partialorder %v3800, 0.0
      %vm3833 = vcmp.ge.f32.partialorder %v3801, 0.0
      %vm3834 = vcmp.ge.f32.partialorder %v3802, 0.0
      %vm3835 = vcmp.ge.f32.partialorder %v3803, 0.0
      %vm3836 = vcmp.ge.f32.partialorder %v3804, 0.0
      %vm3837 = vcmp.ge.f32.partialorder %v3805, 0.0
      %vm3838 = vcmp.ge.f32.partialorder %v3806, 0.0
      %vm3839 = vcmp.ge.f32.partialorder %v3807, 0.0
      %vm3840 = vcmp.ge.f32.partialorder %v3808, 0.0
      %vm3841 = vcmp.ge.f32.partialorder %v3809, 0.0
      %vm3842 = vcmp.ge.f32.partialorder %v3810, 0.0
      %vm3843 = vcmp.ge.f32.partialorder %v3811, 0.0
      %vm3844 = vcmp.ge.f32.partialorder %v3812, 0.0
      %vm3845 = vcmp.ge.f32.partialorder %v3813, 0.0
      %vm3846 = vcmp.ge.f32.partialorder %v3814, 0.0
      %vm3847 = vcmp.ge.f32.partialorder %v3815, 0.0
      %vm3848 = vcmp.ge.f32.partialorder %v3816, 0.0
      %vm3849 = vcmp.ge.f32.partialorder %v3817, 0.0
      %vm3850 = vcmp.ge.f32.partialorder %v3818, 0.0
      %vm3851 = vcmp.ge.f32.partialorder %v3819, 0.0
      %vm3852 = vcmp.ge.f32.partialorder %v3820, 0.0
      %vm3853 = vcmp.ge.f32.partialorder %v3821, 0.0
      %vm3854 = vcmp.ge.f32.partialorder %v3822, 0.0
      %vm3855 = vcmp.ge.f32.partialorder %v3823, 0.0
      %vm3856 = vcmp.ge.f32.partialorder %v3824, 0.0
      %vm3857 = vcmp.ge.f32.partialorder %v3825, 0.0
      %vm3858 = vcmp.ge.f32.partialorder %v3826, 0.0
      %vm3859 = vcmp.ge.f32.partialorder %v3827, 0.0
      %vm3860 = vcmp.ge.f32.partialorder %v3828, 0.0
      %vm3861 = vcmp.ge.f32.partialorder %v3829, 0.0
      %vm3862 = vcmp.ge.f32.partialorder %v3830, 0.0
      %vm3863 = vcmp.ge.f32.partialorder %v3831, 0.0
      %v3864 = vmul.f32 %v3800, 0.2
      %v3865 = vmul.f32 %v3801, 0.2
      %v3866 = vmul.f32 %v3802, 0.2
      %v3867 = vmul.f32 %v3803, 0.2
      %v3868 = vmul.f32 %v3804, 0.2
      %v3869 = vmul.f32 %v3805, 0.2
      %v3870 = vmul.f32 %v3806, 0.2
      %v3871 = vmul.f32 %v3807, 0.2
      %v3872 = vmul.f32 %v3808, 0.2
      %v3873 = vmul.f32 %v3809, 0.2
      %v3874 = vmul.f32 %v3810, 0.2
      %v3875 = vmul.f32 %v3811, 0.2
      %v3876 = vmul.f32 %v3812, 0.2
      %v3877 = vmul.f32 %v3813, 0.2
      %v3878 = vmul.f32 %v3814, 0.2
      %v3879 = vmul.f32 %v3815, 0.2
      %v3880 = vmul.f32 %v3816, 0.2
      %v3881 = vmul.f32 %v3817, 0.2
      %v3882 = vmul.f32 %v3818, 0.2
      %v3883 = vmul.f32 %v3819, 0.2
      %v3884 = vmul.f32 %v3820, 0.2
      %v3885 = vmul.f32 %v3821, 0.2
      %v3886 = vmul.f32 %v3822, 0.2
      %v3887 = vmul.f32 %v3823, 0.2
      %v3888 = vmul.f32 %v3824, 0.2
      %v3889 = vmul.f32 %v3825, 0.2
      %v3890 = vmul.f32 %v3826, 0.2
      %v3891 = vmul.f32 %v3827, 0.2
      %v3892 = vmul.f32 %v3828, 0.2
      %v3893 = vmul.f32 %v3829, 0.2
      %v3894 = vmul.f32 %v3830, 0.2
      %v3895 = vmul.f32 %v3831, 0.2
      %v3896 = vsel %vm3832, %v3800, %v3864
      %v3897 = vsel %vm3833, %v3801, %v3865
      %v3898 = vsel %vm3834, %v3802, %v3866
      %v3899 = vsel %vm3835, %v3803, %v3867
      %v3900 = vsel %vm3836, %v3804, %v3868
      %v3901 = vsel %vm3837, %v3805, %v3869
      %v3902 = vsel %vm3838, %v3806, %v3870
      %v3903 = vsel %vm3839, %v3807, %v3871
      %v3904 = vsel %vm3840, %v3808, %v3872
      %v3905 = vsel %vm3841, %v3809, %v3873
      %v3906 = vsel %vm3842, %v3810, %v3874
      %v3907 = vsel %vm3843, %v3811, %v3875
      %v3908 = vsel %vm3844, %v3812, %v3876
      %v3909 = vsel %vm3845, %v3813, %v3877
      %v3910 = vsel %vm3846, %v3814, %v3878
      %v3911 = vsel %vm3847, %v3815, %v3879
      %v3912 = vsel %vm3848, %v3816, %v3880
      %v3913 = vsel %vm3849, %v3817, %v3881
      %v3914 = vsel %vm3850, %v3818, %v3882
      %v3915 = vsel %vm3851, %v3819, %v3883
      %v3916 = vsel %vm3852, %v3820, %v3884
      %v3917 = vsel %vm3853, %v3821, %v3885
      %v3918 = vsel %vm3854, %v3822, %v3886
      %v3919 = vsel %vm3855, %v3823, %v3887
      %v3920 = vsel %vm3856, %v3824, %v3888
      %v3921 = vsel %vm3857, %v3825, %v3889
      %v3922 = vsel %vm3858, %v3826, %v3890
      %v3923 = vsel %vm3859, %v3827, %v3891
      %v3924 = vsel %vm3860, %v3828, %v3892
      %v3925 = vsel %vm3861, %v3829, %v3893
      %v3926 = vsel %vm3862, %v3830, %v3894
      %v3927 = vsel %vm3863, %v3831, %v3895
      %vm3928 = vcmask 64512
      %3929 = vst.msk [vmem:[#allocation3] sm:$0xff] %vm3928, 0.0
      %3930 = vst.msk [vmem:[#allocation3 + $0x8] sm:$0xff] %vm3928, 0.0
      %vm3931 = vcmask 58368
      %3932 = vst.msk [vmem:[#allocation3 + $0x10] sm:$0x3] %vm3931, 0.0
      %3933 = vst.msk [vmem:[#allocation3 + $0x18] sm:$0xff] %vm3928, 0.0
      %3934 = vst.msk [vmem:[#allocation3 + $0x20] sm:$0xff] %vm3928, 0.0
      %3935 = vst.msk [vmem:[#allocation3 + $0x28] sm:$0x3] %vm3931, 0.0
      %3936 = vst.msk [vmem:[#allocation3 + $0x30] sm:$0xff] %vm3928, 0.0
      %3937 = vst.msk [vmem:[#allocation3 + $0x38] sm:$0xff] %vm3928, 0.0
      %3938 = vst.msk [vmem:[#allocation3 + $0x40] sm:$0x3] %vm3931, 0.0
      %3939 = vst.msk [vmem:[#allocation3 + $0x48] sm:$0xff] %vm3928, 0.0
      %3940 = vst.msk [vmem:[#allocation3 + $0x50] sm:$0xff] %vm3928, 0.0
      %3941 = vst.msk [vmem:[#allocation3 + $0x58] sm:$0x3] %vm3931, 0.0
      %3942 = vst.msk [vmem:[#allocation3 + $0x60] sm:$0xff] %vm3928, 0.0
      %3943 = vst.msk [vmem:[#allocation3 + $0x68] sm:$0xff] %vm3928, 0.0
      %3944 = vst.msk [vmem:[#allocation3 + $0x70] sm:$0x3] %vm3931, 0.0
      %3945 = vst.msk [vmem:[#allocation3 + $0x78] sm:$0xff] %vm3928, 0.0
      %3946 = vst.msk [vmem:[#allocation3 + $0x80] sm:$0xff] %vm3928, 0.0
      %3947 = vst.msk [vmem:[#allocation3 + $0x88] sm:$0x3] %vm3931, 0.0
      %3948 = vst.msk [vmem:[#allocation3 + $0x90] sm:$0xff] %vm3928, 0.0
      %3949 = vst.msk [vmem:[#allocation3 + $0x98] sm:$0xff] %vm3928, 0.0
      %3950 = vst.msk [vmem:[#allocation3 + $0xa0] sm:$0x3] %vm3931, 0.0
      %3951 = vst.msk [vmem:[#allocation3 + $0xa8] sm:$0xff] %vm3928, 0.0
      %3952 = vst.msk [vmem:[#allocation3 + $0xb0] sm:$0xff] %vm3928, 0.0
      %3953 = vst.msk [vmem:[#allocation3 + $0xb8] sm:$0x3] %vm3931, 0.0
      %3954 = vst.msk [vmem:[#allocation3 + $0xc0] sm:$0xff] %vm3928, 0.0
      %3955 = vst.msk [vmem:[#allocation3 + $0xc8] sm:$0xff] %vm3928, 0.0
      %3956 = vst.msk [vmem:[#allocation3 + $0xd0] sm:$0x3] %vm3931, 0.0
      %3957 = vst.msk [vmem:[#allocation3 + $0xd8] sm:$0xff] %vm3928, 0.0
      %3958 = vst.msk [vmem:[#allocation3 + $0xe0] sm:$0xff] %vm3928, 0.0
      %3959 = vst.msk [vmem:[#allocation3 + $0xe8] sm:$0x3] %vm3931, 0.0
      %3960 = vst.msk [vmem:[#allocation3 + $0xf0] sm:$0xff] %vm3928, 0.0
      %3961 = vst.msk [vmem:[#allocation3 + $0xf8] sm:$0xff] %vm3928, 0.0
      %3962 = vst.msk [vmem:[#allocation3 + $0x100] sm:$0x3] %vm3931, 0.0
      %3963 = vst.msk [vmem:[#allocation3 + $0x108] sm:$0xff] %vm3928, 0.0
      %3964 = vst.msk [vmem:[#allocation3 + $0x110] sm:$0xff] %vm3928, 0.0
      %3965 = vst.msk [vmem:[#allocation3 + $0x118] sm:$0x3] %vm3931, 0.0
      %3966 = vst.msk [vmem:[#allocation3 + $0x120] sm:$0xff] %vm3928, 0.0
      %3967 = vst.msk [vmem:[#allocation3 + $0x128] sm:$0xff] %vm3928, 0.0
      %3968 = vst.msk [vmem:[#allocation3 + $0x130] sm:$0x3] %vm3931, 0.0
      %3969 = vst.msk [vmem:[#allocation3 + $0x138] sm:$0xff] %vm3928, 0.0
      %3970 = vst.msk [vmem:[#allocation3 + $0x140] sm:$0xff] %vm3928, 0.0
      %3971 = vst.msk [vmem:[#allocation3 + $0x148] sm:$0x3] %vm3931, 0.0
      %3972 = vst.msk [vmem:[#allocation3 + $0x150] sm:$0xff] %vm3928, 0.0
      %3973 = vst.msk [vmem:[#allocation3 + $0x158] sm:$0xff] %vm3928, 0.0
      %3974 = vst.msk [vmem:[#allocation3 + $0x160] sm:$0x3] %vm3931, 0.0
      %3975 = vst.msk [vmem:[#allocation3 + $0x168] sm:$0xff] %vm3928, 0.0
      %3976 = vst.msk [vmem:[#allocation3 + $0x170] sm:$0xff] %vm3928, 0.0
      %3977 = vst.msk [vmem:[#allocation3 + $0x178] sm:$0x3] %vm3931, 0.0
      %3978 = vst.msk [vmem:[#allocation3 + $0x180] sm:$0xff] %vm3928, 0.0
      %3979 = vst.msk [vmem:[#allocation3 + $0x188] sm:$0xff] %vm3928, 0.0
      %3980 = vst.msk [vmem:[#allocation3 + $0x190] sm:$0x3] %vm3931, 0.0
      %3981 = vst.msk [vmem:[#allocation3 + $0x198] sm:$0xff] %vm3928, 0.0
      %3982 = vst.msk [vmem:[#allocation3 + $0x1a0] sm:$0xff] %vm3928, 0.0
      %3983 = vst.msk [vmem:[#allocation3 + $0x1a8] sm:$0x3] %vm3931, 0.0
      %s3984 = scalar_lea.vmem [#allocation3], 24
      %3985 = vst.msk [vmem:[%s3984 + $0x1] sm:$0xff] %vm3928, %v3896
      %3986 = vst.msk [vmem:[%s3984 + $0x9] sm:$0xff] %vm3928, %v3897
      %3987 = vst.msk [vmem:[%s3984 + $0x19] sm:$0xff] %vm3928, %v3898
      %3988 = vst.msk [vmem:[%s3984 + $0x21] sm:$0xff] %vm3928, %v3899
      %3989 = vst.msk [vmem:[%s3984 + $0x31] sm:$0xff] %vm3928, %v3900
      %3990 = vst.msk [vmem:[%s3984 + $0x39] sm:$0xff] %vm3928, %v3901
      %3991 = vst.msk [vmem:[%s3984 + $0x49] sm:$0xff] %vm3928, %v3902
      %3992 = vst.msk [vmem:[%s3984 + $0x51] sm:$0xff] %vm3928, %v3903
      %3993 = vst.msk [vmem:[%s3984 + $0x61] sm:$0xff] %vm3928, %v3904
      %3994 = vst.msk [vmem:[%s3984 + $0x69] sm:$0xff] %vm3928, %v3905
      %3995 = vst.msk [vmem:[%s3984 + $0x79] sm:$0xff] %vm3928, %v3906
      %3996 = vst.msk [vmem:[%s3984 + $0x81] sm:$0xff] %vm3928, %v3907
      %3997 = vst.msk [vmem:[%s3984 + $0x91] sm:$0xff] %vm3928, %v3908
      %3998 = vst.msk [vmem:[%s3984 + $0x99] sm:$0xff] %vm3928, %v3909
      %3999 = vst.msk [vmem:[%s3984 + $0xa9] sm:$0xff] %vm3928, %v3910
      %4000 = vst.msk [vmem:[%s3984 + $0xb1] sm:$0xff] %vm3928, %v3911
      %4001 = vst.msk [vmem:[%s3984 + $0xc1] sm:$0xff] %vm3928, %v3912
      %4002 = vst.msk [vmem:[%s3984 + $0xc9] sm:$0xff] %vm3928, %v3913
      %4003 = vst.msk [vmem:[%s3984 + $0xd9] sm:$0xff] %vm3928, %v3914
      %4004 = vst.msk [vmem:[%s3984 + $0xe1] sm:$0xff] %vm3928, %v3915
      %4005 = vst.msk [vmem:[%s3984 + $0xf1] sm:$0xff] %vm3928, %v3916
      %4006 = vst.msk [vmem:[%s3984 + $0xf9] sm:$0xff] %vm3928, %v3917
      %4007 = vst.msk [vmem:[%s3984 + $0x109] sm:$0xff] %vm3928, %v3918
      %4008 = vst.msk [vmem:[%s3984 + $0x111] sm:$0xff] %vm3928, %v3919
      %4009 = vst.msk [vmem:[%s3984 + $0x121] sm:$0xff] %vm3928, %v3920
      %4010 = vst.msk [vmem:[%s3984 + $0x129] sm:$0xff] %vm3928, %v3921
      %4011 = vst.msk [vmem:[%s3984 + $0x139] sm:$0xff] %vm3928, %v3922
      %4012 = vst.msk [vmem:[%s3984 + $0x141] sm:$0xff] %vm3928, %v3923
      %4013 = vst.msk [vmem:[%s3984 + $0x151] sm:$0xff] %vm3928, %v3924
      %4014 = vst.msk [vmem:[%s3984 + $0x159] sm:$0xff] %vm3928, %v3925
      %4015 = vst.msk [vmem:[%s3984 + $0x169] sm:$0xff] %vm3928, %v3926
      %4016 = vst.msk [vmem:[%s3984 + $0x171] sm:$0xff] %vm3928, %v3927
      %v4017 = vld [vmem:[#allocation3] sm:$0xff]
      %v4018 = vld [vmem:[#allocation3 + $0x8] sm:$0xff]
      %v4019 = vld [vmem:[#allocation3 + $0x18] sm:$0xff]
      %v4020 = vld [vmem:[#allocation3 + $0x20] sm:$0xff]
      %v4021 = vld [vmem:[#allocation3 + $0x30] sm:$0xff]
      %v4022 = vld [vmem:[#allocation3 + $0x38] sm:$0xff]
      %v4023 = vld [vmem:[#allocation3 + $0x48] sm:$0xff]
      %v4024 = vld [vmem:[#allocation3 + $0x50] sm:$0xff]
      %v4025 = vld [vmem:[#allocation3 + $0x60] sm:$0xff]
      %v4026 = vld [vmem:[#allocation3 + $0x68] sm:$0xff]
      %v4027 = vld [vmem:[#allocation3 + $0x78] sm:$0xff]
      %v4028 = vld [vmem:[#allocation3 + $0x80] sm:$0xff]
      %v4029 = vld [vmem:[#allocation3 + $0x90] sm:$0xff]
      %v4030 = vld [vmem:[#allocation3 + $0x98] sm:$0xff]
      %v4031 = vld [vmem:[#allocation3 + $0xa8] sm:$0xff]
      %v4032 = vld [vmem:[#allocation3 + $0xb0] sm:$0xff]
      %v4033 = vld [vmem:[#allocation3 + $0xc0] sm:$0xff]
      %v4034 = vld [vmem:[#allocation3 + $0xc8] sm:$0xff]
      %v4035 = vld [vmem:[#allocation3 + $0xd8] sm:$0xff]
      %v4036 = vld [vmem:[#allocation3 + $0xe0] sm:$0xff]
      %v4037 = vld [vmem:[#allocation3 + $0xf0] sm:$0xff]
      %v4038 = vld [vmem:[#allocation3 + $0xf8] sm:$0xff]
      %v4039 = vld [vmem:[#allocation3 + $0x108] sm:$0xff]
      %v4040 = vld [vmem:[#allocation3 + $0x110] sm:$0xff]
      %v4041 = vld [vmem:[#allocation3 + $0x120] sm:$0xff]
      %v4042 = vld [vmem:[#allocation3 + $0x128] sm:$0xff]
      %v4043 = vld [vmem:[#allocation3 + $0x138] sm:$0xff]
      %v4044 = vld [vmem:[#allocation3 + $0x140] sm:$0xff]
      %v4045 = vld [vmem:[#allocation3 + $0x150] sm:$0xff]
      %v4046 = vld [vmem:[#allocation3 + $0x158] sm:$0xff]
      %v4047 = vld [vmem:[#allocation3 + $0x168] sm:$0xff]
      %v4048 = vld [vmem:[#allocation3 + $0x170] sm:$0xff]
      %v4049 = vld [vmem:[%s3] sm:$0xff]
      %v4050 = vld [vmem:[#allocation3 + $0x1] sm:$0xff]
      %v4051 = vld [vmem:[#allocation3 + $0x9] sm:$0xff]
      %v4052 = vld [vmem:[#allocation3 + $0x19] sm:$0xff]
      %v4053 = vld [vmem:[#allocation3 + $0x21] sm:$0xff]
      %v4054 = vld [vmem:[#allocation3 + $0x31] sm:$0xff]
      %v4055 = vld [vmem:[#allocation3 + $0x39] sm:$0xff]
      %v4056 = vld [vmem:[#allocation3 + $0x49] sm:$0xff]
      %v4057 = vld [vmem:[#allocation3 + $0x51] sm:$0xff]
      %v4058 = vld [vmem:[#allocation3 + $0x61] sm:$0xff]
      %v4059 = vld [vmem:[#allocation3 + $0x69] sm:$0xff]
      %v4060 = vld [vmem:[#allocation3 + $0x79] sm:$0xff]
      %v4061 = vld [vmem:[#allocation3 + $0x81] sm:$0xff]
      %v4062 = vld [vmem:[#allocation3 + $0x91] sm:$0xff]
      %v4063 = vld [vmem:[#allocation3 + $0x99] sm:$0xff]
      %v4064 = vld [vmem:[#allocation3 + $0xa9] sm:$0xff]
      %v4065 = vld [vmem:[#allocation3 + $0xb1] sm:$0xff]
      %v4066 = vld [vmem:[#allocation3 + $0xc1] sm:$0xff]
      %v4067 = vld [vmem:[#allocation3 + $0xc9] sm:$0xff]
      %v4068 = vld [vmem:[#allocation3 + $0xd9] sm:$0xff]
      %v4069 = vld [vmem:[#allocation3 + $0xe1] sm:$0xff]
      %v4070 = vld [vmem:[#allocation3 + $0xf1] sm:$0xff]
      %v4071 = vld [vmem:[#allocation3 + $0xf9] sm:$0xff]
      %v4072 = vld [vmem:[#allocation3 + $0x109] sm:$0xff]
      %v4073 = vld [vmem:[#allocation3 + $0x111] sm:$0xff]
      %v4074 = vld [vmem:[#allocation3 + $0x121] sm:$0xff]
      %v4075 = vld [vmem:[#allocation3 + $0x129] sm:$0xff]
      %v4076 = vld [vmem:[#allocation3 + $0x139] sm:$0xff]
      %v4077 = vld [vmem:[#allocation3 + $0x141] sm:$0xff]
      %v4078 = vld [vmem:[#allocation3 + $0x151] sm:$0xff]
      %v4079 = vld [vmem:[#allocation3 + $0x159] sm:$0xff]
      %v4080 = vld [vmem:[#allocation3 + $0x169] sm:$0xff]
      %v4081 = vld [vmem:[#allocation3 + $0x171] sm:$0xff]
      %s4082 = scalar_lea.vmem %s3, 8
      %v4083 = vld [vmem:[%s4082] sm:$0xff]
      %v4085 = vsel %vm3928, %v4050, 0
      %v4088 = vsel %vm3928, %v4051, 0
      %v4091 = vsel %vm3928, %v4052, 0
      %v4094 = vsel %vm3928, %v4053, 0
      %v4097 = vsel %vm3928, %v4054, 0
      %v4100 = vsel %vm3928, %v4055, 0
      %v4103 = vsel %vm3928, %v4056, 0
      %v4106 = vsel %vm3928, %v4057, 0
      %v4109 = vsel %vm3928, %v4058, 0
      %v4112 = vsel %vm3928, %v4059, 0
      %v4115 = vsel %vm3928, %v4060, 0
      %v4118 = vsel %vm3928, %v4061, 0
      %v4121 = vsel %vm3928, %v4062, 0
      %v4124 = vsel %vm3928, %v4063, 0
      %v4127 = vsel %vm3928, %v4064, 0
      %v4130 = vsel %vm3928, %v4065, 0
      %v4133 = vsel %vm3928, %v4066, 0
      %v4136 = vsel %vm3928, %v4067, 0
      %v4139 = vsel %vm3928, %v4068, 0
      %v4142 = vsel %vm3928, %v4069, 0
      %v4145 = vsel %vm3928, %v4070, 0
      %v4148 = vsel %vm3928, %v4071, 0
      %v4151 = vsel %vm3928, %v4072, 0
      %v4154 = vsel %vm3928, %v4073, 0
      %v4157 = vsel %vm3928, %v4074, 0
      %v4160 = vsel %vm3928, %v4075, 0
      %v4163 = vsel %vm3928, %v4076, 0
      %v4166 = vsel %vm3928, %v4077, 0
      %v4169 = vsel %vm3928, %v4078, 0
      %v4172 = vsel %vm3928, %v4079, 0
      %v4175 = vsel %vm3928, %v4080, 0
      %v4178 = vsel %vm3928, %v4081, 0
      %4180 = vmatprep.subr.mxu0 0.0
      %4181 = vmatpush1.msra.mxu0 %v4083
      %4182 = vmatprep.subr.mxu0 0.0
      %4183 = vmatpush1.msra.mxu0 0.0
      %4184 = vmatprep.subr.mxu0 0.0
      %4185 = vmatpush1.msra.mxu0 0.0
      %4186 = vmatprep.subr.mxu0 0.0
      %4187 = vmatpush1.msra.mxu0 0.0
      %4188 = vmatprep.subr.mxu0 0.0
      %4189 = vmatpush1.msra.mxu0 0.0
      %4190 = vmatprep.subr.mxu0 0.0
      %4191 = vmatpush1.msra.mxu0 0.0
      %4192 = vmatprep.subr.mxu0 0.0
      %4193 = vmatpush1.msra.mxu0 0.0
      %4194 = vmatprep.subr.mxu0 0.0
      %4195 = vmatpush1.msra.mxu0 0.0
      %4196 = vmatprep.subr.mxu0 0.0
      %4197 = vmatpush1.msra.mxu0 0.0
      %4198 = vmatprep.subr.mxu0 0.0
      %4199 = vmatpush1.msra.mxu0 0.0
      %4200 = vmatprep.subr.mxu0 0.0
      %4201 = vmatpush1.msra.mxu0 0.0
      %4202 = vmatprep.subr.mxu0 0.0
      %4203 = vmatpush1.msra.mxu0 0.0
      %4204 = vmatprep.subr.mxu0 0.0
      %4205 = vmatpush1.msra.mxu0 0.0
      %4206 = vmatprep.subr.mxu0 0.0
      %4207 = vmatpush1.msra.mxu0 0.0
      %4208 = vmatprep.subr.mxu0 0.0
      %4209 = vmatpush1.msra.mxu0 0.0
      %4210 = vmatprep.subr.mxu0 0.0
      %4211 = vmatpush1.msra.mxu0 0.0
      %4212 = vmatprep.subr.mxu0 0.0
      %4213 = vmatpush1.msra.mxu0 0.0
      %4214 = vmatprep.subr.mxu0 0.0
      %4215 = vmatpush1.msra.mxu0 0.0
      %4216 = vmatprep.subr.mxu0 0.0
      %4217 = vmatpush1.msra.mxu0 0.0
      %4218 = vmatprep.subr.mxu0 0.0
      %4219 = vmatpush1.msra.mxu0 0.0
      %4220 = vmatprep.subr.mxu0 0.0
      %4221 = vmatpush1.msra.mxu0 0.0
      %4222 = vmatprep.subr.mxu0 0.0
      %4223 = vmatpush1.msra.mxu0 0.0
      %4224 = vmatprep.subr.mxu0 0.0
      %4225 = vmatpush1.msra.mxu0 0.0
      %4226 = vmatprep.subr.mxu0 0.0
      %4227 = vmatpush1.msra.mxu0 0.0
      %4228 = vmatprep.subr.mxu0 0.0
      %4229 = vmatpush1.msra.mxu0 0.0
      %4230 = vmatprep.subr.mxu0 0.0
      %4231 = vmatpush1.msra.mxu0 0.0
      %4232 = vmatprep.subr.mxu0 0.0
      %4233 = vmatpush1.msra.mxu0 0.0
      %4234 = vmatprep.subr.mxu0 0.0
      %4235 = vmatpush1.msra.mxu0 0.0
      %4236 = vmatprep.subr.mxu0 0.0
      %4237 = vmatpush1.msra.mxu0 0.0
      %4238 = vmatprep.subr.mxu0 0.0
      %4239 = vmatpush1.msra.mxu0 0.0
      %4240 = vmatprep.subr.mxu0 0.0
      %4241 = vmatpush1.msra.mxu0 0.0
      %4242 = vmatprep.subr.mxu0 0.0
      %4243 = vmatpush1.msra.mxu0 0.0
      %4244 = vmatprep.mubr.f32.mxu0 0.0
      %4245 = vmatmul.mubr.f32.gmra.mrb[0].mxu0 %v4085
      %v4246 = vpop.f32.mrb[0].mxu0
      %v4247 = vadd.f32 0.0, %v4246
      %v4248 = vpop.f32.mrb[0].mxu0
      %4249 = vmatprep.mubr.f32.mxu0 0.0
      %4250 = vmatmul.mubr.f32.gmra.mrb[0].mxu0 %v4088
      %v4251 = vpop.f32.mrb[0].mxu0
      %v4252 = vadd.f32 0.0, %v4251
      %v4253 = vpop.f32.mrb[0].mxu0
      %4254 = vmatprep.mubr.f32.mxu0 0.0
      %4255 = vmatmul.mubr.f32.gmra.mrb[0].mxu0 %v4091
      %v4256 = vpop.f32.mrb[0].mxu0
      %v4257 = vadd.f32 0.0, %v4256
      %v4258 = vpop.f32.mrb[0].mxu0
      %4259 = vmatprep.mubr.f32.mxu0 0.0
      %4260 = vmatmul.mubr.f32.gmra.mrb[0].mxu0 %v4094
      %v4261 = vpop.f32.mrb[0].mxu0
      %v4262 = vadd.f32 0.0, %v4261
      %v4263 = vpop.f32.mrb[0].mxu0
      %4264 = vmatprep.mubr.f32.mxu0 0.0
      %4265 = vmatmul.mubr.f32.gmra.mrb[0].mxu0 %v4097
      %v4266 = vpop.f32.mrb[0].mxu0
      %v4267 = vadd.f32 0.0, %v4266
      %v4268 = vpop.f32.mrb[0].mxu0
      %4269 = vmatprep.mubr.f32.mxu0 0.0
      %4270 = vmatmul.mubr.f32.gmra.mrb[0].mxu0 %v4100
      %v4271 = vpop.f32.mrb[0].mxu0
      %v4272 = vadd.f32 0.0, %v4271
      %v4273 = vpop.f32.mrb[0].mxu0
      %4274 = vmatprep.mubr.f32.mxu0 0.0
      %4275 = vmatmul.mubr.f32.gmra.mrb[0].mxu0 %v4103
      %v4276 = vpop.f32.mrb[0].mxu0
      %v4277 = vadd.f32 0.0, %v4276
      %v4278 = vpop.f32.mrb[0].mxu0
      %4279 = vmatprep.mubr.f32.mxu0 0.0
      %4280 = vmatmul.mubr.f32.gmra.mrb[0].mxu0 %v4106
      %v4281 = vpop.f32.mrb[0].mxu0
      %v4282 = vadd.f32 0.0, %v4281
      %v4283 = vpop.f32.mrb[0].mxu0
      %4284 = vmatprep.mubr.f32.mxu0 0.0
      %4285 = vmatmul.mubr.f32.gmra.mrb[0].mxu0 %v4109
      %v4286 = vpop.f32.mrb[0].mxu0
      %v4287 = vadd.f32 0.0, %v4286
      %v4288 = vpop.f32.mrb[0].mxu0
      %4289 = vmatprep.mubr.f32.mxu0 0.0
      %4290 = vmatmul.mubr.f32.gmra.mrb[0].mxu0 %v4112
      %v4291 = vpop.f32.mrb[0].mxu0
      %v4292 = vadd.f32 0.0, %v4291
      %v4293 = vpop.f32.mrb[0].mxu0
      %4294 = vmatprep.mubr.f32.mxu0 0.0
      %4295 = vmatmul.mubr.f32.gmra.mrb[0].mxu0 %v4115
      %v4296 = vpop.f32.mrb[0].mxu0
      %v4297 = vadd.f32 0.0, %v4296
      %v4298 = vpop.f32.mrb[0].mxu0
      %4299 = vmatprep.mubr.f32.mxu0 0.0
      %4300 = vmatmul.mubr.f32.gmra.mrb[0].mxu0 %v4118
      %v4301 = vpop.f32.mrb[0].mxu0
      %v4302 = vadd.f32 0.0, %v4301
      %v4303 = vpop.f32.mrb[0].mxu0
      %4304 = vmatprep.mubr.f32.mxu0 0.0
      %4305 = vmatmul.mubr.f32.gmra.mrb[0].mxu0 %v4121
      %v4306 = vpop.f32.mrb[0].mxu0
      %v4307 = vadd.f32 0.0, %v4306
      %v4308 = vpop.f32.mrb[0].mxu0
      %4309 = vmatprep.mubr.f32.mxu0 0.0
      %4310 = vmatmul.mubr.f32.gmra.mrb[0].mxu0 %v4124
      %v4311 = vpop.f32.mrb[0].mxu0
      %v4312 = vadd.f32 0.0, %v4311
      %v4313 = vpop.f32.mrb[0].mxu0
      %4314 = vmatprep.mubr.f32.mxu0 0.0
      %4315 = vmatmul.mubr.f32.gmra.mrb[0].mxu0 %v4127
      %v4316 = vpop.f32.mrb[0].mxu0
      %v4317 = vadd.f32 0.0, %v4316
      %v4318 = vpop.f32.mrb[0].mxu0
      %4319 = vmatprep.mubr.f32.mxu0 0.0
      %4320 = vmatmul.mubr.f32.gmra.mrb[0].mxu0 %v4130
      %v4321 = vpop.f32.mrb[0].mxu0
      %v4322 = vadd.f32 0.0, %v4321
      %v4323 = vpop.f32.mrb[0].mxu0
      %4324 = vmatprep.mubr.f32.mxu0 0.0
      %4325 = vmatmul.mubr.f32.gmra.mrb[0].mxu0 %v4133
      %v4326 = vpop.f32.mrb[0].mxu0
      %v4327 = vadd.f32 0.0, %v4326
      %v4328 = vpop.f32.mrb[0].mxu0
      %4329 = vmatprep.mubr.f32.mxu0 0.0
      %4330 = vmatmul.mubr.f32.gmra.mrb[0].mxu0 %v4136
      %v4331 = vpop.f32.mrb[0].mxu0
      %v4332 = vadd.f32 0.0, %v4331
      %v4333 = vpop.f32.mrb[0].mxu0
      %4334 = vmatprep.mubr.f32.mxu0 0.0
      %4335 = vmatmul.mubr.f32.gmra.mrb[0].mxu0 %v4139
      %v4336 = vpop.f32.mrb[0].mxu0
      %v4337 = vadd.f32 0.0, %v4336
      %v4338 = vpop.f32.mrb[0].mxu0
      %4339 = vmatprep.mubr.f32.mxu0 0.0
      %4340 = vmatmul.mubr.f32.gmra.mrb[0].mxu0 %v4142
      %v4341 = vpop.f32.mrb[0].mxu0
      %v4342 = vadd.f32 0.0, %v4341
      %v4343 = vpop.f32.mrb[0].mxu0
      %4344 = vmatprep.mubr.f32.mxu0 0.0
      %4345 = vmatmul.mubr.f32.gmra.mrb[0].mxu0 %v4145
      %v4346 = vpop.f32.mrb[0].mxu0
      %v4347 = vadd.f32 0.0, %v4346
      %v4348 = vpop.f32.mrb[0].mxu0
      %4349 = vmatprep.mubr.f32.mxu0 0.0
      %4350 = vmatmul.mubr.f32.gmra.mrb[0].mxu0 %v4148
      %v4351 = vpop.f32.mrb[0].mxu0
      %v4352 = vadd.f32 0.0, %v4351
      %v4353 = vpop.f32.mrb[0].mxu0
      %4354 = vmatprep.mubr.f32.mxu0 0.0
      %4355 = vmatmul.mubr.f32.gmra.mrb[0].mxu0 %v4151
      %v4356 = vpop.f32.mrb[0].mxu0
      %v4357 = vadd.f32 0.0, %v4356
      %v4358 = vpop.f32.mrb[0].mxu0
      %4359 = vmatprep.mubr.f32.mxu0 0.0
      %4360 = vmatmul.mubr.f32.gmra.mrb[0].mxu0 %v4154
      %v4361 = vpop.f32.mrb[0].mxu0
      %v4362 = vadd.f32 0.0, %v4361
      %v4363 = vpop.f32.mrb[0].mxu0
      %4364 = vmatprep.mubr.f32.mxu0 0.0
      %4365 = vmatmul.mubr.f32.gmra.mrb[0].mxu0 %v4157
      %v4366 = vpop.f32.mrb[0].mxu0
      %v4367 = vadd.f32 0.0, %v4366
      %v4368 = vpop.f32.mrb[0].mxu0
      %4369 = vmatprep.mubr.f32.mxu0 0.0
      %4370 = vmatmul.mubr.f32.gmra.mrb[0].mxu0 %v4160
      %v4371 = vpop.f32.mrb[0].mxu0
      %v4372 = vadd.f32 0.0, %v4371
      %v4373 = vpop.f32.mrb[0].mxu0
      %4374 = vmatprep.mubr.f32.mxu0 0.0
      %4375 = vmatmul.mubr.f32.gmra.mrb[0].mxu0 %v4163
      %v4376 = vpop.f32.mrb[0].mxu0
      %v4377 = vadd.f32 0.0, %v4376
      %v4378 = vpop.f32.mrb[0].mxu0
      %4379 = vmatprep.mubr.f32.mxu0 0.0
      %4380 = vmatmul.mubr.f32.gmra.mrb[0].mxu0 %v4166
      %v4381 = vpop.f32.mrb[0].mxu0
      %v4382 = vadd.f32 0.0, %v4381
      %v4383 = vpop.f32.mrb[0].mxu0
      %4384 = vmatprep.mubr.f32.mxu0 0.0
      %4385 = vmatmul.mubr.f32.gmra.mrb[0].mxu0 %v4169
      %v4386 = vpop.f32.mrb[0].mxu0
      %v4387 = vadd.f32 0.0, %v4386
      %v4388 = vpop.f32.mrb[0].mxu0
      %4389 = vmatprep.mubr.f32.mxu0 0.0
      %4390 = vmatmul.mubr.f32.gmra.mrb[0].mxu0 %v4172
      %v4391 = vpop.f32.mrb[0].mxu0
      %v4392 = vadd.f32 0.0, %v4391
      %v4393 = vpop.f32.mrb[0].mxu0
      %4394 = vmatprep.mubr.f32.mxu0 0.0
      %4395 = vmatmul.mubr.f32.gmra.mrb[0].mxu0 %v4175
      %v4396 = vpop.f32.mrb[0].mxu0
      %v4397 = vadd.f32 0.0, %v4396
      %v4398 = vpop.f32.mrb[0].mxu0
      %4399 = vmatprep.mubr.f32.mxu0 0.0
      %4400 = vmatmul.mubr.f32.gmra.mrb[0].mxu0 %v4178
      %v4401 = vpop.f32.mrb[0].mxu0
      %v4402 = vadd.f32 0.0, %v4401
      %v4403 = vpop.f32.mrb[0].mxu0
      %4404 = vdwg.mxu0
      %v4406 = vsel %vm3928, %v4017, 0
      %v4409 = vsel %vm3928, %v4018, 0
      %v4412 = vsel %vm3928, %v4019, 0
      %v4415 = vsel %vm3928, %v4020, 0
      %v4418 = vsel %vm3928, %v4021, 0
      %v4421 = vsel %vm3928, %v4022, 0
      %v4424 = vsel %vm3928, %v4023, 0
      %v4427 = vsel %vm3928, %v4024, 0
      %v4430 = vsel %vm3928, %v4025, 0
      %v4433 = vsel %vm3928, %v4026, 0
      %v4436 = vsel %vm3928, %v4027, 0
      %v4439 = vsel %vm3928, %v4028, 0
      %v4442 = vsel %vm3928, %v4029, 0
      %v4445 = vsel %vm3928, %v4030, 0
      %v4448 = vsel %vm3928, %v4031, 0
      %v4451 = vsel %vm3928, %v4032, 0
      %v4454 = vsel %vm3928, %v4033, 0
      %v4457 = vsel %vm3928, %v4034, 0
      %v4460 = vsel %vm3928, %v4035, 0
      %v4463 = vsel %vm3928, %v4036, 0
      %v4466 = vsel %vm3928, %v4037, 0
      %v4469 = vsel %vm3928, %v4038, 0
      %v4472 = vsel %vm3928, %v4039, 0
      %v4475 = vsel %vm3928, %v4040, 0
      %v4478 = vsel %vm3928, %v4041, 0
      %v4481 = vsel %vm3928, %v4042, 0
      %v4484 = vsel %vm3928, %v4043, 0
      %v4487 = vsel %vm3928, %v4044, 0
      %v4490 = vsel %vm3928, %v4045, 0
      %v4493 = vsel %vm3928, %v4046, 0
      %v4496 = vsel %vm3928, %v4047, 0
      %v4499 = vsel %vm3928, %v4048, 0
      %4501 = vmatprep.subr.mxu0 0.0
      %4502 = vmatpush1.msra.mxu0 %v4049
      %4503 = vmatprep.subr.mxu0 0.0
      %4504 = vmatpush1.msra.mxu0 0.0
      %4505 = vmatprep.subr.mxu0 0.0
      %4506 = vmatpush1.msra.mxu0 0.0
      %4507 = vmatprep.subr.mxu0 0.0
      %4508 = vmatpush1.msra.mxu0 0.0
      %4509 = vmatprep.subr.mxu0 0.0
      %4510 = vmatpush1.msra.mxu0 0.0
      %4511 = vmatprep.subr.mxu0 0.0
      %4512 = vmatpush1.msra.mxu0 0.0
      %4513 = vmatprep.subr.mxu0 0.0
      %4514 = vmatpush1.msra.mxu0 0.0
      %4515 = vmatprep.subr.mxu0 0.0
      %4516 = vmatpush1.msra.mxu0 0.0
      %4517 = vmatprep.subr.mxu0 0.0
      %4518 = vmatpush1.msra.mxu0 0.0
      %4519 = vmatprep.subr.mxu0 0.0
      %4520 = vmatpush1.msra.mxu0 0.0
      %4521 = vmatprep.subr.mxu0 0.0
      %4522 = vmatpush1.msra.mxu0 0.0
      %4523 = vmatprep.subr.mxu0 0.0
      %4524 = vmatpush1.msra.mxu0 0.0
      %4525 = vmatprep.subr.mxu0 0.0
      %4526 = vmatpush1.msra.mxu0 0.0
      %4527 = vmatprep.subr.mxu0 0.0
      %4528 = vmatpush1.msra.mxu0 0.0
      %4529 = vmatprep.subr.mxu0 0.0
      %4530 = vmatpush1.msra.mxu0 0.0
      %4531 = vmatprep.subr.mxu0 0.0
      %4532 = vmatpush1.msra.mxu0 0.0
      %4533 = vmatprep.subr.mxu0 0.0
      %4534 = vmatpush1.msra.mxu0 0.0
      %4535 = vmatprep.subr.mxu0 0.0
      %4536 = vmatpush1.msra.mxu0 0.0
      %4537 = vmatprep.subr.mxu0 0.0
      %4538 = vmatpush1.msra.mxu0 0.0
      %4539 = vmatprep.subr.mxu0 0.0
      %4540 = vmatpush1.msra.mxu0 0.0
      %4541 = vmatprep.subr.mxu0 0.0
      %4542 = vmatpush1.msra.mxu0 0.0
      %4543 = vmatprep.subr.mxu0 0.0
      %4544 = vmatpush1.msra.mxu0 0.0
      %4545 = vmatprep.subr.mxu0 0.0
      %4546 = vmatpush1.msra.mxu0 0.0
      %4547 = vmatprep.subr.mxu0 0.0
      %4548 = vmatpush1.msra.mxu0 0.0
      %4549 = vmatprep.subr.mxu0 0.0
      %4550 = vmatpush1.msra.mxu0 0.0
      %4551 = vmatprep.subr.mxu0 0.0
      %4552 = vmatpush1.msra.mxu0 0.0
      %4553 = vmatprep.subr.mxu0 0.0
      %4554 = vmatpush1.msra.mxu0 0.0
      %4555 = vmatprep.subr.mxu0 0.0
      %4556 = vmatpush1.msra.mxu0 0.0
      %4557 = vmatprep.subr.mxu0 0.0
      %4558 = vmatpush1.msra.mxu0 0.0
      %4559 = vmatprep.subr.mxu0 0.0
      %4560 = vmatpush1.msra.mxu0 0.0
      %4561 = vmatprep.subr.mxu0 0.0
      %4562 = vmatpush1.msra.mxu0 0.0
      %4563 = vmatprep.subr.mxu0 0.0
      %4564 = vmatpush1.msra.mxu0 0.0
      %4565 = vmatprep.mubr.f32.mxu0 0.0
      %4566 = vmatmul.mubr.f32.gmra.mrb[0].mxu0 %v4406
      %v4567 = vpop.f32.mrb[0].mxu0
      %v4568 = vadd.f32 %v4247, %v4567
      %v4569 = vpop.f32.mrb[0].mxu0
      %4570 = vmatprep.mubr.f32.mxu0 0.0
      %4571 = vmatmul.mubr.f32.gmra.mrb[0].mxu0 %v4409
      %v4572 = vpop.f32.mrb[0].mxu0
      %v4573 = vadd.f32 %v4252, %v4572
      %v4574 = vpop.f32.mrb[0].mxu0
      %4575 = vmatprep.mubr.f32.mxu0 0.0
      %4576 = vmatmul.mubr.f32.gmra.mrb[0].mxu0 %v4412
      %v4577 = vpop.f32.mrb[0].mxu0
      %v4578 = vadd.f32 %v4257, %v4577
      %v4579 = vpop.f32.mrb[0].mxu0
      %4580 = vmatprep.mubr.f32.mxu0 0.0
      %4581 = vmatmul.mubr.f32.gmra.mrb[0].mxu0 %v4415
      %v4582 = vpop.f32.mrb[0].mxu0
      %v4583 = vadd.f32 %v4262, %v4582
      %v4584 = vpop.f32.mrb[0].mxu0
      %4585 = vmatprep.mubr.f32.mxu0 0.0
      %4586 = vmatmul.mubr.f32.gmra.mrb[0].mxu0 %v4418
      %v4587 = vpop.f32.mrb[0].mxu0
      %v4588 = vadd.f32 %v4267, %v4587
      %v4589 = vpop.f32.mrb[0].mxu0
      %4590 = vmatprep.mubr.f32.mxu0 0.0
      %4591 = vmatmul.mubr.f32.gmra.mrb[0].mxu0 %v4421
      %v4592 = vpop.f32.mrb[0].mxu0
      %v4593 = vadd.f32 %v4272, %v4592
      %v4594 = vpop.f32.mrb[0].mxu0
      %4595 = vmatprep.mubr.f32.mxu0 0.0
      %4596 = vmatmul.mubr.f32.gmra.mrb[0].mxu0 %v4424
      %v4597 = vpop.f32.mrb[0].mxu0
      %v4598 = vadd.f32 %v4277, %v4597
      %v4599 = vpop.f32.mrb[0].mxu0
      %4600 = vmatprep.mubr.f32.mxu0 0.0
      %4601 = vmatmul.mubr.f32.gmra.mrb[0].mxu0 %v4427
      %v4602 = vpop.f32.mrb[0].mxu0
      %v4603 = vadd.f32 %v4282, %v4602
      %v4604 = vpop.f32.mrb[0].mxu0
      %4605 = vmatprep.mubr.f32.mxu0 0.0
      %4606 = vmatmul.mubr.f32.gmra.mrb[0].mxu0 %v4430
      %v4607 = vpop.f32.mrb[0].mxu0
      %v4608 = vadd.f32 %v4287, %v4607
      %v4609 = vpop.f32.mrb[0].mxu0
      %4610 = vmatprep.mubr.f32.mxu0 0.0
      %4611 = vmatmul.mubr.f32.gmra.mrb[0].mxu0 %v4433
      %v4612 = vpop.f32.mrb[0].mxu0
      %v4613 = vadd.f32 %v4292, %v4612
      %v4614 = vpop.f32.mrb[0].mxu0
      %4615 = vmatprep.mubr.f32.mxu0 0.0
      %4616 = vmatmul.mubr.f32.gmra.mrb[0].mxu0 %v4436
      %v4617 = vpop.f32.mrb[0].mxu0
      %v4618 = vadd.f32 %v4297, %v4617
      %v4619 = vpop.f32.mrb[0].mxu0
      %4620 = vmatprep.mubr.f32.mxu0 0.0
      %4621 = vmatmul.mubr.f32.gmra.mrb[0].mxu0 %v4439
      %v4622 = vpop.f32.mrb[0].mxu0
      %v4623 = vadd.f32 %v4302, %v4622
      %v4624 = vpop.f32.mrb[0].mxu0
      %4625 = vmatprep.mubr.f32.mxu0 0.0
      %4626 = vmatmul.mubr.f32.gmra.mrb[0].mxu0 %v4442
      %v4627 = vpop.f32.mrb[0].mxu0
      %v4628 = vadd.f32 %v4307, %v4627
      %v4629 = vpop.f32.mrb[0].mxu0
      %4630 = vmatprep.mubr.f32.mxu0 0.0
      %4631 = vmatmul.mubr.f32.gmra.mrb[0].mxu0 %v4445
      %v4632 = vpop.f32.mrb[0].mxu0
      %v4633 = vadd.f32 %v4312, %v4632
      %v4634 = vpop.f32.mrb[0].mxu0
      %4635 = vmatprep.mubr.f32.mxu0 0.0
      %4636 = vmatmul.mubr.f32.gmra.mrb[0].mxu0 %v4448
      %v4637 = vpop.f32.mrb[0].mxu0
      %v4638 = vadd.f32 %v4317, %v4637
      %v4639 = vpop.f32.mrb[0].mxu0
      %4640 = vmatprep.mubr.f32.mxu0 0.0
      %4641 = vmatmul.mubr.f32.gmra.mrb[0].mxu0 %v4451
      %v4642 = vpop.f32.mrb[0].mxu0
      %v4643 = vadd.f32 %v4322, %v4642
      %v4644 = vpop.f32.mrb[0].mxu0
      %4645 = vmatprep.mubr.f32.mxu0 0.0
      %4646 = vmatmul.mubr.f32.gmra.mrb[0].mxu0 %v4454
      %v4647 = vpop.f32.mrb[0].mxu0
      %v4648 = vadd.f32 %v4327, %v4647
      %v4649 = vpop.f32.mrb[0].mxu0
      %4650 = vmatprep.mubr.f32.mxu0 0.0
      %4651 = vmatmul.mubr.f32.gmra.mrb[0].mxu0 %v4457
      %v4652 = vpop.f32.mrb[0].mxu0
      %v4653 = vadd.f32 %v4332, %v4652
      %v4654 = vpop.f32.mrb[0].mxu0
      %4655 = vmatprep.mubr.f32.mxu0 0.0
      %4656 = vmatmul.mubr.f32.gmra.mrb[0].mxu0 %v4460
      %v4657 = vpop.f32.mrb[0].mxu0
      %v4658 = vadd.f32 %v4337, %v4657
      %v4659 = vpop.f32.mrb[0].mxu0
      %4660 = vmatprep.mubr.f32.mxu0 0.0
      %4661 = vmatmul.mubr.f32.gmra.mrb[0].mxu0 %v4463
      %v4662 = vpop.f32.mrb[0].mxu0
      %v4663 = vadd.f32 %v4342, %v4662
      %v4664 = vpop.f32.mrb[0].mxu0
      %4665 = vmatprep.mubr.f32.mxu0 0.0
      %4666 = vmatmul.mubr.f32.gmra.mrb[0].mxu0 %v4466
      %v4667 = vpop.f32.mrb[0].mxu0
      %v4668 = vadd.f32 %v4347, %v4667
      %v4669 = vpop.f32.mrb[0].mxu0
      %4670 = vmatprep.mubr.f32.mxu0 0.0
      %4671 = vmatmul.mubr.f32.gmra.mrb[0].mxu0 %v4469
      %v4672 = vpop.f32.mrb[0].mxu0
      %v4673 = vadd.f32 %v4352, %v4672
      %v4674 = vpop.f32.mrb[0].mxu0
      %4675 = vmatprep.mubr.f32.mxu0 0.0
      %4676 = vmatmul.mubr.f32.gmra.mrb[0].mxu0 %v4472
      %v4677 = vpop.f32.mrb[0].mxu0
      %v4678 = vadd.f32 %v4357, %v4677
      %v4679 = vpop.f32.mrb[0].mxu0
      %4680 = vmatprep.mubr.f32.mxu0 0.0
      %4681 = vmatmul.mubr.f32.gmra.mrb[0].mxu0 %v4475
      %v4682 = vpop.f32.mrb[0].mxu0
      %v4683 = vadd.f32 %v4362, %v4682
      %v4684 = vpop.f32.mrb[0].mxu0
      %4685 = vmatprep.mubr.f32.mxu0 0.0
      %4686 = vmatmul.mubr.f32.gmra.mrb[0].mxu0 %v4478
      %v4687 = vpop.f32.mrb[0].mxu0
      %v4688 = vadd.f32 %v4367, %v4687
      %v4689 = vpop.f32.mrb[0].mxu0
      %4690 = vmatprep.mubr.f32.mxu0 0.0
      %4691 = vmatmul.mubr.f32.gmra.mrb[0].mxu0 %v4481
      %v4692 = vpop.f32.mrb[0].mxu0
      %v4693 = vadd.f32 %v4372, %v4692
      %v4694 = vpop.f32.mrb[0].mxu0
      %4695 = vmatprep.mubr.f32.mxu0 0.0
      %4696 = vmatmul.mubr.f32.gmra.mrb[0].mxu0 %v4484
      %v4697 = vpop.f32.mrb[0].mxu0
      %v4698 = vadd.f32 %v4377, %v4697
      %v4699 = vpop.f32.mrb[0].mxu0
      %4700 = vmatprep.mubr.f32.mxu0 0.0
      %4701 = vmatmul.mubr.f32.gmra.mrb[0].mxu0 %v4487
      %v4702 = vpop.f32.mrb[0].mxu0
      %v4703 = vadd.f32 %v4382, %v4702
      %v4704 = vpop.f32.mrb[0].mxu0
      %4705 = vmatprep.mubr.f32.mxu0 0.0
      %4706 = vmatmul.mubr.f32.gmra.mrb[0].mxu0 %v4490
      %v4707 = vpop.f32.mrb[0].mxu0
      %v4708 = vadd.f32 %v4387, %v4707
      %v4709 = vpop.f32.mrb[0].mxu0
      %4710 = vmatprep.mubr.f32.mxu0 0.0
      %4711 = vmatmul.mubr.f32.gmra.mrb[0].mxu0 %v4493
      %v4712 = vpop.f32.mrb[0].mxu0
      %v4713 = vadd.f32 %v4392, %v4712
      %v4714 = vpop.f32.mrb[0].mxu0
      %4715 = vmatprep.mubr.f32.mxu0 0.0
      %4716 = vmatmul.mubr.f32.gmra.mrb[0].mxu0 %v4496
      %v4717 = vpop.f32.mrb[0].mxu0
      %v4718 = vadd.f32 %v4397, %v4717
      %v4719 = vpop.f32.mrb[0].mxu0
      %4720 = vmatprep.mubr.f32.mxu0 0.0
      %4721 = vmatmul.mubr.f32.gmra.mrb[0].mxu0 %v4499
      %v4722 = vpop.f32.mrb[0].mxu0
      %v4723 = vadd.f32 %v4402, %v4722
      %v4724 = vpop.f32.mrb[0].mxu0
      %4725 = vdwg.mxu0
      %v4726 = vld [vmem:[#allocation3 + $0x2] sm:$0xff]
      %v4727 = vld [vmem:[#allocation3 + $0xa] sm:$0xff]
      %v4728 = vld [vmem:[#allocation3 + $0x1a] sm:$0xff]
      %v4729 = vld [vmem:[#allocation3 + $0x22] sm:$0xff]
      %v4730 = vld [vmem:[#allocation3 + $0x32] sm:$0xff]
      %v4731 = vld [vmem:[#allocation3 + $0x3a] sm:$0xff]
      %v4732 = vld [vmem:[#allocation3 + $0x4a] sm:$0xff]
      %v4733 = vld [vmem:[#allocation3 + $0x52] sm:$0xff]
      %v4734 = vld [vmem:[#allocation3 + $0x62] sm:$0xff]
      %v4735 = vld [vmem:[#allocation3 + $0x6a] sm:$0xff]
      %v4736 = vld [vmem:[#allocation3 + $0x7a] sm:$0xff]
      %v4737 = vld [vmem:[#allocation3 + $0x82] sm:$0xff]
      %v4738 = vld [vmem:[#allocation3 + $0x92] sm:$0xff]
      %v4739 = vld [vmem:[#allocation3 + $0x9a] sm:$0xff]
      %v4740 = vld [vmem:[#allocation3 + $0xaa] sm:$0xff]
      %v4741 = vld [vmem:[#allocation3 + $0xb2] sm:$0xff]
      %v4742 = vld [vmem:[#allocation3 + $0xc2] sm:$0xff]
      %v4743 = vld [vmem:[#allocation3 + $0xca] sm:$0xff]
      %v4744 = vld [vmem:[#allocation3 + $0xda] sm:$0xff]
      %v4745 = vld [vmem:[#allocation3 + $0xe2] sm:$0xff]
      %v4746 = vld [vmem:[#allocation3 + $0xf2] sm:$0xff]
      %v4747 = vld [vmem:[#allocation3 + $0xfa] sm:$0xff]
      %v4748 = vld [vmem:[#allocation3 + $0x10a] sm:$0xff]
      %v4749 = vld [vmem:[#allocation3 + $0x112] sm:$0xff]
      %v4750 = vld [vmem:[#allocation3 + $0x122] sm:$0xff]
      %v4751 = vld [vmem:[#allocation3 + $0x12a] sm:$0xff]
      %v4752 = vld [vmem:[#allocation3 + $0x13a] sm:$0xff]
      %v4753 = vld [vmem:[#allocation3 + $0x142] sm:$0xff]
      %v4754 = vld [vmem:[#allocation3 + $0x152] sm:$0xff]
      %v4755 = vld [vmem:[#allocation3 + $0x15a] sm:$0xff]
      %v4756 = vld [vmem:[#allocation3 + $0x16a] sm:$0xff]
      %v4757 = vld [vmem:[#allocation3 + $0x172] sm:$0xff]
      %s4758 = scalar_lea.vmem %s3, 16
      %v4759 = vld [vmem:[%s4758] sm:$0xff]
      %v4761 = vsel %vm3928, %v4726, 0
      %v4764 = vsel %vm3928, %v4727, 0
      %v4767 = vsel %vm3928, %v4728, 0
      %v4770 = vsel %vm3928, %v4729, 0
      %v4773 = vsel %vm3928, %v4730, 0
      %v4776 = vsel %vm3928, %v4731, 0
      %v4779 = vsel %vm3928, %v4732, 0
      %v4782 = vsel %vm3928, %v4733, 0
      %v4785 = vsel %vm3928, %v4734, 0
      %v4788 = vsel %vm3928, %v4735, 0
      %v4791 = vsel %vm3928, %v4736, 0
      %v4794 = vsel %vm3928, %v4737, 0
      %v4797 = vsel %vm3928, %v4738, 0
      %v4800 = vsel %vm3928, %v4739, 0
      %v4803 = vsel %vm3928, %v4740, 0
      %v4806 = vsel %vm3928, %v4741, 0
      %v4809 = vsel %vm3928, %v4742, 0
      %v4812 = vsel %vm3928, %v4743, 0
      %v4815 = vsel %vm3928, %v4744, 0
      %v4818 = vsel %vm3928, %v4745, 0
      %v4821 = vsel %vm3928, %v4746, 0
      %v4824 = vsel %vm3928, %v4747, 0
      %v4827 = vsel %vm3928, %v4748, 0
      %v4830 = vsel %vm3928, %v4749, 0
      %v4833 = vsel %vm3928, %v4750, 0
      %v4836 = vsel %vm3928, %v4751, 0
      %v4839 = vsel %vm3928, %v4752, 0
      %v4842 = vsel %vm3928, %v4753, 0
      %v4845 = vsel %vm3928, %v4754, 0
      %v4848 = vsel %vm3928, %v4755, 0
      %v4851 = vsel %vm3928, %v4756, 0
      %v4854 = vsel %vm3928, %v4757, 0
      %4856 = vmatprep.subr.mxu0 0.0
      %4857 = vmatpush1.msra.mxu0 %v4759
      %4858 = vmatprep.subr.mxu0 0.0
      %4859 = vmatpush1.msra.mxu0 0.0
      %4860 = vmatprep.subr.mxu0 0.0
      %4861 = vmatpush1.msra.mxu0 0.0
      %4862 = vmatprep.subr.mxu0 0.0
      %4863 = vmatpush1.msra.mxu0 0.0
      %4864 = vmatprep.subr.mxu0 0.0
      %4865 = vmatpush1.msra.mxu0 0.0
      %4866 = vmatprep.subr.mxu0 0.0
      %4867 = vmatpush1.msra.mxu0 0.0
      %4868 = vmatprep.subr.mxu0 0.0
      %4869 = vmatpush1.msra.mxu0 0.0
      %4870 = vmatprep.subr.mxu0 0.0
      %4871 = vmatpush1.msra.mxu0 0.0
      %4872 = vmatprep.subr.mxu0 0.0
      %4873 = vmatpush1.msra.mxu0 0.0
      %4874 = vmatprep.subr.mxu0 0.0
      %4875 = vmatpush1.msra.mxu0 0.0
      %4876 = vmatprep.subr.mxu0 0.0
      %4877 = vmatpush1.msra.mxu0 0.0
      %4878 = vmatprep.subr.mxu0 0.0
      %4879 = vmatpush1.msra.mxu0 0.0
      %4880 = vmatprep.subr.mxu0 0.0
      %4881 = vmatpush1.msra.mxu0 0.0
      %4882 = vmatprep.subr.mxu0 0.0
      %4883 = vmatpush1.msra.mxu0 0.0
      %4884 = vmatprep.subr.mxu0 0.0
      %4885 = vmatpush1.msra.mxu0 0.0
      %4886 = vmatprep.subr.mxu0 0.0
      %4887 = vmatpush1.msra.mxu0 0.0
      %4888 = vmatprep.subr.mxu0 0.0
      %4889 = vmatpush1.msra.mxu0 0.0
      %4890 = vmatprep.subr.mxu0 0.0
      %4891 = vmatpush1.msra.mxu0 0.0
      %4892 = vmatprep.subr.mxu0 0.0
      %4893 = vmatpush1.msra.mxu0 0.0
      %4894 = vmatprep.subr.mxu0 0.0
      %4895 = vmatpush1.msra.mxu0 0.0
      %4896 = vmatprep.subr.mxu0 0.0
      %4897 = vmatpush1.msra.mxu0 0.0
      %4898 = vmatprep.subr.mxu0 0.0
      %4899 = vmatpush1.msra.mxu0 0.0
      %4900 = vmatprep.subr.mxu0 0.0
      %4901 = vmatpush1.msra.mxu0 0.0
      %4902 = vmatprep.subr.mxu0 0.0
      %4903 = vmatpush1.msra.mxu0 0.0
      %4904 = vmatprep.subr.mxu0 0.0
      %4905 = vmatpush1.msra.mxu0 0.0
      %4906 = vmatprep.subr.mxu0 0.0
      %4907 = vmatpush1.msra.mxu0 0.0
      %4908 = vmatprep.subr.mxu0 0.0
      %4909 = vmatpush1.msra.mxu0 0.0
      %4910 = vmatprep.subr.mxu0 0.0
      %4911 = vmatpush1.msra.mxu0 0.0
      %4912 = vmatprep.subr.mxu0 0.0
      %4913 = vmatpush1.msra.mxu0 0.0
      %4914 = vmatprep.subr.mxu0 0.0
      %4915 = vmatpush1.msra.mxu0 0.0
      %4916 = vmatprep.subr.mxu0 0.0
      %4917 = vmatpush1.msra.mxu0 0.0
      %4918 = vmatprep.subr.mxu0 0.0
      %4919 = vmatpush1.msra.mxu0 0.0
      %4920 = vmatprep.mubr.f32.mxu0 0.0
      %4921 = vmatmul.mubr.f32.gmra.mrb[0].mxu0 %v4761
      %v4922 = vpop.f32.mrb[0].mxu0
      %v4923 = vadd.f32 0.0, %v4922
      %v4924 = vpop.f32.mrb[0].mxu0
      %4925 = vmatprep.mubr.f32.mxu0 0.0
      %4926 = vmatmul.mubr.f32.gmra.mrb[0].mxu0 %v4764
      %v4927 = vpop.f32.mrb[0].mxu0
      %v4928 = vadd.f32 0.0, %v4927
      %v4929 = vpop.f32.mrb[0].mxu0
      %4930 = vmatprep.mubr.f32.mxu0 0.0
      %4931 = vmatmul.mubr.f32.gmra.mrb[0].mxu0 %v4767
      %v4932 = vpop.f32.mrb[0].mxu0
      %v4933 = vadd.f32 0.0, %v4932
      %v4934 = vpop.f32.mrb[0].mxu0
      %4935 = vmatprep.mubr.f32.mxu0 0.0
      %4936 = vmatmul.mubr.f32.gmra.mrb[0].mxu0 %v4770
      %v4937 = vpop.f32.mrb[0].mxu0
      %v4938 = vadd.f32 0.0, %v4937
      %v4939 = vpop.f32.mrb[0].mxu0
      %4940 = vmatprep.mubr.f32.mxu0 0.0
      %4941 = vmatmul.mubr.f32.gmra.mrb[0].mxu0 %v4773
      %v4942 = vpop.f32.mrb[0].mxu0
      %v4943 = vadd.f32 0.0, %v4942
      %v4944 = vpop.f32.mrb[0].mxu0
      %4945 = vmatprep.mubr.f32.mxu0 0.0
      %4946 = vmatmul.mubr.f32.gmra.mrb[0].mxu0 %v4776
      %v4947 = vpop.f32.mrb[0].mxu0
      %v4948 = vadd.f32 0.0, %v4947
      %v4949 = vpop.f32.mrb[0].mxu0
      %4950 = vmatprep.mubr.f32.mxu0 0.0
      %4951 = vmatmul.mubr.f32.gmra.mrb[0].mxu0 %v4779
      %v4952 = vpop.f32.mrb[0].mxu0
      %v4953 = vadd.f32 0.0, %v4952
      %v4954 = vpop.f32.mrb[0].mxu0
      %4955 = vmatprep.mubr.f32.mxu0 0.0
      %4956 = vmatmul.mubr.f32.gmra.mrb[0].mxu0 %v4782
      %v4957 = vpop.f32.mrb[0].mxu0
      %v4958 = vadd.f32 0.0, %v4957
      %v4959 = vpop.f32.mrb[0].mxu0
      %4960 = vmatprep.mubr.f32.mxu0 0.0
      %4961 = vmatmul.mubr.f32.gmra.mrb[0].mxu0 %v4785
      %v4962 = vpop.f32.mrb[0].mxu0
      %v4963 = vadd.f32 0.0, %v4962
      %v4964 = vpop.f32.mrb[0].mxu0
      %4965 = vmatprep.mubr.f32.mxu0 0.0
      %4966 = vmatmul.mubr.f32.gmra.mrb[0].mxu0 %v4788
      %v4967 = vpop.f32.mrb[0].mxu0
      %v4968 = vadd.f32 0.0, %v4967
      %v4969 = vpop.f32.mrb[0].mxu0
      %4970 = vmatprep.mubr.f32.mxu0 0.0
      %4971 = vmatmul.mubr.f32.gmra.mrb[0].mxu0 %v4791
      %v4972 = vpop.f32.mrb[0].mxu0
      %v4973 = vadd.f32 0.0, %v4972
      %v4974 = vpop.f32.mrb[0].mxu0
      %4975 = vmatprep.mubr.f32.mxu0 0.0
      %4976 = vmatmul.mubr.f32.gmra.mrb[0].mxu0 %v4794
      %v4977 = vpop.f32.mrb[0].mxu0
      %v4978 = vadd.f32 0.0, %v4977
      %v4979 = vpop.f32.mrb[0].mxu0
      %4980 = vmatprep.mubr.f32.mxu0 0.0
      %4981 = vmatmul.mubr.f32.gmra.mrb[0].mxu0 %v4797
      %v4982 = vpop.f32.mrb[0].mxu0
      %v4983 = vadd.f32 0.0, %v4982
      %v4984 = vpop.f32.mrb[0].mxu0
      %4985 = vmatprep.mubr.f32.mxu0 0.0
      %4986 = vmatmul.mubr.f32.gmra.mrb[0].mxu0 %v4800
      %v4987 = vpop.f32.mrb[0].mxu0
      %v4988 = vadd.f32 0.0, %v4987
      %v4989 = vpop.f32.mrb[0].mxu0
      %4990 = vmatprep.mubr.f32.mxu0 0.0
      %4991 = vmatmul.mubr.f32.gmra.mrb[0].mxu0 %v4803
      %v4992 = vpop.f32.mrb[0].mxu0
      %v4993 = vadd.f32 0.0, %v4992
      %v4994 = vpop.f32.mrb[0].mxu0
      %4995 = vmatprep.mubr.f32.mxu0 0.0
      %4996 = vmatmul.mubr.f32.gmra.mrb[0].mxu0 %v4806
      %v4997 = vpop.f32.mrb[0].mxu0
      %v4998 = vadd.f32 0.0, %v4997
      %v4999 = vpop.f32.mrb[0].mxu0
      %5000 = vmatprep.mubr.f32.mxu0 0.0
      %5001 = vmatmul.mubr.f32.gmra.mrb[0].mxu0 %v4809
      %v5002 = vpop.f32.mrb[0].mxu0
      %v5003 = vadd.f32 0.0, %v5002
      %v5004 = vpop.f32.mrb[0].mxu0
      %5005 = vmatprep.mubr.f32.mxu0 0.0
      %5006 = vmatmul.mubr.f32.gmra.mrb[0].mxu0 %v4812
      %v5007 = vpop.f32.mrb[0].mxu0
      %v5008 = vadd.f32 0.0, %v5007
      %v5009 = vpop.f32.mrb[0].mxu0
      %5010 = vmatprep.mubr.f32.mxu0 0.0
      %5011 = vmatmul.mubr.f32.gmra.mrb[0].mxu0 %v4815
      %v5012 = vpop.f32.mrb[0].mxu0
      %v5013 = vadd.f32 0.0, %v5012
      %v5014 = vpop.f32.mrb[0].mxu0
      %5015 = vmatprep.mubr.f32.mxu0 0.0
      %5016 = vmatmul.mubr.f32.gmra.mrb[0].mxu0 %v4818
      %v5017 = vpop.f32.mrb[0].mxu0
      %v5018 = vadd.f32 0.0, %v5017
      %v5019 = vpop.f32.mrb[0].mxu0
      %5020 = vmatprep.mubr.f32.mxu0 0.0
      %5021 = vmatmul.mubr.f32.gmra.mrb[0].mxu0 %v4821
      %v5022 = vpop.f32.mrb[0].mxu0
      %v5023 = vadd.f32 0.0, %v5022
      %v5024 = vpop.f32.mrb[0].mxu0
      %5025 = vmatprep.mubr.f32.mxu0 0.0
      %5026 = vmatmul.mubr.f32.gmra.mrb[0].mxu0 %v4824
      %v5027 = vpop.f32.mrb[0].mxu0
      %v5028 = vadd.f32 0.0, %v5027
      %v5029 = vpop.f32.mrb[0].mxu0
      %5030 = vmatprep.mubr.f32.mxu0 0.0
      %5031 = vmatmul.mubr.f32.gmra.mrb[0].mxu0 %v4827
      %v5032 = vpop.f32.mrb[0].mxu0
      %v5033 = vadd.f32 0.0, %v5032
      %v5034 = vpop.f32.mrb[0].mxu0
      %5035 = vmatprep.mubr.f32.mxu0 0.0
      %5036 = vmatmul.mubr.f32.gmra.mrb[0].mxu0 %v4830
      %v5037 = vpop.f32.mrb[0].mxu0
      %v5038 = vadd.f32 0.0, %v5037
      %v5039 = vpop.f32.mrb[0].mxu0
      %5040 = vmatprep.mubr.f32.mxu0 0.0
      %5041 = vmatmul.mubr.f32.gmra.mrb[0].mxu0 %v4833
      %v5042 = vpop.f32.mrb[0].mxu0
      %v5043 = vadd.f32 0.0, %v5042
      %v5044 = vpop.f32.mrb[0].mxu0
      %5045 = vmatprep.mubr.f32.mxu0 0.0
      %5046 = vmatmul.mubr.f32.gmra.mrb[0].mxu0 %v4836
      %v5047 = vpop.f32.mrb[0].mxu0
      %v5048 = vadd.f32 0.0, %v5047
      %v5049 = vpop.f32.mrb[0].mxu0
      %5050 = vmatprep.mubr.f32.mxu0 0.0
      %5051 = vmatmul.mubr.f32.gmra.mrb[0].mxu0 %v4839
      %v5052 = vpop.f32.mrb[0].mxu0
      %v5053 = vadd.f32 0.0, %v5052
      %v5054 = vpop.f32.mrb[0].mxu0
      %5055 = vmatprep.mubr.f32.mxu0 0.0
      %5056 = vmatmul.mubr.f32.gmra.mrb[0].mxu0 %v4842
      %v5057 = vpop.f32.mrb[0].mxu0
      %v5058 = vadd.f32 0.0, %v5057
      %v5059 = vpop.f32.mrb[0].mxu0
      %5060 = vmatprep.mubr.f32.mxu0 0.0
      %5061 = vmatmul.mubr.f32.gmra.mrb[0].mxu0 %v4845
      %v5062 = vpop.f32.mrb[0].mxu0
      %v5063 = vadd.f32 0.0, %v5062
      %v5064 = vpop.f32.mrb[0].mxu0
      %5065 = vmatprep.mubr.f32.mxu0 0.0
      %5066 = vmatmul.mubr.f32.gmra.mrb[0].mxu0 %v4848
      %v5067 = vpop.f32.mrb[0].mxu0
      %v5068 = vadd.f32 0.0, %v5067
      %v5069 = vpop.f32.mrb[0].mxu0
      %5070 = vmatprep.mubr.f32.mxu0 0.0
      %5071 = vmatmul.mubr.f32.gmra.mrb[0].mxu0 %v4851
      %v5072 = vpop.f32.mrb[0].mxu0
      %v5073 = vadd.f32 0.0, %v5072
      %v5074 = vpop.f32.mrb[0].mxu0
      %5075 = vmatprep.mubr.f32.mxu0 0.0
      %5076 = vmatmul.mubr.f32.gmra.mrb[0].mxu0 %v4854
      %v5077 = vpop.f32.mrb[0].mxu0
      %v5078 = vadd.f32 0.0, %v5077
      %v5079 = vpop.f32.mrb[0].mxu0
      %5080 = vdwg.mxu0
      %v5081 = vadd.f32 %v4568, %v4923
      %v5082 = vadd.f32 %v4573, %v4928
      %v5083 = vadd.f32 %v4578, %v4933
      %v5084 = vadd.f32 %v4583, %v4938
      %v5085 = vadd.f32 %v4588, %v4943
      %v5086 = vadd.f32 %v4593, %v4948
      %v5087 = vadd.f32 %v4598, %v4953
      %v5088 = vadd.f32 %v4603, %v4958
      %v5089 = vadd.f32 %v4608, %v4963
      %v5090 = vadd.f32 %v4613, %v4968
      %v5091 = vadd.f32 %v4618, %v4973
      %v5092 = vadd.f32 %v4623, %v4978
      %v5093 = vadd.f32 %v4628, %v4983
      %v5094 = vadd.f32 %v4633, %v4988
      %v5095 = vadd.f32 %v4638, %v4993
      %v5096 = vadd.f32 %v4643, %v4998
      %v5097 = vadd.f32 %v4648, %v5003
      %v5098 = vadd.f32 %v4653, %v5008
      %v5099 = vadd.f32 %v4658, %v5013
      %v5100 = vadd.f32 %v4663, %v5018
      %v5101 = vadd.f32 %v4668, %v5023
      %v5102 = vadd.f32 %v4673, %v5028
      %v5103 = vadd.f32 %v4678, %v5033
      %v5104 = vadd.f32 %v4683, %v5038
      %v5105 = vadd.f32 %v4688, %v5043
      %v5106 = vadd.f32 %v4693, %v5048
      %v5107 = vadd.f32 %v4698, %v5053
      %v5108 = vadd.f32 %v4703, %v5058
      %v5109 = vadd.f32 %v4708, %v5063
      %v5110 = vadd.f32 %v4713, %v5068
      %v5111 = vadd.f32 %v4718, %v5073
      %v5112 = vadd.f32 %v4723, %v5078
      %v5113 = vld [vmem:[%s3984] sm:$0xff]
      %v5114 = vld [vmem:[%s3984 + $0x8] sm:$0xff]
      %v5115 = vld [vmem:[%s3984 + $0x18] sm:$0xff]
      %v5116 = vld [vmem:[%s3984 + $0x20] sm:$0xff]
      %v5117 = vld [vmem:[%s3984 + $0x30] sm:$0xff]
      %v5118 = vld [vmem:[%s3984 + $0x38] sm:$0xff]
      %v5119 = vld [vmem:[%s3984 + $0x48] sm:$0xff]
      %v5120 = vld [vmem:[%s3984 + $0x50] sm:$0xff]
      %v5121 = vld [vmem:[%s3984 + $0x60] sm:$0xff]
      %v5122 = vld [vmem:[%s3984 + $0x68] sm:$0xff]
      %v5123 = vld [vmem:[%s3984 + $0x78] sm:$0xff]
      %v5124 = vld [vmem:[%s3984 + $0x80] sm:$0xff]
      %v5125 = vld [vmem:[%s3984 + $0x90] sm:$0xff]
      %v5126 = vld [vmem:[%s3984 + $0x98] sm:$0xff]
      %v5127 = vld [vmem:[%s3984 + $0xa8] sm:$0xff]
      %v5128 = vld [vmem:[%s3984 + $0xb0] sm:$0xff]
      %v5129 = vld [vmem:[%s3984 + $0xc0] sm:$0xff]
      %v5130 = vld [vmem:[%s3984 + $0xc8] sm:$0xff]
      %v5131 = vld [vmem:[%s3984 + $0xd8] sm:$0xff]
      %v5132 = vld [vmem:[%s3984 + $0xe0] sm:$0xff]
      %v5133 = vld [vmem:[%s3984 + $0xf0] sm:$0xff]
      %v5134 = vld [vmem:[%s3984 + $0xf8] sm:$0xff]
      %v5135 = vld [vmem:[%s3984 + $0x108] sm:$0xff]
      %v5136 = vld [vmem:[%s3984 + $0x110] sm:$0xff]
      %v5137 = vld [vmem:[%s3984 + $0x120] sm:$0xff]
      %v5138 = vld [vmem:[%s3984 + $0x128] sm:$0xff]
      %v5139 = vld [vmem:[%s3984 + $0x138] sm:$0xff]
      %v5140 = vld [vmem:[%s3984 + $0x140] sm:$0xff]
      %v5141 = vld [vmem:[%s3984 + $0x150] sm:$0xff]
      %v5142 = vld [vmem:[%s3984 + $0x158] sm:$0xff]
      %v5143 = vld [vmem:[%s3984 + $0x168] sm:$0xff]
      %v5144 = vld [vmem:[%s3984 + $0x170] sm:$0xff]
      %s5145 = scalar_lea.vmem %s3, 24
      %v5146 = vld [vmem:[%s5145] sm:$0xff]
      %v5148 = vsel %vm3928, %v5113, 0
      %v5151 = vsel %vm3928, %v5114, 0
      %v5154 = vsel %vm3928, %v5115, 0
      %v5157 = vsel %vm3928, %v5116, 0
      %v5160 = vsel %vm3928, %v5117, 0
      %v5163 = vsel %vm3928, %v5118, 0
      %v5166 = vsel %vm3928, %v5119, 0
      %v5169 = vsel %vm3928, %v5120, 0
      %v5172 = vsel %vm3928, %v5121, 0
      %v5175 = vsel %vm3928, %v5122, 0
      %v5178 = vsel %vm3928, %v5123, 0
      %v5181 = vsel %vm3928, %v5124, 0
      %v5184 = vsel %vm3928, %v5125, 0
      %v5187 = vsel %vm3928, %v5126, 0
      %v5190 = vsel %vm3928, %v5127, 0
      %v5193 = vsel %vm3928, %v5128, 0
      %v5196 = vsel %vm3928, %v5129, 0
      %v5199 = vsel %vm3928, %v5130, 0
      %v5202 = vsel %vm3928, %v5131, 0
      %v5205 = vsel %vm3928, %v5132, 0
      %v5208 = vsel %vm3928, %v5133, 0
      %v5211 = vsel %vm3928, %v5134, 0
      %v5214 = vsel %vm3928, %v5135, 0
      %v5217 = vsel %vm3928, %v5136, 0
      %v5220 = vsel %vm3928, %v5137, 0
      %v5223 = vsel %vm3928, %v5138, 0
      %v5226 = vsel %vm3928, %v5139, 0
      %v5229 = vsel %vm3928, %v5140, 0
      %v5232 = vsel %vm3928, %v5141, 0
      %v5235 = vsel %vm3928, %v5142, 0
      %v5238 = vsel %vm3928, %v5143, 0
      %v5241 = vsel %vm3928, %v5144, 0
      %5243 = vmatprep.subr.mxu0 0.0
      %5244 = vmatpush1.msra.mxu0 %v5146
      %5245 = vmatprep.subr.mxu0 0.0
      %5246 = vmatpush1.msra.mxu0 0.0
      %5247 = vmatprep.subr.mxu0 0.0
      %5248 = vmatpush1.msra.mxu0 0.0
      %5249 = vmatprep.subr.mxu0 0.0
      %5250 = vmatpush1.msra.mxu0 0.0
      %5251 = vmatprep.subr.mxu0 0.0
      %5252 = vmatpush1.msra.mxu0 0.0
      %5253 = vmatprep.subr.mxu0 0.0
      %5254 = vmatpush1.msra.mxu0 0.0
      %5255 = vmatprep.subr.mxu0 0.0
      %5256 = vmatpush1.msra.mxu0 0.0
      %5257 = vmatprep.subr.mxu0 0.0
      %5258 = vmatpush1.msra.mxu0 0.0
      %5259 = vmatprep.subr.mxu0 0.0
      %5260 = vmatpush1.msra.mxu0 0.0
      %5261 = vmatprep.subr.mxu0 0.0
      %5262 = vmatpush1.msra.mxu0 0.0
      %5263 = vmatprep.subr.mxu0 0.0
      %5264 = vmatpush1.msra.mxu0 0.0
      %5265 = vmatprep.subr.mxu0 0.0
      %5266 = vmatpush1.msra.mxu0 0.0
      %5267 = vmatprep.subr.mxu0 0.0
      %5268 = vmatpush1.msra.mxu0 0.0
      %5269 = vmatprep.subr.mxu0 0.0
      %5270 = vmatpush1.msra.mxu0 0.0
      %5271 = vmatprep.subr.mxu0 0.0
      %5272 = vmatpush1.msra.mxu0 0.0
      %5273 = vmatprep.subr.mxu0 0.0
      %5274 = vmatpush1.msra.mxu0 0.0
      %5275 = vmatprep.subr.mxu0 0.0
      %5276 = vmatpush1.msra.mxu0 0.0
      %5277 = vmatprep.subr.mxu0 0.0
      %5278 = vmatpush1.msra.mxu0 0.0
      %5279 = vmatprep.subr.mxu0 0.0
      %5280 = vmatpush1.msra.mxu0 0.0
      %5281 = vmatprep.subr.mxu0 0.0
      %5282 = vmatpush1.msra.mxu0 0.0
      %5283 = vmatprep.subr.mxu0 0.0
      %5284 = vmatpush1.msra.mxu0 0.0
      %5285 = vmatprep.subr.mxu0 0.0
      %5286 = vmatpush1.msra.mxu0 0.0
      %5287 = vmatprep.subr.mxu0 0.0
      %5288 = vmatpush1.msra.mxu0 0.0
      %5289 = vmatprep.subr.mxu0 0.0
      %5290 = vmatpush1.msra.mxu0 0.0
      %5291 = vmatprep.subr.mxu0 0.0
      %5292 = vmatpush1.msra.mxu0 0.0
      %5293 = vmatprep.subr.mxu0 0.0
      %5294 = vmatpush1.msra.mxu0 0.0
      %5295 = vmatprep.subr.mxu0 0.0
      %5296 = vmatpush1.msra.mxu0 0.0
      %5297 = vmatprep.subr.mxu0 0.0
      %5298 = vmatpush1.msra.mxu0 0.0
      %5299 = vmatprep.subr.mxu0 0.0
      %5300 = vmatpush1.msra.mxu0 0.0
      %5301 = vmatprep.subr.mxu0 0.0
      %5302 = vmatpush1.msra.mxu0 0.0
      %5303 = vmatprep.subr.mxu0 0.0
      %5304 = vmatpush1.msra.mxu0 0.0
      %5305 = vmatprep.subr.mxu0 0.0
      %5306 = vmatpush1.msra.mxu0 0.0
      %5307 = vmatprep.mubr.f32.mxu0 0.0
      %5308 = vmatmul.mubr.f32.gmra.mrb[0].mxu0 %v5148
      %v5309 = vpop.f32.mrb[0].mxu0
      %v5310 = vadd.f32 0.0, %v5309
      %v5311 = vpop.f32.mrb[0].mxu0
      %5312 = vmatprep.mubr.f32.mxu0 0.0
      %5313 = vmatmul.mubr.f32.gmra.mrb[0].mxu0 %v5151
      %v5314 = vpop.f32.mrb[0].mxu0
      %v5315 = vadd.f32 0.0, %v5314
      %v5316 = vpop.f32.mrb[0].mxu0
      %5317 = vmatprep.mubr.f32.mxu0 0.0
      %5318 = vmatmul.mubr.f32.gmra.mrb[0].mxu0 %v5154
      %v5319 = vpop.f32.mrb[0].mxu0
      %v5320 = vadd.f32 0.0, %v5319
      %v5321 = vpop.f32.mrb[0].mxu0
      %5322 = vmatprep.mubr.f32.mxu0 0.0
      %5323 = vmatmul.mubr.f32.gmra.mrb[0].mxu0 %v5157
      %v5324 = vpop.f32.mrb[0].mxu0
      %v5325 = vadd.f32 0.0, %v5324
      %v5326 = vpop.f32.mrb[0].mxu0
      %5327 = vmatprep.mubr.f32.mxu0 0.0
      %5328 = vmatmul.mubr.f32.gmra.mrb[0].mxu0 %v5160
      %v5329 = vpop.f32.mrb[0].mxu0
      %v5330 = vadd.f32 0.0, %v5329
      %v5331 = vpop.f32.mrb[0].mxu0
      %5332 = vmatprep.mubr.f32.mxu0 0.0
      %5333 = vmatmul.mubr.f32.gmra.mrb[0].mxu0 %v5163
      %v5334 = vpop.f32.mrb[0].mxu0
      %v5335 = vadd.f32 0.0, %v5334
      %v5336 = vpop.f32.mrb[0].mxu0
      %5337 = vmatprep.mubr.f32.mxu0 0.0
      %5338 = vmatmul.mubr.f32.gmra.mrb[0].mxu0 %v5166
      %v5339 = vpop.f32.mrb[0].mxu0
      %v5340 = vadd.f32 0.0, %v5339
      %v5341 = vpop.f32.mrb[0].mxu0
      %5342 = vmatprep.mubr.f32.mxu0 0.0
      %5343 = vmatmul.mubr.f32.gmra.mrb[0].mxu0 %v5169
      %v5344 = vpop.f32.mrb[0].mxu0
      %v5345 = vadd.f32 0.0, %v5344
      %v5346 = vpop.f32.mrb[0].mxu0
      %5347 = vmatprep.mubr.f32.mxu0 0.0
      %5348 = vmatmul.mubr.f32.gmra.mrb[0].mxu0 %v5172
      %v5349 = vpop.f32.mrb[0].mxu0
      %v5350 = vadd.f32 0.0, %v5349
      %v5351 = vpop.f32.mrb[0].mxu0
      %5352 = vmatprep.mubr.f32.mxu0 0.0
      %5353 = vmatmul.mubr.f32.gmra.mrb[0].mxu0 %v5175
      %v5354 = vpop.f32.mrb[0].mxu0
      %v5355 = vadd.f32 0.0, %v5354
      %v5356 = vpop.f32.mrb[0].mxu0
      %5357 = vmatprep.mubr.f32.mxu0 0.0
      %5358 = vmatmul.mubr.f32.gmra.mrb[0].mxu0 %v5178
      %v5359 = vpop.f32.mrb[0].mxu0
      %v5360 = vadd.f32 0.0, %v5359
      %v5361 = vpop.f32.mrb[0].mxu0
      %5362 = vmatprep.mubr.f32.mxu0 0.0
      %5363 = vmatmul.mubr.f32.gmra.mrb[0].mxu0 %v5181
      %v5364 = vpop.f32.mrb[0].mxu0
      %v5365 = vadd.f32 0.0, %v5364
      %v5366 = vpop.f32.mrb[0].mxu0
      %5367 = vmatprep.mubr.f32.mxu0 0.0
      %5368 = vmatmul.mubr.f32.gmra.mrb[0].mxu0 %v5184
      %v5369 = vpop.f32.mrb[0].mxu0
      %v5370 = vadd.f32 0.0, %v5369
      %v5371 = vpop.f32.mrb[0].mxu0
      %5372 = vmatprep.mubr.f32.mxu0 0.0
      %5373 = vmatmul.mubr.f32.gmra.mrb[0].mxu0 %v5187
      %v5374 = vpop.f32.mrb[0].mxu0
      %v5375 = vadd.f32 0.0, %v5374
      %v5376 = vpop.f32.mrb[0].mxu0
      %5377 = vmatprep.mubr.f32.mxu0 0.0
      %5378 = vmatmul.mubr.f32.gmra.mrb[0].mxu0 %v5190
      %v5379 = vpop.f32.mrb[0].mxu0
      %v5380 = vadd.f32 0.0, %v5379
      %v5381 = vpop.f32.mrb[0].mxu0
      %5382 = vmatprep.mubr.f32.mxu0 0.0
      %5383 = vmatmul.mubr.f32.gmra.mrb[0].mxu0 %v5193
      %v5384 = vpop.f32.mrb[0].mxu0
      %v5385 = vadd.f32 0.0, %v5384
      %v5386 = vpop.f32.mrb[0].mxu0
      %5387 = vmatprep.mubr.f32.mxu0 0.0
      %5388 = vmatmul.mubr.f32.gmra.mrb[0].mxu0 %v5196
      %v5389 = vpop.f32.mrb[0].mxu0
      %v5390 = vadd.f32 0.0, %v5389
      %v5391 = vpop.f32.mrb[0].mxu0
      %5392 = vmatprep.mubr.f32.mxu0 0.0
      %5393 = vmatmul.mubr.f32.gmra.mrb[0].mxu0 %v5199
      %v5394 = vpop.f32.mrb[0].mxu0
      %v5395 = vadd.f32 0.0, %v5394
      %v5396 = vpop.f32.mrb[0].mxu0
      %5397 = vmatprep.mubr.f32.mxu0 0.0
      %5398 = vmatmul.mubr.f32.gmra.mrb[0].mxu0 %v5202
      %v5399 = vpop.f32.mrb[0].mxu0
      %v5400 = vadd.f32 0.0, %v5399
      %v5401 = vpop.f32.mrb[0].mxu0
      %5402 = vmatprep.mubr.f32.mxu0 0.0
      %5403 = vmatmul.mubr.f32.gmra.mrb[0].mxu0 %v5205
      %v5404 = vpop.f32.mrb[0].mxu0
      %v5405 = vadd.f32 0.0, %v5404
      %v5406 = vpop.f32.mrb[0].mxu0
      %5407 = vmatprep.mubr.f32.mxu0 0.0
      %5408 = vmatmul.mubr.f32.gmra.mrb[0].mxu0 %v5208
      %v5409 = vpop.f32.mrb[0].mxu0
      %v5410 = vadd.f32 0.0, %v5409
      %v5411 = vpop.f32.mrb[0].mxu0
      %5412 = vmatprep.mubr.f32.mxu0 0.0
      %5413 = vmatmul.mubr.f32.gmra.mrb[0].mxu0 %v5211
      %v5414 = vpop.f32.mrb[0].mxu0
      %v5415 = vadd.f32 0.0, %v5414
      %v5416 = vpop.f32.mrb[0].mxu0
      %5417 = vmatprep.mubr.f32.mxu0 0.0
      %5418 = vmatmul.mubr.f32.gmra.mrb[0].mxu0 %v5214
      %v5419 = vpop.f32.mrb[0].mxu0
      %v5420 = vadd.f32 0.0, %v5419
      %v5421 = vpop.f32.mrb[0].mxu0
      %5422 = vmatprep.mubr.f32.mxu0 0.0
      %5423 = vmatmul.mubr.f32.gmra.mrb[0].mxu0 %v5217
      %v5424 = vpop.f32.mrb[0].mxu0
      %v5425 = vadd.f32 0.0, %v5424
      %v5426 = vpop.f32.mrb[0].mxu0
      %5427 = vmatprep.mubr.f32.mxu0 0.0
      %5428 = vmatmul.mubr.f32.gmra.mrb[0].mxu0 %v5220
      %v5429 = vpop.f32.mrb[0].mxu0
      %v5430 = vadd.f32 0.0, %v5429
      %v5431 = vpop.f32.mrb[0].mxu0
      %5432 = vmatprep.mubr.f32.mxu0 0.0
      %5433 = vmatmul.mubr.f32.gmra.mrb[0].mxu0 %v5223
      %v5434 = vpop.f32.mrb[0].mxu0
      %v5435 = vadd.f32 0.0, %v5434
      %v5436 = vpop.f32.mrb[0].mxu0
      %5437 = vmatprep.mubr.f32.mxu0 0.0
      %5438 = vmatmul.mubr.f32.gmra.mrb[0].mxu0 %v5226
      %v5439 = vpop.f32.mrb[0].mxu0
      %v5440 = vadd.f32 0.0, %v5439
      %v5441 = vpop.f32.mrb[0].mxu0
      %5442 = vmatprep.mubr.f32.mxu0 0.0
      %5443 = vmatmul.mubr.f32.gmra.mrb[0].mxu0 %v5229
      %v5444 = vpop.f32.mrb[0].mxu0
      %v5445 = vadd.f32 0.0, %v5444
      %v5446 = vpop.f32.mrb[0].mxu0
      %5447 = vmatprep.mubr.f32.mxu0 0.0
      %5448 = vmatmul.mubr.f32.gmra.mrb[0].mxu0 %v5232
      %v5449 = vpop.f32.mrb[0].mxu0
      %v5450 = vadd.f32 0.0, %v5449
      %v5451 = vpop.f32.mrb[0].mxu0
      %5452 = vmatprep.mubr.f32.mxu0 0.0
      %5453 = vmatmul.mubr.f32.gmra.mrb[0].mxu0 %v5235
      %v5454 = vpop.f32.mrb[0].mxu0
      %v5455 = vadd.f32 0.0, %v5454
      %v5456 = vpop.f32.mrb[0].mxu0
      %5457 = vmatprep.mubr.f32.mxu0 0.0
      %5458 = vmatmul.mubr.f32.gmra.mrb[0].mxu0 %v5238
      %v5459 = vpop.f32.mrb[0].mxu0
      %v5460 = vadd.f32 0.0, %v5459
      %v5461 = vpop.f32.mrb[0].mxu0
      %5462 = vmatprep.mubr.f32.mxu0 0.0
      %5463 = vmatmul.mubr.f32.gmra.mrb[0].mxu0 %v5241
      %v5464 = vpop.f32.mrb[0].mxu0
      %v5465 = vadd.f32 0.0, %v5464
      %v5466 = vpop.f32.mrb[0].mxu0
      %5467 = vdwg.mxu0
      %v5468 = vadd.f32 %v5081, %v5310
      %v5469 = vadd.f32 %v5082, %v5315
      %v5470 = vadd.f32 %v5083, %v5320
      %v5471 = vadd.f32 %v5084, %v5325
      %v5472 = vadd.f32 %v5085, %v5330
      %v5473 = vadd.f32 %v5086, %v5335
      %v5474 = vadd.f32 %v5087, %v5340
      %v5475 = vadd.f32 %v5088, %v5345
      %v5476 = vadd.f32 %v5089, %v5350
      %v5477 = vadd.f32 %v5090, %v5355
      %v5478 = vadd.f32 %v5091, %v5360
      %v5479 = vadd.f32 %v5092, %v5365
      %v5480 = vadd.f32 %v5093, %v5370
      %v5481 = vadd.f32 %v5094, %v5375
      %v5482 = vadd.f32 %v5095, %v5380
      %v5483 = vadd.f32 %v5096, %v5385
      %v5484 = vadd.f32 %v5097, %v5390
      %v5485 = vadd.f32 %v5098, %v5395
      %v5486 = vadd.f32 %v5099, %v5400
      %v5487 = vadd.f32 %v5100, %v5405
      %v5488 = vadd.f32 %v5101, %v5410
      %v5489 = vadd.f32 %v5102, %v5415
      %v5490 = vadd.f32 %v5103, %v5420
      %v5491 = vadd.f32 %v5104, %v5425
      %v5492 = vadd.f32 %v5105, %v5430
      %v5493 = vadd.f32 %v5106, %v5435
      %v5494 = vadd.f32 %v5107, %v5440
      %v5495 = vadd.f32 %v5108, %v5445
      %v5496 = vadd.f32 %v5109, %v5450
      %v5497 = vadd.f32 %v5110, %v5455
      %v5498 = vadd.f32 %v5111, %v5460
      %v5499 = vadd.f32 %v5112, %v5465
      %v5500 = vld [vmem:[%s3984 + $0x1] sm:$0xff]
      %v5501 = vld [vmem:[%s3984 + $0x9] sm:$0xff]
      %v5502 = vld [vmem:[%s3984 + $0x19] sm:$0xff]
      %v5503 = vld [vmem:[%s3984 + $0x21] sm:$0xff]
      %v5504 = vld [vmem:[%s3984 + $0x31] sm:$0xff]
      %v5505 = vld [vmem:[%s3984 + $0x39] sm:$0xff]
      %v5506 = vld [vmem:[%s3984 + $0x49] sm:$0xff]
      %v5507 = vld [vmem:[%s3984 + $0x51] sm:$0xff]
      %v5508 = vld [vmem:[%s3984 + $0x61] sm:$0xff]
      %v5509 = vld [vmem:[%s3984 + $0x69] sm:$0xff]
      %v5510 = vld [vmem:[%s3984 + $0x79] sm:$0xff]
      %v5511 = vld [vmem:[%s3984 + $0x81] sm:$0xff]
      %v5512 = vld [vmem:[%s3984 + $0x91] sm:$0xff]
      %v5513 = vld [vmem:[%s3984 + $0x99] sm:$0xff]
      %v5514 = vld [vmem:[%s3984 + $0xa9] sm:$0xff]
      %v5515 = vld [vmem:[%s3984 + $0xb1] sm:$0xff]
      %v5516 = vld [vmem:[%s3984 + $0xc1] sm:$0xff]
      %v5517 = vld [vmem:[%s3984 + $0xc9] sm:$0xff]
      %v5518 = vld [vmem:[%s3984 + $0xd9] sm:$0xff]
      %v5519 = vld [vmem:[%s3984 + $0xe1] sm:$0xff]
      %v5520 = vld [vmem:[%s3984 + $0xf1] sm:$0xff]
      %v5521 = vld [vmem:[%s3984 + $0xf9] sm:$0xff]
      %v5522 = vld [vmem:[%s3984 + $0x109] sm:$0xff]
      %v5523 = vld [vmem:[%s3984 + $0x111] sm:$0xff]
      %v5524 = vld [vmem:[%s3984 + $0x121] sm:$0xff]
      %v5525 = vld [vmem:[%s3984 + $0x129] sm:$0xff]
      %v5526 = vld [vmem:[%s3984 + $0x139] sm:$0xff]
      %v5527 = vld [vmem:[%s3984 + $0x141] sm:$0xff]
      %v5528 = vld [vmem:[%s3984 + $0x151] sm:$0xff]
      %v5529 = vld [vmem:[%s3984 + $0x159] sm:$0xff]
      %v5530 = vld [vmem:[%s3984 + $0x169] sm:$0xff]
      %v5531 = vld [vmem:[%s3984 + $0x171] sm:$0xff]
      %s5532 = scalar_lea.vmem %s3, 32
      %v5533 = vld [vmem:[%s5532] sm:$0xff]
      %v5535 = vsel %vm3928, %v5500, 0
      %v5538 = vsel %vm3928, %v5501, 0
      %v5541 = vsel %vm3928, %v5502, 0
      %v5544 = vsel %vm3928, %v5503, 0
      %v5547 = vsel %vm3928, %v5504, 0
      %v5550 = vsel %vm3928, %v5505, 0
      %v5553 = vsel %vm3928, %v5506, 0
      %v5556 = vsel %vm3928, %v5507, 0
      %v5559 = vsel %vm3928, %v5508, 0
      %v5562 = vsel %vm3928, %v5509, 0
      %v5565 = vsel %vm3928, %v5510, 0
      %v5568 = vsel %vm3928, %v5511, 0
      %v5571 = vsel %vm3928, %v5512, 0
      %v5574 = vsel %vm3928, %v5513, 0
      %v5577 = vsel %vm3928, %v5514, 0
      %v5580 = vsel %vm3928, %v5515, 0
      %v5583 = vsel %vm3928, %v5516, 0
      %v5586 = vsel %vm3928, %v5517, 0
      %v5589 = vsel %vm3928, %v5518, 0
      %v5592 = vsel %vm3928, %v5519, 0
      %v5595 = vsel %vm3928, %v5520, 0
      %v5598 = vsel %vm3928, %v5521, 0
      %v5601 = vsel %vm3928, %v5522, 0
      %v5604 = vsel %vm3928, %v5523, 0
      %v5607 = vsel %vm3928, %v5524, 0
      %v5610 = vsel %vm3928, %v5525, 0
      %v5613 = vsel %vm3928, %v5526, 0
      %v5616 = vsel %vm3928, %v5527, 0
      %v5619 = vsel %vm3928, %v5528, 0
      %v5622 = vsel %vm3928, %v5529, 0
      %v5625 = vsel %vm3928, %v5530, 0
      %v5628 = vsel %vm3928, %v5531, 0
      %5630 = vmatprep.subr.mxu0 0.0
      %5631 = vmatpush1.msra.mxu0 %v5533
      %5632 = vmatprep.subr.mxu0 0.0
      %5633 = vmatpush1.msra.mxu0 0.0
      %5634 = vmatprep.subr.mxu0 0.0
      %5635 = vmatpush1.msra.mxu0 0.0
      %5636 = vmatprep.subr.mxu0 0.0
      %5637 = vmatpush1.msra.mxu0 0.0
      %5638 = vmatprep.subr.mxu0 0.0
      %5639 = vmatpush1.msra.mxu0 0.0
      %5640 = vmatprep.subr.mxu0 0.0
      %5641 = vmatpush1.msra.mxu0 0.0
      %5642 = vmatprep.subr.mxu0 0.0
      %5643 = vmatpush1.msra.mxu0 0.0
      %5644 = vmatprep.subr.mxu0 0.0
      %5645 = vmatpush1.msra.mxu0 0.0
      %5646 = vmatprep.subr.mxu0 0.0
      %5647 = vmatpush1.msra.mxu0 0.0
      %5648 = vmatprep.subr.mxu0 0.0
      %5649 = vmatpush1.msra.mxu0 0.0
      %5650 = vmatprep.subr.mxu0 0.0
      %5651 = vmatpush1.msra.mxu0 0.0
      %5652 = vmatprep.subr.mxu0 0.0
      %5653 = vmatpush1.msra.mxu0 0.0
      %5654 = vmatprep.subr.mxu0 0.0
      %5655 = vmatpush1.msra.mxu0 0.0
      %5656 = vmatprep.subr.mxu0 0.0
      %5657 = vmatpush1.msra.mxu0 0.0
      %5658 = vmatprep.subr.mxu0 0.0
      %5659 = vmatpush1.msra.mxu0 0.0
      %5660 = vmatprep.subr.mxu0 0.0
      %5661 = vmatpush1.msra.mxu0 0.0
      %5662 = vmatprep.subr.mxu0 0.0
      %5663 = vmatpush1.msra.mxu0 0.0
      %5664 = vmatprep.subr.mxu0 0.0
      %5665 = vmatpush1.msra.mxu0 0.0
      %5666 = vmatprep.subr.mxu0 0.0
      %5667 = vmatpush1.msra.mxu0 0.0
      %5668 = vmatprep.subr.mxu0 0.0
      %5669 = vmatpush1.msra.mxu0 0.0
      %5670 = vmatprep.subr.mxu0 0.0
      %5671 = vmatpush1.msra.mxu0 0.0
      %5672 = vmatprep.subr.mxu0 0.0
      %5673 = vmatpush1.msra.mxu0 0.0
      %5674 = vmatprep.subr.mxu0 0.0
      %5675 = vmatpush1.msra.mxu0 0.0
      %5676 = vmatprep.subr.mxu0 0.0
      %5677 = vmatpush1.msra.mxu0 0.0
      %5678 = vmatprep.subr.mxu0 0.0
      %5679 = vmatpush1.msra.mxu0 0.0
      %5680 = vmatprep.subr.mxu0 0.0
      %5681 = vmatpush1.msra.mxu0 0.0
      %5682 = vmatprep.subr.mxu0 0.0
      %5683 = vmatpush1.msra.mxu0 0.0
      %5684 = vmatprep.subr.mxu0 0.0
      %5685 = vmatpush1.msra.mxu0 0.0
      %5686 = vmatprep.subr.mxu0 0.0
      %5687 = vmatpush1.msra.mxu0 0.0
      %5688 = vmatprep.subr.mxu0 0.0
      %5689 = vmatpush1.msra.mxu0 0.0
      %5690 = vmatprep.subr.mxu0 0.0
      %5691 = vmatpush1.msra.mxu0 0.0
      %5692 = vmatprep.subr.mxu0 0.0
      %5693 = vmatpush1.msra.mxu0 0.0
      %5694 = vmatprep.mubr.f32.mxu0 0.0
      %5695 = vmatmul.mubr.f32.gmra.mrb[0].mxu0 %v5535
      %v5696 = vpop.f32.mrb[0].mxu0
      %v5697 = vadd.f32 0.0, %v5696
      %v5698 = vpop.f32.mrb[0].mxu0
      %5699 = vmatprep.mubr.f32.mxu0 0.0
      %5700 = vmatmul.mubr.f32.gmra.mrb[0].mxu0 %v5538
      %v5701 = vpop.f32.mrb[0].mxu0
      %v5702 = vadd.f32 0.0, %v5701
      %v5703 = vpop.f32.mrb[0].mxu0
      %5704 = vmatprep.mubr.f32.mxu0 0.0
      %5705 = vmatmul.mubr.f32.gmra.mrb[0].mxu0 %v5541
      %v5706 = vpop.f32.mrb[0].mxu0
      %v5707 = vadd.f32 0.0, %v5706
      %v5708 = vpop.f32.mrb[0].mxu0
      %5709 = vmatprep.mubr.f32.mxu0 0.0
      %5710 = vmatmul.mubr.f32.gmra.mrb[0].mxu0 %v5544
      %v5711 = vpop.f32.mrb[0].mxu0
      %v5712 = vadd.f32 0.0, %v5711
      %v5713 = vpop.f32.mrb[0].mxu0
      %5714 = vmatprep.mubr.f32.mxu0 0.0
      %5715 = vmatmul.mubr.f32.gmra.mrb[0].mxu0 %v5547
      %v5716 = vpop.f32.mrb[0].mxu0
      %v5717 = vadd.f32 0.0, %v5716
      %v5718 = vpop.f32.mrb[0].mxu0
      %5719 = vmatprep.mubr.f32.mxu0 0.0
      %5720 = vmatmul.mubr.f32.gmra.mrb[0].mxu0 %v5550
      %v5721 = vpop.f32.mrb[0].mxu0
      %v5722 = vadd.f32 0.0, %v5721
      %v5723 = vpop.f32.mrb[0].mxu0
      %5724 = vmatprep.mubr.f32.mxu0 0.0
      %5725 = vmatmul.mubr.f32.gmra.mrb[0].mxu0 %v5553
      %v5726 = vpop.f32.mrb[0].mxu0
      %v5727 = vadd.f32 0.0, %v5726
      %v5728 = vpop.f32.mrb[0].mxu0
      %5729 = vmatprep.mubr.f32.mxu0 0.0
      %5730 = vmatmul.mubr.f32.gmra.mrb[0].mxu0 %v5556
      %v5731 = vpop.f32.mrb[0].mxu0
      %v5732 = vadd.f32 0.0, %v5731
      %v5733 = vpop.f32.mrb[0].mxu0
      %5734 = vmatprep.mubr.f32.mxu0 0.0
      %5735 = vmatmul.mubr.f32.gmra.mrb[0].mxu0 %v5559
      %v5736 = vpop.f32.mrb[0].mxu0
      %v5737 = vadd.f32 0.0, %v5736
      %v5738 = vpop.f32.mrb[0].mxu0
      %5739 = vmatprep.mubr.f32.mxu0 0.0
      %5740 = vmatmul.mubr.f32.gmra.mrb[0].mxu0 %v5562
      %v5741 = vpop.f32.mrb[0].mxu0
      %v5742 = vadd.f32 0.0, %v5741
      %v5743 = vpop.f32.mrb[0].mxu0
      %5744 = vmatprep.mubr.f32.mxu0 0.0
      %5745 = vmatmul.mubr.f32.gmra.mrb[0].mxu0 %v5565
      %v5746 = vpop.f32.mrb[0].mxu0
      %v5747 = vadd.f32 0.0, %v5746
      %v5748 = vpop.f32.mrb[0].mxu0
      %5749 = vmatprep.mubr.f32.mxu0 0.0
      %5750 = vmatmul.mubr.f32.gmra.mrb[0].mxu0 %v5568
      %v5751 = vpop.f32.mrb[0].mxu0
      %v5752 = vadd.f32 0.0, %v5751
      %v5753 = vpop.f32.mrb[0].mxu0
      %5754 = vmatprep.mubr.f32.mxu0 0.0
      %5755 = vmatmul.mubr.f32.gmra.mrb[0].mxu0 %v5571
      %v5756 = vpop.f32.mrb[0].mxu0
      %v5757 = vadd.f32 0.0, %v5756
      %v5758 = vpop.f32.mrb[0].mxu0
      %5759 = vmatprep.mubr.f32.mxu0 0.0
      %5760 = vmatmul.mubr.f32.gmra.mrb[0].mxu0 %v5574
      %v5761 = vpop.f32.mrb[0].mxu0
      %v5762 = vadd.f32 0.0, %v5761
      %v5763 = vpop.f32.mrb[0].mxu0
      %5764 = vmatprep.mubr.f32.mxu0 0.0
      %5765 = vmatmul.mubr.f32.gmra.mrb[0].mxu0 %v5577
      %v5766 = vpop.f32.mrb[0].mxu0
      %v5767 = vadd.f32 0.0, %v5766
      %v5768 = vpop.f32.mrb[0].mxu0
      %5769 = vmatprep.mubr.f32.mxu0 0.0
      %5770 = vmatmul.mubr.f32.gmra.mrb[0].mxu0 %v5580
      %v5771 = vpop.f32.mrb[0].mxu0
      %v5772 = vadd.f32 0.0, %v5771
      %v5773 = vpop.f32.mrb[0].mxu0
      %5774 = vmatprep.mubr.f32.mxu0 0.0
      %5775 = vmatmul.mubr.f32.gmra.mrb[0].mxu0 %v5583
      %v5776 = vpop.f32.mrb[0].mxu0
      %v5777 = vadd.f32 0.0, %v5776
      %v5778 = vpop.f32.mrb[0].mxu0
      %5779 = vmatprep.mubr.f32.mxu0 0.0
      %5780 = vmatmul.mubr.f32.gmra.mrb[0].mxu0 %v5586
      %v5781 = vpop.f32.mrb[0].mxu0
      %v5782 = vadd.f32 0.0, %v5781
      %v5783 = vpop.f32.mrb[0].mxu0
      %5784 = vmatprep.mubr.f32.mxu0 0.0
      %5785 = vmatmul.mubr.f32.gmra.mrb[0].mxu0 %v5589
      %v5786 = vpop.f32.mrb[0].mxu0
      %v5787 = vadd.f32 0.0, %v5786
      %v5788 = vpop.f32.mrb[0].mxu0
      %5789 = vmatprep.mubr.f32.mxu0 0.0
      %5790 = vmatmul.mubr.f32.gmra.mrb[0].mxu0 %v5592
      %v5791 = vpop.f32.mrb[0].mxu0
      %v5792 = vadd.f32 0.0, %v5791
      %v5793 = vpop.f32.mrb[0].mxu0
      %5794 = vmatprep.mubr.f32.mxu0 0.0
      %5795 = vmatmul.mubr.f32.gmra.mrb[0].mxu0 %v5595
      %v5796 = vpop.f32.mrb[0].mxu0
      %v5797 = vadd.f32 0.0, %v5796
      %v5798 = vpop.f32.mrb[0].mxu0
      %5799 = vmatprep.mubr.f32.mxu0 0.0
      %5800 = vmatmul.mubr.f32.gmra.mrb[0].mxu0 %v5598
      %v5801 = vpop.f32.mrb[0].mxu0
      %v5802 = vadd.f32 0.0, %v5801
      %v5803 = vpop.f32.mrb[0].mxu0
      %5804 = vmatprep.mubr.f32.mxu0 0.0
      %5805 = vmatmul.mubr.f32.gmra.mrb[0].mxu0 %v5601
      %v5806 = vpop.f32.mrb[0].mxu0
      %v5807 = vadd.f32 0.0, %v5806
      %v5808 = vpop.f32.mrb[0].mxu0
      %5809 = vmatprep.mubr.f32.mxu0 0.0
      %5810 = vmatmul.mubr.f32.gmra.mrb[0].mxu0 %v5604
      %v5811 = vpop.f32.mrb[0].mxu0
      %v5812 = vadd.f32 0.0, %v5811
      %v5813 = vpop.f32.mrb[0].mxu0
      %5814 = vmatprep.mubr.f32.mxu0 0.0
      %5815 = vmatmul.mubr.f32.gmra.mrb[0].mxu0 %v5607
      %v5816 = vpop.f32.mrb[0].mxu0
      %v5817 = vadd.f32 0.0, %v5816
      %v5818 = vpop.f32.mrb[0].mxu0
      %5819 = vmatprep.mubr.f32.mxu0 0.0
      %5820 = vmatmul.mubr.f32.gmra.mrb[0].mxu0 %v5610
      %v5821 = vpop.f32.mrb[0].mxu0
      %v5822 = vadd.f32 0.0, %v5821
      %v5823 = vpop.f32.mrb[0].mxu0
      %5824 = vmatprep.mubr.f32.mxu0 0.0
      %5825 = vmatmul.mubr.f32.gmra.mrb[0].mxu0 %v5613
      %v5826 = vpop.f32.mrb[0].mxu0
      %v5827 = vadd.f32 0.0, %v5826
      %v5828 = vpop.f32.mrb[0].mxu0
      %5829 = vmatprep.mubr.f32.mxu0 0.0
      %5830 = vmatmul.mubr.f32.gmra.mrb[0].mxu0 %v5616
      %v5831 = vpop.f32.mrb[0].mxu0
      %v5832 = vadd.f32 0.0, %v5831
      %v5833 = vpop.f32.mrb[0].mxu0
      %5834 = vmatprep.mubr.f32.mxu0 0.0
      %5835 = vmatmul.mubr.f32.gmra.mrb[0].mxu0 %v5619
      %v5836 = vpop.f32.mrb[0].mxu0
      %v5837 = vadd.f32 0.0, %v5836
      %v5838 = vpop.f32.mrb[0].mxu0
      %5839 = vmatprep.mubr.f32.mxu0 0.0
      %5840 = vmatmul.mubr.f32.gmra.mrb[0].mxu0 %v5622
      %v5841 = vpop.f32.mrb[0].mxu0
      %v5842 = vadd.f32 0.0, %v5841
      %v5843 = vpop.f32.mrb[0].mxu0
      %5844 = vmatprep.mubr.f32.mxu0 0.0
      %5845 = vmatmul.mubr.f32.gmra.mrb[0].mxu0 %v5625
      %v5846 = vpop.f32.mrb[0].mxu0
      %v5847 = vadd.f32 0.0, %v5846
      %v5848 = vpop.f32.mrb[0].mxu0
      %5849 = vmatprep.mubr.f32.mxu0 0.0
      %5850 = vmatmul.mubr.f32.gmra.mrb[0].mxu0 %v5628
      %v5851 = vpop.f32.mrb[0].mxu0
      %v5852 = vadd.f32 0.0, %v5851
      %v5853 = vpop.f32.mrb[0].mxu0
      %5854 = vdwg.mxu0
      %v5855 = vadd.f32 %v5468, %v5697
      %v5856 = vadd.f32 %v5469, %v5702
      %v5857 = vadd.f32 %v5470, %v5707
      %v5858 = vadd.f32 %v5471, %v5712
      %v5859 = vadd.f32 %v5472, %v5717
      %v5860 = vadd.f32 %v5473, %v5722
      %v5861 = vadd.f32 %v5474, %v5727
      %v5862 = vadd.f32 %v5475, %v5732
      %v5863 = vadd.f32 %v5476, %v5737
      %v5864 = vadd.f32 %v5477, %v5742
      %v5865 = vadd.f32 %v5478, %v5747
      %v5866 = vadd.f32 %v5479, %v5752
      %v5867 = vadd.f32 %v5480, %v5757
      %v5868 = vadd.f32 %v5481, %v5762
      %v5869 = vadd.f32 %v5482, %v5767
      %v5870 = vadd.f32 %v5483, %v5772
      %v5871 = vadd.f32 %v5484, %v5777
      %v5872 = vadd.f32 %v5485, %v5782
      %v5873 = vadd.f32 %v5486, %v5787
      %v5874 = vadd.f32 %v5487, %v5792
      %v5875 = vadd.f32 %v5488, %v5797
      %v5876 = vadd.f32 %v5489, %v5802
      %v5877 = vadd.f32 %v5490, %v5807
      %v5878 = vadd.f32 %v5491, %v5812
      %v5879 = vadd.f32 %v5492, %v5817
      %v5880 = vadd.f32 %v5493, %v5822
      %v5881 = vadd.f32 %v5494, %v5827
      %v5882 = vadd.f32 %v5495, %v5832
      %v5883 = vadd.f32 %v5496, %v5837
      %v5884 = vadd.f32 %v5497, %v5842
      %v5885 = vadd.f32 %v5498, %v5847
      %v5886 = vadd.f32 %v5499, %v5852
      %v5887 = vld [vmem:[%s3984 + $0x2] sm:$0xff]
      %v5888 = vld [vmem:[%s3984 + $0xa] sm:$0xff]
      %v5889 = vld [vmem:[%s3984 + $0x1a] sm:$0xff]
      %v5890 = vld [vmem:[%s3984 + $0x22] sm:$0xff]
      %v5891 = vld [vmem:[%s3984 + $0x32] sm:$0xff]
      %v5892 = vld [vmem:[%s3984 + $0x3a] sm:$0xff]
      %v5893 = vld [vmem:[%s3984 + $0x4a] sm:$0xff]
      %v5894 = vld [vmem:[%s3984 + $0x52] sm:$0xff]
      %v5895 = vld [vmem:[%s3984 + $0x62] sm:$0xff]
      %v5896 = vld [vmem:[%s3984 + $0x6a] sm:$0xff]
      %v5897 = vld [vmem:[%s3984 + $0x7a] sm:$0xff]
      %v5898 = vld [vmem:[%s3984 + $0x82] sm:$0xff]
      %v5899 = vld [vmem:[%s3984 + $0x92] sm:$0xff]
      %v5900 = vld [vmem:[%s3984 + $0x9a] sm:$0xff]
      %v5901 = vld [vmem:[%s3984 + $0xaa] sm:$0xff]
      %v5902 = vld [vmem:[%s3984 + $0xb2] sm:$0xff]
      %v5903 = vld [vmem:[%s3984 + $0xc2] sm:$0xff]
      %v5904 = vld [vmem:[%s3984 + $0xca] sm:$0xff]
      %v5905 = vld [vmem:[%s3984 + $0xda] sm:$0xff]
      %v5906 = vld [vmem:[%s3984 + $0xe2] sm:$0xff]
      %v5907 = vld [vmem:[%s3984 + $0xf2] sm:$0xff]
      %v5908 = vld [vmem:[%s3984 + $0xfa] sm:$0xff]
      %v5909 = vld [vmem:[%s3984 + $0x10a] sm:$0xff]
      %v5910 = vld [vmem:[%s3984 + $0x112] sm:$0xff]
      %v5911 = vld [vmem:[%s3984 + $0x122] sm:$0xff]
      %v5912 = vld [vmem:[%s3984 + $0x12a] sm:$0xff]
      %v5913 = vld [vmem:[%s3984 + $0x13a] sm:$0xff]
      %v5914 = vld [vmem:[%s3984 + $0x142] sm:$0xff]
      %v5915 = vld [vmem:[%s3984 + $0x152] sm:$0xff]
      %v5916 = vld [vmem:[%s3984 + $0x15a] sm:$0xff]
      %v5917 = vld [vmem:[%s3984 + $0x16a] sm:$0xff]
      %v5918 = vld [vmem:[%s3984 + $0x172] sm:$0xff]
      %s5919 = scalar_lea.vmem %s3, 40
      %v5920 = vld [vmem:[%s5919] sm:$0xff]
      %v5922 = vsel %vm3928, %v5887, 0
      %v5925 = vsel %vm3928, %v5888, 0
      %v5928 = vsel %vm3928, %v5889, 0
      %v5931 = vsel %vm3928, %v5890, 0
      %v5934 = vsel %vm3928, %v5891, 0
      %v5937 = vsel %vm3928, %v5892, 0
      %v5940 = vsel %vm3928, %v5893, 0
      %v5943 = vsel %vm3928, %v5894, 0
      %v5946 = vsel %vm3928, %v5895, 0
      %v5949 = vsel %vm3928, %v5896, 0
      %v5952 = vsel %vm3928, %v5897, 0
      %v5955 = vsel %vm3928, %v5898, 0
      %v5958 = vsel %vm3928, %v5899, 0
      %v5961 = vsel %vm3928, %v5900, 0
      %v5964 = vsel %vm3928, %v5901, 0
      %v5967 = vsel %vm3928, %v5902, 0
      %v5970 = vsel %vm3928, %v5903, 0
      %v5973 = vsel %vm3928, %v5904, 0
      %v5976 = vsel %vm3928, %v5905, 0
      %v5979 = vsel %vm3928, %v5906, 0
      %v5982 = vsel %vm3928, %v5907, 0
      %v5985 = vsel %vm3928, %v5908, 0
      %v5988 = vsel %vm3928, %v5909, 0
      %v5991 = vsel %vm3928, %v5910, 0
      %v5994 = vsel %vm3928, %v5911, 0
      %v5997 = vsel %vm3928, %v5912, 0
      %v6000 = vsel %vm3928, %v5913, 0
      %v6003 = vsel %vm3928, %v5914, 0
      %v6006 = vsel %vm3928, %v5915, 0
      %v6009 = vsel %vm3928, %v5916, 0
      %v6012 = vsel %vm3928, %v5917, 0
      %v6015 = vsel %vm3928, %v5918, 0
      %6017 = vmatprep.subr.mxu0 0.0
      %6018 = vmatpush1.msra.mxu0 %v5920
      %6019 = vmatprep.subr.mxu0 0.0
      %6020 = vmatpush1.msra.mxu0 0.0
      %6021 = vmatprep.subr.mxu0 0.0
      %6022 = vmatpush1.msra.mxu0 0.0
      %6023 = vmatprep.subr.mxu0 0.0
      %6024 = vmatpush1.msra.mxu0 0.0
      %6025 = vmatprep.subr.mxu0 0.0
      %6026 = vmatpush1.msra.mxu0 0.0
      %6027 = vmatprep.subr.mxu0 0.0
      %6028 = vmatpush1.msra.mxu0 0.0
      %6029 = vmatprep.subr.mxu0 0.0
      %6030 = vmatpush1.msra.mxu0 0.0
      %6031 = vmatprep.subr.mxu0 0.0
      %6032 = vmatpush1.msra.mxu0 0.0
      %6033 = vmatprep.subr.mxu0 0.0
      %6034 = vmatpush1.msra.mxu0 0.0
      %6035 = vmatprep.subr.mxu0 0.0
      %6036 = vmatpush1.msra.mxu0 0.0
      %6037 = vmatprep.subr.mxu0 0.0
      %6038 = vmatpush1.msra.mxu0 0.0
      %6039 = vmatprep.subr.mxu0 0.0
      %6040 = vmatpush1.msra.mxu0 0.0
      %6041 = vmatprep.subr.mxu0 0.0
      %6042 = vmatpush1.msra.mxu0 0.0
      %6043 = vmatprep.subr.mxu0 0.0
      %6044 = vmatpush1.msra.mxu0 0.0
      %6045 = vmatprep.subr.mxu0 0.0
      %6046 = vmatpush1.msra.mxu0 0.0
      %6047 = vmatprep.subr.mxu0 0.0
      %6048 = vmatpush1.msra.mxu0 0.0
      %6049 = vmatprep.subr.mxu0 0.0
      %6050 = vmatpush1.msra.mxu0 0.0
      %6051 = vmatprep.subr.mxu0 0.0
      %6052 = vmatpush1.msra.mxu0 0.0
      %6053 = vmatprep.subr.mxu0 0.0
      %6054 = vmatpush1.msra.mxu0 0.0
      %6055 = vmatprep.subr.mxu0 0.0
      %6056 = vmatpush1.msra.mxu0 0.0
      %6057 = vmatprep.subr.mxu0 0.0
      %6058 = vmatpush1.msra.mxu0 0.0
      %6059 = vmatprep.subr.mxu0 0.0
      %6060 = vmatpush1.msra.mxu0 0.0
      %6061 = vmatprep.subr.mxu0 0.0
      %6062 = vmatpush1.msra.mxu0 0.0
      %6063 = vmatprep.subr.mxu0 0.0
      %6064 = vmatpush1.msra.mxu0 0.0
      %6065 = vmatprep.subr.mxu0 0.0
      %6066 = vmatpush1.msra.mxu0 0.0
      %6067 = vmatprep.subr.mxu0 0.0
      %6068 = vmatpush1.msra.mxu0 0.0
      %6069 = vmatprep.subr.mxu0 0.0
      %6070 = vmatpush1.msra.mxu0 0.0
      %6071 = vmatprep.subr.mxu0 0.0
      %6072 = vmatpush1.msra.mxu0 0.0
      %6073 = vmatprep.subr.mxu0 0.0
      %6074 = vmatpush1.msra.mxu0 0.0
      %6075 = vmatprep.subr.mxu0 0.0
      %6076 = vmatpush1.msra.mxu0 0.0
      %6077 = vmatprep.subr.mxu0 0.0
      %6078 = vmatpush1.msra.mxu0 0.0
      %6079 = vmatprep.subr.mxu0 0.0
      %6080 = vmatpush1.msra.mxu0 0.0
      %6081 = vmatprep.mubr.f32.mxu0 0.0
      %6082 = vmatmul.mubr.f32.gmra.mrb[0].mxu0 %v5922
      %v6083 = vpop.f32.mrb[0].mxu0
      %v6084 = vadd.f32 0.0, %v6083
      %v6085 = vpop.f32.mrb[0].mxu0
      %6086 = vmatprep.mubr.f32.mxu0 0.0
      %6087 = vmatmul.mubr.f32.gmra.mrb[0].mxu0 %v5925
      %v6088 = vpop.f32.mrb[0].mxu0
      %v6089 = vadd.f32 0.0, %v6088
      %v6090 = vpop.f32.mrb[0].mxu0
      %6091 = vmatprep.mubr.f32.mxu0 0.0
      %6092 = vmatmul.mubr.f32.gmra.mrb[0].mxu0 %v5928
      %v6093 = vpop.f32.mrb[0].mxu0
      %v6094 = vadd.f32 0.0, %v6093
      %v6095 = vpop.f32.mrb[0].mxu0
      %6096 = vmatprep.mubr.f32.mxu0 0.0
      %6097 = vmatmul.mubr.f32.gmra.mrb[0].mxu0 %v5931
      %v6098 = vpop.f32.mrb[0].mxu0
      %v6099 = vadd.f32 0.0, %v6098
      %v6100 = vpop.f32.mrb[0].mxu0
      %6101 = vmatprep.mubr.f32.mxu0 0.0
      %6102 = vmatmul.mubr.f32.gmra.mrb[0].mxu0 %v5934
      %v6103 = vpop.f32.mrb[0].mxu0
      %v6104 = vadd.f32 0.0, %v6103
      %v6105 = vpop.f32.mrb[0].mxu0
      %6106 = vmatprep.mubr.f32.mxu0 0.0
      %6107 = vmatmul.mubr.f32.gmra.mrb[0].mxu0 %v5937
      %v6108 = vpop.f32.mrb[0].mxu0
      %v6109 = vadd.f32 0.0, %v6108
      %v6110 = vpop.f32.mrb[0].mxu0
      %6111 = vmatprep.mubr.f32.mxu0 0.0
      %6112 = vmatmul.mubr.f32.gmra.mrb[0].mxu0 %v5940
      %v6113 = vpop.f32.mrb[0].mxu0
      %v6114 = vadd.f32 0.0, %v6113
      %v6115 = vpop.f32.mrb[0].mxu0
      %6116 = vmatprep.mubr.f32.mxu0 0.0
      %6117 = vmatmul.mubr.f32.gmra.mrb[0].mxu0 %v5943
      %v6118 = vpop.f32.mrb[0].mxu0
      %v6119 = vadd.f32 0.0, %v6118
      %v6120 = vpop.f32.mrb[0].mxu0
      %6121 = vmatprep.mubr.f32.mxu0 0.0
      %6122 = vmatmul.mubr.f32.gmra.mrb[0].mxu0 %v5946
      %v6123 = vpop.f32.mrb[0].mxu0
      %v6124 = vadd.f32 0.0, %v6123
      %v6125 = vpop.f32.mrb[0].mxu0
      %6126 = vmatprep.mubr.f32.mxu0 0.0
      %6127 = vmatmul.mubr.f32.gmra.mrb[0].mxu0 %v5949
      %v6128 = vpop.f32.mrb[0].mxu0
      %v6129 = vadd.f32 0.0, %v6128
      %v6130 = vpop.f32.mrb[0].mxu0
      %6131 = vmatprep.mubr.f32.mxu0 0.0
      %6132 = vmatmul.mubr.f32.gmra.mrb[0].mxu0 %v5952
      %v6133 = vpop.f32.mrb[0].mxu0
      %v6134 = vadd.f32 0.0, %v6133
      %v6135 = vpop.f32.mrb[0].mxu0
      %6136 = vmatprep.mubr.f32.mxu0 0.0
      %6137 = vmatmul.mubr.f32.gmra.mrb[0].mxu0 %v5955
      %v6138 = vpop.f32.mrb[0].mxu0
      %v6139 = vadd.f32 0.0, %v6138
      %v6140 = vpop.f32.mrb[0].mxu0
      %6141 = vmatprep.mubr.f32.mxu0 0.0
      %6142 = vmatmul.mubr.f32.gmra.mrb[0].mxu0 %v5958
      %v6143 = vpop.f32.mrb[0].mxu0
      %v6144 = vadd.f32 0.0, %v6143
      %v6145 = vpop.f32.mrb[0].mxu0
      %6146 = vmatprep.mubr.f32.mxu0 0.0
      %6147 = vmatmul.mubr.f32.gmra.mrb[0].mxu0 %v5961
      %v6148 = vpop.f32.mrb[0].mxu0
      %v6149 = vadd.f32 0.0, %v6148
      %v6150 = vpop.f32.mrb[0].mxu0
      %6151 = vmatprep.mubr.f32.mxu0 0.0
      %6152 = vmatmul.mubr.f32.gmra.mrb[0].mxu0 %v5964
      %v6153 = vpop.f32.mrb[0].mxu0
      %v6154 = vadd.f32 0.0, %v6153
      %v6155 = vpop.f32.mrb[0].mxu0
      %6156 = vmatprep.mubr.f32.mxu0 0.0
      %6157 = vmatmul.mubr.f32.gmra.mrb[0].mxu0 %v5967
      %v6158 = vpop.f32.mrb[0].mxu0
      %v6159 = vadd.f32 0.0, %v6158
      %v6160 = vpop.f32.mrb[0].mxu0
      %6161 = vmatprep.mubr.f32.mxu0 0.0
      %6162 = vmatmul.mubr.f32.gmra.mrb[0].mxu0 %v5970
      %v6163 = vpop.f32.mrb[0].mxu0
      %v6164 = vadd.f32 0.0, %v6163
      %v6165 = vpop.f32.mrb[0].mxu0
      %6166 = vmatprep.mubr.f32.mxu0 0.0
      %6167 = vmatmul.mubr.f32.gmra.mrb[0].mxu0 %v5973
      %v6168 = vpop.f32.mrb[0].mxu0
      %v6169 = vadd.f32 0.0, %v6168
      %v6170 = vpop.f32.mrb[0].mxu0
      %6171 = vmatprep.mubr.f32.mxu0 0.0
      %6172 = vmatmul.mubr.f32.gmra.mrb[0].mxu0 %v5976
      %v6173 = vpop.f32.mrb[0].mxu0
      %v6174 = vadd.f32 0.0, %v6173
      %v6175 = vpop.f32.mrb[0].mxu0
      %6176 = vmatprep.mubr.f32.mxu0 0.0
      %6177 = vmatmul.mubr.f32.gmra.mrb[0].mxu0 %v5979
      %v6178 = vpop.f32.mrb[0].mxu0
      %v6179 = vadd.f32 0.0, %v6178
      %v6180 = vpop.f32.mrb[0].mxu0
      %6181 = vmatprep.mubr.f32.mxu0 0.0
      %6182 = vmatmul.mubr.f32.gmra.mrb[0].mxu0 %v5982
      %v6183 = vpop.f32.mrb[0].mxu0
      %v6184 = vadd.f32 0.0, %v6183
      %v6185 = vpop.f32.mrb[0].mxu0
      %6186 = vmatprep.mubr.f32.mxu0 0.0
      %6187 = vmatmul.mubr.f32.gmra.mrb[0].mxu0 %v5985
      %v6188 = vpop.f32.mrb[0].mxu0
      %v6189 = vadd.f32 0.0, %v6188
      %v6190 = vpop.f32.mrb[0].mxu0
      %6191 = vmatprep.mubr.f32.mxu0 0.0
      %6192 = vmatmul.mubr.f32.gmra.mrb[0].mxu0 %v5988
      %v6193 = vpop.f32.mrb[0].mxu0
      %v6194 = vadd.f32 0.0, %v6193
      %v6195 = vpop.f32.mrb[0].mxu0
      %6196 = vmatprep.mubr.f32.mxu0 0.0
      %6197 = vmatmul.mubr.f32.gmra.mrb[0].mxu0 %v5991
      %v6198 = vpop.f32.mrb[0].mxu0
      %v6199 = vadd.f32 0.0, %v6198
      %v6200 = vpop.f32.mrb[0].mxu0
      %6201 = vmatprep.mubr.f32.mxu0 0.0
      %6202 = vmatmul.mubr.f32.gmra.mrb[0].mxu0 %v5994
      %v6203 = vpop.f32.mrb[0].mxu0
      %v6204 = vadd.f32 0.0, %v6203
      %v6205 = vpop.f32.mrb[0].mxu0
      %6206 = vmatprep.mubr.f32.mxu0 0.0
      %6207 = vmatmul.mubr.f32.gmra.mrb[0].mxu0 %v5997
      %v6208 = vpop.f32.mrb[0].mxu0
      %v6209 = vadd.f32 0.0, %v6208
      %v6210 = vpop.f32.mrb[0].mxu0
      %6211 = vmatprep.mubr.f32.mxu0 0.0
      %6212 = vmatmul.mubr.f32.gmra.mrb[0].mxu0 %v6000
      %v6213 = vpop.f32.mrb[0].mxu0
      %v6214 = vadd.f32 0.0, %v6213
      %v6215 = vpop.f32.mrb[0].mxu0
      %6216 = vmatprep.mubr.f32.mxu0 0.0
      %6217 = vmatmul.mubr.f32.gmra.mrb[0].mxu0 %v6003
      %v6218 = vpop.f32.mrb[0].mxu0
      %v6219 = vadd.f32 0.0, %v6218
      %v6220 = vpop.f32.mrb[0].mxu0
      %6221 = vmatprep.mubr.f32.mxu0 0.0
      %6222 = vmatmul.mubr.f32.gmra.mrb[0].mxu0 %v6006
      %v6223 = vpop.f32.mrb[0].mxu0
      %v6224 = vadd.f32 0.0, %v6223
      %v6225 = vpop.f32.mrb[0].mxu0
      %6226 = vmatprep.mubr.f32.mxu0 0.0
      %6227 = vmatmul.mubr.f32.gmra.mrb[0].mxu0 %v6009
      %v6228 = vpop.f32.mrb[0].mxu0
      %v6229 = vadd.f32 0.0, %v6228
      %v6230 = vpop.f32.mrb[0].mxu0
      %6231 = vmatprep.mubr.f32.mxu0 0.0
      %6232 = vmatmul.mubr.f32.gmra.mrb[0].mxu0 %v6012
      %v6233 = vpop.f32.mrb[0].mxu0
      %v6234 = vadd.f32 0.0, %v6233
      %v6235 = vpop.f32.mrb[0].mxu0
      %6236 = vmatprep.mubr.f32.mxu0 0.0
      %6237 = vmatmul.mubr.f32.gmra.mrb[0].mxu0 %v6015
      %v6238 = vpop.f32.mrb[0].mxu0
      %v6239 = vadd.f32 0.0, %v6238
      %v6240 = vpop.f32.mrb[0].mxu0
      %6241 = vdwg.mxu0
      %v6242 = vadd.f32 %v5855, %v6084
      %v6243 = vadd.f32 %v5856, %v6089
      %v6244 = vadd.f32 %v5857, %v6094
      %v6245 = vadd.f32 %v5858, %v6099
      %v6246 = vadd.f32 %v5859, %v6104
      %v6247 = vadd.f32 %v5860, %v6109
      %v6248 = vadd.f32 %v5861, %v6114
      %v6249 = vadd.f32 %v5862, %v6119
      %v6250 = vadd.f32 %v5863, %v6124
      %v6251 = vadd.f32 %v5864, %v6129
      %v6252 = vadd.f32 %v5865, %v6134
      %v6253 = vadd.f32 %v5866, %v6139
      %v6254 = vadd.f32 %v5867, %v6144
      %v6255 = vadd.f32 %v5868, %v6149
      %v6256 = vadd.f32 %v5869, %v6154
      %v6257 = vadd.f32 %v5870, %v6159
      %v6258 = vadd.f32 %v5871, %v6164
      %v6259 = vadd.f32 %v5872, %v6169
      %v6260 = vadd.f32 %v5873, %v6174
      %v6261 = vadd.f32 %v5874, %v6179
      %v6262 = vadd.f32 %v5875, %v6184
      %v6263 = vadd.f32 %v5876, %v6189
      %v6264 = vadd.f32 %v5877, %v6194
      %v6265 = vadd.f32 %v5878, %v6199
      %v6266 = vadd.f32 %v5879, %v6204
      %v6267 = vadd.f32 %v5880, %v6209
      %v6268 = vadd.f32 %v5881, %v6214
      %v6269 = vadd.f32 %v5882, %v6219
      %v6270 = vadd.f32 %v5883, %v6224
      %v6271 = vadd.f32 %v5884, %v6229
      %v6272 = vadd.f32 %v5885, %v6234
      %v6273 = vadd.f32 %v5886, %v6239
      %s6274 = scalar_lea.vmem [#allocation3], 48
      %v6275 = vld [vmem:[%s6274] sm:$0xff]
      %v6276 = vld [vmem:[%s6274 + $0x8] sm:$0xff]
      %v6277 = vld [vmem:[%s6274 + $0x18] sm:$0xff]
      %v6278 = vld [vmem:[%s6274 + $0x20] sm:$0xff]
      %v6279 = vld [vmem:[%s6274 + $0x30] sm:$0xff]
      %v6280 = vld [vmem:[%s6274 + $0x38] sm:$0xff]
      %v6281 = vld [vmem:[%s6274 + $0x48] sm:$0xff]
      %v6282 = vld [vmem:[%s6274 + $0x50] sm:$0xff]
      %v6283 = vld [vmem:[%s6274 + $0x60] sm:$0xff]
      %v6284 = vld [vmem:[%s6274 + $0x68] sm:$0xff]
      %v6285 = vld [vmem:[%s6274 + $0x78] sm:$0xff]
      %v6286 = vld [vmem:[%s6274 + $0x80] sm:$0xff]
      %v6287 = vld [vmem:[%s6274 + $0x90] sm:$0xff]
      %v6288 = vld [vmem:[%s6274 + $0x98] sm:$0xff]
      %v6289 = vld [vmem:[%s6274 + $0xa8] sm:$0xff]
      %v6290 = vld [vmem:[%s6274 + $0xb0] sm:$0xff]
      %v6291 = vld [vmem:[%s6274 + $0xc0] sm:$0xff]
      %v6292 = vld [vmem:[%s6274 + $0xc8] sm:$0xff]
      %v6293 = vld [vmem:[%s6274 + $0xd8] sm:$0xff]
      %v6294 = vld [vmem:[%s6274 + $0xe0] sm:$0xff]
      %v6295 = vld [vmem:[%s6274 + $0xf0] sm:$0xff]
      %v6296 = vld [vmem:[%s6274 + $0xf8] sm:$0xff]
      %v6297 = vld [vmem:[%s6274 + $0x108] sm:$0xff]
      %v6298 = vld [vmem:[%s6274 + $0x110] sm:$0xff]
      %v6299 = vld [vmem:[%s6274 + $0x120] sm:$0xff]
      %v6300 = vld [vmem:[%s6274 + $0x128] sm:$0xff]
      %v6301 = vld [vmem:[%s6274 + $0x138] sm:$0xff]
      %v6302 = vld [vmem:[%s6274 + $0x140] sm:$0xff]
      %v6303 = vld [vmem:[%s6274 + $0x150] sm:$0xff]
      %v6304 = vld [vmem:[%s6274 + $0x158] sm:$0xff]
      %v6305 = vld [vmem:[%s6274 + $0x168] sm:$0xff]
      %v6306 = vld [vmem:[%s6274 + $0x170] sm:$0xff]
      %s6307 = scalar_lea.vmem %s3, 48
      %v6308 = vld [vmem:[%s6307] sm:$0xff]
      %v6310 = vsel %vm3928, %v6275, 0
      %v6313 = vsel %vm3928, %v6276, 0
      %v6316 = vsel %vm3928, %v6277, 0
      %v6319 = vsel %vm3928, %v6278, 0
      %v6322 = vsel %vm3928, %v6279, 0
      %v6325 = vsel %vm3928, %v6280, 0
      %v6328 = vsel %vm3928, %v6281, 0
      %v6331 = vsel %vm3928, %v6282, 0
      %v6334 = vsel %vm3928, %v6283, 0
      %v6337 = vsel %vm3928, %v6284, 0
      %v6340 = vsel %vm3928, %v6285, 0
      %v6343 = vsel %vm3928, %v6286, 0
      %v6346 = vsel %vm3928, %v6287, 0
      %v6349 = vsel %vm3928, %v6288, 0
      %v6352 = vsel %vm3928, %v6289, 0
      %v6355 = vsel %vm3928, %v6290, 0
      %v6358 = vsel %vm3928, %v6291, 0
      %v6361 = vsel %vm3928, %v6292, 0
      %v6364 = vsel %vm3928, %v6293, 0
      %v6367 = vsel %vm3928, %v6294, 0
      %v6370 = vsel %vm3928, %v6295, 0
      %v6373 = vsel %vm3928, %v6296, 0
      %v6376 = vsel %vm3928, %v6297, 0
      %v6379 = vsel %vm3928, %v6298, 0
      %v6382 = vsel %vm3928, %v6299, 0
      %v6385 = vsel %vm3928, %v6300, 0
      %v6388 = vsel %vm3928, %v6301, 0
      %v6391 = vsel %vm3928, %v6302, 0
      %v6394 = vsel %vm3928, %v6303, 0
      %v6397 = vsel %vm3928, %v6304, 0
      %v6400 = vsel %vm3928, %v6305, 0
      %v6403 = vsel %vm3928, %v6306, 0
      %6405 = vmatprep.subr.mxu0 0.0
      %6406 = vmatpush1.msra.mxu0 %v6308
      %6407 = vmatprep.subr.mxu0 0.0
      %6408 = vmatpush1.msra.mxu0 0.0
      %6409 = vmatprep.subr.mxu0 0.0
      %6410 = vmatpush1.msra.mxu0 0.0
      %6411 = vmatprep.subr.mxu0 0.0
      %6412 = vmatpush1.msra.mxu0 0.0
      %6413 = vmatprep.subr.mxu0 0.0
      %6414 = vmatpush1.msra.mxu0 0.0
      %6415 = vmatprep.subr.mxu0 0.0
      %6416 = vmatpush1.msra.mxu0 0.0
      %6417 = vmatprep.subr.mxu0 0.0
      %6418 = vmatpush1.msra.mxu0 0.0
      %6419 = vmatprep.subr.mxu0 0.0
      %6420 = vmatpush1.msra.mxu0 0.0
      %6421 = vmatprep.subr.mxu0 0.0
      %6422 = vmatpush1.msra.mxu0 0.0
      %6423 = vmatprep.subr.mxu0 0.0
      %6424 = vmatpush1.msra.mxu0 0.0
      %6425 = vmatprep.subr.mxu0 0.0
      %6426 = vmatpush1.msra.mxu0 0.0
      %6427 = vmatprep.subr.mxu0 0.0
      %6428 = vmatpush1.msra.mxu0 0.0
      %6429 = vmatprep.subr.mxu0 0.0
      %6430 = vmatpush1.msra.mxu0 0.0
      %6431 = vmatprep.subr.mxu0 0.0
      %6432 = vmatpush1.msra.mxu0 0.0
      %6433 = vmatprep.subr.mxu0 0.0
      %6434 = vmatpush1.msra.mxu0 0.0
      %6435 = vmatprep.subr.mxu0 0.0
      %6436 = vmatpush1.msra.mxu0 0.0
      %6437 = vmatprep.subr.mxu0 0.0
      %6438 = vmatpush1.msra.mxu0 0.0
      %6439 = vmatprep.subr.mxu0 0.0
      %6440 = vmatpush1.msra.mxu0 0.0
      %6441 = vmatprep.subr.mxu0 0.0
      %6442 = vmatpush1.msra.mxu0 0.0
      %6443 = vmatprep.subr.mxu0 0.0
      %6444 = vmatpush1.msra.mxu0 0.0
      %6445 = vmatprep.subr.mxu0 0.0
      %6446 = vmatpush1.msra.mxu0 0.0
      %6447 = vmatprep.subr.mxu0 0.0
      %6448 = vmatpush1.msra.mxu0 0.0
      %6449 = vmatprep.subr.mxu0 0.0
      %6450 = vmatpush1.msra.mxu0 0.0
      %6451 = vmatprep.subr.mxu0 0.0
      %6452 = vmatpush1.msra.mxu0 0.0
      %6453 = vmatprep.subr.mxu0 0.0
      %6454 = vmatpush1.msra.mxu0 0.0
      %6455 = vmatprep.subr.mxu0 0.0
      %6456 = vmatpush1.msra.mxu0 0.0
      %6457 = vmatprep.subr.mxu0 0.0
      %6458 = vmatpush1.msra.mxu0 0.0
      %6459 = vmatprep.subr.mxu0 0.0
      %6460 = vmatpush1.msra.mxu0 0.0
      %6461 = vmatprep.subr.mxu0 0.0
      %6462 = vmatpush1.msra.mxu0 0.0
      %6463 = vmatprep.subr.mxu0 0.0
      %6464 = vmatpush1.msra.mxu0 0.0
      %6465 = vmatprep.subr.mxu0 0.0
      %6466 = vmatpush1.msra.mxu0 0.0
      %6467 = vmatprep.subr.mxu0 0.0
      %6468 = vmatpush1.msra.mxu0 0.0
      %6469 = vmatprep.mubr.f32.mxu0 0.0
      %6470 = vmatmul.mubr.f32.gmra.mrb[0].mxu0 %v6310
      %v6471 = vpop.f32.mrb[0].mxu0
      %v6472 = vadd.f32 0.0, %v6471
      %v6473 = vpop.f32.mrb[0].mxu0
      %6474 = vmatprep.mubr.f32.mxu0 0.0
      %6475 = vmatmul.mubr.f32.gmra.mrb[0].mxu0 %v6313
      %v6476 = vpop.f32.mrb[0].mxu0
      %v6477 = vadd.f32 0.0, %v6476
      %v6478 = vpop.f32.mrb[0].mxu0
      %6479 = vmatprep.mubr.f32.mxu0 0.0
      %6480 = vmatmul.mubr.f32.gmra.mrb[0].mxu0 %v6316
      %v6481 = vpop.f32.mrb[0].mxu0
      %v6482 = vadd.f32 0.0, %v6481
      %v6483 = vpop.f32.mrb[0].mxu0
      %6484 = vmatprep.mubr.f32.mxu0 0.0
      %6485 = vmatmul.mubr.f32.gmra.mrb[0].mxu0 %v6319
      %v6486 = vpop.f32.mrb[0].mxu0
      %v6487 = vadd.f32 0.0, %v6486
      %v6488 = vpop.f32.mrb[0].mxu0
      %6489 = vmatprep.mubr.f32.mxu0 0.0
      %6490 = vmatmul.mubr.f32.gmra.mrb[0].mxu0 %v6322
      %v6491 = vpop.f32.mrb[0].mxu0
      %v6492 = vadd.f32 0.0, %v6491
      %v6493 = vpop.f32.mrb[0].mxu0
      %6494 = vmatprep.mubr.f32.mxu0 0.0
      %6495 = vmatmul.mubr.f32.gmra.mrb[0].mxu0 %v6325
      %v6496 = vpop.f32.mrb[0].mxu0
      %v6497 = vadd.f32 0.0, %v6496
      %v6498 = vpop.f32.mrb[0].mxu0
      %6499 = vmatprep.mubr.f32.mxu0 0.0
      %6500 = vmatmul.mubr.f32.gmra.mrb[0].mxu0 %v6328
      %v6501 = vpop.f32.mrb[0].mxu0
      %v6502 = vadd.f32 0.0, %v6501
      %v6503 = vpop.f32.mrb[0].mxu0
      %6504 = vmatprep.mubr.f32.mxu0 0.0
      %6505 = vmatmul.mubr.f32.gmra.mrb[0].mxu0 %v6331
      %v6506 = vpop.f32.mrb[0].mxu0
      %v6507 = vadd.f32 0.0, %v6506
      %v6508 = vpop.f32.mrb[0].mxu0
      %6509 = vmatprep.mubr.f32.mxu0 0.0
      %6510 = vmatmul.mubr.f32.gmra.mrb[0].mxu0 %v6334
      %v6511 = vpop.f32.mrb[0].mxu0
      %v6512 = vadd.f32 0.0, %v6511
      %v6513 = vpop.f32.mrb[0].mxu0
      %6514 = vmatprep.mubr.f32.mxu0 0.0
      %6515 = vmatmul.mubr.f32.gmra.mrb[0].mxu0 %v6337
      %v6516 = vpop.f32.mrb[0].mxu0
      %v6517 = vadd.f32 0.0, %v6516
      %v6518 = vpop.f32.mrb[0].mxu0
      %6519 = vmatprep.mubr.f32.mxu0 0.0
      %6520 = vmatmul.mubr.f32.gmra.mrb[0].mxu0 %v6340
      %v6521 = vpop.f32.mrb[0].mxu0
      %v6522 = vadd.f32 0.0, %v6521
      %v6523 = vpop.f32.mrb[0].mxu0
      %6524 = vmatprep.mubr.f32.mxu0 0.0
      %6525 = vmatmul.mubr.f32.gmra.mrb[0].mxu0 %v6343
      %v6526 = vpop.f32.mrb[0].mxu0
      %v6527 = vadd.f32 0.0, %v6526
      %v6528 = vpop.f32.mrb[0].mxu0
      %6529 = vmatprep.mubr.f32.mxu0 0.0
      %6530 = vmatmul.mubr.f32.gmra.mrb[0].mxu0 %v6346
      %v6531 = vpop.f32.mrb[0].mxu0
      %v6532 = vadd.f32 0.0, %v6531
      %v6533 = vpop.f32.mrb[0].mxu0
      %6534 = vmatprep.mubr.f32.mxu0 0.0
      %6535 = vmatmul.mubr.f32.gmra.mrb[0].mxu0 %v6349
      %v6536 = vpop.f32.mrb[0].mxu0
      %v6537 = vadd.f32 0.0, %v6536
      %v6538 = vpop.f32.mrb[0].mxu0
      %6539 = vmatprep.mubr.f32.mxu0 0.0
      %6540 = vmatmul.mubr.f32.gmra.mrb[0].mxu0 %v6352
      %v6541 = vpop.f32.mrb[0].mxu0
      %v6542 = vadd.f32 0.0, %v6541
      %v6543 = vpop.f32.mrb[0].mxu0
      %6544 = vmatprep.mubr.f32.mxu0 0.0
      %6545 = vmatmul.mubr.f32.gmra.mrb[0].mxu0 %v6355
      %v6546 = vpop.f32.mrb[0].mxu0
      %v6547 = vadd.f32 0.0, %v6546
      %v6548 = vpop.f32.mrb[0].mxu0
      %6549 = vmatprep.mubr.f32.mxu0 0.0
      %6550 = vmatmul.mubr.f32.gmra.mrb[0].mxu0 %v6358
      %v6551 = vpop.f32.mrb[0].mxu0
      %v6552 = vadd.f32 0.0, %v6551
      %v6553 = vpop.f32.mrb[0].mxu0
      %6554 = vmatprep.mubr.f32.mxu0 0.0
      %6555 = vmatmul.mubr.f32.gmra.mrb[0].mxu0 %v6361
      %v6556 = vpop.f32.mrb[0].mxu0
      %v6557 = vadd.f32 0.0, %v6556
      %v6558 = vpop.f32.mrb[0].mxu0
      %6559 = vmatprep.mubr.f32.mxu0 0.0
      %6560 = vmatmul.mubr.f32.gmra.mrb[0].mxu0 %v6364
      %v6561 = vpop.f32.mrb[0].mxu0
      %v6562 = vadd.f32 0.0, %v6561
      %v6563 = vpop.f32.mrb[0].mxu0
      %6564 = vmatprep.mubr.f32.mxu0 0.0
      %6565 = vmatmul.mubr.f32.gmra.mrb[0].mxu0 %v6367
      %v6566 = vpop.f32.mrb[0].mxu0
      %v6567 = vadd.f32 0.0, %v6566
      %v6568 = vpop.f32.mrb[0].mxu0
      %6569 = vmatprep.mubr.f32.mxu0 0.0
      %6570 = vmatmul.mubr.f32.gmra.mrb[0].mxu0 %v6370
      %v6571 = vpop.f32.mrb[0].mxu0
      %v6572 = vadd.f32 0.0, %v6571
      %v6573 = vpop.f32.mrb[0].mxu0
      %6574 = vmatprep.mubr.f32.mxu0 0.0
      %6575 = vmatmul.mubr.f32.gmra.mrb[0].mxu0 %v6373
      %v6576 = vpop.f32.mrb[0].mxu0
      %v6577 = vadd.f32 0.0, %v6576
      %v6578 = vpop.f32.mrb[0].mxu0
      %6579 = vmatprep.mubr.f32.mxu0 0.0
      %6580 = vmatmul.mubr.f32.gmra.mrb[0].mxu0 %v6376
      %v6581 = vpop.f32.mrb[0].mxu0
      %v6582 = vadd.f32 0.0, %v6581
      %v6583 = vpop.f32.mrb[0].mxu0
      %6584 = vmatprep.mubr.f32.mxu0 0.0
      %6585 = vmatmul.mubr.f32.gmra.mrb[0].mxu0 %v6379
      %v6586 = vpop.f32.mrb[0].mxu0
      %v6587 = vadd.f32 0.0, %v6586
      %v6588 = vpop.f32.mrb[0].mxu0
      %6589 = vmatprep.mubr.f32.mxu0 0.0
      %6590 = vmatmul.mubr.f32.gmra.mrb[0].mxu0 %v6382
      %v6591 = vpop.f32.mrb[0].mxu0
      %v6592 = vadd.f32 0.0, %v6591
      %v6593 = vpop.f32.mrb[0].mxu0
      %6594 = vmatprep.mubr.f32.mxu0 0.0
      %6595 = vmatmul.mubr.f32.gmra.mrb[0].mxu0 %v6385
      %v6596 = vpop.f32.mrb[0].mxu0
      %v6597 = vadd.f32 0.0, %v6596
      %v6598 = vpop.f32.mrb[0].mxu0
      %6599 = vmatprep.mubr.f32.mxu0 0.0
      %6600 = vmatmul.mubr.f32.gmra.mrb[0].mxu0 %v6388
      %v6601 = vpop.f32.mrb[0].mxu0
      %v6602 = vadd.f32 0.0, %v6601
      %v6603 = vpop.f32.mrb[0].mxu0
      %6604 = vmatprep.mubr.f32.mxu0 0.0
      %6605 = vmatmul.mubr.f32.gmra.mrb[0].mxu0 %v6391
      %v6606 = vpop.f32.mrb[0].mxu0
      %v6607 = vadd.f32 0.0, %v6606
      %v6608 = vpop.f32.mrb[0].mxu0
      %6609 = vmatprep.mubr.f32.mxu0 0.0
      %6610 = vmatmul.mubr.f32.gmra.mrb[0].mxu0 %v6394
      %v6611 = vpop.f32.mrb[0].mxu0
      %v6612 = vadd.f32 0.0, %v6611
      %v6613 = vpop.f32.mrb[0].mxu0
      %6614 = vmatprep.mubr.f32.mxu0 0.0
      %6615 = vmatmul.mubr.f32.gmra.mrb[0].mxu0 %v6397
      %v6616 = vpop.f32.mrb[0].mxu0
      %v6617 = vadd.f32 0.0, %v6616
      %v6618 = vpop.f32.mrb[0].mxu0
      %6619 = vmatprep.mubr.f32.mxu0 0.0
      %6620 = vmatmul.mubr.f32.gmra.mrb[0].mxu0 %v6400
      %v6621 = vpop.f32.mrb[0].mxu0
      %v6622 = vadd.f32 0.0, %v6621
      %v6623 = vpop.f32.mrb[0].mxu0
      %6624 = vmatprep.mubr.f32.mxu0 0.0
      %6625 = vmatmul.mubr.f32.gmra.mrb[0].mxu0 %v6403
      %v6626 = vpop.f32.mrb[0].mxu0
      %v6627 = vadd.f32 0.0, %v6626
      %v6628 = vpop.f32.mrb[0].mxu0
      %6629 = vdwg.mxu0
      %v6630 = vadd.f32 %v6242, %v6472
      %v6631 = vadd.f32 %v6243, %v6477
      %v6632 = vadd.f32 %v6244, %v6482
      %v6633 = vadd.f32 %v6245, %v6487
      %v6634 = vadd.f32 %v6246, %v6492
      %v6635 = vadd.f32 %v6247, %v6497
      %v6636 = vadd.f32 %v6248, %v6502
      %v6637 = vadd.f32 %v6249, %v6507
      %v6638 = vadd.f32 %v6250, %v6512
      %v6639 = vadd.f32 %v6251, %v6517
      %v6640 = vadd.f32 %v6252, %v6522
      %v6641 = vadd.f32 %v6253, %v6527
      %v6642 = vadd.f32 %v6254, %v6532
      %v6643 = vadd.f32 %v6255, %v6537
      %v6644 = vadd.f32 %v6256, %v6542
      %v6645 = vadd.f32 %v6257, %v6547
      %v6646 = vadd.f32 %v6258, %v6552
      %v6647 = vadd.f32 %v6259, %v6557
      %v6648 = vadd.f32 %v6260, %v6562
      %v6649 = vadd.f32 %v6261, %v6567
      %v6650 = vadd.f32 %v6262, %v6572
      %v6651 = vadd.f32 %v6263, %v6577
      %v6652 = vadd.f32 %v6264, %v6582
      %v6653 = vadd.f32 %v6265, %v6587
      %v6654 = vadd.f32 %v6266, %v6592
      %v6655 = vadd.f32 %v6267, %v6597
      %v6656 = vadd.f32 %v6268, %v6602
      %v6657 = vadd.f32 %v6269, %v6607
      %v6658 = vadd.f32 %v6270, %v6612
      %v6659 = vadd.f32 %v6271, %v6617
      %v6660 = vadd.f32 %v6272, %v6622
      %v6661 = vadd.f32 %v6273, %v6627
      %v6662 = vld [vmem:[%s6274 + $0x1] sm:$0xff]
      %v6663 = vld [vmem:[%s6274 + $0x9] sm:$0xff]
      %v6664 = vld [vmem:[%s6274 + $0x19] sm:$0xff]
      %v6665 = vld [vmem:[%s6274 + $0x21] sm:$0xff]
      %v6666 = vld [vmem:[%s6274 + $0x31] sm:$0xff]
      %v6667 = vld [vmem:[%s6274 + $0x39] sm:$0xff]
      %v6668 = vld [vmem:[%s6274 + $0x49] sm:$0xff]
      %v6669 = vld [vmem:[%s6274 + $0x51] sm:$0xff]
      %v6670 = vld [vmem:[%s6274 + $0x61] sm:$0xff]
      %v6671 = vld [vmem:[%s6274 + $0x69] sm:$0xff]
      %v6672 = vld [vmem:[%s6274 + $0x79] sm:$0xff]
      %v6673 = vld [vmem:[%s6274 + $0x81] sm:$0xff]
      %v6674 = vld [vmem:[%s6274 + $0x91] sm:$0xff]
      %v6675 = vld [vmem:[%s6274 + $0x99] sm:$0xff]
      %v6676 = vld [vmem:[%s6274 + $0xa9] sm:$0xff]
      %v6677 = vld [vmem:[%s6274 + $0xb1] sm:$0xff]
      %v6678 = vld [vmem:[%s6274 + $0xc1] sm:$0xff]
      %v6679 = vld [vmem:[%s6274 + $0xc9] sm:$0xff]
      %v6680 = vld [vmem:[%s6274 + $0xd9] sm:$0xff]
      %v6681 = vld [vmem:[%s6274 + $0xe1] sm:$0xff]
      %v6682 = vld [vmem:[%s6274 + $0xf1] sm:$0xff]
      %v6683 = vld [vmem:[%s6274 + $0xf9] sm:$0xff]
      %v6684 = vld [vmem:[%s6274 + $0x109] sm:$0xff]
      %v6685 = vld [vmem:[%s6274 + $0x111] sm:$0xff]
      %v6686 = vld [vmem:[%s6274 + $0x121] sm:$0xff]
      %v6687 = vld [vmem:[%s6274 + $0x129] sm:$0xff]
      %v6688 = vld [vmem:[%s6274 + $0x139] sm:$0xff]
      %v6689 = vld [vmem:[%s6274 + $0x141] sm:$0xff]
      %v6690 = vld [vmem:[%s6274 + $0x151] sm:$0xff]
      %v6691 = vld [vmem:[%s6274 + $0x159] sm:$0xff]
      %v6692 = vld [vmem:[%s6274 + $0x169] sm:$0xff]
      %v6693 = vld [vmem:[%s6274 + $0x171] sm:$0xff]
      %s6694 = scalar_lea.vmem %s3, 56
      %v6695 = vld [vmem:[%s6694] sm:$0xff]
      %v6697 = vsel %vm3928, %v6662, 0
      %v6700 = vsel %vm3928, %v6663, 0
      %v6703 = vsel %vm3928, %v6664, 0
      %v6706 = vsel %vm3928, %v6665, 0
      %v6709 = vsel %vm3928, %v6666, 0
      %v6712 = vsel %vm3928, %v6667, 0
      %v6715 = vsel %vm3928, %v6668, 0
      %v6718 = vsel %vm3928, %v6669, 0
      %v6721 = vsel %vm3928, %v6670, 0
      %v6724 = vsel %vm3928, %v6671, 0
      %v6727 = vsel %vm3928, %v6672, 0
      %v6730 = vsel %vm3928, %v6673, 0
      %v6733 = vsel %vm3928, %v6674, 0
      %v6736 = vsel %vm3928, %v6675, 0
      %v6739 = vsel %vm3928, %v6676, 0
      %v6742 = vsel %vm3928, %v6677, 0
      %v6745 = vsel %vm3928, %v6678, 0
      %v6748 = vsel %vm3928, %v6679, 0
      %v6751 = vsel %vm3928, %v6680, 0
      %v6754 = vsel %vm3928, %v6681, 0
      %v6757 = vsel %vm3928, %v6682, 0
      %v6760 = vsel %vm3928, %v6683, 0
      %v6763 = vsel %vm3928, %v6684, 0
      %v6766 = vsel %vm3928, %v6685, 0
      %v6769 = vsel %vm3928, %v6686, 0
      %v6772 = vsel %vm3928, %v6687, 0
      %v6775 = vsel %vm3928, %v6688, 0
      %v6778 = vsel %vm3928, %v6689, 0
      %v6781 = vsel %vm3928, %v6690, 0
      %v6784 = vsel %vm3928, %v6691, 0
      %v6787 = vsel %vm3928, %v6692, 0
      %v6790 = vsel %vm3928, %v6693, 0
      %6792 = vmatprep.subr.mxu0 0.0
      %6793 = vmatpush1.msra.mxu0 %v6695
      %6794 = vmatprep.subr.mxu0 0.0
      %6795 = vmatpush1.msra.mxu0 0.0
      %6796 = vmatprep.subr.mxu0 0.0
      %6797 = vmatpush1.msra.mxu0 0.0
      %6798 = vmatprep.subr.mxu0 0.0
      %6799 = vmatpush1.msra.mxu0 0.0
      %6800 = vmatprep.subr.mxu0 0.0
      %6801 = vmatpush1.msra.mxu0 0.0
      %6802 = vmatprep.subr.mxu0 0.0
      %6803 = vmatpush1.msra.mxu0 0.0
      %6804 = vmatprep.subr.mxu0 0.0
      %6805 = vmatpush1.msra.mxu0 0.0
      %6806 = vmatprep.subr.mxu0 0.0
      %6807 = vmatpush1.msra.mxu0 0.0
      %6808 = vmatprep.subr.mxu0 0.0
      %6809 = vmatpush1.msra.mxu0 0.0
      %6810 = vmatprep.subr.mxu0 0.0
      %6811 = vmatpush1.msra.mxu0 0.0
      %6812 = vmatprep.subr.mxu0 0.0
      %6813 = vmatpush1.msra.mxu0 0.0
      %6814 = vmatprep.subr.mxu0 0.0
      %6815 = vmatpush1.msra.mxu0 0.0
      %6816 = vmatprep.subr.mxu0 0.0
      %6817 = vmatpush1.msra.mxu0 0.0
      %6818 = vmatprep.subr.mxu0 0.0
      %6819 = vmatpush1.msra.mxu0 0.0
      %6820 = vmatprep.subr.mxu0 0.0
      %6821 = vmatpush1.msra.mxu0 0.0
      %6822 = vmatprep.subr.mxu0 0.0
      %6823 = vmatpush1.msra.mxu0 0.0
      %6824 = vmatprep.subr.mxu0 0.0
      %6825 = vmatpush1.msra.mxu0 0.0
      %6826 = vmatprep.subr.mxu0 0.0
      %6827 = vmatpush1.msra.mxu0 0.0
      %6828 = vmatprep.subr.mxu0 0.0
      %6829 = vmatpush1.msra.mxu0 0.0
      %6830 = vmatprep.subr.mxu0 0.0
      %6831 = vmatpush1.msra.mxu0 0.0
      %6832 = vmatprep.subr.mxu0 0.0
      %6833 = vmatpush1.msra.mxu0 0.0
      %6834 = vmatprep.subr.mxu0 0.0
      %6835 = vmatpush1.msra.mxu0 0.0
      %6836 = vmatprep.subr.mxu0 0.0
      %6837 = vmatpush1.msra.mxu0 0.0
      %6838 = vmatprep.subr.mxu0 0.0
      %6839 = vmatpush1.msra.mxu0 0.0
      %6840 = vmatprep.subr.mxu0 0.0
      %6841 = vmatpush1.msra.mxu0 0.0
      %6842 = vmatprep.subr.mxu0 0.0
      %6843 = vmatpush1.msra.mxu0 0.0
      %6844 = vmatprep.subr.mxu0 0.0
      %6845 = vmatpush1.msra.mxu0 0.0
      %6846 = vmatprep.subr.mxu0 0.0
      %6847 = vmatpush1.msra.mxu0 0.0
      %6848 = vmatprep.subr.mxu0 0.0
      %6849 = vmatpush1.msra.mxu0 0.0
      %6850 = vmatprep.subr.mxu0 0.0
      %6851 = vmatpush1.msra.mxu0 0.0
      %6852 = vmatprep.subr.mxu0 0.0
      %6853 = vmatpush1.msra.mxu0 0.0
      %6854 = vmatprep.subr.mxu0 0.0
      %6855 = vmatpush1.msra.mxu0 0.0
      %6856 = vmatprep.mubr.f32.mxu0 0.0
      %6857 = vmatmul.mubr.f32.gmra.mrb[0].mxu0 %v6697
      %v6858 = vpop.f32.mrb[0].mxu0
      %v6859 = vadd.f32 0.0, %v6858
      %v6860 = vpop.f32.mrb[0].mxu0
      %6861 = vmatprep.mubr.f32.mxu0 0.0
      %6862 = vmatmul.mubr.f32.gmra.mrb[0].mxu0 %v6700
      %v6863 = vpop.f32.mrb[0].mxu0
      %v6864 = vadd.f32 0.0, %v6863
      %v6865 = vpop.f32.mrb[0].mxu0
      %6866 = vmatprep.mubr.f32.mxu0 0.0
      %6867 = vmatmul.mubr.f32.gmra.mrb[0].mxu0 %v6703
      %v6868 = vpop.f32.mrb[0].mxu0
      %v6869 = vadd.f32 0.0, %v6868
      %v6870 = vpop.f32.mrb[0].mxu0
      %6871 = vmatprep.mubr.f32.mxu0 0.0
      %6872 = vmatmul.mubr.f32.gmra.mrb[0].mxu0 %v6706
      %v6873 = vpop.f32.mrb[0].mxu0
      %v6874 = vadd.f32 0.0, %v6873
      %v6875 = vpop.f32.mrb[0].mxu0
      %6876 = vmatprep.mubr.f32.mxu0 0.0
      %6877 = vmatmul.mubr.f32.gmra.mrb[0].mxu0 %v6709
      %v6878 = vpop.f32.mrb[0].mxu0
      %v6879 = vadd.f32 0.0, %v6878
      %v6880 = vpop.f32.mrb[0].mxu0
      %6881 = vmatprep.mubr.f32.mxu0 0.0
      %6882 = vmatmul.mubr.f32.gmra.mrb[0].mxu0 %v6712
      %v6883 = vpop.f32.mrb[0].mxu0
      %v6884 = vadd.f32 0.0, %v6883
      %v6885 = vpop.f32.mrb[0].mxu0
      %6886 = vmatprep.mubr.f32.mxu0 0.0
      %6887 = vmatmul.mubr.f32.gmra.mrb[0].mxu0 %v6715
      %v6888 = vpop.f32.mrb[0].mxu0
      %v6889 = vadd.f32 0.0, %v6888
      %v6890 = vpop.f32.mrb[0].mxu0
      %6891 = vmatprep.mubr.f32.mxu0 0.0
      %6892 = vmatmul.mubr.f32.gmra.mrb[0].mxu0 %v6718
      %v6893 = vpop.f32.mrb[0].mxu0
      %v6894 = vadd.f32 0.0, %v6893
      %v6895 = vpop.f32.mrb[0].mxu0
      %6896 = vmatprep.mubr.f32.mxu0 0.0
      %6897 = vmatmul.mubr.f32.gmra.mrb[0].mxu0 %v6721
      %v6898 = vpop.f32.mrb[0].mxu0
      %v6899 = vadd.f32 0.0, %v6898
      %v6900 = vpop.f32.mrb[0].mxu0
      %6901 = vmatprep.mubr.f32.mxu0 0.0
      %6902 = vmatmul.mubr.f32.gmra.mrb[0].mxu0 %v6724
      %v6903 = vpop.f32.mrb[0].mxu0
      %v6904 = vadd.f32 0.0, %v6903
      %v6905 = vpop.f32.mrb[0].mxu0
      %6906 = vmatprep.mubr.f32.mxu0 0.0
      %6907 = vmatmul.mubr.f32.gmra.mrb[0].mxu0 %v6727
      %v6908 = vpop.f32.mrb[0].mxu0
      %v6909 = vadd.f32 0.0, %v6908
      %v6910 = vpop.f32.mrb[0].mxu0
      %6911 = vmatprep.mubr.f32.mxu0 0.0
      %6912 = vmatmul.mubr.f32.gmra.mrb[0].mxu0 %v6730
      %v6913 = vpop.f32.mrb[0].mxu0
      %v6914 = vadd.f32 0.0, %v6913
      %v6915 = vpop.f32.mrb[0].mxu0
      %6916 = vmatprep.mubr.f32.mxu0 0.0
      %6917 = vmatmul.mubr.f32.gmra.mrb[0].mxu0 %v6733
      %v6918 = vpop.f32.mrb[0].mxu0
      %v6919 = vadd.f32 0.0, %v6918
      %v6920 = vpop.f32.mrb[0].mxu0
      %6921 = vmatprep.mubr.f32.mxu0 0.0
      %6922 = vmatmul.mubr.f32.gmra.mrb[0].mxu0 %v6736
      %v6923 = vpop.f32.mrb[0].mxu0
      %v6924 = vadd.f32 0.0, %v6923
      %v6925 = vpop.f32.mrb[0].mxu0
      %6926 = vmatprep.mubr.f32.mxu0 0.0
      %6927 = vmatmul.mubr.f32.gmra.mrb[0].mxu0 %v6739
      %v6928 = vpop.f32.mrb[0].mxu0
      %v6929 = vadd.f32 0.0, %v6928
      %v6930 = vpop.f32.mrb[0].mxu0
      %6931 = vmatprep.mubr.f32.mxu0 0.0
      %6932 = vmatmul.mubr.f32.gmra.mrb[0].mxu0 %v6742
      %v6933 = vpop.f32.mrb[0].mxu0
      %v6934 = vadd.f32 0.0, %v6933
      %v6935 = vpop.f32.mrb[0].mxu0
      %6936 = vmatprep.mubr.f32.mxu0 0.0
      %6937 = vmatmul.mubr.f32.gmra.mrb[0].mxu0 %v6745
      %v6938 = vpop.f32.mrb[0].mxu0
      %v6939 = vadd.f32 0.0, %v6938
      %v6940 = vpop.f32.mrb[0].mxu0
      %6941 = vmatprep.mubr.f32.mxu0 0.0
      %6942 = vmatmul.mubr.f32.gmra.mrb[0].mxu0 %v6748
      %v6943 = vpop.f32.mrb[0].mxu0
      %v6944 = vadd.f32 0.0, %v6943
      %v6945 = vpop.f32.mrb[0].mxu0
      %6946 = vmatprep.mubr.f32.mxu0 0.0
      %6947 = vmatmul.mubr.f32.gmra.mrb[0].mxu0 %v6751
      %v6948 = vpop.f32.mrb[0].mxu0
      %v6949 = vadd.f32 0.0, %v6948
      %v6950 = vpop.f32.mrb[0].mxu0
      %6951 = vmatprep.mubr.f32.mxu0 0.0
      %6952 = vmatmul.mubr.f32.gmra.mrb[0].mxu0 %v6754
      %v6953 = vpop.f32.mrb[0].mxu0
      %v6954 = vadd.f32 0.0, %v6953
      %v6955 = vpop.f32.mrb[0].mxu0
      %6956 = vmatprep.mubr.f32.mxu0 0.0
      %6957 = vmatmul.mubr.f32.gmra.mrb[0].mxu0 %v6757
      %v6958 = vpop.f32.mrb[0].mxu0
      %v6959 = vadd.f32 0.0, %v6958
      %v6960 = vpop.f32.mrb[0].mxu0
      %6961 = vmatprep.mubr.f32.mxu0 0.0
      %6962 = vmatmul.mubr.f32.gmra.mrb[0].mxu0 %v6760
      %v6963 = vpop.f32.mrb[0].mxu0
      %v6964 = vadd.f32 0.0, %v6963
      %v6965 = vpop.f32.mrb[0].mxu0
      %6966 = vmatprep.mubr.f32.mxu0 0.0
      %6967 = vmatmul.mubr.f32.gmra.mrb[0].mxu0 %v6763
      %v6968 = vpop.f32.mrb[0].mxu0
      %v6969 = vadd.f32 0.0, %v6968
      %v6970 = vpop.f32.mrb[0].mxu0
      %6971 = vmatprep.mubr.f32.mxu0 0.0
      %6972 = vmatmul.mubr.f32.gmra.mrb[0].mxu0 %v6766
      %v6973 = vpop.f32.mrb[0].mxu0
      %v6974 = vadd.f32 0.0, %v6973
      %v6975 = vpop.f32.mrb[0].mxu0
      %6976 = vmatprep.mubr.f32.mxu0 0.0
      %6977 = vmatmul.mubr.f32.gmra.mrb[0].mxu0 %v6769
      %v6978 = vpop.f32.mrb[0].mxu0
      %v6979 = vadd.f32 0.0, %v6978
      %v6980 = vpop.f32.mrb[0].mxu0
      %6981 = vmatprep.mubr.f32.mxu0 0.0
      %6982 = vmatmul.mubr.f32.gmra.mrb[0].mxu0 %v6772
      %v6983 = vpop.f32.mrb[0].mxu0
      %v6984 = vadd.f32 0.0, %v6983
      %v6985 = vpop.f32.mrb[0].mxu0
      %6986 = vmatprep.mubr.f32.mxu0 0.0
      %6987 = vmatmul.mubr.f32.gmra.mrb[0].mxu0 %v6775
      %v6988 = vpop.f32.mrb[0].mxu0
      %v6989 = vadd.f32 0.0, %v6988
      %v6990 = vpop.f32.mrb[0].mxu0
      %6991 = vmatprep.mubr.f32.mxu0 0.0
      %6992 = vmatmul.mubr.f32.gmra.mrb[0].mxu0 %v6778
      %v6993 = vpop.f32.mrb[0].mxu0
      %v6994 = vadd.f32 0.0, %v6993
      %v6995 = vpop.f32.mrb[0].mxu0
      %6996 = vmatprep.mubr.f32.mxu0 0.0
      %6997 = vmatmul.mubr.f32.gmra.mrb[0].mxu0 %v6781
      %v6998 = vpop.f32.mrb[0].mxu0
      %v6999 = vadd.f32 0.0, %v6998
      %v7000 = vpop.f32.mrb[0].mxu0
      %7001 = vmatprep.mubr.f32.mxu0 0.0
      %7002 = vmatmul.mubr.f32.gmra.mrb[0].mxu0 %v6784
      %v7003 = vpop.f32.mrb[0].mxu0
      %v7004 = vadd.f32 0.0, %v7003
      %v7005 = vpop.f32.mrb[0].mxu0
      %7006 = vmatprep.mubr.f32.mxu0 0.0
      %7007 = vmatmul.mubr.f32.gmra.mrb[0].mxu0 %v6787
      %v7008 = vpop.f32.mrb[0].mxu0
      %v7009 = vadd.f32 0.0, %v7008
      %v7010 = vpop.f32.mrb[0].mxu0
      %7011 = vmatprep.mubr.f32.mxu0 0.0
      %7012 = vmatmul.mubr.f32.gmra.mrb[0].mxu0 %v6790
      %v7013 = vpop.f32.mrb[0].mxu0
      %v7014 = vadd.f32 0.0, %v7013
      %v7015 = vpop.f32.mrb[0].mxu0
      %7016 = vdwg.mxu0
      %v7017 = vadd.f32 %v6630, %v6859
      %v7018 = vadd.f32 %v6631, %v6864
      %v7019 = vadd.f32 %v6632, %v6869
      %v7020 = vadd.f32 %v6633, %v6874
      %v7021 = vadd.f32 %v6634, %v6879
      %v7022 = vadd.f32 %v6635, %v6884
      %v7023 = vadd.f32 %v6636, %v6889
      %v7024 = vadd.f32 %v6637, %v6894
      %v7025 = vadd.f32 %v6638, %v6899
      %v7026 = vadd.f32 %v6639, %v6904
      %v7027 = vadd.f32 %v6640, %v6909
      %v7028 = vadd.f32 %v6641, %v6914
      %v7029 = vadd.f32 %v6642, %v6919
      %v7030 = vadd.f32 %v6643, %v6924
      %v7031 = vadd.f32 %v6644, %v6929
      %v7032 = vadd.f32 %v6645, %v6934
      %v7033 = vadd.f32 %v6646, %v6939
      %v7034 = vadd.f32 %v6647, %v6944
      %v7035 = vadd.f32 %v6648, %v6949
      %v7036 = vadd.f32 %v6649, %v6954
      %v7037 = vadd.f32 %v6650, %v6959
      %v7038 = vadd.f32 %v6651, %v6964
      %v7039 = vadd.f32 %v6652, %v6969
      %v7040 = vadd.f32 %v6653, %v6974
      %v7041 = vadd.f32 %v6654, %v6979
      %v7042 = vadd.f32 %v6655, %v6984
      %v7043 = vadd.f32 %v6656, %v6989
      %v7044 = vadd.f32 %v6657, %v6994
      %v7045 = vadd.f32 %v6658, %v6999
      %v7046 = vadd.f32 %v6659, %v7004
      %v7047 = vadd.f32 %v6660, %v7009
      %v7048 = vadd.f32 %v6661, %v7014
      %v7049 = vld [vmem:[%s6274 + $0x2] sm:$0xff]
      %v7050 = vld [vmem:[%s6274 + $0xa] sm:$0xff]
      %v7051 = vld [vmem:[%s6274 + $0x1a] sm:$0xff]
      %v7052 = vld [vmem:[%s6274 + $0x22] sm:$0xff]
      %v7053 = vld [vmem:[%s6274 + $0x32] sm:$0xff]
      %v7054 = vld [vmem:[%s6274 + $0x3a] sm:$0xff]
      %v7055 = vld [vmem:[%s6274 + $0x4a] sm:$0xff]
      %v7056 = vld [vmem:[%s6274 + $0x52] sm:$0xff]
      %v7057 = vld [vmem:[%s6274 + $0x62] sm:$0xff]
      %v7058 = vld [vmem:[%s6274 + $0x6a] sm:$0xff]
      %v7059 = vld [vmem:[%s6274 + $0x7a] sm:$0xff]
      %v7060 = vld [vmem:[%s6274 + $0x82] sm:$0xff]
      %v7061 = vld [vmem:[%s6274 + $0x92] sm:$0xff]
      %v7062 = vld [vmem:[%s6274 + $0x9a] sm:$0xff]
      %v7063 = vld [vmem:[%s6274 + $0xaa] sm:$0xff]
      %v7064 = vld [vmem:[%s6274 + $0xb2] sm:$0xff]
      %v7065 = vld [vmem:[%s6274 + $0xc2] sm:$0xff]
      %v7066 = vld [vmem:[%s6274 + $0xca] sm:$0xff]
      %v7067 = vld [vmem:[%s6274 + $0xda] sm:$0xff]
      %v7068 = vld [vmem:[%s6274 + $0xe2] sm:$0xff]
      %v7069 = vld [vmem:[%s6274 + $0xf2] sm:$0xff]
      %v7070 = vld [vmem:[%s6274 + $0xfa] sm:$0xff]
      %v7071 = vld [vmem:[%s6274 + $0x10a] sm:$0xff]
      %v7072 = vld [vmem:[%s6274 + $0x112] sm:$0xff]
      %v7073 = vld [vmem:[%s6274 + $0x122] sm:$0xff]
      %v7074 = vld [vmem:[%s6274 + $0x12a] sm:$0xff]
      %v7075 = vld [vmem:[%s6274 + $0x13a] sm:$0xff]
      %v7076 = vld [vmem:[%s6274 + $0x142] sm:$0xff]
      %v7077 = vld [vmem:[%s6274 + $0x152] sm:$0xff]
      %v7078 = vld [vmem:[%s6274 + $0x15a] sm:$0xff]
      %v7079 = vld [vmem:[%s6274 + $0x16a] sm:$0xff]
      %v7080 = vld [vmem:[%s6274 + $0x172] sm:$0xff]
      %s7081 = scalar_lea.vmem %s3, 64
      %v7082 = vld [vmem:[%s7081] sm:$0xff]
      %v7084 = vsel %vm3928, %v7049, 0
      %v7087 = vsel %vm3928, %v7050, 0
      %v7090 = vsel %vm3928, %v7051, 0
      %v7093 = vsel %vm3928, %v7052, 0
      %v7096 = vsel %vm3928, %v7053, 0
      %v7099 = vsel %vm3928, %v7054, 0
      %v7102 = vsel %vm3928, %v7055, 0
      %v7105 = vsel %vm3928, %v7056, 0
      %v7108 = vsel %vm3928, %v7057, 0
      %v7111 = vsel %vm3928, %v7058, 0
      %v7114 = vsel %vm3928, %v7059, 0
      %v7117 = vsel %vm3928, %v7060, 0
      %v7120 = vsel %vm3928, %v7061, 0
      %v7123 = vsel %vm3928, %v7062, 0
      %v7126 = vsel %vm3928, %v7063, 0
      %v7129 = vsel %vm3928, %v7064, 0
      %v7132 = vsel %vm3928, %v7065, 0
      %v7135 = vsel %vm3928, %v7066, 0
      %v7138 = vsel %vm3928, %v7067, 0
      %v7141 = vsel %vm3928, %v7068, 0
      %v7144 = vsel %vm3928, %v7069, 0
      %v7147 = vsel %vm3928, %v7070, 0
      %v7150 = vsel %vm3928, %v7071, 0
      %v7153 = vsel %vm3928, %v7072, 0
      %v7156 = vsel %vm3928, %v7073, 0
      %v7159 = vsel %vm3928, %v7074, 0
      %v7162 = vsel %vm3928, %v7075, 0
      %v7165 = vsel %vm3928, %v7076, 0
      %v7168 = vsel %vm3928, %v7077, 0
      %v7171 = vsel %vm3928, %v7078, 0
      %v7174 = vsel %vm3928, %v7079, 0
      %v7177 = vsel %vm3928, %v7080, 0
      %7179 = vmatprep.subr.mxu0 0.0
      %7180 = vmatpush1.msra.mxu0 %v7082
      %7181 = vmatprep.subr.mxu0 0.0
      %7182 = vmatpush1.msra.mxu0 0.0
      %7183 = vmatprep.subr.mxu0 0.0
      %7184 = vmatpush1.msra.mxu0 0.0
      %7185 = vmatprep.subr.mxu0 0.0
      %7186 = vmatpush1.msra.mxu0 0.0
      %7187 = vmatprep.subr.mxu0 0.0
      %7188 = vmatpush1.msra.mxu0 0.0
      %7189 = vmatprep.subr.mxu0 0.0
      %7190 = vmatpush1.msra.mxu0 0.0
      %7191 = vmatprep.subr.mxu0 0.0
      %7192 = vmatpush1.msra.mxu0 0.0
      %7193 = vmatprep.subr.mxu0 0.0
      %7194 = vmatpush1.msra.mxu0 0.0
      %7195 = vmatprep.subr.mxu0 0.0
      %7196 = vmatpush1.msra.mxu0 0.0
      %7197 = vmatprep.subr.mxu0 0.0
      %7198 = vmatpush1.msra.mxu0 0.0
      %7199 = vmatprep.subr.mxu0 0.0
      %7200 = vmatpush1.msra.mxu0 0.0
      %7201 = vmatprep.subr.mxu0 0.0
      %7202 = vmatpush1.msra.mxu0 0.0
      %7203 = vmatprep.subr.mxu0 0.0
      %7204 = vmatpush1.msra.mxu0 0.0
      %7205 = vmatprep.subr.mxu0 0.0
      %7206 = vmatpush1.msra.mxu0 0.0
      %7207 = vmatprep.subr.mxu0 0.0
      %7208 = vmatpush1.msra.mxu0 0.0
      %7209 = vmatprep.subr.mxu0 0.0
      %7210 = vmatpush1.msra.mxu0 0.0
      %7211 = vmatprep.subr.mxu0 0.0
      %7212 = vmatpush1.msra.mxu0 0.0
      %7213 = vmatprep.subr.mxu0 0.0
      %7214 = vmatpush1.msra.mxu0 0.0
      %7215 = vmatprep.subr.mxu0 0.0
      %7216 = vmatpush1.msra.mxu0 0.0
      %7217 = vmatprep.subr.mxu0 0.0
      %7218 = vmatpush1.msra.mxu0 0.0
      %7219 = vmatprep.subr.mxu0 0.0
      %7220 = vmatpush1.msra.mxu0 0.0
      %7221 = vmatprep.subr.mxu0 0.0
      %7222 = vmatpush1.msra.mxu0 0.0
      %7223 = vmatprep.subr.mxu0 0.0
      %7224 = vmatpush1.msra.mxu0 0.0
      %7225 = vmatprep.subr.mxu0 0.0
      %7226 = vmatpush1.msra.mxu0 0.0
      %7227 = vmatprep.subr.mxu0 0.0
      %7228 = vmatpush1.msra.mxu0 0.0
      %7229 = vmatprep.subr.mxu0 0.0
      %7230 = vmatpush1.msra.mxu0 0.0
      %7231 = vmatprep.subr.mxu0 0.0
      %7232 = vmatpush1.msra.mxu0 0.0
      %7233 = vmatprep.subr.mxu0 0.0
      %7234 = vmatpush1.msra.mxu0 0.0
      %7235 = vmatprep.subr.mxu0 0.0
      %7236 = vmatpush1.msra.mxu0 0.0
      %7237 = vmatprep.subr.mxu0 0.0
      %7238 = vmatpush1.msra.mxu0 0.0
      %7239 = vmatprep.subr.mxu0 0.0
      %7240 = vmatpush1.msra.mxu0 0.0
      %7241 = vmatprep.subr.mxu0 0.0
      %7242 = vmatpush1.msra.mxu0 0.0
      %7243 = vmatprep.mubr.f32.mxu0 0.0
      %7244 = vmatmul.mubr.f32.gmra.mrb[0].mxu0 %v7084
      %v7245 = vpop.f32.mrb[0].mxu0
      %v7246 = vadd.f32 0.0, %v7245
      %v7247 = vpop.f32.mrb[0].mxu0
      %7248 = vmatprep.mubr.f32.mxu0 0.0
      %7249 = vmatmul.mubr.f32.gmra.mrb[0].mxu0 %v7087
      %v7250 = vpop.f32.mrb[0].mxu0
      %v7251 = vadd.f32 0.0, %v7250
      %v7252 = vpop.f32.mrb[0].mxu0
      %7253 = vmatprep.mubr.f32.mxu0 0.0
      %7254 = vmatmul.mubr.f32.gmra.mrb[0].mxu0 %v7090
      %v7255 = vpop.f32.mrb[0].mxu0
      %v7256 = vadd.f32 0.0, %v7255
      %v7257 = vpop.f32.mrb[0].mxu0
      %7258 = vmatprep.mubr.f32.mxu0 0.0
      %7259 = vmatmul.mubr.f32.gmra.mrb[0].mxu0 %v7093
      %v7260 = vpop.f32.mrb[0].mxu0
      %v7261 = vadd.f32 0.0, %v7260
      %v7262 = vpop.f32.mrb[0].mxu0
      %7263 = vmatprep.mubr.f32.mxu0 0.0
      %7264 = vmatmul.mubr.f32.gmra.mrb[0].mxu0 %v7096
      %v7265 = vpop.f32.mrb[0].mxu0
      %v7266 = vadd.f32 0.0, %v7265
      %v7267 = vpop.f32.mrb[0].mxu0
      %7268 = vmatprep.mubr.f32.mxu0 0.0
      %7269 = vmatmul.mubr.f32.gmra.mrb[0].mxu0 %v7099
      %v7270 = vpop.f32.mrb[0].mxu0
      %v7271 = vadd.f32 0.0, %v7270
      %v7272 = vpop.f32.mrb[0].mxu0
      %7273 = vmatprep.mubr.f32.mxu0 0.0
      %7274 = vmatmul.mubr.f32.gmra.mrb[0].mxu0 %v7102
      %v7275 = vpop.f32.mrb[0].mxu0
      %v7276 = vadd.f32 0.0, %v7275
      %v7277 = vpop.f32.mrb[0].mxu0
      %7278 = vmatprep.mubr.f32.mxu0 0.0
      %7279 = vmatmul.mubr.f32.gmra.mrb[0].mxu0 %v7105
      %v7280 = vpop.f32.mrb[0].mxu0
      %v7281 = vadd.f32 0.0, %v7280
      %v7282 = vpop.f32.mrb[0].mxu0
      %7283 = vmatprep.mubr.f32.mxu0 0.0
      %7284 = vmatmul.mubr.f32.gmra.mrb[0].mxu0 %v7108
      %v7285 = vpop.f32.mrb[0].mxu0
      %v7286 = vadd.f32 0.0, %v7285
      %v7287 = vpop.f32.mrb[0].mxu0
      %7288 = vmatprep.mubr.f32.mxu0 0.0
      %7289 = vmatmul.mubr.f32.gmra.mrb[0].mxu0 %v7111
      %v7290 = vpop.f32.mrb[0].mxu0
      %v7291 = vadd.f32 0.0, %v7290
      %v7292 = vpop.f32.mrb[0].mxu0
      %7293 = vmatprep.mubr.f32.mxu0 0.0
      %7294 = vmatmul.mubr.f32.gmra.mrb[0].mxu0 %v7114
      %v7295 = vpop.f32.mrb[0].mxu0
      %v7296 = vadd.f32 0.0, %v7295
      %v7297 = vpop.f32.mrb[0].mxu0
      %7298 = vmatprep.mubr.f32.mxu0 0.0
      %7299 = vmatmul.mubr.f32.gmra.mrb[0].mxu0 %v7117
      %v7300 = vpop.f32.mrb[0].mxu0
      %v7301 = vadd.f32 0.0, %v7300
      %v7302 = vpop.f32.mrb[0].mxu0
      %7303 = vmatprep.mubr.f32.mxu0 0.0
      %7304 = vmatmul.mubr.f32.gmra.mrb[0].mxu0 %v7120
      %v7305 = vpop.f32.mrb[0].mxu0
      %v7306 = vadd.f32 0.0, %v7305
      %v7307 = vpop.f32.mrb[0].mxu0
      %7308 = vmatprep.mubr.f32.mxu0 0.0
      %7309 = vmatmul.mubr.f32.gmra.mrb[0].mxu0 %v7123
      %v7310 = vpop.f32.mrb[0].mxu0
      %v7311 = vadd.f32 0.0, %v7310
      %v7312 = vpop.f32.mrb[0].mxu0
      %7313 = vmatprep.mubr.f32.mxu0 0.0
      %7314 = vmatmul.mubr.f32.gmra.mrb[0].mxu0 %v7126
      %v7315 = vpop.f32.mrb[0].mxu0
      %v7316 = vadd.f32 0.0, %v7315
      %v7317 = vpop.f32.mrb[0].mxu0
      %7318 = vmatprep.mubr.f32.mxu0 0.0
      %7319 = vmatmul.mubr.f32.gmra.mrb[0].mxu0 %v7129
      %v7320 = vpop.f32.mrb[0].mxu0
      %v7321 = vadd.f32 0.0, %v7320
      %v7322 = vpop.f32.mrb[0].mxu0
      %7323 = vmatprep.mubr.f32.mxu0 0.0
      %7324 = vmatmul.mubr.f32.gmra.mrb[0].mxu0 %v7132
      %v7325 = vpop.f32.mrb[0].mxu0
      %v7326 = vadd.f32 0.0, %v7325
      %v7327 = vpop.f32.mrb[0].mxu0
      %7328 = vmatprep.mubr.f32.mxu0 0.0
      %7329 = vmatmul.mubr.f32.gmra.mrb[0].mxu0 %v7135
      %v7330 = vpop.f32.mrb[0].mxu0
      %v7331 = vadd.f32 0.0, %v7330
      %v7332 = vpop.f32.mrb[0].mxu0
      %7333 = vmatprep.mubr.f32.mxu0 0.0
      %7334 = vmatmul.mubr.f32.gmra.mrb[0].mxu0 %v7138
      %v7335 = vpop.f32.mrb[0].mxu0
      %v7336 = vadd.f32 0.0, %v7335
      %v7337 = vpop.f32.mrb[0].mxu0
      %7338 = vmatprep.mubr.f32.mxu0 0.0
      %7339 = vmatmul.mubr.f32.gmra.mrb[0].mxu0 %v7141
      %v7340 = vpop.f32.mrb[0].mxu0
      %v7341 = vadd.f32 0.0, %v7340
      %v7342 = vpop.f32.mrb[0].mxu0
      %7343 = vmatprep.mubr.f32.mxu0 0.0
      %7344 = vmatmul.mubr.f32.gmra.mrb[0].mxu0 %v7144
      %v7345 = vpop.f32.mrb[0].mxu0
      %v7346 = vadd.f32 0.0, %v7345
      %v7347 = vpop.f32.mrb[0].mxu0
      %7348 = vmatprep.mubr.f32.mxu0 0.0
      %7349 = vmatmul.mubr.f32.gmra.mrb[0].mxu0 %v7147
      %v7350 = vpop.f32.mrb[0].mxu0
      %v7351 = vadd.f32 0.0, %v7350
      %v7352 = vpop.f32.mrb[0].mxu0
      %7353 = vmatprep.mubr.f32.mxu0 0.0
      %7354 = vmatmul.mubr.f32.gmra.mrb[0].mxu0 %v7150
      %v7355 = vpop.f32.mrb[0].mxu0
      %v7356 = vadd.f32 0.0, %v7355
      %v7357 = vpop.f32.mrb[0].mxu0
      %7358 = vmatprep.mubr.f32.mxu0 0.0
      %7359 = vmatmul.mubr.f32.gmra.mrb[0].mxu0 %v7153
      %v7360 = vpop.f32.mrb[0].mxu0
      %v7361 = vadd.f32 0.0, %v7360
      %v7362 = vpop.f32.mrb[0].mxu0
      %7363 = vmatprep.mubr.f32.mxu0 0.0
      %7364 = vmatmul.mubr.f32.gmra.mrb[0].mxu0 %v7156
      %v7365 = vpop.f32.mrb[0].mxu0
      %v7366 = vadd.f32 0.0, %v7365
      %v7367 = vpop.f32.mrb[0].mxu0
      %7368 = vmatprep.mubr.f32.mxu0 0.0
      %7369 = vmatmul.mubr.f32.gmra.mrb[0].mxu0 %v7159
      %v7370 = vpop.f32.mrb[0].mxu0
      %v7371 = vadd.f32 0.0, %v7370
      %v7372 = vpop.f32.mrb[0].mxu0
      %7373 = vmatprep.mubr.f32.mxu0 0.0
      %7374 = vmatmul.mubr.f32.gmra.mrb[0].mxu0 %v7162
      %v7375 = vpop.f32.mrb[0].mxu0
      %v7376 = vadd.f32 0.0, %v7375
      %v7377 = vpop.f32.mrb[0].mxu0
      %7378 = vmatprep.mubr.f32.mxu0 0.0
      %7379 = vmatmul.mubr.f32.gmra.mrb[0].mxu0 %v7165
      %v7380 = vpop.f32.mrb[0].mxu0
      %v7381 = vadd.f32 0.0, %v7380
      %v7382 = vpop.f32.mrb[0].mxu0
      %7383 = vmatprep.mubr.f32.mxu0 0.0
      %7384 = vmatmul.mubr.f32.gmra.mrb[0].mxu0 %v7168
      %v7385 = vpop.f32.mrb[0].mxu0
      %v7386 = vadd.f32 0.0, %v7385
      %v7387 = vpop.f32.mrb[0].mxu0
      %7388 = vmatprep.mubr.f32.mxu0 0.0
      %7389 = vmatmul.mubr.f32.gmra.mrb[0].mxu0 %v7171
      %v7390 = vpop.f32.mrb[0].mxu0
      %v7391 = vadd.f32 0.0, %v7390
      %v7392 = vpop.f32.mrb[0].mxu0
      %7393 = vmatprep.mubr.f32.mxu0 0.0
      %7394 = vmatmul.mubr.f32.gmra.mrb[0].mxu0 %v7174
      %v7395 = vpop.f32.mrb[0].mxu0
      %v7396 = vadd.f32 0.0, %v7395
      %v7397 = vpop.f32.mrb[0].mxu0
      %7398 = vmatprep.mubr.f32.mxu0 0.0
      %7399 = vmatmul.mubr.f32.gmra.mrb[0].mxu0 %v7177
      %v7400 = vpop.f32.mrb[0].mxu0
      %v7401 = vadd.f32 0.0, %v7400
      %v7402 = vpop.f32.mrb[0].mxu0
      %7403 = vdwg.mxu0
      %v7404 = vadd.f32 %v7017, %v7246
      %v7405 = vadd.f32 %v7018, %v7251
      %v7406 = vadd.f32 %v7019, %v7256
      %v7407 = vadd.f32 %v7020, %v7261
      %v7408 = vadd.f32 %v7021, %v7266
      %v7409 = vadd.f32 %v7022, %v7271
      %v7410 = vadd.f32 %v7023, %v7276
      %v7411 = vadd.f32 %v7024, %v7281
      %v7412 = vadd.f32 %v7025, %v7286
      %v7413 = vadd.f32 %v7026, %v7291
      %v7414 = vadd.f32 %v7027, %v7296
      %v7415 = vadd.f32 %v7028, %v7301
      %v7416 = vadd.f32 %v7029, %v7306
      %v7417 = vadd.f32 %v7030, %v7311
      %v7418 = vadd.f32 %v7031, %v7316
      %v7419 = vadd.f32 %v7032, %v7321
      %v7420 = vadd.f32 %v7033, %v7326
      %v7421 = vadd.f32 %v7034, %v7331
      %v7422 = vadd.f32 %v7035, %v7336
      %v7423 = vadd.f32 %v7036, %v7341
      %v7424 = vadd.f32 %v7037, %v7346
      %v7425 = vadd.f32 %v7038, %v7351
      %v7426 = vadd.f32 %v7039, %v7356
      %v7427 = vadd.f32 %v7040, %v7361
      %v7428 = vadd.f32 %v7041, %v7366
      %v7429 = vadd.f32 %v7042, %v7371
      %v7430 = vadd.f32 %v7043, %v7376
      %v7431 = vadd.f32 %v7044, %v7381
      %v7432 = vadd.f32 %v7045, %v7386
      %v7433 = vadd.f32 %v7046, %v7391
      %v7434 = vadd.f32 %v7047, %v7396
      %v7435 = vadd.f32 %v7048, %v7401
      %v7436 = vld [vmem:[%s4] sm:$0x1]
      %v7438 = vlaneseq
      %v7439 = vshrl.u32 %v7438, 7
      %v7440 = vsub.s32 0, %v7439
      %v7441 = vrot.slane %v7436, %v7440
      %v7443 = vadd.f32 %v7404, %v7441
      %v7444 = vadd.f32 %v7405, %v7441
      %v7445 = vadd.f32 %v7406, %v7441
      %v7446 = vadd.f32 %v7407, %v7441
      %v7447 = vadd.f32 %v7408, %v7441
      %v7448 = vadd.f32 %v7409, %v7441
      %v7449 = vadd.f32 %v7410, %v7441
      %v7450 = vadd.f32 %v7411, %v7441
      %v7451 = vadd.f32 %v7412, %v7441
      %v7452 = vadd.f32 %v7413, %v7441
      %v7453 = vadd.f32 %v7414, %v7441
      %v7454 = vadd.f32 %v7415, %v7441
      %v7455 = vadd.f32 %v7416, %v7441
      %v7456 = vadd.f32 %v7417, %v7441
      %v7457 = vadd.f32 %v7418, %v7441
      %v7458 = vadd.f32 %v7419, %v7441
      %v7459 = vadd.f32 %v7420, %v7441
      %v7460 = vadd.f32 %v7421, %v7441
      %v7461 = vadd.f32 %v7422, %v7441
      %v7462 = vadd.f32 %v7423, %v7441
      %v7463 = vadd.f32 %v7424, %v7441
      %v7464 = vadd.f32 %v7425, %v7441
      %v7465 = vadd.f32 %v7426, %v7441
      %v7466 = vadd.f32 %v7427, %v7441
      %v7467 = vadd.f32 %v7428, %v7441
      %v7468 = vadd.f32 %v7429, %v7441
      %v7469 = vadd.f32 %v7430, %v7441
      %v7470 = vadd.f32 %v7431, %v7441
      %v7471 = vadd.f32 %v7432, %v7441
      %v7472 = vadd.f32 %v7433, %v7441
      %v7473 = vadd.f32 %v7434, %v7441
      %v7474 = vadd.f32 %v7435, %v7441
      %vm7475 = vcmp.ge.f32.partialorder %v7443, 0.0
      %vm7476 = vcmp.ge.f32.partialorder %v7444, 0.0
      %vm7477 = vcmp.ge.f32.partialorder %v7445, 0.0
      %vm7478 = vcmp.ge.f32.partialorder %v7446, 0.0
      %vm7479 = vcmp.ge.f32.partialorder %v7447, 0.0
      %vm7480 = vcmp.ge.f32.partialorder %v7448, 0.0
      %vm7481 = vcmp.ge.f32.partialorder %v7449, 0.0
      %vm7482 = vcmp.ge.f32.partialorder %v7450, 0.0
      %vm7483 = vcmp.ge.f32.partialorder %v7451, 0.0
      %vm7484 = vcmp.ge.f32.partialorder %v7452, 0.0
      %vm7485 = vcmp.ge.f32.partialorder %v7453, 0.0
      %vm7486 = vcmp.ge.f32.partialorder %v7454, 0.0
      %vm7487 = vcmp.ge.f32.partialorder %v7455, 0.0
      %vm7488 = vcmp.ge.f32.partialorder %v7456, 0.0
      %vm7489 = vcmp.ge.f32.partialorder %v7457, 0.0
      %vm7490 = vcmp.ge.f32.partialorder %v7458, 0.0
      %vm7491 = vcmp.ge.f32.partialorder %v7459, 0.0
      %vm7492 = vcmp.ge.f32.partialorder %v7460, 0.0
      %vm7493 = vcmp.ge.f32.partialorder %v7461, 0.0
      %vm7494 = vcmp.ge.f32.partialorder %v7462, 0.0
      %vm7495 = vcmp.ge.f32.partialorder %v7463, 0.0
      %vm7496 = vcmp.ge.f32.partialorder %v7464, 0.0
      %vm7497 = vcmp.ge.f32.partialorder %v7465, 0.0
      %vm7498 = vcmp.ge.f32.partialorder %v7466, 0.0
      %vm7499 = vcmp.ge.f32.partialorder %v7467, 0.0
      %vm7500 = vcmp.ge.f32.partialorder %v7468, 0.0
      %vm7501 = vcmp.ge.f32.partialorder %v7469, 0.0
      %vm7502 = vcmp.ge.f32.partialorder %v7470, 0.0
      %vm7503 = vcmp.ge.f32.partialorder %v7471, 0.0
      %vm7504 = vcmp.ge.f32.partialorder %v7472, 0.0
      %vm7505 = vcmp.ge.f32.partialorder %v7473, 0.0
      %vm7506 = vcmp.ge.f32.partialorder %v7474, 0.0
      %v7507 = vmul.f32 %v7443, 0.2
      %v7508 = vmul.f32 %v7444, 0.2
      %v7509 = vmul.f32 %v7445, 0.2
      %v7510 = vmul.f32 %v7446, 0.2
      %v7511 = vmul.f32 %v7447, 0.2
      %v7512 = vmul.f32 %v7448, 0.2
      %v7513 = vmul.f32 %v7449, 0.2
      %v7514 = vmul.f32 %v7450, 0.2
      %v7515 = vmul.f32 %v7451, 0.2
      %v7516 = vmul.f32 %v7452, 0.2
      %v7517 = vmul.f32 %v7453, 0.2
      %v7518 = vmul.f32 %v7454, 0.2
      %v7519 = vmul.f32 %v7455, 0.2
      %v7520 = vmul.f32 %v7456, 0.2
      %v7521 = vmul.f32 %v7457, 0.2
      %v7522 = vmul.f32 %v7458, 0.2
      %v7523 = vmul.f32 %v7459, 0.2
      %v7524 = vmul.f32 %v7460, 0.2
      %v7525 = vmul.f32 %v7461, 0.2
      %v7526 = vmul.f32 %v7462, 0.2
      %v7527 = vmul.f32 %v7463, 0.2
      %v7528 = vmul.f32 %v7464, 0.2
      %v7529 = vmul.f32 %v7465, 0.2
      %v7530 = vmul.f32 %v7466, 0.2
      %v7531 = vmul.f32 %v7467, 0.2
      %v7532 = vmul.f32 %v7468, 0.2
      %v7533 = vmul.f32 %v7469, 0.2
      %v7534 = vmul.f32 %v7470, 0.2
      %v7535 = vmul.f32 %v7471, 0.2
      %v7536 = vmul.f32 %v7472, 0.2
      %v7537 = vmul.f32 %v7473, 0.2
      %v7538 = vmul.f32 %v7474, 0.2
      %v7539 = vsel %vm7475, %v7443, %v7507
      %v7540 = vsel %vm7476, %v7444, %v7508
      %v7541 = vsel %vm7477, %v7445, %v7509
      %v7542 = vsel %vm7478, %v7446, %v7510
      %v7543 = vsel %vm7479, %v7447, %v7511
      %v7544 = vsel %vm7480, %v7448, %v7512
      %v7545 = vsel %vm7481, %v7449, %v7513
      %v7546 = vsel %vm7482, %v7450, %v7514
      %v7547 = vsel %vm7483, %v7451, %v7515
      %v7548 = vsel %vm7484, %v7452, %v7516
      %v7549 = vsel %vm7485, %v7453, %v7517
      %v7550 = vsel %vm7486, %v7454, %v7518
      %v7551 = vsel %vm7487, %v7455, %v7519
      %v7552 = vsel %vm7488, %v7456, %v7520
      %v7553 = vsel %vm7489, %v7457, %v7521
      %v7554 = vsel %vm7490, %v7458, %v7522
      %v7555 = vsel %vm7491, %v7459, %v7523
      %v7556 = vsel %vm7492, %v7460, %v7524
      %v7557 = vsel %vm7493, %v7461, %v7525
      %v7558 = vsel %vm7494, %v7462, %v7526
      %v7559 = vsel %vm7495, %v7463, %v7527
      %v7560 = vsel %vm7496, %v7464, %v7528
      %v7561 = vsel %vm7497, %v7465, %v7529
      %v7562 = vsel %vm7498, %v7466, %v7530
      %v7563 = vsel %vm7499, %v7467, %v7531
      %v7564 = vsel %vm7500, %v7468, %v7532
      %v7565 = vsel %vm7501, %v7469, %v7533
      %v7566 = vsel %vm7502, %v7470, %v7534
      %v7567 = vsel %vm7503, %v7471, %v7535
      %v7568 = vsel %vm7504, %v7472, %v7536
      %v7569 = vsel %vm7505, %v7473, %v7537
      %v7570 = vsel %vm7506, %v7474, %v7538
      %7571 = vst.msk [vmem:[%s224] sm:$0xff] %vm3928, %v7539
      %7572 = vst.msk [vmem:[%s224 + $0x8] sm:$0xff] %vm3928, %v7540
      %7573 = vst.msk [vmem:[%s224 + $0x10] sm:$0xff] %vm3928, %v7541
      %7574 = vst.msk [vmem:[%s224 + $0x18] sm:$0xff] %vm3928, %v7542
      %7575 = vst.msk [vmem:[%s224 + $0x20] sm:$0xff] %vm3928, %v7543
      %7576 = vst.msk [vmem:[%s224 + $0x28] sm:$0xff] %vm3928, %v7544
      %7577 = vst.msk [vmem:[%s224 + $0x30] sm:$0xff] %vm3928, %v7545
      %7578 = vst.msk [vmem:[%s224 + $0x38] sm:$0xff] %vm3928, %v7546
      %7579 = vst.msk [vmem:[%s224 + $0x40] sm:$0xff] %vm3928, %v7547
      %7580 = vst.msk [vmem:[%s224 + $0x48] sm:$0xff] %vm3928, %v7548
      %7581 = vst.msk [vmem:[%s224 + $0x50] sm:$0xff] %vm3928, %v7549
      %7582 = vst.msk [vmem:[%s224 + $0x58] sm:$0xff] %vm3928, %v7550
      %7583 = vst.msk [vmem:[%s224 + $0x60] sm:$0xff] %vm3928, %v7551
      %7584 = vst.msk [vmem:[%s224 + $0x68] sm:$0xff] %vm3928, %v7552
      %7585 = vst.msk [vmem:[%s224 + $0x70] sm:$0xff] %vm3928, %v7553
      %7586 = vst.msk [vmem:[%s224 + $0x78] sm:$0xff] %vm3928, %v7554
      %7587 = vst.msk [vmem:[%s224 + $0x80] sm:$0xff] %vm3928, %v7555
      %7588 = vst.msk [vmem:[%s224 + $0x88] sm:$0xff] %vm3928, %v7556
      %7589 = vst.msk [vmem:[%s224 + $0x90] sm:$0xff] %vm3928, %v7557
      %7590 = vst.msk [vmem:[%s224 + $0x98] sm:$0xff] %vm3928, %v7558
      %7591 = vst.msk [vmem:[%s224 + $0xa0] sm:$0xff] %vm3928, %v7559
      %7592 = vst.msk [vmem:[%s224 + $0xa8] sm:$0xff] %vm3928, %v7560
      %7593 = vst.msk [vmem:[%s224 + $0xb0] sm:$0xff] %vm3928, %v7561
      %7594 = vst.msk [vmem:[%s224 + $0xb8] sm:$0xff] %vm3928, %v7562
      %7595 = vst.msk [vmem:[%s224 + $0xc0] sm:$0xff] %vm3928, %v7563
      %7596 = vst.msk [vmem:[%s224 + $0xc8] sm:$0xff] %vm3928, %v7564
      %7597 = vst.msk [vmem:[%s224 + $0xd0] sm:$0xff] %vm3928, %v7565
      %7598 = vst.msk [vmem:[%s224 + $0xd8] sm:$0xff] %vm3928, %v7566
      %7599 = vst.msk [vmem:[%s224 + $0xe0] sm:$0xff] %vm3928, %v7567
      %7600 = vst.msk [vmem:[%s224 + $0xe8] sm:$0xff] %vm3928, %v7568
      %7601 = vst.msk [vmem:[%s224 + $0xf0] sm:$0xff] %vm3928, %v7569
      %7602 = vst.msk [vmem:[%s224 + $0xf8] sm:$0xff] %vm3928, %v7570
      %p7603 = scmp.lt.s32.totalorder %s16, 1
      %s7604 = scalar_select %p7603, %s16, 1
      %s7605 = smul.addr %s7604, 32
      %s7606 = smul.addr %s7605, 8
      %s7607 = scalar_lea.vmem %s5, %s7606
      // Predicated region
      $region41: #{tpu_custom_call.1} parent=39 // pred_check
        %p7608 = pneg %p144
      $region42: #{tpu_custom_call.1} parent=39 // pred_check_branch
        %7610 = sbr.rel (%p7608) target = $region44
      $region43: #{tpu_custom_call.1} parent=39 // pred_region
        _
      $region44: #{tpu_custom_call.1} parent=39 // pred_fallthru
        _
    $region40: #{tpu_custom_call.1} parent=5 // pred_fallthru
      _
    %p7611 = scmp.le.s32.totalorder 2, %s11
    // Predicated region
    $region45: #{tpu_custom_call.1} parent=5 // pred_check
      %p7612 = pneg %p7611
    $region46: #{tpu_custom_call.1} parent=5 // pred_check_branch
      %7614 = sbr.rel (%p7612) target = $region48
    $region47: #{tpu_custom_call.1} parent=5 // pred_region
      %s7615 = ssub.s32 %s11, 2
      // Predicated region
      $region49: #{tpu_custom_call.1} parent=47 // pred_check
        %p7616 = pneg %p150
      $region50: #{tpu_custom_call.1} parent=47 // pred_check_branch
        %7618 = sbr.rel (%p7616) target = $region52
      $region51: #{tpu_custom_call.1} parent=47 // pred_region
        %p7619 = scmp.lt.s32.totalorder %s17, 1
        %s7620 = scalar_select %p7619, %s17, 1
        %s7621 = smul.addr %s7620, 32
        %s7622 = smul.addr %s7621, 8
        %s7623 = scalar_lea.vmem %s5, %s7622
      $region52: #{tpu_custom_call.1} parent=47 // pred_fallthru
        _
    $region48: #{tpu_custom_call.1} parent=5 // pred_fallthru
      _
  $region6: #{tpu_custom_call.1} parent=0 // loop_footer
    %s15 = sadd.s32 1, %s11
  $region7: #{tpu_custom_call.1} parent=0 // loop_footer_branch
    %10 = sbr.rel target = $region3
  $region8: #{tpu_custom_call.1} parent=0 // loop_exit
    _

</llo_original>
